<compile_context>
chip_gen: v6e
topology: v6e:2x2x1
jax: 0.10.0
libtpu: 0.0.40
codegen_flags: <defaults>
</compile_context>

<pallas_src>
import functools

import jax
import jax.numpy as jnp
from jax.experimental import pallas as pl
from jax.experimental.pallas import tpu as pltpu

LANE = 128
_NEG_BIG = -9.0e15  # same mask constant as the PyTorch GAT layer


def _round_up(v, m=LANE):
    return ((v + m - 1) // m) * m


def _cdiv(a, b):
    return -(-a // b)


# --------------------------------------------------------------------------- #
# Kernel
# --------------------------------------------------------------------------- #
def _vgae7_kernel(alpha,
                  x_ref, y_ref, noise_ref, bias_ref,
                  w1_ref, a1_ref,
                  wmsh_ref, wmsy_ref, ams_ref,
                  fc1wz_ref, fc1wy_ref, fc1b_ref, fc2w_ref, fc2b_ref,
                  out_ref, hms_ref):
    f32 = jnp.float32
    bias = bias_ref[...]                          # [R, R] additive mask (0 / -9e15)

    def elu(v):
        return jnp.where(v > 0, v, jnp.exp(jnp.minimum(v, 0.0)) - 1.0)

    def attend(f_src, f_dst_row, h):
        # scores[i, j] = leaky_relu(f_src[i] + f_dst[j]) + bias[i, j]
        pre = f_src + f_dst_row                                   # [R, R]
        e = jnp.maximum(pre, alpha * pre) + bias                  # leaky-relu, 0<alpha<1
        m = jnp.max(e, axis=1, keepdims=True)
        p = jnp.exp(e - m)
        s = jnp.sum(p, axis=1, keepdims=True)
        attn = p * pl.reciprocal(s, approx=True)                  # EUP, free slot
        return jnp.dot(attn, h, preferred_element_type=f32)

    # ---- base_gcn: GAT(input_dim -> hidden1), ELU -------------------------- #
    h1p = jnp.dot(x_ref[...], w1_ref[...], preferred_element_type=f32)     # [R, H1P]
    sc1 = jnp.dot(h1p, a1_ref[...], preferred_element_type=f32)[:, :2]     # [R, 2]
    h1 = elu(attend(sc1[:, 0:1], sc1[:, 1:2].T, h1p))                      # [R, H1P]

    # ---- gcn_mean / gcn_logstddev, fused, on cat([h1, Y]) ------------------ #
    y = y_ref[...]
    hms = (jnp.dot(h1, wmsh_ref[...], preferred_element_type=f32)
           + jnp.dot(y, wmsy_ref[...], preferred_element_type=f32))        # [R, 2*H2P]
    scms = jnp.dot(hms, ams_ref[...], preferred_element_type=f32)[:, :4]   # [R, 4]
    hms_ref[...] = hms                    # stage in VMEM; bound the live range
    dsts = scms[:, 2:4].T                 # [2, R] (narrow transpose only)
    half = hms_ref.shape[1] // 2
    mean = elu(attend(scms[:, 0:1], dsts[0:1, :], hms_ref[:, :half]))
    logstd = elu(attend(scms[:, 1:2], dsts[1:2, :], hms_ref[:, half:]))

    # ---- reparameterization ------------------------------------------------ #
    z = noise_ref[...] * jnp.exp(logstd) + mean                            # [R, H2P]

    # ---- decoder: relu(fc1(cat([z, Y]))), sigmoid(fc2(.)) ------------------ #
    zh = jnp.maximum(
        jnp.dot(z, fc1wz_ref[...], preferred_element_type=f32)
        + jnp.dot(y, fc1wy_ref[...], preferred_element_type=f32)
        + fc1b_ref[...], 0.0)                                              # [R, H1P]
    logits = (jnp.dot(zh, fc2w_ref[...], preferred_element_type=f32)
              + fc2b_ref[...])                                             # [R, NP]
    # numerically stable sigmoid: exp only ever sees non-positive arguments
    t = jnp.exp(-jnp.abs(logits))
    r = pl.reciprocal(1.0 + t, approx=True)
    out_ref[...] = jnp.where(logits >= 0, r, t * r)


# --------------------------------------------------------------------------- #
# One-time parameter packing (hoisted out of the per-call path)
# --------------------------------------------------------------------------- #
def pack_vgae7_params(params, adj, *, n_nodes, batch_hint, alpha,
                      rows_per_block=256):
    """Pad/fuse weights and build the block-diagonal attention bias ONCE.

    rows_per_block=256 fills the 256-wide v6e/v7x MXU; use 128 on v5e (its MXU
    is 128 wide and a larger R only inflates the quadratic attention work).
    The grid is kept at >= 2 steps whenever the batch allows so both v7x
    TensorCores stay busy.
    """
    f32 = jnp.float32
    d_in, H1 = params["W1"].shape
    H2 = params["Wm"].shape[1]
    C = params["Wm"].shape[0] - H1
    N = n_nodes

    G = max(1, rows_per_block // N)                 # graphs packed per grid step
    while G > 1 and _cdiv(batch_hint, G) < 2:       # keep >= 2 parallel steps
        G //= 2
    R = G * N                                       # rows per grid step
    if R % 8 != 0:
        raise NotImplementedError("graphs-per-block * n_nodes must be a multiple of 8")

    DP, CP, H1P, H2P, NP = (_round_up(v) for v in (d_in, C, H1, H2, N))

    def pad2(a, r, c):
        return jnp.zeros((r, c), f32).at[:a.shape[0], :a.shape[1]].set(a.astype(f32))

    # GAT 1: packed score projection (col 0 = a_src, col 1 = a_dst).
    a1 = params["a1"].astype(f32)
    A1 = (jnp.zeros((H1P, LANE), f32)
          .at[:H1, 0].set(a1[:H1, 0])
          .at[:H1, 1].set(a1[H1:, 0]))

    # Fused mean / logstd GAT weights (columns :H2P = mean, H2P: = logstd).
    Wm, Ws = params["Wm"].astype(f32), params["Ws"].astype(f32)
    Wmsh = (jnp.zeros((H1P, 2 * H2P), f32)
            .at[:H1, :H2].set(Wm[:H1])
            .at[:H1, H2P:H2P + H2].set(Ws[:H1]))
    Wmsy = (jnp.zeros((CP, 2 * H2P), f32)
            .at[:C, :H2].set(Wm[H1:])
            .at[:C, H2P:H2P + H2].set(Ws[H1:]))
    am, as_ = params["am"].astype(f32), params["as"].astype(f32)
    # cols: 0 = mean src, 1 = logstd src, 2 = mean dst, 3 = logstd dst.
    Ams = (jnp.zeros((2 * H2P, LANE), f32)
           .at[:H2, 0].set(am[:H2, 0])
           .at[H2P:H2P + H2, 1].set(as_[:H2, 0])
           .at[:H2, 2].set(am[H2:, 0])
           .at[H2P:H2P + H2, 3].set(as_[H2:, 0]))

    # Additive attention-mask bias for G block-diagonally packed graphs.
    blk_mask = jnp.kron(jnp.eye(G, dtype=f32), (adj > 0).astype(f32)) > 0
    adj_bias = jnp.where(blk_mask, 0.0, _NEG_BIG).astype(f32)

    return {
        "alpha": float(alpha), "N": N, "G": G, "R": R,
        "DP": DP, "CP": CP, "H1P": H1P, "H2P": H2P, "NP": NP,
        "adj_bias": adj_bias,
        "W1": pad2(params["W1"], DP, H1P),
        "A1": A1,
        "Wmsh": Wmsh, "Wmsy": Wmsy, "Ams": Ams,
        "fc1wz": pad2(params["fc1_w"][:H2], H2P, H1P),
        "fc1wy": pad2(params["fc1_w"][H2:], CP, H1P),
        "fc1b": pad2(params["fc1_b"].reshape(1, -1), 1, H1P),
        "fc2w": pad2(params["fc2_w"], H1P, NP),
        "fc2b": pad2(params["fc2_b"].reshape(1, -1), 1, NP),
    }


# --------------------------------------------------------------------------- #
# Forward wrapper: input packing + pallas_call
# --------------------------------------------------------------------------- #
def vgae7_forward(x, y, noise, packed):
    """Batched VGAE7 forward.

    x: [B, N, input_dim]  y: [B, N, num_class]  noise: [B, N, hidden2]
    Returns A_pred: [B, N, N].
    """
    f32 = jnp.float32
    B, N, _ = x.shape
    assert N == packed["N"], "node count mismatch vs packed params"
    G, R = packed["G"], packed["R"]
    DP, CP, H1P, H2P, NP = (packed[k] for k in ("DP", "CP", "H1P", "H2P", "NP"))

    Bp = _cdiv(B, G) * G
    num_blocks = Bp // G

    def pack_rows(a, dpad):
        a = a.astype(f32)
        a = jnp.pad(a, ((0, Bp - B), (0, 0), (0, dpad - a.shape[-1])))
        return a.reshape(Bp * N, dpad)

    x2 = pack_rows(x, DP)
    y2 = pack_rows(y, CP)
    nz2 = pack_rows(noise, H2P)

    operands = (x2, y2, nz2, packed["adj_bias"], packed["W1"], packed["A1"],
                packed["Wmsh"], packed["Wmsy"], packed["Ams"],
                packed["fc1wz"], packed["fc1wy"], packed["fc1b"],
                packed["fc2w"], packed["fc2b"])

    def row_spec(d):
        return pl.BlockSpec((R, d), lambda g: (g, 0))

    def full_spec(a):
        return pl.BlockSpec(a.shape, lambda g: (0, 0))

    in_specs = [row_spec(DP), row_spec(CP), row_spec(H2P)]
    in_specs += [full_spec(a) for a in operands[3:]]
    out_spec = pl.BlockSpec((R, NP), lambda g: (g, 0))

    # ---- advisory cost hint for the XLA scheduler --------------------------- #
    mm = [(R, DP, H1P), (R, H1P, LANE), (R, R, H1P),
          (R, H1P, 2 * H2P), (R, CP, 2 * H2P), (R, 2 * H2P, LANE),
          (R, R, H2P), (R, R, H2P),
          (R, H2P, H1P), (R, CP, H1P), (R, H1P, NP)]
    flops = 2 * num_blocks * sum(m * k * n for m, k, n in mm)
    transcendentals = num_blocks * (3 * R * R + R * (H1P + 3 * H2P + 2 * NP) + 6 * R)
    bytes_accessed = 4 * (sum(int(a.size) for a in operands) + Bp * N * NP)
    cost = pl.CostEstimate(flops=int(flops),
                           transcendentals=int(transcendentals),
                           bytes_accessed=int(bytes_accessed))

    out = pl.pallas_call(
        functools.partial(_vgae7_kernel, packed["alpha"]),
        out_shape=jax.ShapeDtypeStruct((Bp * N, NP), f32),
        grid=(num_blocks,),
        in_specs=in_specs,
        out_specs=out_spec,
        scratch_shapes=[pltpu.VMEM((R, 2 * H2P), jnp.float32)],
        compiler_params=pltpu.CompilerParams(
            dimension_semantics=("parallel",)),
        cost_estimate=cost,
    )(*operands)

    return out.reshape(Bp, N, NP)[:B, :, :N]


# --------------------------------------------------------------------------- #
# Pure-JAX reference (mirrors the PyTorch module, per graph)
# --------------------------------------------------------------------------- #
def _gat_ref(x, adj, W, a, alpha):
    h = x @ W
    F = W.shape[1]
    e = jax.nn.leaky_relu((h @ a[:F]) + (h @ a[F:]).T, alpha)
    scores = jnp.where(adj > 0, e, _NEG_BIG)
    attn = jax.nn.softmax(scores, axis=1)
    return jax.nn.elu(attn @ h)


def vgae7_reference(x, y, adj, params, noise, alpha):
    h = _gat_ref(x, adj, params["W1"], params["a1"], alpha)
    hidden = jnp.concatenate([h, y], axis=1)
    mean = _gat_ref(hidden, adj, params["Wm"], params["am"], alpha)
    logstd = _gat_ref(hidden, adj, params["Ws"], params["as"], alpha)
    z = noise * jnp.exp(logstd) + mean
    zc = jnp.concatenate([z, y], axis=1)
    zh = jax.nn.relu(zc @ params["fc1_w"] + params["fc1_b"])
    return jax.nn.sigmoid(zh @ params["fc2_w"] + params["fc2_b"])


# --------------------------------------------------------------------------- #
# Demo / self-test
# --------------------------------------------------------------------------- #
if __name__ == "__main__":
    key = jax.random.PRNGKey(0)
    B, n_nodes, input_dim, hidden1, hidden2, num_class = 64, 8, 16, 32, 16, 4
    alpha = 0.2
    ks = jax.random.split(key, 16)

    x = jax.random.normal(ks[0], (B, n_nodes, input_dim), jnp.float32)
    labels = jax.random.randint(ks[1], (B, n_nodes), 0, num_class)
    y = jax.nn.one_hot(labels, num_class, dtype=jnp.float32)
    noise = jax.random.normal(ks[2], (B, n_nodes, hidden2), jnp.float32)

    a_rand = (jax.random.uniform(ks[3], (n_nodes, n_nodes)) > 0.5).astype(jnp.float32)
    adj = jnp.maximum(jnp.maximum(a_rand, a_rand.T),
                      jnp.eye(n_nodes, dtype=jnp.float32))

    def xavier(k, shape, gain=1.414):
        bound = gain * (6.0 / (shape[0] + shape[1])) ** 0.5
        return jax.random.uniform(k, shape, jnp.float32, -bound, bound)

    params = {
        "W1": xavier(ks[4], (input_dim, hidden1)),
        "a1": xavier(ks[5], (2 * hidden1, 1)),
        "Wm": xavier(ks[6], (hidden1 + num_class, hidden2)),
        "am": xavier(ks[7], (2 * hidden2, 1)),
        "Ws": xavier(ks[8], (hidden1 + num_class, hidden2)),
        "as": xavier(ks[9], (2 * hidden2, 1)),
        "fc1_w": xavier(ks[10], (hidden2 + num_class, hidden1), gain=1.0),
        "fc1_b": jax.random.uniform(ks[11], (1, hidden1), jnp.float32, -0.1, 0.1),
        "fc2_w": xavier(ks[12], (hidden1, n_nodes), gain=1.0),
        "fc2_b": jax.random.uniform(ks[13], (1, n_nodes), jnp.float32, -0.1, 0.1),
    }

    # One-time weight packing (hoisted out of the per-call path).
    packed = pack_vgae7_params(params, adj, n_nodes=n_nodes, batch_hint=B,
                               alpha=alpha, rows_per_block=256)

    a_pred = jax.block_until_ready(vgae7_forward(x, y, noise, packed))
    a_ref = jax.vmap(
        lambda xb, yb, nb: vgae7_reference(xb, yb, adj, params, nb, alpha)
    )(x, y, noise)

    assert a_pred.shape == (B, n_nodes, n_nodes)
    max_err = float(jnp.max(jnp.abs(a_pred - a_ref)))
    # Tolerance loosened from 1e-4 because the softmax/sigmoid use the EUP
    # approximate reciprocal (pl.reciprocal(approx=True)); math is otherwise f32.
    assert max_err < 5e-3, f"max abs error vs reference: {max_err}"
    print("KERNEL_OK")
</pallas_src>

<mosaic_0001>
module attributes {stable_mosaic.version = 11 : i64} {
  func.func @_vgae7_kernel(%arg0: i32, %arg1: memref<256x128xf32, #tpu.memory_space<vmem>>, %arg2: memref<256x128xf32, #tpu.memory_space<vmem>>, %arg3: memref<256x128xf32, #tpu.memory_space<vmem>>, %arg4: memref<256x256xf32, #tpu.memory_space<vmem>>, %arg5: memref<128x128xf32, #tpu.memory_space<vmem>>, %arg6: memref<128x128xf32, #tpu.memory_space<vmem>>, %arg7: memref<128x256xf32, #tpu.memory_space<vmem>>, %arg8: memref<128x256xf32, #tpu.memory_space<vmem>>, %arg9: memref<256x128xf32, #tpu.memory_space<vmem>>, %arg10: memref<128x128xf32, #tpu.memory_space<vmem>>, %arg11: memref<128x128xf32, #tpu.memory_space<vmem>>, %arg12: memref<1x128xf32, #tpu.memory_space<vmem>>, %arg13: memref<128x128xf32, #tpu.memory_space<vmem>>, %arg14: memref<1x128xf32, #tpu.memory_space<vmem>>, %arg15: memref<256x128xf32, #tpu.memory_space<vmem>>, %arg16: memref<256x256xf32, #tpu.memory_space<vmem>>) attributes {dimension_semantics = [#tpu.dimension_semantics<parallel>], iteration_bounds = array<i64: 2>, scalar_prefetch = 0 : i64, scratch_operands = 1 : i64, tpu.core_type = #tpu.core_type<tc>, window_params = [{transform_indices = @transform_0, window_bounds = array<i64: 256, 128>}, {transform_indices = @transform_1, window_bounds = array<i64: 256, 128>}, {transform_indices = @transform_2, window_bounds = array<i64: 256, 128>}, {pipeline_mode = #tpu.pipeline_mode<synchronous>, transform_indices = @transform_3, window_bounds = array<i64: 256, 256>}, {pipeline_mode = #tpu.pipeline_mode<synchronous>, transform_indices = @transform_4, window_bounds = array<i64: 128, 128>}, {pipeline_mode = #tpu.pipeline_mode<synchronous>, transform_indices = @transform_5, window_bounds = array<i64: 128, 128>}, {pipeline_mode = #tpu.pipeline_mode<synchronous>, transform_indices = @transform_6, window_bounds = array<i64: 128, 256>}, {pipeline_mode = #tpu.pipeline_mode<synchronous>, transform_indices = @transform_7, window_bounds = array<i64: 128, 256>}, {pipeline_mode = #tpu.pipeline_mode<synchronous>, transform_indices = @transform_8, window_bounds = array<i64: 256, 128>}, {pipeline_mode = #tpu.pipeline_mode<synchronous>, transform_indices = @transform_9, window_bounds = array<i64: 128, 128>}, {pipeline_mode = #tpu.pipeline_mode<synchronous>, transform_indices = @transform_10, window_bounds = array<i64: 128, 128>}, {pipeline_mode = #tpu.pipeline_mode<synchronous>, transform_indices = @transform_11, window_bounds = array<i64: 1, 128>}, {pipeline_mode = #tpu.pipeline_mode<synchronous>, transform_indices = @transform_12, window_bounds = array<i64: 128, 128>}, {pipeline_mode = #tpu.pipeline_mode<synchronous>, transform_indices = @transform_13, window_bounds = array<i64: 1, 128>}, {transform_indices = @transform_14, window_bounds = array<i64: 256, 128>}]} {
    %c0 = arith.constant 0 : index
    %c0_0 = arith.constant 0 : index
    %0 = vector.load %arg4[%c0, %c0_0] : memref<256x256xf32, #tpu.memory_space<vmem>>, vector<256x256xf32>
    %c0_1 = arith.constant 0 : index
    %c0_2 = arith.constant 0 : index
    %1 = vector.load %arg1[%c0_1, %c0_2] : memref<256x128xf32, #tpu.memory_space<vmem>>, vector<256x128xf32>
    %c0_3 = arith.constant 0 : index
    %c0_4 = arith.constant 0 : index
    %2 = vector.load %arg5[%c0_3, %c0_4] : memref<128x128xf32, #tpu.memory_space<vmem>>, vector<128x128xf32>
    %cst = arith.constant dense<0.000000e+00> : vector<256x128xf32>
    %3 = tpu.matmul %1, %2, %cst {dimension_numbers = #tpu.dot_dimension_numbers<[1], [0], [0], [1], [0, 0, 1, 1], [], []>} : vector<256x128xf32>, vector<128x128xf32>, vector<256x128xf32> -> vector<256x128xf32>
    %c0_5 = arith.constant 0 : index
    %c0_6 = arith.constant 0 : index
    %4 = vector.load %arg6[%c0_5, %c0_6] : memref<128x128xf32, #tpu.memory_space<vmem>>, vector<128x128xf32>
    %cst_7 = arith.constant dense<0.000000e+00> : vector<256x128xf32>
    %5 = tpu.matmul %3, %4, %cst_7 {dimension_numbers = #tpu.dot_dimension_numbers<[1], [0], [0], [1], [0, 0, 1, 1], [], []>} : vector<256x128xf32>, vector<128x128xf32>, vector<256x128xf32> -> vector<256x128xf32>
    %6 = vector.extract_strided_slice %5 {offsets = [0, 0], sizes = [256, 2], strides = [1, 1]} : vector<256x128xf32> to vector<256x2xf32>
    %7 = vector.extract_strided_slice %6 {offsets = [0, 0], sizes = [256, 1], strides = [1, 1]} : vector<256x2xf32> to vector<256x1xf32>
    %8 = vector.extract_strided_slice %6 {offsets = [0, 1], sizes = [256, 1], strides = [1, 1]} : vector<256x2xf32> to vector<256x1xf32>
    %9 = tpu.transpose %8, [1, 0] : vector<256x1xf32> -> vector<1x256xf32>
    %10 = vector.broadcast %7 : vector<256x1xf32> to vector<256x256xf32>
    %11 = vector.broadcast %9 : vector<1x256xf32> to vector<256x256xf32>
    %12 = arith.addf %10, %11 : vector<256x256xf32>
    %cst_8 = arith.constant 2.000000e-01 : f32
    %13 = vector.broadcast %cst_8 : f32 to vector<256x256xf32>
    %14 = arith.mulf %13, %12 : vector<256x256xf32>
    %15 = arith.maximumf %12, %14 : vector<256x256xf32>
    %16 = arith.addf %15, %0 : vector<256x256xf32>
    %cst_9 = arith.constant dense<0xFF800000> : vector<256xf32>
    %17 = vector.multi_reduction <maximumf>, %16, %cst_9 [1] : vector<256x256xf32> to vector<256xf32>
    %18 = vector.shape_cast %17 : vector<256xf32> to vector<256x1xf32>
    %19 = vector.broadcast %18 : vector<256x1xf32> to vector<256x256xf32>
    %20 = arith.subf %16, %19 : vector<256x256xf32>
    %21 = math.exp %20 : vector<256x256xf32>
    %cst_10 = arith.constant dense<0.000000e+00> : vector<256xf32>
    %22 = vector.multi_reduction <add>, %21, %cst_10 [1] : vector<256x256xf32> to vector<256xf32>
    %23 = vector.shape_cast %22 : vector<256xf32> to vector<256x1xf32>
    %24 = tpu.reciprocal %23 {approx = true} : vector<256x1xf32> -> vector<256x1xf32>
    %25 = vector.broadcast %24 : vector<256x1xf32> to vector<256x256xf32>
    %26 = arith.mulf %21, %25 : vector<256x256xf32>
    %cst_11 = arith.constant dense<0.000000e+00> : vector<256x128xf32>
    %27 = tpu.matmul %26, %3, %cst_11 {dimension_numbers = #tpu.dot_dimension_numbers<[1], [0], [0], [1], [0, 0, 1, 1], [], []>} : vector<256x256xf32>, vector<256x128xf32>, vector<256x128xf32> -> vector<256x128xf32>
    %cst_12 = arith.constant 0.000000e+00 : f32
    %28 = vector.broadcast %cst_12 : f32 to vector<256x128xf32>
    %29 = arith.cmpf ogt, %27, %28 : vector<256x128xf32>
    %cst_13 = arith.constant 0.000000e+00 : f32
    %30 = vector.broadcast %cst_13 : f32 to vector<256x128xf32>
    %31 = arith.minimumf %27, %30 : vector<256x128xf32>
    %32 = math.exp %31 : vector<256x128xf32>
    %cst_14 = arith.constant 1.000000e+00 : f32
    %33 = vector.broadcast %cst_14 : f32 to vector<256x128xf32>
    %34 = arith.subf %32, %33 : vector<256x128xf32>
    %35 = arith.select %29, %27, %34 : vector<256x128xi1>, vector<256x128xf32>
    %c0_15 = arith.constant 0 : index
    %c0_16 = arith.constant 0 : index
    %36 = vector.load %arg2[%c0_15, %c0_16] : memref<256x128xf32, #tpu.memory_space<vmem>>, vector<256x128xf32>
    %c0_17 = arith.constant 0 : index
    %c0_18 = arith.constant 0 : index
    %37 = vector.load %arg7[%c0_17, %c0_18] : memref<128x256xf32, #tpu.memory_space<vmem>>, vector<128x256xf32>
    %cst_19 = arith.constant dense<0.000000e+00> : vector<256x256xf32>
    %38 = tpu.matmul %35, %37, %cst_19 {dimension_numbers = #tpu.dot_dimension_numbers<[1], [0], [0], [1], [0, 0, 1, 1], [], []>} : vector<256x128xf32>, vector<128x256xf32>, vector<256x256xf32> -> vector<256x256xf32>
    %c0_20 = arith.constant 0 : index
    %c0_21 = arith.constant 0 : index
    %39 = vector.load %arg8[%c0_20, %c0_21] : memref<128x256xf32, #tpu.memory_space<vmem>>, vector<128x256xf32>
    %cst_22 = arith.constant dense<0.000000e+00> : vector<256x256xf32>
    %40 = tpu.matmul %36, %39, %cst_22 {dimension_numbers = #tpu.dot_dimension_numbers<[1], [0], [0], [1], [0, 0, 1, 1], [], []>} : vector<256x128xf32>, vector<128x256xf32>, vector<256x256xf32> -> vector<256x256xf32>
    %41 = arith.addf %38, %40 : vector<256x256xf32>
    %c0_23 = arith.constant 0 : index
    %c0_24 = arith.constant 0 : index
    %42 = vector.load %arg9[%c0_23, %c0_24] : memref<256x128xf32, #tpu.memory_space<vmem>>, vector<256x128xf32>
    %cst_25 = arith.constant dense<0.000000e+00> : vector<256x128xf32>
    %43 = tpu.matmul %41, %42, %cst_25 {dimension_numbers = #tpu.dot_dimension_numbers<[1], [0], [0], [1], [0, 0, 1, 1], [], []>} : vector<256x256xf32>, vector<256x128xf32>, vector<256x128xf32> -> vector<256x128xf32>
    %44 = vector.extract_strided_slice %43 {offsets = [0, 0], sizes = [256, 4], strides = [1, 1]} : vector<256x128xf32> to vector<256x4xf32>
    %c0_26 = arith.constant 0 : index
    %c0_27 = arith.constant 0 : index
    %45 = vector.load %arg16[%c0_26, %c0_27] : memref<256x256xf32, #tpu.memory_space<vmem>>, vector<256x256xf32>
    tpu.vector_store %arg16[%c0_26, %c0_27], %41 {strides = array<i32>} : memref<256x256xf32, #tpu.memory_space<vmem>>, vector<256x256xf32>,
    %46 = vector.extract_strided_slice %44 {offsets = [0, 2], sizes = [256, 2], strides = [1, 1]} : vector<256x4xf32> to vector<256x2xf32>
    %47 = tpu.transpose %46, [1, 0] : vector<256x2xf32> -> vector<2x256xf32>
    %48 = vector.extract_strided_slice %44 {offsets = [0, 0], sizes = [256, 1], strides = [1, 1]} : vector<256x4xf32> to vector<256x1xf32>
    %49 = vector.extract_strided_slice %47 {offsets = [0, 0], sizes = [1, 256], strides = [1, 1]} : vector<2x256xf32> to vector<1x256xf32>
    %c0_28 = arith.constant 0 : index
    %c0_29 = arith.constant 0 : index
    %50 = vector.load %arg16[%c0_28, %c0_29] : memref<256x256xf32, #tpu.memory_space<vmem>>, vector<256x128xf32>
    %51 = vector.broadcast %48 : vector<256x1xf32> to vector<256x256xf32>
    %52 = vector.broadcast %49 : vector<1x256xf32> to vector<256x256xf32>
    %53 = arith.addf %51, %52 : vector<256x256xf32>
    %cst_30 = arith.constant 2.000000e-01 : f32
    %54 = vector.broadcast %cst_30 : f32 to vector<256x256xf32>
    %55 = arith.mulf %54, %53 : vector<256x256xf32>
    %56 = arith.maximumf %53, %55 : vector<256x256xf32>
    %57 = arith.addf %56, %0 : vector<256x256xf32>
    %cst_31 = arith.constant dense<0xFF800000> : vector<256xf32>
    %58 = vector.multi_reduction <maximumf>, %57, %cst_31 [1] : vector<256x256xf32> to vector<256xf32>
    %59 = vector.shape_cast %58 : vector<256xf32> to vector<256x1xf32>
    %60 = vector.broadcast %59 : vector<256x1xf32> to vector<256x256xf32>
    %61 = arith.subf %57, %60 : vector<256x256xf32>
    %62 = math.exp %61 : vector<256x256xf32>
    %cst_32 = arith.constant dense<0.000000e+00> : vector<256xf32>
    %63 = vector.multi_reduction <add>, %62, %cst_32 [1] : vector<256x256xf32> to vector<256xf32>
    %64 = vector.shape_cast %63 : vector<256xf32> to vector<256x1xf32>
    %65 = tpu.reciprocal %64 {approx = true} : vector<256x1xf32> -> vector<256x1xf32>
    %66 = vector.broadcast %65 : vector<256x1xf32> to vector<256x256xf32>
    %67 = arith.mulf %62, %66 : vector<256x256xf32>
    %cst_33 = arith.constant dense<0.000000e+00> : vector<256x128xf32>
    %68 = tpu.matmul %67, %50, %cst_33 {dimension_numbers = #tpu.dot_dimension_numbers<[1], [0], [0], [1], [0, 0, 1, 1], [], []>} : vector<256x256xf32>, vector<256x128xf32>, vector<256x128xf32> -> vector<256x128xf32>
    %cst_34 = arith.constant 0.000000e+00 : f32
    %69 = vector.broadcast %cst_34 : f32 to vector<256x128xf32>
    %70 = arith.cmpf ogt, %68, %69 : vector<256x128xf32>
    %cst_35 = arith.constant 0.000000e+00 : f32
    %71 = vector.broadcast %cst_35 : f32 to vector<256x128xf32>
    %72 = arith.minimumf %68, %71 : vector<256x128xf32>
    %73 = math.exp %72 : vector<256x128xf32>
    %cst_36 = arith.constant 1.000000e+00 : f32
    %74 = vector.broadcast %cst_36 : f32 to vector<256x128xf32>
    %75 = arith.subf %73, %74 : vector<256x128xf32>
    %76 = arith.select %70, %68, %75 : vector<256x128xi1>, vector<256x128xf32>
    %77 = vector.extract_strided_slice %44 {offsets = [0, 1], sizes = [256, 1], strides = [1, 1]} : vector<256x4xf32> to vector<256x1xf32>
    %78 = vector.extract_strided_slice %47 {offsets = [1, 0], sizes = [1, 256], strides = [1, 1]} : vector<2x256xf32> to vector<1x256xf32>
    %c0_37 = arith.constant 0 : index
    %c128 = arith.constant 128 : index
    %79 = vector.load %arg16[%c0_37, %c128] : memref<256x256xf32, #tpu.memory_space<vmem>>, vector<256x128xf32>
    %80 = vector.broadcast %77 : vector<256x1xf32> to vector<256x256xf32>
    %81 = vector.broadcast %78 : vector<1x256xf32> to vector<256x256xf32>
    %82 = arith.addf %80, %81 : vector<256x256xf32>
    %cst_38 = arith.constant 2.000000e-01 : f32
    %83 = vector.broadcast %cst_38 : f32 to vector<256x256xf32>
    %84 = arith.mulf %83, %82 : vector<256x256xf32>
    %85 = arith.maximumf %82, %84 : vector<256x256xf32>
    %86 = arith.addf %85, %0 : vector<256x256xf32>
    %cst_39 = arith.constant dense<0xFF800000> : vector<256xf32>
    %87 = vector.multi_reduction <maximumf>, %86, %cst_39 [1] : vector<256x256xf32> to vector<256xf32>
    %88 = vector.shape_cast %87 : vector<256xf32> to vector<256x1xf32>
    %89 = vector.broadcast %88 : vector<256x1xf32> to vector<256x256xf32>
    %90 = arith.subf %86, %89 : vector<256x256xf32>
    %91 = math.exp %90 : vector<256x256xf32>
    %cst_40 = arith.constant dense<0.000000e+00> : vector<256xf32>
    %92 = vector.multi_reduction <add>, %91, %cst_40 [1] : vector<256x256xf32> to vector<256xf32>
    %93 = vector.shape_cast %92 : vector<256xf32> to vector<256x1xf32>
    %94 = tpu.reciprocal %93 {approx = true} : vector<256x1xf32> -> vector<256x1xf32>
    %95 = vector.broadcast %94 : vector<256x1xf32> to vector<256x256xf32>
    %96 = arith.mulf %91, %95 : vector<256x256xf32>
    %cst_41 = arith.constant dense<0.000000e+00> : vector<256x128xf32>
    %97 = tpu.matmul %96, %79, %cst_41 {dimension_numbers = #tpu.dot_dimension_numbers<[1], [0], [0], [1], [0, 0, 1, 1], [], []>} : vector<256x256xf32>, vector<256x128xf32>, vector<256x128xf32> -> vector<256x128xf32>
    %cst_42 = arith.constant 0.000000e+00 : f32
    %98 = vector.broadcast %cst_42 : f32 to vector<256x128xf32>
    %99 = arith.cmpf ogt, %97, %98 : vector<256x128xf32>
    %cst_43 = arith.constant 0.000000e+00 : f32
    %100 = vector.broadcast %cst_43 : f32 to vector<256x128xf32>
    %101 = arith.minimumf %97, %100 : vector<256x128xf32>
    %102 = math.exp %101 : vector<256x128xf32>
    %cst_44 = arith.constant 1.000000e+00 : f32
    %103 = vector.broadcast %cst_44 : f32 to vector<256x128xf32>
    %104 = arith.subf %102, %103 : vector<256x128xf32>
    %105 = arith.select %99, %97, %104 : vector<256x128xi1>, vector<256x128xf32>
    %c0_45 = arith.constant 0 : index
    %c0_46 = arith.constant 0 : index
    %106 = vector.load %arg3[%c0_45, %c0_46] : memref<256x128xf32, #tpu.memory_space<vmem>>, vector<256x128xf32>
    %107 = math.exp %105 : vector<256x128xf32>
    %108 = arith.mulf %106, %107 : vector<256x128xf32>
    %109 = arith.addf %108, %76 : vector<256x128xf32>
    %c0_47 = arith.constant 0 : index
    %c0_48 = arith.constant 0 : index
    %110 = vector.load %arg10[%c0_47, %c0_48] : memref<128x128xf32, #tpu.memory_space<vmem>>, vector<128x128xf32>
    %cst_49 = arith.constant dense<0.000000e+00> : vector<256x128xf32>
    %111 = tpu.matmul %109, %110, %cst_49 {dimension_numbers = #tpu.dot_dimension_numbers<[1], [0], [0], [1], [0, 0, 1, 1], [], []>} : vector<256x128xf32>, vector<128x128xf32>, vector<256x128xf32> -> vector<256x128xf32>
    %c0_50 = arith.constant 0 : index
    %c0_51 = arith.constant 0 : index
    %112 = vector.load %arg11[%c0_50, %c0_51] : memref<128x128xf32, #tpu.memory_space<vmem>>, vector<128x128xf32>
    %cst_52 = arith.constant dense<0.000000e+00> : vector<256x128xf32>
    %113 = tpu.matmul %36, %112, %cst_52 {dimension_numbers = #tpu.dot_dimension_numbers<[1], [0], [0], [1], [0, 0, 1, 1], [], []>} : vector<256x128xf32>, vector<128x128xf32>, vector<256x128xf32> -> vector<256x128xf32>
    %114 = arith.addf %111, %113 : vector<256x128xf32>
    %c0_53 = arith.constant 0 : index
    %c0_54 = arith.constant 0 : index
    %115 = vector.load %arg12[%c0_53, %c0_54] : memref<1x128xf32, #tpu.memory_space<vmem>>, vector<1x128xf32>
    %116 = vector.broadcast %115 : vector<1x128xf32> to vector<256x128xf32>
    %117 = arith.addf %114, %116 : vector<256x128xf32>
    %cst_55 = arith.constant 0.000000e+00 : f32
    %118 = vector.broadcast %cst_55 : f32 to vector<256x128xf32>
    %119 = arith.maximumf %117, %118 : vector<256x128xf32>
    %c0_56 = arith.constant 0 : index
    %c0_57 = arith.constant 0 : index
    %120 = vector.load %arg13[%c0_56, %c0_57] : memref<128x128xf32, #tpu.memory_space<vmem>>, vector<128x128xf32>
    %cst_58 = arith.constant dense<0.000000e+00> : vector<256x128xf32>
    %121 = tpu.matmul %119, %120, %cst_58 {dimension_numbers = #tpu.dot_dimension_numbers<[1], [0], [0], [1], [0, 0, 1, 1], [], []>} : vector<256x128xf32>, vector<128x128xf32>, vector<256x128xf32> -> vector<256x128xf32>
    %c0_59 = arith.constant 0 : index
    %c0_60 = arith.constant 0 : index
    %122 = vector.load %arg14[%c0_59, %c0_60] : memref<1x128xf32, #tpu.memory_space<vmem>>, vector<1x128xf32>
    %123 = vector.broadcast %122 : vector<1x128xf32> to vector<256x128xf32>
    %124 = arith.addf %121, %123 : vector<256x128xf32>
    %125 = math.absf %124 : vector<256x128xf32>
    %cst_61 = arith.constant 0.000000e+00 : f32
    %126 = vector.broadcast %cst_61 : f32 to vector<256x128xf32>
    %127 = arith.subf %126, %125 : vector<256x128xf32>
    %128 = math.exp %127 : vector<256x128xf32>
    %cst_62 = arith.constant 1.000000e+00 : f32
    %129 = vector.broadcast %cst_62 : f32 to vector<256x128xf32>
    %130 = arith.addf %129, %128 : vector<256x128xf32>
    %131 = tpu.reciprocal %130 {approx = true} : vector<256x128xf32> -> vector<256x128xf32>
    %cst_63 = arith.constant 0.000000e+00 : f32
    %132 = vector.broadcast %cst_63 : f32 to vector<256x128xf32>
    %133 = arith.cmpf oge, %124, %132 : vector<256x128xf32>
    %134 = arith.mulf %128, %131 : vector<256x128xf32>
    %135 = arith.select %133, %131, %134 : vector<256x128xi1>, vector<256x128xf32>
    %c0_64 = arith.constant 0 : index
    %c0_65 = arith.constant 0 : index
    %136 = vector.load %arg15[%c0_64, %c0_65] : memref<256x128xf32, #tpu.memory_space<vmem>>, vector<256x128xf32>
    tpu.vector_store %arg15[%c0_64, %c0_65], %135 {strides = array<i32>} : memref<256x128xf32, #tpu.memory_space<vmem>>, vector<256x128xf32>,
    return
  }
  func.func @transform_0(%arg0: i32) -> (i32, i32) {
    %c0_i32 = arith.constant 0 : i32
    %c0_i32_0 = arith.constant 0 : i32
    return %arg0, %c0_i32 : i32, i32
  }
  func.func @transform_1(%arg0: i32) -> (i32, i32) {
    %c0_i32 = arith.constant 0 : i32
    %c0_i32_0 = arith.constant 0 : i32
    return %arg0, %c0_i32 : i32, i32
  }
  func.func @transform_2(%arg0: i32) -> (i32, i32) {
    %c0_i32 = arith.constant 0 : i32
    %c0_i32_0 = arith.constant 0 : i32
    return %arg0, %c0_i32 : i32, i32
  }
  func.func @transform_3(%arg0: i32) -> (i32, i32) {
    %c0_i32 = arith.constant 0 : i32
    %c0_i32_0 = arith.constant 0 : i32
    %c0_i32_1 = arith.constant 0 : i32
    return %c0_i32, %c0_i32_0 : i32, i32
  }
  func.func @transform_4(%arg0: i32) -> (i32, i32) {
    %c0_i32 = arith.constant 0 : i32
    %c0_i32_0 = arith.constant 0 : i32
    %c0_i32_1 = arith.constant 0 : i32
    return %c0_i32, %c0_i32_0 : i32, i32
  }
  func.func @transform_5(%arg0: i32) -> (i32, i32) {
    %c0_i32 = arith.constant 0 : i32
    %c0_i32_0 = arith.constant 0 : i32
    %c0_i32_1 = arith.constant 0 : i32
    return %c0_i32, %c0_i32_0 : i32, i32
  }
  func.func @transform_6(%arg0: i32) -> (i32, i32) {
    %c0_i32 = arith.constant 0 : i32
    %c0_i32_0 = arith.constant 0 : i32
    %c0_i32_1 = arith.constant 0 : i32
    return %c0_i32, %c0_i32_0 : i32, i32
  }
  func.func @transform_7(%arg0: i32) -> (i32, i32) {
    %c0_i32 = arith.constant 0 : i32
    %c0_i32_0 = arith.constant 0 : i32
    %c0_i32_1 = arith.constant 0 : i32
    return %c0_i32, %c0_i32_0 : i32, i32
  }
  func.func @transform_8(%arg0: i32) -> (i32, i32) {
    %c0_i32 = arith.constant 0 : i32
    %c0_i32_0 = arith.constant 0 : i32
    %c0_i32_1 = arith.constant 0 : i32
    return %c0_i32, %c0_i32_0 : i32, i32
  }
  func.func @transform_9(%arg0: i32) -> (i32, i32) {
    %c0_i32 = arith.constant 0 : i32
    %c0_i32_0 = arith.constant 0 : i32
    %c0_i32_1 = arith.constant 0 : i32
    return %c0_i32, %c0_i32_0 : i32, i32
  }
  func.func @transform_10(%arg0: i32) -> (i32, i32) {
    %c0_i32 = arith.constant 0 : i32
    %c0_i32_0 = arith.constant 0 : i32
    %c0_i32_1 = arith.constant 0 : i32
    return %c0_i32, %c0_i32_0 : i32, i32
  }
  func.func @transform_11(%arg0: i32) -> (i32, i32) {
    %c0_i32 = arith.constant 0 : i32
    %c0_i32_0 = arith.constant 0 : i32
    %c0_i32_1 = arith.constant 0 : i32
    return %c0_i32, %c0_i32_0 : i32, i32
  }
  func.func @transform_12(%arg0: i32) -> (i32, i32) {
    %c0_i32 = arith.constant 0 : i32
    %c0_i32_0 = arith.constant 0 : i32
    %c0_i32_1 = arith.constant 0 : i32
    return %c0_i32, %c0_i32_0 : i32, i32
  }
  func.func @transform_13(%arg0: i32) -> (i32, i32) {
    %c0_i32 = arith.constant 0 : i32
    %c0_i32_0 = arith.constant 0 : i32
    %c0_i32_1 = arith.constant 0 : i32
    return %c0_i32, %c0_i32_0 : i32, i32
  }
  func.func @transform_14(%arg0: i32) -> (i32, i32) {
    %c0_i32 = arith.constant 0 : i32
    %c0_i32_0 = arith.constant 0 : i32
    return %arg0, %c0_i32 : i32, i32
  }
}

</mosaic_0001>

<llo_original>
// kernel: tpu_custom_call.1
$region0: #{tpu_custom_call.1}
  #allocation0 [shape = 'u32[]', space=smem, size = 0x4, offset = 0x4, fixed_abs, tag = 'smem constant byte address 0x4 - core index']
  #allocation1 [shape = 'u32[144,128]{1,0:T(1,128)}', space=vmem, size = 0x12000, scoped, tag = 'internal scratch']
  #allocation2 [shape = 'f32[256,256]{1,0:T(8,128)}', space=vmem, size = 0x40000, scoped, tag = 'scratch operand']
  %s0 = inlined_call_operand.hbm [shape: f32[512,128], index: 0, kind: input, shape index: {}]
  %s1 = inlined_call_operand.hbm [shape: f32[512,128], index: 1, kind: input, shape index: {}]
  %s2 = inlined_call_operand.hbm [shape: f32[512,128], index: 2, kind: input, shape index: {}]
  %s3 = inlined_call_operand.hbm [shape: f32[256,256], index: 3, kind: input, shape index: {}]
  %s4 = inlined_call_operand.hbm [shape: f32[128,128], index: 4, kind: input, shape index: {}]
  %s5 = inlined_call_operand.hbm [shape: f32[128,128], index: 5, kind: input, shape index: {}]
  %s6 = inlined_call_operand.hbm [shape: f32[128,256], index: 6, kind: input, shape index: {}]
  %s7 = inlined_call_operand.hbm [shape: f32[128,256], index: 7, kind: input, shape index: {}]
  %s8 = inlined_call_operand.hbm [shape: f32[256,128], index: 8, kind: input, shape index: {}]
  %s9 = inlined_call_operand.hbm [shape: f32[128,128], index: 9, kind: input, shape index: {}]
  %s10 = inlined_call_operand.hbm [shape: f32[128,128], index: 10, kind: input, shape index: {}]
  %s11 = inlined_call_operand.vmem [shape: f32[1,128], index: 11, kind: input, shape index: {}]
  %s12 = inlined_call_operand.hbm [shape: f32[128,128], index: 12, kind: input, shape index: {}]
  %s13 = inlined_call_operand.vmem [shape: f32[1,128], index: 13, kind: input, shape index: {}]
  %s14 = inlined_call_operand.hbm [shape: f32[512,128], index: 14, kind: output, shape index: {}]
  %s15 = sld [smem:[#allocation0]]
  $region137: #{tpu_custom_call.1} parent=0
    _
  %s17 = ssub.s32 1, %s15
  %s18 = scalar_select 0, %s17, %s15
  $region1: #{tpu_custom_call.1} parent=0
    #allocation3 [shape = 'u8[262144]{0}', space=vmem, size = 0x40000, scoped, tag = 'input window, operand 0']
    #allocation4 [shape = 's32[2]{0}', space=sflag, size = 0x8, scoped, tag = 'scoped memory for tpu_custom_call.1']
    #allocation5 [shape = 's32[2]{0}', space=sflag, size = 0x8, scoped, tag = 'scoped memory for tpu_custom_call.1']
    #allocation6 [shape = 'u8[262144]{0}', space=vmem, size = 0x40000, scoped, tag = 'input window, operand 1']
    #allocation7 [shape = 's32[2]{0}', space=sflag, size = 0x8, scoped, tag = 'scoped memory for tpu_custom_call.1']
    #allocation8 [shape = 'u8[262144]{0}', space=vmem, size = 0x40000, scoped, tag = 'input window, operand 2']
    #allocation9 [shape = 'u8[262144]{0}', space=vmem, size = 0x40000, scoped, tag = 'input window, operand 3, single buffered']
    #allocation10 [shape = 's32[1]{0}', space=sflag, size = 0x4, scoped, tag = 'scoped memory for tpu_custom_call.1']
    #allocation11 [shape = 'u8[65536]{0}', space=vmem, size = 0x10000, scoped, tag = 'input window, operand 4, single buffered']
    #allocation12 [shape = 'u8[65536]{0}', space=vmem, size = 0x10000, scoped, tag = 'input window, operand 5, single buffered']
    #allocation13 [shape = 's32[1]{0}', space=sflag, size = 0x4, scoped, tag = 'scoped memory for tpu_custom_call.1']
    #allocation14 [shape = 'u8[131072]{0}', space=vmem, size = 0x20000, scoped, tag = 'input window, operand 6, single buffered']
    #allocation15 [shape = 'u8[131072]{0}', space=vmem, size = 0x20000, scoped, tag = 'input window, operand 7, single buffered']
    #allocation16 [shape = 's32[1]{0}', space=sflag, size = 0x4, scoped, tag = 'scoped memory for tpu_custom_call.1']
    #allocation17 [shape = 'u8[131072]{0}', space=vmem, size = 0x20000, scoped, tag = 'input window, operand 8, single buffered']
    #allocation18 [shape = 'u8[65536]{0}', space=vmem, size = 0x10000, scoped, tag = 'input window, operand 9, single buffered']
    #allocation19 [shape = 's32[1]{0}', space=sflag, size = 0x4, scoped, tag = 'scoped memory for tpu_custom_call.1']
    #allocation20 [shape = 'u8[65536]{0}', space=vmem, size = 0x10000, scoped, tag = 'input window, operand 10, single buffered']
    #allocation21 [shape = 'u8[65536]{0}', space=vmem, size = 0x10000, scoped, tag = 'input window, operand 12, single buffered']
    #allocation22 [shape = 's32[1]{0}', space=sflag, size = 0x4, scoped, tag = 'scoped memory for tpu_custom_call.1']
    #allocation23 [shape = 'u8[262144]{0}', space=vmem, size = 0x40000, scoped, tag = 'output window, operand 0']
    %19 = vsyncpa [#allocation4], 0
    %s20 = scalar_lea.sflag [#allocation4], 1
    %21 = vsyncpa %s20, 0
    %22 = vsyncpa [#allocation7], 0
    %s23 = scalar_lea.sflag [#allocation7], 1
    %24 = vsyncpa %s23, 0
    %25 = vsyncpa [#allocation10], 0
    %26 = vsyncpa [#allocation13], 0
    %27 = vsyncpa [#allocation16], 0
    %28 = vsyncpa [#allocation19], 0
    %29 = vsyncpa [#allocation22], 0
    %30 = vsyncpa [#allocation5], 0
    %s31 = scalar_lea.sflag [#allocation5], 1
    %32 = vsyncpa %s31, 0
    loop: start=0, step=1, limit=4
    $region2: #{tpu_custom_call.1} parent=1 // loop_pre_header
      _
    $region3: #{tpu_custom_call.1} parent=1 // loop_header
      %s34 = sphi 0, %s38
      %p35 = scmp.ge.s32.totalorder %s34, 4
      %s44 = sphi 0, %s46
      %s47 = sphi 0, %s44
      %s48 = sphi 0, %s47
      %s64 = sphi 0, %s48
      %s70 = sphi 0, %s72
      %s73 = sphi 0, %s70
      %s74 = sphi 0, %s73
      %s90 = sphi 0, %s74
      %s96 = sphi 0, %s98
      %s99 = sphi 0, %s96
      %s100 = sphi 0, %s99
      %s116 = sphi 0, %s100
      %s120 = sphi 0, %s120
      %s122 = sphi 0, %s120
      %s123 = sphi 0, %s122
      %s137 = sphi 0, %s123
      %s141 = sphi 0, %s141
      %s143 = sphi 0, %s141
      %s144 = sphi 0, %s143
      %s158 = sphi 0, %s144
      %s162 = sphi 0, %s162
      %s164 = sphi 0, %s162
      %s165 = sphi 0, %s164
      %s179 = sphi 0, %s165
      %s183 = sphi 0, %s183
      %s185 = sphi 0, %s183
      %s186 = sphi 0, %s185
      %s200 = sphi 0, %s186
      %s204 = sphi 0, %s204
      %s206 = sphi 0, %s204
      %s207 = sphi 0, %s206
      %s221 = sphi 0, %s207
      %s225 = sphi 0, %s225
      %s227 = sphi 0, %s225
      %s228 = sphi 0, %s227
      %s242 = sphi 0, %s228
      %s246 = sphi 0, %s246
      %s248 = sphi 0, %s246
      %s249 = sphi 0, %s248
      %s263 = sphi 0, %s249
      %s267 = sphi 0, %s267
      %s269 = sphi 0, %s267
      %s270 = sphi 0, %s269
      %s284 = sphi 0, %s270
      %s288 = sphi 0, %s288
      %s290 = sphi 0, %s288
      %s291 = sphi 0, %s290
      %s305 = sphi 0, %s291
      %s309 = sphi 0, %s309
      %s311 = sphi 0, %s309
      %s312 = sphi 0, %s311
      %s326 = sphi 0, %s312
      %s330 = sphi 0, %s330
      %s332 = sphi 0, %s330
      %s333 = sphi 0, %s332
      %s347 = sphi 0, %s333
      %s353 = sphi 0, %s355
      %s356 = sphi 0, %s353
      %s357 = sphi 0, %s356
      %s373 = sphi 0, %s357
    $region4: #{tpu_custom_call.1} parent=1 // loop_header_branch
      %37 = sbr.rel (%p35) target = $region8
    $region5: #{tpu_custom_call.1} parent=1 // loop_body
      %s39 = ssub.s32 %s34, 1
      %s40 = ssub.s32 %s34, 2
      %s41 = sadd.s32 %s34, 1
      %s42 = ssub.s32 %s34, %s41
      %p43 = scmp.eq.s32.totalorder %s42, 0
      %s45 = sadd.s32 %s44, 1
      %s46 = scalar_select %p43, %s44, %s45
      %p49 = pneg %p43
      %p50 = scmp.eq.s32.totalorder %s34, 1
      %p51 = por %p49, %p50
      %p52 = scmp.ne.s32.totalorder %s44, %s47
      %p53 = scmp.eq.s32.totalorder %s34, 0
      %p54 = por %p52, %p53
      %p55 = scmp.ne.s32.totalorder %s44, %s47
      %p56 = scmp.eq.s32.totalorder %s39, 1
      %p57 = por %p55, %p56
      %p58 = scmp.ne.s32.totalorder %s47, %s48
      %p59 = scmp.eq.s32.totalorder %s39, 0
      %p60 = por %p58, %p59
      %p61 = scmp.ne.s32.totalorder %s47, %s48
      %p62 = scmp.eq.s32.totalorder %s40, 1
      %p63 = por %p61, %p62
      %p65 = scmp.ne.s32.totalorder %s48, %s64
      %p66 = scmp.eq.s32.totalorder %s40, 0
      %p67 = por %p65, %p66
      %s68 = ssub.s32 %s34, %s41
      %p69 = scmp.eq.s32.totalorder %s68, 0
      %s71 = sadd.s32 %s70, 1
      %s72 = scalar_select %p69, %s70, %s71
      %p75 = pneg %p69
      %p76 = scmp.eq.s32.totalorder %s34, 1
      %p77 = por %p75, %p76
      %p78 = scmp.ne.s32.totalorder %s70, %s73
      %p79 = scmp.eq.s32.totalorder %s34, 0
      %p80 = por %p78, %p79
      %p81 = scmp.ne.s32.totalorder %s70, %s73
      %p82 = scmp.eq.s32.totalorder %s39, 1
      %p83 = por %p81, %p82
      %p84 = scmp.ne.s32.totalorder %s73, %s74
      %p85 = scmp.eq.s32.totalorder %s39, 0
      %p86 = por %p84, %p85
      %p87 = scmp.ne.s32.totalorder %s73, %s74
      %p88 = scmp.eq.s32.totalorder %s40, 1
      %p89 = por %p87, %p88
      %p91 = scmp.ne.s32.totalorder %s74, %s90
      %p92 = scmp.eq.s32.totalorder %s40, 0
      %p93 = por %p91, %p92
      %s94 = ssub.s32 %s34, %s41
      %p95 = scmp.eq.s32.totalorder %s94, 0
      %s97 = sadd.s32 %s96, 1
      %s98 = scalar_select %p95, %s96, %s97
      %p101 = pneg %p95
      %p102 = scmp.eq.s32.totalorder %s34, 1
      %p103 = por %p101, %p102
      %p104 = scmp.ne.s32.totalorder %s96, %s99
      %p105 = scmp.eq.s32.totalorder %s34, 0
      %p106 = por %p104, %p105
      %p107 = scmp.ne.s32.totalorder %s96, %s99
      %p108 = scmp.eq.s32.totalorder %s39, 1
      %p109 = por %p107, %p108
      %p110 = scmp.ne.s32.totalorder %s99, %s100
      %p111 = scmp.eq.s32.totalorder %s39, 0
      %p112 = por %p110, %p111
      %p113 = scmp.ne.s32.totalorder %s99, %s100
      %p114 = scmp.eq.s32.totalorder %s40, 1
      %p115 = por %p113, %p114
      %p117 = scmp.ne.s32.totalorder %s100, %s116
      %p118 = scmp.eq.s32.totalorder %s40, 0
      %p119 = por %p117, %p118
      %s121 = sadd.s32 %s120, 1
      %p124 = scmp.eq.s32.totalorder %s34, 1
      %p125 = scmp.ne.s32.totalorder %s120, %s122
      %p126 = scmp.eq.s32.totalorder %s34, 0
      %p127 = por %p125, %p126
      %p128 = scmp.ne.s32.totalorder %s120, %s122
      %p129 = scmp.eq.s32.totalorder %s39, 1
      %p130 = por %p128, %p129
      %p131 = scmp.ne.s32.totalorder %s122, %s123
      %p132 = scmp.eq.s32.totalorder %s39, 0
      %p133 = por %p131, %p132
      %p134 = scmp.ne.s32.totalorder %s122, %s123
      %p135 = scmp.eq.s32.totalorder %s40, 1
      %p136 = por %p134, %p135
      %p138 = scmp.ne.s32.totalorder %s123, %s137
      %p139 = scmp.eq.s32.totalorder %s40, 0
      %p140 = por %p138, %p139
      %s142 = sadd.s32 %s141, 1
      %p145 = scmp.eq.s32.totalorder %s34, 1
      %p146 = scmp.ne.s32.totalorder %s141, %s143
      %p147 = scmp.eq.s32.totalorder %s34, 0
      %p148 = por %p146, %p147
      %p149 = scmp.ne.s32.totalorder %s141, %s143
      %p150 = scmp.eq.s32.totalorder %s39, 1
      %p151 = por %p149, %p150
      %p152 = scmp.ne.s32.totalorder %s143, %s144
      %p153 = scmp.eq.s32.totalorder %s39, 0
      %p154 = por %p152, %p153
      %p155 = scmp.ne.s32.totalorder %s143, %s144
      %p156 = scmp.eq.s32.totalorder %s40, 1
      %p157 = por %p155, %p156
      %p159 = scmp.ne.s32.totalorder %s144, %s158
      %p160 = scmp.eq.s32.totalorder %s40, 0
      %p161 = por %p159, %p160
      %s163 = sadd.s32 %s162, 1
      %p166 = scmp.eq.s32.totalorder %s34, 1
      %p167 = scmp.ne.s32.totalorder %s162, %s164
      %p168 = scmp.eq.s32.totalorder %s34, 0
      %p169 = por %p167, %p168
      %p170 = scmp.ne.s32.totalorder %s162, %s164
      %p171 = scmp.eq.s32.totalorder %s39, 1
      %p172 = por %p170, %p171
      %p173 = scmp.ne.s32.totalorder %s164, %s165
      %p174 = scmp.eq.s32.totalorder %s39, 0
      %p175 = por %p173, %p174
      %p176 = scmp.ne.s32.totalorder %s164, %s165
      %p177 = scmp.eq.s32.totalorder %s40, 1
      %p178 = por %p176, %p177
      %p180 = scmp.ne.s32.totalorder %s165, %s179
      %p181 = scmp.eq.s32.totalorder %s40, 0
      %p182 = por %p180, %p181
      %s184 = sadd.s32 %s183, 1
      %p187 = scmp.eq.s32.totalorder %s34, 1
      %p188 = scmp.ne.s32.totalorder %s183, %s185
      %p189 = scmp.eq.s32.totalorder %s34, 0
      %p190 = por %p188, %p189
      %p191 = scmp.ne.s32.totalorder %s183, %s185
      %p192 = scmp.eq.s32.totalorder %s39, 1
      %p193 = por %p191, %p192
      %p194 = scmp.ne.s32.totalorder %s185, %s186
      %p195 = scmp.eq.s32.totalorder %s39, 0
      %p196 = por %p194, %p195
      %p197 = scmp.ne.s32.totalorder %s185, %s186
      %p198 = scmp.eq.s32.totalorder %s40, 1
      %p199 = por %p197, %p198
      %p201 = scmp.ne.s32.totalorder %s186, %s200
      %p202 = scmp.eq.s32.totalorder %s40, 0
      %p203 = por %p201, %p202
      %s205 = sadd.s32 %s204, 1
      %p208 = scmp.eq.s32.totalorder %s34, 1
      %p209 = scmp.ne.s32.totalorder %s204, %s206
      %p210 = scmp.eq.s32.totalorder %s34, 0
      %p211 = por %p209, %p210
      %p212 = scmp.ne.s32.totalorder %s204, %s206
      %p213 = scmp.eq.s32.totalorder %s39, 1
      %p214 = por %p212, %p213
      %p215 = scmp.ne.s32.totalorder %s206, %s207
      %p216 = scmp.eq.s32.totalorder %s39, 0
      %p217 = por %p215, %p216
      %p218 = scmp.ne.s32.totalorder %s206, %s207
      %p219 = scmp.eq.s32.totalorder %s40, 1
      %p220 = por %p218, %p219
      %p222 = scmp.ne.s32.totalorder %s207, %s221
      %p223 = scmp.eq.s32.totalorder %s40, 0
      %p224 = por %p222, %p223
      %s226 = sadd.s32 %s225, 1
      %p229 = scmp.eq.s32.totalorder %s34, 1
      %p230 = scmp.ne.s32.totalorder %s225, %s227
      %p231 = scmp.eq.s32.totalorder %s34, 0
      %p232 = por %p230, %p231
      %p233 = scmp.ne.s32.totalorder %s225, %s227
      %p234 = scmp.eq.s32.totalorder %s39, 1
      %p235 = por %p233, %p234
      %p236 = scmp.ne.s32.totalorder %s227, %s228
      %p237 = scmp.eq.s32.totalorder %s39, 0
      %p238 = por %p236, %p237
      %p239 = scmp.ne.s32.totalorder %s227, %s228
      %p240 = scmp.eq.s32.totalorder %s40, 1
      %p241 = por %p239, %p240
      %p243 = scmp.ne.s32.totalorder %s228, %s242
      %p244 = scmp.eq.s32.totalorder %s40, 0
      %p245 = por %p243, %p244
      %s247 = sadd.s32 %s246, 1
      %p250 = scmp.eq.s32.totalorder %s34, 1
      %p251 = scmp.ne.s32.totalorder %s246, %s248
      %p252 = scmp.eq.s32.totalorder %s34, 0
      %p253 = por %p251, %p252
      %p254 = scmp.ne.s32.totalorder %s246, %s248
      %p255 = scmp.eq.s32.totalorder %s39, 1
      %p256 = por %p254, %p255
      %p257 = scmp.ne.s32.totalorder %s248, %s249
      %p258 = scmp.eq.s32.totalorder %s39, 0
      %p259 = por %p257, %p258
      %p260 = scmp.ne.s32.totalorder %s248, %s249
      %p261 = scmp.eq.s32.totalorder %s40, 1
      %p262 = por %p260, %p261
      %p264 = scmp.ne.s32.totalorder %s249, %s263
      %p265 = scmp.eq.s32.totalorder %s40, 0
      %p266 = por %p264, %p265
      %s268 = sadd.s32 %s267, 1
      %p271 = scmp.eq.s32.totalorder %s34, 1
      %p272 = scmp.ne.s32.totalorder %s267, %s269
      %p273 = scmp.eq.s32.totalorder %s34, 0
      %p274 = por %p272, %p273
      %p275 = scmp.ne.s32.totalorder %s267, %s269
      %p276 = scmp.eq.s32.totalorder %s39, 1
      %p277 = por %p275, %p276
      %p278 = scmp.ne.s32.totalorder %s269, %s270
      %p279 = scmp.eq.s32.totalorder %s39, 0
      %p280 = por %p278, %p279
      %p281 = scmp.ne.s32.totalorder %s269, %s270
      %p282 = scmp.eq.s32.totalorder %s40, 1
      %p283 = por %p281, %p282
      %p285 = scmp.ne.s32.totalorder %s270, %s284
      %p286 = scmp.eq.s32.totalorder %s40, 0
      %p287 = por %p285, %p286
      %s289 = sadd.s32 %s288, 1
      %p292 = scmp.eq.s32.totalorder %s34, 1
      %p293 = scmp.ne.s32.totalorder %s288, %s290
      %p294 = scmp.eq.s32.totalorder %s34, 0
      %p295 = por %p293, %p294
      %p296 = scmp.ne.s32.totalorder %s288, %s290
      %p297 = scmp.eq.s32.totalorder %s39, 1
      %p298 = por %p296, %p297
      %p299 = scmp.ne.s32.totalorder %s290, %s291
      %p300 = scmp.eq.s32.totalorder %s39, 0
      %p301 = por %p299, %p300
      %p302 = scmp.ne.s32.totalorder %s290, %s291
      %p303 = scmp.eq.s32.totalorder %s40, 1
      %p304 = por %p302, %p303
      %p306 = scmp.ne.s32.totalorder %s291, %s305
      %p307 = scmp.eq.s32.totalorder %s40, 0
      %p308 = por %p306, %p307
      %s310 = sadd.s32 %s309, 1
      %p313 = scmp.eq.s32.totalorder %s34, 1
      %p314 = scmp.ne.s32.totalorder %s309, %s311
      %p315 = scmp.eq.s32.totalorder %s34, 0
      %p316 = por %p314, %p315
      %p317 = scmp.ne.s32.totalorder %s309, %s311
      %p318 = scmp.eq.s32.totalorder %s39, 1
      %p319 = por %p317, %p318
      %p320 = scmp.ne.s32.totalorder %s311, %s312
      %p321 = scmp.eq.s32.totalorder %s39, 0
      %p322 = por %p320, %p321
      %p323 = scmp.ne.s32.totalorder %s311, %s312
      %p324 = scmp.eq.s32.totalorder %s40, 1
      %p325 = por %p323, %p324
      %p327 = scmp.ne.s32.totalorder %s312, %s326
      %p328 = scmp.eq.s32.totalorder %s40, 0
      %p329 = por %p327, %p328
      %s331 = sadd.s32 %s330, 1
      %p334 = scmp.eq.s32.totalorder %s34, 1
      %p335 = scmp.ne.s32.totalorder %s330, %s332
      %p336 = scmp.eq.s32.totalorder %s34, 0
      %p337 = por %p335, %p336
      %p338 = scmp.ne.s32.totalorder %s330, %s332
      %p339 = scmp.eq.s32.totalorder %s39, 1
      %p340 = por %p338, %p339
      %p341 = scmp.ne.s32.totalorder %s332, %s333
      %p342 = scmp.eq.s32.totalorder %s39, 0
      %p343 = por %p341, %p342
      %p344 = scmp.ne.s32.totalorder %s332, %s333
      %p345 = scmp.eq.s32.totalorder %s40, 1
      %p346 = por %p344, %p345
      %p348 = scmp.ne.s32.totalorder %s333, %s347
      %p349 = scmp.eq.s32.totalorder %s40, 0
      %p350 = por %p348, %p349
      %s351 = ssub.s32 %s34, %s41
      %p352 = scmp.eq.s32.totalorder %s351, 0
      %s354 = sadd.s32 %s353, 1
      %s355 = scalar_select %p352, %s353, %s354
      %p358 = pneg %p352
      %p359 = scmp.eq.s32.totalorder %s34, 1
      %p360 = por %p358, %p359
      %p361 = scmp.ne.s32.totalorder %s353, %s356
      %p362 = scmp.eq.s32.totalorder %s34, 0
      %p363 = por %p361, %p362
      %p364 = scmp.ne.s32.totalorder %s353, %s356
      %p365 = scmp.eq.s32.totalorder %s39, 1
      %p366 = por %p364, %p365
      %p367 = scmp.ne.s32.totalorder %s356, %s357
      %p368 = scmp.eq.s32.totalorder %s39, 0
      %p369 = por %p367, %p368
      %p370 = scmp.ne.s32.totalorder %s356, %s357
      %p371 = scmp.eq.s32.totalorder %s40, 1
      %p372 = por %p370, %p371
      %p374 = scmp.ne.s32.totalorder %s357, %s373
      %p375 = scmp.eq.s32.totalorder %s40, 0
      %p376 = por %p374, %p375
      %p377 = scmp.le.s32.totalorder 1, %s34
      %p378 = scmp.lt.s32.totalorder %s34, 3
      %p379 = pnand %p377, %p378
      %p380 = pneg %p379
      // Predicated region
      $region9: #{tpu_custom_call.1} parent=5 // pred_check
        _
      $region10: #{tpu_custom_call.1} parent=5 // pred_check_branch
        %382 = sbr.rel (%p379) target = $region12
      $region11: #{tpu_custom_call.1} parent=5 // pred_region
        %s383 = ssub.s32 %s34, 1
        // Predicated region
        $region13: #{tpu_custom_call.1} parent=11 // pred_check
          %p384 = pneg %p133
        $region14: #{tpu_custom_call.1} parent=11 // pred_check_branch
          %386 = sbr.rel (%p384) target = $region16
        $region15: #{tpu_custom_call.1} parent=11 // pred_region
          %s388 = ssub.s32 8192, 8192
          %389 = vsyncadd [#allocation10], %s388
          %s390 = sshll.u32 [#allocation9], 4
          %s391 = int_to_ptr.vmem [resolvable:$true] %s390
          %396 = dma.hbm_to_vmem [thread:$0]  %s3, 8192, %s391, [#allocation10], 256, 256, 16
        $region16: #{tpu_custom_call.1} parent=11 // pred_fallthru
          _
        // Predicated region
        $region17: #{tpu_custom_call.1} parent=11 // pred_check
          %p397 = pneg %p154
        $region18: #{tpu_custom_call.1} parent=11 // pred_check_branch
          %399 = sbr.rel (%p397) target = $region20
        $region19: #{tpu_custom_call.1} parent=11 // pred_region
          %s401 = ssub.s32 2048, 2048
          %402 = vsyncadd [#allocation10], %s401
          %s403 = sshll.u32 [#allocation11], 4
          %s404 = int_to_ptr.vmem [resolvable:$true] %s403
          %409 = dma.hbm_to_vmem [thread:$0]  %s4, 2048, %s404, [#allocation10], 128, 128, 8
        $region20: #{tpu_custom_call.1} parent=11 // pred_fallthru
          _
        // Predicated region
        $region21: #{tpu_custom_call.1} parent=11 // pred_check
          %p410 = pneg %p175
        $region22: #{tpu_custom_call.1} parent=11 // pred_check_branch
          %412 = sbr.rel (%p410) target = $region24
        $region23: #{tpu_custom_call.1} parent=11 // pred_region
          %s414 = ssub.s32 2048, 2048
          %415 = vsyncadd [#allocation13], %s414
          %s416 = sshll.u32 [#allocation12], 4
          %s417 = int_to_ptr.vmem [resolvable:$true] %s416
          %422 = dma.hbm_to_vmem [thread:$0]  %s5, 2048, %s417, [#allocation13], 128, 128, 8
        $region24: #{tpu_custom_call.1} parent=11 // pred_fallthru
          _
        // Predicated region
        $region25: #{tpu_custom_call.1} parent=11 // pred_check
          %p423 = pneg %p196
        $region26: #{tpu_custom_call.1} parent=11 // pred_check_branch
          %425 = sbr.rel (%p423) target = $region28
        $region27: #{tpu_custom_call.1} parent=11 // pred_region
          %s427 = ssub.s32 4096, 4096
          %428 = vsyncadd [#allocation13], %s427
          %s429 = sshll.u32 [#allocation14], 4
          %s430 = int_to_ptr.vmem [resolvable:$true] %s429
          %435 = dma.hbm_to_vmem [thread:$0]  %s6, 4096, %s430, [#allocation13], 256, 256, 16
        $region28: #{tpu_custom_call.1} parent=11 // pred_fallthru
          _
        // Predicated region
        $region29: #{tpu_custom_call.1} parent=11 // pred_check
          %p436 = pneg %p217
        $region30: #{tpu_custom_call.1} parent=11 // pred_check_branch
          %438 = sbr.rel (%p436) target = $region32
        $region31: #{tpu_custom_call.1} parent=11 // pred_region
          %s440 = ssub.s32 4096, 4096
          %441 = vsyncadd [#allocation16], %s440
          %s442 = sshll.u32 [#allocation15], 4
          %s443 = int_to_ptr.vmem [resolvable:$true] %s442
          %448 = dma.hbm_to_vmem [thread:$0]  %s7, 4096, %s443, [#allocation16], 256, 256, 16
        $region32: #{tpu_custom_call.1} parent=11 // pred_fallthru
          _
        // Predicated region
        $region33: #{tpu_custom_call.1} parent=11 // pred_check
          %p449 = pneg %p238
        $region34: #{tpu_custom_call.1} parent=11 // pred_check_branch
          %451 = sbr.rel (%p449) target = $region36
        $region35: #{tpu_custom_call.1} parent=11 // pred_region
          %s453 = ssub.s32 4096, 4096
          %454 = vsyncadd [#allocation16], %s453
          %s455 = sshll.u32 [#allocation17], 4
          %s456 = int_to_ptr.vmem [resolvable:$true] %s455
          %461 = dma.hbm_to_vmem [thread:$0]  %s8, 4096, %s456, [#allocation16], 128, 128, 8
        $region36: #{tpu_custom_call.1} parent=11 // pred_fallthru
          _
        // Predicated region
        $region37: #{tpu_custom_call.1} parent=11 // pred_check
          %p462 = pneg %p259
        $region38: #{tpu_custom_call.1} parent=11 // pred_check_branch
          %464 = sbr.rel (%p462) target = $region40
        $region39: #{tpu_custom_call.1} parent=11 // pred_region
          %s466 = ssub.s32 2048, 2048
          %467 = vsyncadd [#allocation19], %s466
          %s468 = sshll.u32 [#allocation18], 4
          %s469 = int_to_ptr.vmem [resolvable:$true] %s468
          %474 = dma.hbm_to_vmem [thread:$0]  %s9, 2048, %s469, [#allocation19], 128, 128, 8
        $region40: #{tpu_custom_call.1} parent=11 // pred_fallthru
          _
        // Predicated region
        $region41: #{tpu_custom_call.1} parent=11 // pred_check
          %p475 = pneg %p280
        $region42: #{tpu_custom_call.1} parent=11 // pred_check_branch
          %477 = sbr.rel (%p475) target = $region44
        $region43: #{tpu_custom_call.1} parent=11 // pred_region
          %s479 = ssub.s32 2048, 2048
          %480 = vsyncadd [#allocation19], %s479
          %s481 = sshll.u32 [#allocation20], 4
          %s482 = int_to_ptr.vmem [resolvable:$true] %s481
          %487 = dma.hbm_to_vmem [thread:$0]  %s10, 2048, %s482, [#allocation19], 128, 128, 8
        $region44: #{tpu_custom_call.1} parent=11 // pred_fallthru
          _
        // Predicated region
        $region45: #{tpu_custom_call.1} parent=11 // pred_check
          %p488 = pneg %p301
        $region46: #{tpu_custom_call.1} parent=11 // pred_check_branch
          %490 = sbr.rel (%p488) target = $region48
        $region47: #{tpu_custom_call.1} parent=11 // pred_region
          _
        $region48: #{tpu_custom_call.1} parent=11 // pred_fallthru
          _
        // Predicated region
        $region49: #{tpu_custom_call.1} parent=11 // pred_check
          %p491 = pneg %p322
        $region50: #{tpu_custom_call.1} parent=11 // pred_check_branch
          %493 = sbr.rel (%p491) target = $region52
        $region51: #{tpu_custom_call.1} parent=11 // pred_region
          %s495 = ssub.s32 2048, 2048
          %496 = vsyncadd [#allocation22], %s495
          %s497 = sshll.u32 [#allocation21], 4
          %s498 = int_to_ptr.vmem [resolvable:$true] %s497
          %503 = dma.hbm_to_vmem [thread:$0]  %s12, 2048, %s498, [#allocation22], 128, 128, 8
        $region52: #{tpu_custom_call.1} parent=11 // pred_fallthru
          _
        // Predicated region
        $region53: #{tpu_custom_call.1} parent=11 // pred_check
          %p504 = pneg %p343
        $region54: #{tpu_custom_call.1} parent=11 // pred_check_branch
          %506 = sbr.rel (%p504) target = $region56
        $region55: #{tpu_custom_call.1} parent=11 // pred_region
          _
        $region56: #{tpu_custom_call.1} parent=11 // pred_fallthru
          _
      $region12: #{tpu_custom_call.1} parent=5 // pred_fallthru
        _
      %p507 = scmp.lt.s32.totalorder %s34, 2
      // Predicated region
      $region57: #{tpu_custom_call.1} parent=5 // pred_check
        %p508 = pneg %p507
      $region58: #{tpu_custom_call.1} parent=5 // pred_check_branch
        %510 = sbr.rel (%p508) target = $region60
      $region59: #{tpu_custom_call.1} parent=5 // pred_region
        // Predicated region
        $region61: #{tpu_custom_call.1} parent=59 // pred_check
          %p511 = pneg %p54
        $region62: #{tpu_custom_call.1} parent=59 // pred_check_branch
          %513 = sbr.rel (%p511) target = $region64
        $region63: #{tpu_custom_call.1} parent=59 // pred_region
          %s514 = sand.u32 %s44, 1
          %s515 = scalar_lea.sflag [#allocation4], %s514
          %s516 = sand.u32 %s44, 1
          %s517 = smul.addr %s516, 256
          %s518 = scalar_lea.vmem [#allocation3], %s517
          %s519 = smul.u32 32, %s34
          %s521 = ssub.s32 4096, 4096
          %522 = vsyncadd %s515, %s521
          %s523 = smul.addr %s519, 128
          %s524 = scalar_lea.hbm %s0, %s523
          %s525 = sshll.u32 %s518, 4
          %s526 = int_to_ptr.vmem [resolvable:$true] %s525
          %531 = dma.hbm_to_vmem [thread:$0]  %s524, 4096, %s526, %s515, 128, 128, 8
        $region64: #{tpu_custom_call.1} parent=59 // pred_fallthru
          _
        // Predicated region
        $region65: #{tpu_custom_call.1} parent=59 // pred_check
          %p532 = pneg %p80
        $region66: #{tpu_custom_call.1} parent=59 // pred_check_branch
          %534 = sbr.rel (%p532) target = $region68
        $region67: #{tpu_custom_call.1} parent=59 // pred_region
          %s535 = sand.u32 %s34, 1
          %s536 = scalar_lea.sflag [#allocation7], %s535
          %s537 = sand.u32 %s70, 1
          %s538 = smul.addr %s537, 256
          %s539 = scalar_lea.vmem [#allocation6], %s538
          %s540 = smul.u32 32, %s34
          %s542 = ssub.s32 4096, 4096
          %543 = vsyncadd %s536, %s542
          %s544 = smul.addr %s540, 128
          %s545 = scalar_lea.hbm %s1, %s544
          %s546 = sshll.u32 %s539, 4
          %s547 = int_to_ptr.vmem [resolvable:$true] %s546
          %552 = dma.hbm_to_vmem [thread:$0]  %s545, 4096, %s547, %s536, 128, 128, 8
        $region68: #{tpu_custom_call.1} parent=59 // pred_fallthru
          _
        // Predicated region
        $region69: #{tpu_custom_call.1} parent=59 // pred_check
          %p553 = pneg %p106
        $region70: #{tpu_custom_call.1} parent=59 // pred_check_branch
          %555 = sbr.rel (%p553) target = $region72
        $region71: #{tpu_custom_call.1} parent=59 // pred_region
          %s556 = sand.u32 %s34, 1
          %s557 = scalar_lea.sflag [#allocation7], %s556
          %s558 = sand.u32 %s96, 1
          %s559 = smul.addr %s558, 256
          %s560 = scalar_lea.vmem [#allocation8], %s559
          %s561 = smul.u32 32, %s34
          %s563 = ssub.s32 4096, 4096
          %564 = vsyncadd %s557, %s563
          %s565 = smul.addr %s561, 128
          %s566 = scalar_lea.hbm %s2, %s565
          %s567 = sshll.u32 %s560, 4
          %s568 = int_to_ptr.vmem [resolvable:$true] %s567
          %573 = dma.hbm_to_vmem [thread:$0]  %s566, 4096, %s568, %s557, 128, 128, 8
        $region72: #{tpu_custom_call.1} parent=59 // pred_fallthru
          _
      $region60: #{tpu_custom_call.1} parent=5 // pred_fallthru
        _
      %p574 = scmp.le.s32.totalorder 1, %s34
      %p575 = scmp.lt.s32.totalorder %s34, 3
      %p576 = pnand %p574, %p575
      %p577 = pneg %p576
      // Predicated region
      $region73: #{tpu_custom_call.1} parent=5 // pred_check
        _
      $region74: #{tpu_custom_call.1} parent=5 // pred_check_branch
        %579 = sbr.rel (%p576) target = $region76
      $region75: #{tpu_custom_call.1} parent=5 // pred_region
        %s580 = ssub.s32 %s34, 1
        %s581 = sand.u32 %s47, 1
        %s582 = scalar_lea.sflag [#allocation4], %s581
        %s583 = sand.u32 %s47, 1
        %s584 = smul.addr %s583, 256
        %s585 = scalar_lea.vmem [#allocation3], %s584
        // Predicated region
        $region77: #{tpu_custom_call.1} parent=75 // pred_check
          %p586 = pneg %p60
        $region78: #{tpu_custom_call.1} parent=75 // pred_check_branch
          %588 = sbr.rel (%p586) target = $region80
        $region79: #{tpu_custom_call.1} parent=75 // pred_region
          %589 = dma.done %s582, 4096
        $region80: #{tpu_custom_call.1} parent=75 // pred_fallthru
          _
        %s590 = sand.u32 %s39, 1
        %s591 = scalar_lea.sflag [#allocation7], %s590
        %s592 = sand.u32 %s73, 1
        %s593 = smul.addr %s592, 256
        %s594 = scalar_lea.vmem [#allocation6], %s593
        // Predicated region
        $region81: #{tpu_custom_call.1} parent=75 // pred_check
          %p595 = pneg %p86
        $region82: #{tpu_custom_call.1} parent=75 // pred_check_branch
          %597 = sbr.rel (%p595) target = $region84
        $region83: #{tpu_custom_call.1} parent=75 // pred_region
          %598 = dma.done %s591, 4096
        $region84: #{tpu_custom_call.1} parent=75 // pred_fallthru
          _
        %s599 = sand.u32 %s39, 1
        %s600 = scalar_lea.sflag [#allocation7], %s599
        %s601 = sand.u32 %s99, 1
        %s602 = smul.addr %s601, 256
        %s603 = scalar_lea.vmem [#allocation8], %s602
        // Predicated region
        $region85: #{tpu_custom_call.1} parent=75 // pred_check
          %p604 = pneg %p112
        $region86: #{tpu_custom_call.1} parent=75 // pred_check_branch
          %606 = sbr.rel (%p604) target = $region88
        $region87: #{tpu_custom_call.1} parent=75 // pred_region
          %607 = dma.done %s600, 4096
        $region88: #{tpu_custom_call.1} parent=75 // pred_fallthru
          _
        // Predicated region
        $region89: #{tpu_custom_call.1} parent=75 // pred_check
          %p608 = pneg %p133
        $region90: #{tpu_custom_call.1} parent=75 // pred_check_branch
          %610 = sbr.rel (%p608) target = $region92
        $region91: #{tpu_custom_call.1} parent=75 // pred_region
          %611 = dma.done [#allocation10], 8192
        $region92: #{tpu_custom_call.1} parent=75 // pred_fallthru
          _
        // Predicated region
        $region93: #{tpu_custom_call.1} parent=75 // pred_check
          %p612 = pneg %p154
        $region94: #{tpu_custom_call.1} parent=75 // pred_check_branch
          %614 = sbr.rel (%p612) target = $region96
        $region95: #{tpu_custom_call.1} parent=75 // pred_region
          %615 = dma.done [#allocation10], 2048
        $region96: #{tpu_custom_call.1} parent=75 // pred_fallthru
          _
        // Predicated region
        $region97: #{tpu_custom_call.1} parent=75 // pred_check
          %p616 = pneg %p175
        $region98: #{tpu_custom_call.1} parent=75 // pred_check_branch
          %618 = sbr.rel (%p616) target = $region100
        $region99: #{tpu_custom_call.1} parent=75 // pred_region
          %619 = dma.done [#allocation13], 2048
        $region100: #{tpu_custom_call.1} parent=75 // pred_fallthru
          _
        // Predicated region
        $region101: #{tpu_custom_call.1} parent=75 // pred_check
          %p620 = pneg %p196
        $region102: #{tpu_custom_call.1} parent=75 // pred_check_branch
          %622 = sbr.rel (%p620) target = $region104
        $region103: #{tpu_custom_call.1} parent=75 // pred_region
          %623 = dma.done [#allocation13], 4096
        $region104: #{tpu_custom_call.1} parent=75 // pred_fallthru
          _
        // Predicated region
        $region105: #{tpu_custom_call.1} parent=75 // pred_check
          %p624 = pneg %p217
        $region106: #{tpu_custom_call.1} parent=75 // pred_check_branch
          %626 = sbr.rel (%p624) target = $region108
        $region107: #{tpu_custom_call.1} parent=75 // pred_region
          %627 = dma.done [#allocation16], 4096
        $region108: #{tpu_custom_call.1} parent=75 // pred_fallthru
          _
        // Predicated region
        $region109: #{tpu_custom_call.1} parent=75 // pred_check
          %p628 = pneg %p238
        $region110: #{tpu_custom_call.1} parent=75 // pred_check_branch
          %630 = sbr.rel (%p628) target = $region112
        $region111: #{tpu_custom_call.1} parent=75 // pred_region
          %631 = dma.done [#allocation16], 4096
        $region112: #{tpu_custom_call.1} parent=75 // pred_fallthru
          _
        // Predicated region
        $region113: #{tpu_custom_call.1} parent=75 // pred_check
          %p632 = pneg %p259
        $region114: #{tpu_custom_call.1} parent=75 // pred_check_branch
          %634 = sbr.rel (%p632) target = $region116
        $region115: #{tpu_custom_call.1} parent=75 // pred_region
          %635 = dma.done [#allocation19], 2048
        $region116: #{tpu_custom_call.1} parent=75 // pred_fallthru
          _
        // Predicated region
        $region117: #{tpu_custom_call.1} parent=75 // pred_check
          %p636 = pneg %p280
        $region118: #{tpu_custom_call.1} parent=75 // pred_check_branch
          %638 = sbr.rel (%p636) target = $region120
        $region119: #{tpu_custom_call.1} parent=75 // pred_region
          %639 = dma.done [#allocation19], 2048
        $region120: #{tpu_custom_call.1} parent=75 // pred_fallthru
          _
        // Predicated region
        $region121: #{tpu_custom_call.1} parent=75 // pred_check
          %p640 = pneg %p322
        $region122: #{tpu_custom_call.1} parent=75 // pred_check_branch
          %642 = sbr.rel (%p640) target = $region124
        $region123: #{tpu_custom_call.1} parent=75 // pred_region
          %643 = dma.done [#allocation22], 2048
        $region124: #{tpu_custom_call.1} parent=75 // pred_fallthru
          _
        %s644 = sand.u32 %s47, 1
        %s645 = scalar_lea.sflag [#allocation4], %s644
        %s646 = sand.u32 %s47, 1
        %s647 = smul.addr %s646, 256
        %s648 = scalar_lea.vmem [#allocation3], %s647
        %p649 = pneg %p60
        %p650 = pneg %p57
        %s651 = sand.u32 %s39, 1
        %s652 = scalar_lea.sflag [#allocation7], %s651
        %s653 = sand.u32 %s73, 1
        %s654 = smul.addr %s653, 256
        %s655 = scalar_lea.vmem [#allocation6], %s654
        %p656 = pneg %p86
        %p657 = pneg %p83
        %s658 = sand.u32 %s39, 1
        %s659 = scalar_lea.sflag [#allocation7], %s658
        %s660 = sand.u32 %s99, 1
        %s661 = smul.addr %s660, 256
        %s662 = scalar_lea.vmem [#allocation8], %s661
        %p663 = pneg %p112
        %p664 = pneg %p109
        %p665 = pneg %p133
        %p666 = pneg %p130
        %p667 = pneg %p154
        %p668 = pneg %p151
        %p669 = pneg %p175
        %p670 = pneg %p172
        %p671 = pneg %p196
        %p672 = pneg %p193
        %p673 = pneg %p217
        %p674 = pneg %p214
        %p675 = pneg %p238
        %p676 = pneg %p235
        %p677 = pneg %p259
        %p678 = pneg %p256
        %p679 = pneg %p280
        %p680 = pneg %p277
        %p681 = pneg %p301
        %p682 = pneg %p298
        %p683 = pneg %p322
        %p684 = pneg %p319
        %p685 = pneg %p343
        %p686 = pneg %p340
        %p687 = pneg %p369
        %p688 = pneg %p366
        %s689 = sand.u32 %s356, 1
        %s690 = scalar_lea.sflag [#allocation5], %s689
        %s691 = sand.u32 %s356, 1
        %s692 = smul.addr %s691, 256
        %s693 = scalar_lea.vmem [#allocation23], %s692
        %s694 = smul.u32 32, %s39
        %s695 = smul.u32 32, %s39
        %s696 = smul.u32 32, %s39
        %s697 = smul.u32 32, %s39
        %v698 = vld [vmem:[#allocation9] sm:$0xff]
        %v699 = vld [vmem:[#allocation9 + $0x8] sm:$0xff]
        %v700 = vld [vmem:[#allocation9 + $0x10] sm:$0xff]
        %v701 = vld [vmem:[#allocation9 + $0x18] sm:$0xff]
        %v702 = vld [vmem:[#allocation9 + $0x20] sm:$0xff]
        %v703 = vld [vmem:[#allocation9 + $0x28] sm:$0xff]
        %v704 = vld [vmem:[#allocation9 + $0x30] sm:$0xff]
        %v705 = vld [vmem:[#allocation9 + $0x38] sm:$0xff]
        %v706 = vld [vmem:[#allocation9 + $0x40] sm:$0xff]
        %v707 = vld [vmem:[#allocation9 + $0x48] sm:$0xff]
        %v708 = vld [vmem:[#allocation9 + $0x50] sm:$0xff]
        %v709 = vld [vmem:[#allocation9 + $0x58] sm:$0xff]
        %v710 = vld [vmem:[#allocation9 + $0x60] sm:$0xff]
        %v711 = vld [vmem:[#allocation9 + $0x68] sm:$0xff]
        %v712 = vld [vmem:[#allocation9 + $0x70] sm:$0xff]
        %v713 = vld [vmem:[#allocation9 + $0x78] sm:$0xff]
        %v714 = vld [vmem:[#allocation9 + $0x80] sm:$0xff]
        %v715 = vld [vmem:[#allocation9 + $0x88] sm:$0xff]
        %v716 = vld [vmem:[#allocation9 + $0x90] sm:$0xff]
        %v717 = vld [vmem:[#allocation9 + $0x98] sm:$0xff]
        %v718 = vld [vmem:[#allocation9 + $0xa0] sm:$0xff]
        %v719 = vld [vmem:[#allocation9 + $0xa8] sm:$0xff]
        %v720 = vld [vmem:[#allocation9 + $0xb0] sm:$0xff]
        %v721 = vld [vmem:[#allocation9 + $0xb8] sm:$0xff]
        %v722 = vld [vmem:[#allocation9 + $0xc0] sm:$0xff]
        %v723 = vld [vmem:[#allocation9 + $0xc8] sm:$0xff]
        %v724 = vld [vmem:[#allocation9 + $0xd0] sm:$0xff]
        %v725 = vld [vmem:[#allocation9 + $0xd8] sm:$0xff]
        %v726 = vld [vmem:[#allocation9 + $0xe0] sm:$0xff]
        %v727 = vld [vmem:[#allocation9 + $0xe8] sm:$0xff]
        %v728 = vld [vmem:[#allocation9 + $0xf0] sm:$0xff]
        %v729 = vld [vmem:[#allocation9 + $0xf8] sm:$0xff]
        %v730 = vld [vmem:[#allocation9 + $0x100] sm:$0xff]
        %v731 = vld [vmem:[#allocation9 + $0x108] sm:$0xff]
        %v732 = vld [vmem:[#allocation9 + $0x110] sm:$0xff]
        %v733 = vld [vmem:[#allocation9 + $0x118] sm:$0xff]
        %v734 = vld [vmem:[#allocation9 + $0x120] sm:$0xff]
        %v735 = vld [vmem:[#allocation9 + $0x128] sm:$0xff]
        %v736 = vld [vmem:[#allocation9 + $0x130] sm:$0xff]
        %v737 = vld [vmem:[#allocation9 + $0x138] sm:$0xff]
        %v738 = vld [vmem:[#allocation9 + $0x140] sm:$0xff]
        %v739 = vld [vmem:[#allocation9 + $0x148] sm:$0xff]
        %v740 = vld [vmem:[#allocation9 + $0x150] sm:$0xff]
        %v741 = vld [vmem:[#allocation9 + $0x158] sm:$0xff]
        %v742 = vld [vmem:[#allocation9 + $0x160] sm:$0xff]
        %v743 = vld [vmem:[#allocation9 + $0x168] sm:$0xff]
        %v744 = vld [vmem:[#allocation9 + $0x170] sm:$0xff]
        %v745 = vld [vmem:[#allocation9 + $0x178] sm:$0xff]
        %v746 = vld [vmem:[#allocation9 + $0x180] sm:$0xff]
        %v747 = vld [vmem:[#allocation9 + $0x188] sm:$0xff]
        %v748 = vld [vmem:[#allocation9 + $0x190] sm:$0xff]
        %v749 = vld [vmem:[#allocation9 + $0x198] sm:$0xff]
        %v750 = vld [vmem:[#allocation9 + $0x1a0] sm:$0xff]
        %v751 = vld [vmem:[#allocation9 + $0x1a8] sm:$0xff]
        %v752 = vld [vmem:[#allocation9 + $0x1b0] sm:$0xff]
        %v753 = vld [vmem:[#allocation9 + $0x1b8] sm:$0xff]
        %v754 = vld [vmem:[#allocation9 + $0x1c0] sm:$0xff]
        %v755 = vld [vmem:[#allocation9 + $0x1c8] sm:$0xff]
        %v756 = vld [vmem:[#allocation9 + $0x1d0] sm:$0xff]
        %v757 = vld [vmem:[#allocation9 + $0x1d8] sm:$0xff]
        %v758 = vld [vmem:[#allocation9 + $0x1e0] sm:$0xff]
        %v759 = vld [vmem:[#allocation9 + $0x1e8] sm:$0xff]
        %v760 = vld [vmem:[#allocation9 + $0x1f0] sm:$0xff]
        %v761 = vld [vmem:[#allocation9 + $0x1f8] sm:$0xff]
        %v762 = vld [vmem:[%s585] sm:$0xff]
        %v763 = vld [vmem:[%s585 + $0x8] sm:$0xff]
        %v764 = vld [vmem:[%s585 + $0x10] sm:$0xff]
        %v765 = vld [vmem:[%s585 + $0x18] sm:$0xff]
        %v766 = vld [vmem:[%s585 + $0x20] sm:$0xff]
        %v767 = vld [vmem:[%s585 + $0x28] sm:$0xff]
        %v768 = vld [vmem:[%s585 + $0x30] sm:$0xff]
        %v769 = vld [vmem:[%s585 + $0x38] sm:$0xff]
        %v770 = vld [vmem:[%s585 + $0x40] sm:$0xff]
        %v771 = vld [vmem:[%s585 + $0x48] sm:$0xff]
        %v772 = vld [vmem:[%s585 + $0x50] sm:$0xff]
        %v773 = vld [vmem:[%s585 + $0x58] sm:$0xff]
        %v774 = vld [vmem:[%s585 + $0x60] sm:$0xff]
        %v775 = vld [vmem:[%s585 + $0x68] sm:$0xff]
        %v776 = vld [vmem:[%s585 + $0x70] sm:$0xff]
        %v777 = vld [vmem:[%s585 + $0x78] sm:$0xff]
        %v778 = vld [vmem:[%s585 + $0x80] sm:$0xff]
        %v779 = vld [vmem:[%s585 + $0x88] sm:$0xff]
        %v780 = vld [vmem:[%s585 + $0x90] sm:$0xff]
        %v781 = vld [vmem:[%s585 + $0x98] sm:$0xff]
        %v782 = vld [vmem:[%s585 + $0xa0] sm:$0xff]
        %v783 = vld [vmem:[%s585 + $0xa8] sm:$0xff]
        %v784 = vld [vmem:[%s585 + $0xb0] sm:$0xff]
        %v785 = vld [vmem:[%s585 + $0xb8] sm:$0xff]
        %v786 = vld [vmem:[%s585 + $0xc0] sm:$0xff]
        %v787 = vld [vmem:[%s585 + $0xc8] sm:$0xff]
        %v788 = vld [vmem:[%s585 + $0xd0] sm:$0xff]
        %v789 = vld [vmem:[%s585 + $0xd8] sm:$0xff]
        %v790 = vld [vmem:[%s585 + $0xe0] sm:$0xff]
        %v791 = vld [vmem:[%s585 + $0xe8] sm:$0xff]
        %v792 = vld [vmem:[%s585 + $0xf0] sm:$0xff]
        %v793 = vld [vmem:[%s585 + $0xf8] sm:$0xff]
        %v794 = vld [vmem:[#allocation11] sm:$0xff]
        %v795 = vld [vmem:[#allocation11 + $0x8] sm:$0xff]
        %v796 = vld [vmem:[#allocation11 + $0x10] sm:$0xff]
        %v797 = vld [vmem:[#allocation11 + $0x18] sm:$0xff]
        %v798 = vld [vmem:[#allocation11 + $0x20] sm:$0xff]
        %v799 = vld [vmem:[#allocation11 + $0x28] sm:$0xff]
        %v800 = vld [vmem:[#allocation11 + $0x30] sm:$0xff]
        %v801 = vld [vmem:[#allocation11 + $0x38] sm:$0xff]
        %v802 = vld [vmem:[#allocation11 + $0x40] sm:$0xff]
        %v803 = vld [vmem:[#allocation11 + $0x48] sm:$0xff]
        %v804 = vld [vmem:[#allocation11 + $0x50] sm:$0xff]
        %v805 = vld [vmem:[#allocation11 + $0x58] sm:$0xff]
        %v806 = vld [vmem:[#allocation11 + $0x60] sm:$0xff]
        %v807 = vld [vmem:[#allocation11 + $0x68] sm:$0xff]
        %v808 = vld [vmem:[#allocation11 + $0x70] sm:$0xff]
        %v809 = vld [vmem:[#allocation11 + $0x78] sm:$0xff]
        %810 = vmatprep.subr.mxu0 0.0
        %811 = vmatpush1.msra.mxu0 %v809
        %812 = vmatprep.subr.mxu0 0.0
        %813 = vmatpush1.msra.mxu0 %v808
        %814 = vmatprep.subr.mxu0 0.0
        %815 = vmatpush1.msra.mxu0 %v807
        %816 = vmatprep.subr.mxu0 0.0
        %817 = vmatpush1.msra.mxu0 %v806
        %818 = vmatprep.subr.mxu0 0.0
        %819 = vmatpush1.msra.mxu0 %v805
        %820 = vmatprep.subr.mxu0 0.0
        %821 = vmatpush1.msra.mxu0 %v804
        %822 = vmatprep.subr.mxu0 0.0
        %823 = vmatpush1.msra.mxu0 %v803
        %824 = vmatprep.subr.mxu0 0.0
        %825 = vmatpush1.msra.mxu0 %v802
        %826 = vmatprep.subr.mxu0 0.0
        %827 = vmatpush1.msra.mxu0 %v801
        %828 = vmatprep.subr.mxu0 0.0
        %829 = vmatpush1.msra.mxu0 %v800
        %830 = vmatprep.subr.mxu0 0.0
        %831 = vmatpush1.msra.mxu0 %v799
        %832 = vmatprep.subr.mxu0 0.0
        %833 = vmatpush1.msra.mxu0 %v798
        %834 = vmatprep.subr.mxu0 0.0
        %835 = vmatpush1.msra.mxu0 %v797
        %836 = vmatprep.subr.mxu0 0.0
        %837 = vmatpush1.msra.mxu0 %v796
        %838 = vmatprep.subr.mxu0 0.0
        %839 = vmatpush1.msra.mxu0 %v795
        %840 = vmatprep.subr.mxu0 0.0
        %841 = vmatpush1.msra.mxu0 %v794
        %842 = vmatprep.subr.mxu0 0.0
        %843 = vmatpush2.msra.mxu0 0.0
        %844 = vmatprep.subr.mxu0 0.0
        %845 = vmatpush2.msra.mxu0 0.0
        %846 = vmatprep.subr.mxu0 0.0
        %847 = vmatpush2.msra.mxu0 0.0
        %848 = vmatprep.subr.mxu0 0.0
        %849 = vmatpush2.msra.mxu0 0.0
        %850 = vmatprep.subr.mxu0 0.0
        %851 = vmatpush2.msra.mxu0 0.0
        %852 = vmatprep.subr.mxu0 0.0
        %853 = vmatpush2.msra.mxu0 0.0
        %854 = vmatprep.subr.mxu0 0.0
        %855 = vmatpush2.msra.mxu0 0.0
        %856 = vmatprep.subr.mxu0 0.0
        %857 = vmatpush2.msra.mxu0 0.0
        %858 = vmatprep.subr.mxu0 0.0
        %859 = vmatpush2.msra.mxu0 0.0
        %860 = vmatprep.subr.mxu0 0.0
        %861 = vmatpush2.msra.mxu0 0.0
        %862 = vmatprep.subr.mxu0 0.0
        %863 = vmatpush2.msra.mxu0 0.0
        %864 = vmatprep.subr.mxu0 0.0
        %865 = vmatpush2.msra.mxu0 0.0
        %866 = vmatprep.subr.mxu0 0.0
        %867 = vmatpush2.msra.mxu0 0.0
        %868 = vmatprep.subr.mxu0 0.0
        %869 = vmatpush2.msra.mxu0 0.0
        %870 = vmatprep.subr.mxu0 0.0
        %871 = vmatpush2.msra.mxu0 0.0
        %872 = vmatprep.subr.mxu0 0.0
        %873 = vmatpush2.msra.mxu0 0.0
        %874 = vmatprep.mubr.f32.mxu0 0.0
        %875 = vmatmul.mubr.f32.gmra.mxu0 %v762
        %v876 = vpop.f32.mrf.mxu0
        %v877 = vadd.f32 0.0, %v876
        %v878 = vpop.f32.mrf.mxu0
        %879 = vmatprep.mubr.f32.mxu0 0.0
        %880 = vmatmul.mubr.f32.gmra.mxu0 %v763
        %v881 = vpop.f32.mrf.mxu0
        %v882 = vadd.f32 0.0, %v881
        %v883 = vpop.f32.mrf.mxu0
        %884 = vmatprep.mubr.f32.mxu0 0.0
        %885 = vmatmul.mubr.f32.gmra.mxu0 %v764
        %v886 = vpop.f32.mrf.mxu0
        %v887 = vadd.f32 0.0, %v886
        %v888 = vpop.f32.mrf.mxu0
        %889 = vmatprep.mubr.f32.mxu0 0.0
        %890 = vmatmul.mubr.f32.gmra.mxu0 %v765
        %v891 = vpop.f32.mrf.mxu0
        %v892 = vadd.f32 0.0, %v891
        %v893 = vpop.f32.mrf.mxu0
        %894 = vmatprep.mubr.f32.mxu0 0.0
        %895 = vmatmul.mubr.f32.gmra.mxu0 %v766
        %v896 = vpop.f32.mrf.mxu0
        %v897 = vadd.f32 0.0, %v896
        %v898 = vpop.f32.mrf.mxu0
        %899 = vmatprep.mubr.f32.mxu0 0.0
        %900 = vmatmul.mubr.f32.gmra.mxu0 %v767
        %v901 = vpop.f32.mrf.mxu0
        %v902 = vadd.f32 0.0, %v901
        %v903 = vpop.f32.mrf.mxu0
        %904 = vmatprep.mubr.f32.mxu0 0.0
        %905 = vmatmul.mubr.f32.gmra.mxu0 %v768
        %v906 = vpop.f32.mrf.mxu0
        %v907 = vadd.f32 0.0, %v906
        %v908 = vpop.f32.mrf.mxu0
        %909 = vmatprep.mubr.f32.mxu0 0.0
        %910 = vmatmul.mubr.f32.gmra.mxu0 %v769
        %v911 = vpop.f32.mrf.mxu0
        %v912 = vadd.f32 0.0, %v911
        %v913 = vpop.f32.mrf.mxu0
        %914 = vmatprep.mubr.f32.mxu0 0.0
        %915 = vmatmul.mubr.f32.gmra.mxu0 %v770
        %v916 = vpop.f32.mrf.mxu0
        %v917 = vadd.f32 0.0, %v916
        %v918 = vpop.f32.mrf.mxu0
        %919 = vmatprep.mubr.f32.mxu0 0.0
        %920 = vmatmul.mubr.f32.gmra.mxu0 %v771
        %v921 = vpop.f32.mrf.mxu0
        %v922 = vadd.f32 0.0, %v921
        %v923 = vpop.f32.mrf.mxu0
        %924 = vmatprep.mubr.f32.mxu0 0.0
        %925 = vmatmul.mubr.f32.gmra.mxu0 %v772
        %v926 = vpop.f32.mrf.mxu0
        %v927 = vadd.f32 0.0, %v926
        %v928 = vpop.f32.mrf.mxu0
        %929 = vmatprep.mubr.f32.mxu0 0.0
        %930 = vmatmul.mubr.f32.gmra.mxu0 %v773
        %v931 = vpop.f32.mrf.mxu0
        %v932 = vadd.f32 0.0, %v931
        %v933 = vpop.f32.mrf.mxu0
        %934 = vmatprep.mubr.f32.mxu0 0.0
        %935 = vmatmul.mubr.f32.gmra.mxu0 %v774
        %v936 = vpop.f32.mrf.mxu0
        %v937 = vadd.f32 0.0, %v936
        %v938 = vpop.f32.mrf.mxu0
        %939 = vmatprep.mubr.f32.mxu0 0.0
        %940 = vmatmul.mubr.f32.gmra.mxu0 %v775
        %v941 = vpop.f32.mrf.mxu0
        %v942 = vadd.f32 0.0, %v941
        %v943 = vpop.f32.mrf.mxu0
        %944 = vmatprep.mubr.f32.mxu0 0.0
        %945 = vmatmul.mubr.f32.gmra.mxu0 %v776
        %v946 = vpop.f32.mrf.mxu0
        %v947 = vadd.f32 0.0, %v946
        %v948 = vpop.f32.mrf.mxu0
        %949 = vmatprep.mubr.f32.mxu0 0.0
        %950 = vmatmul.mubr.f32.gmra.mxu0 %v777
        %v951 = vpop.f32.mrf.mxu0
        %v952 = vadd.f32 0.0, %v951
        %v953 = vpop.f32.mrf.mxu0
        %954 = vmatprep.mubr.f32.mxu0 0.0
        %955 = vmatmul.mubr.f32.gmra.mxu0 %v778
        %v956 = vpop.f32.mrf.mxu0
        %v957 = vadd.f32 0.0, %v956
        %v958 = vpop.f32.mrf.mxu0
        %959 = vmatprep.mubr.f32.mxu0 0.0
        %960 = vmatmul.mubr.f32.gmra.mxu0 %v779
        %v961 = vpop.f32.mrf.mxu0
        %v962 = vadd.f32 0.0, %v961
        %v963 = vpop.f32.mrf.mxu0
        %964 = vmatprep.mubr.f32.mxu0 0.0
        %965 = vmatmul.mubr.f32.gmra.mxu0 %v780
        %v966 = vpop.f32.mrf.mxu0
        %v967 = vadd.f32 0.0, %v966
        %v968 = vpop.f32.mrf.mxu0
        %969 = vmatprep.mubr.f32.mxu0 0.0
        %970 = vmatmul.mubr.f32.gmra.mxu0 %v781
        %v971 = vpop.f32.mrf.mxu0
        %v972 = vadd.f32 0.0, %v971
        %v973 = vpop.f32.mrf.mxu0
        %974 = vmatprep.mubr.f32.mxu0 0.0
        %975 = vmatmul.mubr.f32.gmra.mxu0 %v782
        %v976 = vpop.f32.mrf.mxu0
        %v977 = vadd.f32 0.0, %v976
        %v978 = vpop.f32.mrf.mxu0
        %979 = vmatprep.mubr.f32.mxu0 0.0
        %980 = vmatmul.mubr.f32.gmra.mxu0 %v783
        %v981 = vpop.f32.mrf.mxu0
        %v982 = vadd.f32 0.0, %v981
        %v983 = vpop.f32.mrf.mxu0
        %984 = vmatprep.mubr.f32.mxu0 0.0
        %985 = vmatmul.mubr.f32.gmra.mxu0 %v784
        %v986 = vpop.f32.mrf.mxu0
        %v987 = vadd.f32 0.0, %v986
        %v988 = vpop.f32.mrf.mxu0
        %989 = vmatprep.mubr.f32.mxu0 0.0
        %990 = vmatmul.mubr.f32.gmra.mxu0 %v785
        %v991 = vpop.f32.mrf.mxu0
        %v992 = vadd.f32 0.0, %v991
        %v993 = vpop.f32.mrf.mxu0
        %994 = vmatprep.mubr.f32.mxu0 0.0
        %995 = vmatmul.mubr.f32.gmra.mxu0 %v786
        %v996 = vpop.f32.mrf.mxu0
        %v997 = vadd.f32 0.0, %v996
        %v998 = vpop.f32.mrf.mxu0
        %999 = vmatprep.mubr.f32.mxu0 0.0
        %1000 = vmatmul.mubr.f32.gmra.mxu0 %v787
        %v1001 = vpop.f32.mrf.mxu0
        %v1002 = vadd.f32 0.0, %v1001
        %v1003 = vpop.f32.mrf.mxu0
        %1004 = vmatprep.mubr.f32.mxu0 0.0
        %1005 = vmatmul.mubr.f32.gmra.mxu0 %v788
        %v1006 = vpop.f32.mrf.mxu0
        %v1007 = vadd.f32 0.0, %v1006
        %v1008 = vpop.f32.mrf.mxu0
        %1009 = vmatprep.mubr.f32.mxu0 0.0
        %1010 = vmatmul.mubr.f32.gmra.mxu0 %v789
        %v1011 = vpop.f32.mrf.mxu0
        %v1012 = vadd.f32 0.0, %v1011
        %v1013 = vpop.f32.mrf.mxu0
        %1014 = vmatprep.mubr.f32.mxu0 0.0
        %1015 = vmatmul.mubr.f32.gmra.mxu0 %v790
        %v1016 = vpop.f32.mrf.mxu0
        %v1017 = vadd.f32 0.0, %v1016
        %v1018 = vpop.f32.mrf.mxu0
        %1019 = vmatprep.mubr.f32.mxu0 0.0
        %1020 = vmatmul.mubr.f32.gmra.mxu0 %v791
        %v1021 = vpop.f32.mrf.mxu0
        %v1022 = vadd.f32 0.0, %v1021
        %v1023 = vpop.f32.mrf.mxu0
        %1024 = vmatprep.mubr.f32.mxu0 0.0
        %1025 = vmatmul.mubr.f32.gmra.mxu0 %v792
        %v1026 = vpop.f32.mrf.mxu0
        %v1027 = vadd.f32 0.0, %v1026
        %v1028 = vpop.f32.mrf.mxu0
        %1029 = vmatprep.mubr.f32.mxu0 0.0
        %1030 = vmatmul.mubr.f32.gmra.mxu0 %v793
        %v1031 = vpop.f32.mrf.mxu0
        %v1032 = vadd.f32 0.0, %v1031
        %v1033 = vpop.f32.mrf.mxu0
        %1034 = vdwg.mxu0
        %v1035 = vld [vmem:[#allocation12] sm:$0xff]
        %v1036 = vld [vmem:[#allocation12 + $0x8] sm:$0xff]
        %v1037 = vld [vmem:[#allocation12 + $0x10] sm:$0xff]
        %v1038 = vld [vmem:[#allocation12 + $0x18] sm:$0xff]
        %v1039 = vld [vmem:[#allocation12 + $0x20] sm:$0xff]
        %v1040 = vld [vmem:[#allocation12 + $0x28] sm:$0xff]
        %v1041 = vld [vmem:[#allocation12 + $0x30] sm:$0xff]
        %v1042 = vld [vmem:[#allocation12 + $0x38] sm:$0xff]
        %v1043 = vld [vmem:[#allocation12 + $0x40] sm:$0xff]
        %v1044 = vld [vmem:[#allocation12 + $0x48] sm:$0xff]
        %v1045 = vld [vmem:[#allocation12 + $0x50] sm:$0xff]
        %v1046 = vld [vmem:[#allocation12 + $0x58] sm:$0xff]
        %v1047 = vld [vmem:[#allocation12 + $0x60] sm:$0xff]
        %v1048 = vld [vmem:[#allocation12 + $0x68] sm:$0xff]
        %v1049 = vld [vmem:[#allocation12 + $0x70] sm:$0xff]
        %v1050 = vld [vmem:[#allocation12 + $0x78] sm:$0xff]
        %1051 = vmatprep.subr.mxu0 0.0
        %1052 = vmatpush1.msra.mxu0 %v1050
        %1053 = vmatprep.subr.mxu0 0.0
        %1054 = vmatpush1.msra.mxu0 %v1049
        %1055 = vmatprep.subr.mxu0 0.0
        %1056 = vmatpush1.msra.mxu0 %v1048
        %1057 = vmatprep.subr.mxu0 0.0
        %1058 = vmatpush1.msra.mxu0 %v1047
        %1059 = vmatprep.subr.mxu0 0.0
        %1060 = vmatpush1.msra.mxu0 %v1046
        %1061 = vmatprep.subr.mxu0 0.0
        %1062 = vmatpush1.msra.mxu0 %v1045
        %1063 = vmatprep.subr.mxu0 0.0
        %1064 = vmatpush1.msra.mxu0 %v1044
        %1065 = vmatprep.subr.mxu0 0.0
        %1066 = vmatpush1.msra.mxu0 %v1043
        %1067 = vmatprep.subr.mxu0 0.0
        %1068 = vmatpush1.msra.mxu0 %v1042
        %1069 = vmatprep.subr.mxu0 0.0
        %1070 = vmatpush1.msra.mxu0 %v1041
        %1071 = vmatprep.subr.mxu0 0.0
        %1072 = vmatpush1.msra.mxu0 %v1040
        %1073 = vmatprep.subr.mxu0 0.0
        %1074 = vmatpush1.msra.mxu0 %v1039
        %1075 = vmatprep.subr.mxu0 0.0
        %1076 = vmatpush1.msra.mxu0 %v1038
        %1077 = vmatprep.subr.mxu0 0.0
        %1078 = vmatpush1.msra.mxu0 %v1037
        %1079 = vmatprep.subr.mxu0 0.0
        %1080 = vmatpush1.msra.mxu0 %v1036
        %1081 = vmatprep.subr.mxu0 0.0
        %1082 = vmatpush1.msra.mxu0 %v1035
        %1083 = vmatprep.subr.mxu0 0.0
        %1084 = vmatpush2.msra.mxu0 0.0
        %1085 = vmatprep.subr.mxu0 0.0
        %1086 = vmatpush2.msra.mxu0 0.0
        %1087 = vmatprep.subr.mxu0 0.0
        %1088 = vmatpush2.msra.mxu0 0.0
        %1089 = vmatprep.subr.mxu0 0.0
        %1090 = vmatpush2.msra.mxu0 0.0
        %1091 = vmatprep.subr.mxu0 0.0
        %1092 = vmatpush2.msra.mxu0 0.0
        %1093 = vmatprep.subr.mxu0 0.0
        %1094 = vmatpush2.msra.mxu0 0.0
        %1095 = vmatprep.subr.mxu0 0.0
        %1096 = vmatpush2.msra.mxu0 0.0
        %1097 = vmatprep.subr.mxu0 0.0
        %1098 = vmatpush2.msra.mxu0 0.0
        %1099 = vmatprep.subr.mxu0 0.0
        %1100 = vmatpush2.msra.mxu0 0.0
        %1101 = vmatprep.subr.mxu0 0.0
        %1102 = vmatpush2.msra.mxu0 0.0
        %1103 = vmatprep.subr.mxu0 0.0
        %1104 = vmatpush2.msra.mxu0 0.0
        %1105 = vmatprep.subr.mxu0 0.0
        %1106 = vmatpush2.msra.mxu0 0.0
        %1107 = vmatprep.subr.mxu0 0.0
        %1108 = vmatpush2.msra.mxu0 0.0
        %1109 = vmatprep.subr.mxu0 0.0
        %1110 = vmatpush2.msra.mxu0 0.0
        %1111 = vmatprep.subr.mxu0 0.0
        %1112 = vmatpush2.msra.mxu0 0.0
        %1113 = vmatprep.subr.mxu0 0.0
        %1114 = vmatpush2.msra.mxu0 0.0
        %1115 = vmatprep.mubr.f32.mxu0 0.0
        %1116 = vmatmul.mubr.f32.gmra.mxu0 %v877
        %v1117 = vpop.f32.mrf.mxu0
        %v1118 = vadd.f32 0.0, %v1117
        %v1119 = vpop.f32.mrf.mxu0
        %1120 = vmatprep.mubr.f32.mxu0 0.0
        %1121 = vmatmul.mubr.f32.gmra.mxu0 %v882
        %v1122 = vpop.f32.mrf.mxu0
        %v1123 = vadd.f32 0.0, %v1122
        %v1124 = vpop.f32.mrf.mxu0
        %1125 = vmatprep.mubr.f32.mxu0 0.0
        %1126 = vmatmul.mubr.f32.gmra.mxu0 %v887
        %v1127 = vpop.f32.mrf.mxu0
        %v1128 = vadd.f32 0.0, %v1127
        %v1129 = vpop.f32.mrf.mxu0
        %1130 = vmatprep.mubr.f32.mxu0 0.0
        %1131 = vmatmul.mubr.f32.gmra.mxu0 %v892
        %v1132 = vpop.f32.mrf.mxu0
        %v1133 = vadd.f32 0.0, %v1132
        %v1134 = vpop.f32.mrf.mxu0
        %1135 = vmatprep.mubr.f32.mxu0 0.0
        %1136 = vmatmul.mubr.f32.gmra.mxu0 %v897
        %v1137 = vpop.f32.mrf.mxu0
        %v1138 = vadd.f32 0.0, %v1137
        %v1139 = vpop.f32.mrf.mxu0
        %1140 = vmatprep.mubr.f32.mxu0 0.0
        %1141 = vmatmul.mubr.f32.gmra.mxu0 %v902
        %v1142 = vpop.f32.mrf.mxu0
        %v1143 = vadd.f32 0.0, %v1142
        %v1144 = vpop.f32.mrf.mxu0
        %1145 = vmatprep.mubr.f32.mxu0 0.0
        %1146 = vmatmul.mubr.f32.gmra.mxu0 %v907
        %v1147 = vpop.f32.mrf.mxu0
        %v1148 = vadd.f32 0.0, %v1147
        %v1149 = vpop.f32.mrf.mxu0
        %1150 = vmatprep.mubr.f32.mxu0 0.0
        %1151 = vmatmul.mubr.f32.gmra.mxu0 %v912
        %v1152 = vpop.f32.mrf.mxu0
        %v1153 = vadd.f32 0.0, %v1152
        %v1154 = vpop.f32.mrf.mxu0
        %1155 = vmatprep.mubr.f32.mxu0 0.0
        %1156 = vmatmul.mubr.f32.gmra.mxu0 %v917
        %v1157 = vpop.f32.mrf.mxu0
        %v1158 = vadd.f32 0.0, %v1157
        %v1159 = vpop.f32.mrf.mxu0
        %1160 = vmatprep.mubr.f32.mxu0 0.0
        %1161 = vmatmul.mubr.f32.gmra.mxu0 %v922
        %v1162 = vpop.f32.mrf.mxu0
        %v1163 = vadd.f32 0.0, %v1162
        %v1164 = vpop.f32.mrf.mxu0
        %1165 = vmatprep.mubr.f32.mxu0 0.0
        %1166 = vmatmul.mubr.f32.gmra.mxu0 %v927
        %v1167 = vpop.f32.mrf.mxu0
        %v1168 = vadd.f32 0.0, %v1167
        %v1169 = vpop.f32.mrf.mxu0
        %1170 = vmatprep.mubr.f32.mxu0 0.0
        %1171 = vmatmul.mubr.f32.gmra.mxu0 %v932
        %v1172 = vpop.f32.mrf.mxu0
        %v1173 = vadd.f32 0.0, %v1172
        %v1174 = vpop.f32.mrf.mxu0
        %1175 = vmatprep.mubr.f32.mxu0 0.0
        %1176 = vmatmul.mubr.f32.gmra.mxu0 %v937
        %v1177 = vpop.f32.mrf.mxu0
        %v1178 = vadd.f32 0.0, %v1177
        %v1179 = vpop.f32.mrf.mxu0
        %1180 = vmatprep.mubr.f32.mxu0 0.0
        %1181 = vmatmul.mubr.f32.gmra.mxu0 %v942
        %v1182 = vpop.f32.mrf.mxu0
        %v1183 = vadd.f32 0.0, %v1182
        %v1184 = vpop.f32.mrf.mxu0
        %1185 = vmatprep.mubr.f32.mxu0 0.0
        %1186 = vmatmul.mubr.f32.gmra.mxu0 %v947
        %v1187 = vpop.f32.mrf.mxu0
        %v1188 = vadd.f32 0.0, %v1187
        %v1189 = vpop.f32.mrf.mxu0
        %1190 = vmatprep.mubr.f32.mxu0 0.0
        %1191 = vmatmul.mubr.f32.gmra.mxu0 %v952
        %v1192 = vpop.f32.mrf.mxu0
        %v1193 = vadd.f32 0.0, %v1192
        %v1194 = vpop.f32.mrf.mxu0
        %1195 = vmatprep.mubr.f32.mxu0 0.0
        %1196 = vmatmul.mubr.f32.gmra.mxu0 %v957
        %v1197 = vpop.f32.mrf.mxu0
        %v1198 = vadd.f32 0.0, %v1197
        %v1199 = vpop.f32.mrf.mxu0
        %1200 = vmatprep.mubr.f32.mxu0 0.0
        %1201 = vmatmul.mubr.f32.gmra.mxu0 %v962
        %v1202 = vpop.f32.mrf.mxu0
        %v1203 = vadd.f32 0.0, %v1202
        %v1204 = vpop.f32.mrf.mxu0
        %1205 = vmatprep.mubr.f32.mxu0 0.0
        %1206 = vmatmul.mubr.f32.gmra.mxu0 %v967
        %v1207 = vpop.f32.mrf.mxu0
        %v1208 = vadd.f32 0.0, %v1207
        %v1209 = vpop.f32.mrf.mxu0
        %1210 = vmatprep.mubr.f32.mxu0 0.0
        %1211 = vmatmul.mubr.f32.gmra.mxu0 %v972
        %v1212 = vpop.f32.mrf.mxu0
        %v1213 = vadd.f32 0.0, %v1212
        %v1214 = vpop.f32.mrf.mxu0
        %1215 = vmatprep.mubr.f32.mxu0 0.0
        %1216 = vmatmul.mubr.f32.gmra.mxu0 %v977
        %v1217 = vpop.f32.mrf.mxu0
        %v1218 = vadd.f32 0.0, %v1217
        %v1219 = vpop.f32.mrf.mxu0
        %1220 = vmatprep.mubr.f32.mxu0 0.0
        %1221 = vmatmul.mubr.f32.gmra.mxu0 %v982
        %v1222 = vpop.f32.mrf.mxu0
        %v1223 = vadd.f32 0.0, %v1222
        %v1224 = vpop.f32.mrf.mxu0
        %1225 = vmatprep.mubr.f32.mxu0 0.0
        %1226 = vmatmul.mubr.f32.gmra.mxu0 %v987
        %v1227 = vpop.f32.mrf.mxu0
        %v1228 = vadd.f32 0.0, %v1227
        %v1229 = vpop.f32.mrf.mxu0
        %1230 = vmatprep.mubr.f32.mxu0 0.0
        %1231 = vmatmul.mubr.f32.gmra.mxu0 %v992
        %v1232 = vpop.f32.mrf.mxu0
        %v1233 = vadd.f32 0.0, %v1232
        %v1234 = vpop.f32.mrf.mxu0
        %1235 = vmatprep.mubr.f32.mxu0 0.0
        %1236 = vmatmul.mubr.f32.gmra.mxu0 %v997
        %v1237 = vpop.f32.mrf.mxu0
        %v1238 = vadd.f32 0.0, %v1237
        %v1239 = vpop.f32.mrf.mxu0
        %1240 = vmatprep.mubr.f32.mxu0 0.0
        %1241 = vmatmul.mubr.f32.gmra.mxu0 %v1002
        %v1242 = vpop.f32.mrf.mxu0
        %v1243 = vadd.f32 0.0, %v1242
        %v1244 = vpop.f32.mrf.mxu0
        %1245 = vmatprep.mubr.f32.mxu0 0.0
        %1246 = vmatmul.mubr.f32.gmra.mxu0 %v1007
        %v1247 = vpop.f32.mrf.mxu0
        %v1248 = vadd.f32 0.0, %v1247
        %v1249 = vpop.f32.mrf.mxu0
        %1250 = vmatprep.mubr.f32.mxu0 0.0
        %1251 = vmatmul.mubr.f32.gmra.mxu0 %v1012
        %v1252 = vpop.f32.mrf.mxu0
        %v1253 = vadd.f32 0.0, %v1252
        %v1254 = vpop.f32.mrf.mxu0
        %1255 = vmatprep.mubr.f32.mxu0 0.0
        %1256 = vmatmul.mubr.f32.gmra.mxu0 %v1017
        %v1257 = vpop.f32.mrf.mxu0
        %v1258 = vadd.f32 0.0, %v1257
        %v1259 = vpop.f32.mrf.mxu0
        %1260 = vmatprep.mubr.f32.mxu0 0.0
        %1261 = vmatmul.mubr.f32.gmra.mxu0 %v1022
        %v1262 = vpop.f32.mrf.mxu0
        %v1263 = vadd.f32 0.0, %v1262
        %v1264 = vpop.f32.mrf.mxu0
        %1265 = vmatprep.mubr.f32.mxu0 0.0
        %1266 = vmatmul.mubr.f32.gmra.mxu0 %v1027
        %v1267 = vpop.f32.mrf.mxu0
        %v1268 = vadd.f32 0.0, %v1267
        %v1269 = vpop.f32.mrf.mxu0
        %1270 = vmatprep.mubr.f32.mxu0 0.0
        %1271 = vmatmul.mubr.f32.gmra.mxu0 %v1032
        %v1272 = vpop.f32.mrf.mxu0
        %v1273 = vadd.f32 0.0, %v1272
        %v1274 = vpop.f32.mrf.mxu0
        %1275 = vdwg.mxu0
        %1308 = vrot.lane.b32.xlu0 %v1118, 127
        %v1309 = vpop.permute.xlu0 %1308
        %1310 = vrot.lane.b32.xlu0 %v1123, 127
        %v1311 = vpop.permute.xlu0 %1310
        %1312 = vrot.lane.b32.xlu0 %v1128, 127
        %v1313 = vpop.permute.xlu0 %1312
        %1314 = vrot.lane.b32.xlu0 %v1133, 127
        %v1315 = vpop.permute.xlu0 %1314
        %1316 = vrot.lane.b32.xlu0 %v1138, 127
        %v1317 = vpop.permute.xlu0 %1316
        %1318 = vrot.lane.b32.xlu0 %v1143, 127
        %v1319 = vpop.permute.xlu0 %1318
        %1320 = vrot.lane.b32.xlu0 %v1148, 127
        %v1321 = vpop.permute.xlu0 %1320
        %1322 = vrot.lane.b32.xlu0 %v1153, 127
        %v1323 = vpop.permute.xlu0 %1322
        %1324 = vrot.lane.b32.xlu0 %v1158, 127
        %v1325 = vpop.permute.xlu0 %1324
        %1326 = vrot.lane.b32.xlu0 %v1163, 127
        %v1327 = vpop.permute.xlu0 %1326
        %1328 = vrot.lane.b32.xlu0 %v1168, 127
        %v1329 = vpop.permute.xlu0 %1328
        %1330 = vrot.lane.b32.xlu0 %v1173, 127
        %v1331 = vpop.permute.xlu0 %1330
        %1332 = vrot.lane.b32.xlu0 %v1178, 127
        %v1333 = vpop.permute.xlu0 %1332
        %1334 = vrot.lane.b32.xlu0 %v1183, 127
        %v1335 = vpop.permute.xlu0 %1334
        %1336 = vrot.lane.b32.xlu0 %v1188, 127
        %v1337 = vpop.permute.xlu0 %1336
        %1338 = vrot.lane.b32.xlu0 %v1193, 127
        %v1339 = vpop.permute.xlu0 %1338
        %1340 = vrot.lane.b32.xlu0 %v1198, 127
        %v1341 = vpop.permute.xlu0 %1340
        %1342 = vrot.lane.b32.xlu0 %v1203, 127
        %v1343 = vpop.permute.xlu0 %1342
        %1344 = vrot.lane.b32.xlu0 %v1208, 127
        %v1345 = vpop.permute.xlu0 %1344
        %1346 = vrot.lane.b32.xlu0 %v1213, 127
        %v1347 = vpop.permute.xlu0 %1346
        %1348 = vrot.lane.b32.xlu0 %v1218, 127
        %v1349 = vpop.permute.xlu0 %1348
        %1350 = vrot.lane.b32.xlu0 %v1223, 127
        %v1351 = vpop.permute.xlu0 %1350
        %1352 = vrot.lane.b32.xlu0 %v1228, 127
        %v1353 = vpop.permute.xlu0 %1352
        %1354 = vrot.lane.b32.xlu0 %v1233, 127
        %v1355 = vpop.permute.xlu0 %1354
        %1356 = vrot.lane.b32.xlu0 %v1238, 127
        %v1357 = vpop.permute.xlu0 %1356
        %1358 = vrot.lane.b32.xlu0 %v1243, 127
        %v1359 = vpop.permute.xlu0 %1358
        %1360 = vrot.lane.b32.xlu0 %v1248, 127
        %v1361 = vpop.permute.xlu0 %1360
        %1362 = vrot.lane.b32.xlu0 %v1253, 127
        %v1363 = vpop.permute.xlu0 %1362
        %1364 = vrot.lane.b32.xlu0 %v1258, 127
        %v1365 = vpop.permute.xlu0 %1364
        %1366 = vrot.lane.b32.xlu0 %v1263, 127
        %v1367 = vpop.permute.xlu0 %1366
        %1368 = vrot.lane.b32.xlu0 %v1268, 127
        %v1369 = vpop.permute.xlu0 %1368
        %1370 = vrot.lane.b32.xlu0 %v1273, 127
        %v1371 = vpop.permute.xlu0 %1370
        %1404 = vxpose.xlu0.b32.start [1/16] %v1309, 128
        %1405 = vxpose.xlu0.b32.cont [2/16] %v1311, 128
        %1406 = vxpose.xlu0.b32.cont [3/16] %v1313, 128
        %1407 = vxpose.xlu0.b32.cont [4/16] %v1315, 128
        %1408 = vxpose.xlu0.b32.cont [5/16] %v1317, 128
        %1409 = vxpose.xlu0.b32.cont [6/16] %v1319, 128
        %1410 = vxpose.xlu0.b32.cont [7/16] %v1321, 128
        %1411 = vxpose.xlu0.b32.cont [8/16] %v1323, 128
        %1412 = vxpose.xlu0.b32.cont [9/16] %v1325, 128
        %1413 = vxpose.xlu0.b32.cont [10/16] %v1327, 128
        %1414 = vxpose.xlu0.b32.cont [11/16] %v1329, 128
        %1415 = vxpose.xlu0.b32.cont [12/16] %v1331, 128
        %1416 = vxpose.xlu0.b32.cont [13/16] %v1333, 128
        %1417 = vxpose.xlu0.b32.cont [14/16] %v1335, 128
        %1418 = vxpose.xlu0.b32.cont [15/16] %v1337, 128
        %1419 = vxpose.xlu0.b32.end [16/16] %v1339, 128
        %v1420 = vpop.trf.xlu0
        %v1421 = vpop.trf.xlu0
        %v1422 = vpop.trf.xlu0
        %v1423 = vpop.trf.xlu0
        %v1424 = vpop.trf.xlu0
        %v1425 = vpop.trf.xlu0
        %v1426 = vpop.trf.xlu0
        %v1427 = vpop.trf.xlu0
        %v1428 = vpop.trf.xlu0
        %v1429 = vpop.trf.xlu0
        %v1430 = vpop.trf.xlu0
        %v1431 = vpop.trf.xlu0
        %v1432 = vpop.trf.xlu0
        %v1433 = vpop.trf.xlu0
        %v1434 = vpop.trf.xlu0
        %v1435 = vpop.trf.xlu0
        %1436 = vxpose.xlu0.b32.start [1/16] %v1341, 128
        %1437 = vxpose.xlu0.b32.cont [2/16] %v1343, 128
        %1438 = vxpose.xlu0.b32.cont [3/16] %v1345, 128
        %1439 = vxpose.xlu0.b32.cont [4/16] %v1347, 128
        %1440 = vxpose.xlu0.b32.cont [5/16] %v1349, 128
        %1441 = vxpose.xlu0.b32.cont [6/16] %v1351, 128
        %1442 = vxpose.xlu0.b32.cont [7/16] %v1353, 128
        %1443 = vxpose.xlu0.b32.cont [8/16] %v1355, 128
        %1444 = vxpose.xlu0.b32.cont [9/16] %v1357, 128
        %1445 = vxpose.xlu0.b32.cont [10/16] %v1359, 128
        %1446 = vxpose.xlu0.b32.cont [11/16] %v1361, 128
        %1447 = vxpose.xlu0.b32.cont [12/16] %v1363, 128
        %1448 = vxpose.xlu0.b32.cont [13/16] %v1365, 128
        %1449 = vxpose.xlu0.b32.cont [14/16] %v1367, 128
        %1450 = vxpose.xlu0.b32.cont [15/16] %v1369, 128
        %1451 = vxpose.xlu0.b32.end [16/16] %v1371, 128
        %v1452 = vpop.trf.xlu0
        %v1453 = vpop.trf.xlu0
        %v1454 = vpop.trf.xlu0
        %v1455 = vpop.trf.xlu0
        %v1456 = vpop.trf.xlu0
        %v1457 = vpop.trf.xlu0
        %v1458 = vpop.trf.xlu0
        %v1459 = vpop.trf.xlu0
        %v1460 = vpop.trf.xlu0
        %v1461 = vpop.trf.xlu0
        %v1462 = vpop.trf.xlu0
        %v1463 = vpop.trf.xlu0
        %v1464 = vpop.trf.xlu0
        %v1465 = vpop.trf.xlu0
        %v1466 = vpop.trf.xlu0
        %v1467 = vpop.trf.xlu0
        %1468 = vset.pattern.permute.xlu0 0
        %1469 = vperm.xlu0 %1468, %v1118
        %v1470 = vpop.permute.xlu0 %1469
        %1472 = vset.pattern.permute.xlu0 0
        %1473 = vperm.xlu0 %1472, %v1123
        %v1474 = vpop.permute.xlu0 %1473
        %1476 = vset.pattern.permute.xlu0 0
        %1477 = vperm.xlu0 %1476, %v1128
        %v1478 = vpop.permute.xlu0 %1477
        %1480 = vset.pattern.permute.xlu0 0
        %1481 = vperm.xlu0 %1480, %v1133
        %v1482 = vpop.permute.xlu0 %1481
        %1484 = vset.pattern.permute.xlu0 0
        %1485 = vperm.xlu0 %1484, %v1138
        %v1486 = vpop.permute.xlu0 %1485
        %1488 = vset.pattern.permute.xlu0 0
        %1489 = vperm.xlu0 %1488, %v1143
        %v1490 = vpop.permute.xlu0 %1489
        %1492 = vset.pattern.permute.xlu0 0
        %1493 = vperm.xlu0 %1492, %v1148
        %v1494 = vpop.permute.xlu0 %1493
        %1496 = vset.pattern.permute.xlu0 0
        %1497 = vperm.xlu0 %1496, %v1153
        %v1498 = vpop.permute.xlu0 %1497
        %1500 = vset.pattern.permute.xlu0 0
        %1501 = vperm.xlu0 %1500, %v1158
        %v1502 = vpop.permute.xlu0 %1501
        %1504 = vset.pattern.permute.xlu0 0
        %1505 = vperm.xlu0 %1504, %v1163
        %v1506 = vpop.permute.xlu0 %1505
        %1508 = vset.pattern.permute.xlu0 0
        %1509 = vperm.xlu0 %1508, %v1168
        %v1510 = vpop.permute.xlu0 %1509
        %1512 = vset.pattern.permute.xlu0 0
        %1513 = vperm.xlu0 %1512, %v1173
        %v1514 = vpop.permute.xlu0 %1513
        %1516 = vset.pattern.permute.xlu0 0
        %1517 = vperm.xlu0 %1516, %v1178
        %v1518 = vpop.permute.xlu0 %1517
        %1520 = vset.pattern.permute.xlu0 0
        %1521 = vperm.xlu0 %1520, %v1183
        %v1522 = vpop.permute.xlu0 %1521
        %1524 = vset.pattern.permute.xlu0 0
        %1525 = vperm.xlu0 %1524, %v1188
        %v1526 = vpop.permute.xlu0 %1525
        %1528 = vset.pattern.permute.xlu0 0
        %1529 = vperm.xlu0 %1528, %v1193
        %v1530 = vpop.permute.xlu0 %1529
        %1532 = vset.pattern.permute.xlu0 0
        %1533 = vperm.xlu0 %1532, %v1198
        %v1534 = vpop.permute.xlu0 %1533
        %1536 = vset.pattern.permute.xlu0 0
        %1537 = vperm.xlu0 %1536, %v1203
        %v1538 = vpop.permute.xlu0 %1537
        %1540 = vset.pattern.permute.xlu0 0
        %1541 = vperm.xlu0 %1540, %v1208
        %v1542 = vpop.permute.xlu0 %1541
        %1544 = vset.pattern.permute.xlu0 0
        %1545 = vperm.xlu0 %1544, %v1213
        %v1546 = vpop.permute.xlu0 %1545
        %1548 = vset.pattern.permute.xlu0 0
        %1549 = vperm.xlu0 %1548, %v1218
        %v1550 = vpop.permute.xlu0 %1549
        %1552 = vset.pattern.permute.xlu0 0
        %1553 = vperm.xlu0 %1552, %v1223
        %v1554 = vpop.permute.xlu0 %1553
        %1556 = vset.pattern.permute.xlu0 0
        %1557 = vperm.xlu0 %1556, %v1228
        %v1558 = vpop.permute.xlu0 %1557
        %1560 = vset.pattern.permute.xlu0 0
        %1561 = vperm.xlu0 %1560, %v1233
        %v1562 = vpop.permute.xlu0 %1561
        %1564 = vset.pattern.permute.xlu0 0
        %1565 = vperm.xlu0 %1564, %v1238
        %v1566 = vpop.permute.xlu0 %1565
        %1568 = vset.pattern.permute.xlu0 0
        %1569 = vperm.xlu0 %1568, %v1243
        %v1570 = vpop.permute.xlu0 %1569
        %1572 = vset.pattern.permute.xlu0 0
        %1573 = vperm.xlu0 %1572, %v1248
        %v1574 = vpop.permute.xlu0 %1573
        %1576 = vset.pattern.permute.xlu0 0
        %1577 = vperm.xlu0 %1576, %v1253
        %v1578 = vpop.permute.xlu0 %1577
        %1580 = vset.pattern.permute.xlu0 0
        %1581 = vperm.xlu0 %1580, %v1258
        %v1582 = vpop.permute.xlu0 %1581
        %1584 = vset.pattern.permute.xlu0 0
        %1585 = vperm.xlu0 %1584, %v1263
        %v1586 = vpop.permute.xlu0 %1585
        %1588 = vset.pattern.permute.xlu0 0
        %1589 = vperm.xlu0 %1588, %v1268
        %v1590 = vpop.permute.xlu0 %1589
        %1592 = vset.pattern.permute.xlu0 0
        %1593 = vperm.xlu0 %1592, %v1273
        %v1594 = vpop.permute.xlu0 %1593
        %v1596 = vlaneseq
        %v1597 = vshrl.u32 %v1596, 7
        %v1598 = vsub.s32 0, %v1597
        %v1599 = vrot.slane %v1420, %v1598
        %v1600 = vlaneseq
        %v1601 = vshrl.u32 %v1600, 7
        %v1602 = vsub.s32 0, %v1601
        %v1603 = vrot.slane %v1452, %v1602
        %v1604 = vadd.f32 %v1470, %v1599
        %v1605 = vadd.f32 %v1470, %v1603
        %v1606 = vadd.f32 %v1474, %v1599
        %v1607 = vadd.f32 %v1474, %v1603
        %v1608 = vadd.f32 %v1478, %v1599
        %v1609 = vadd.f32 %v1478, %v1603
        %v1610 = vadd.f32 %v1482, %v1599
        %v1611 = vadd.f32 %v1482, %v1603
        %v1612 = vadd.f32 %v1486, %v1599
        %v1613 = vadd.f32 %v1486, %v1603
        %v1614 = vadd.f32 %v1490, %v1599
        %v1615 = vadd.f32 %v1490, %v1603
        %v1616 = vadd.f32 %v1494, %v1599
        %v1617 = vadd.f32 %v1494, %v1603
        %v1618 = vadd.f32 %v1498, %v1599
        %v1619 = vadd.f32 %v1498, %v1603
        %v1620 = vadd.f32 %v1502, %v1599
        %v1621 = vadd.f32 %v1502, %v1603
        %v1622 = vadd.f32 %v1506, %v1599
        %v1623 = vadd.f32 %v1506, %v1603
        %v1624 = vadd.f32 %v1510, %v1599
        %v1625 = vadd.f32 %v1510, %v1603
        %v1626 = vadd.f32 %v1514, %v1599
        %v1627 = vadd.f32 %v1514, %v1603
        %v1628 = vadd.f32 %v1518, %v1599
        %v1629 = vadd.f32 %v1518, %v1603
        %v1630 = vadd.f32 %v1522, %v1599
        %v1631 = vadd.f32 %v1522, %v1603
        %v1632 = vadd.f32 %v1526, %v1599
        %v1633 = vadd.f32 %v1526, %v1603
        %v1634 = vadd.f32 %v1530, %v1599
        %v1635 = vadd.f32 %v1530, %v1603
        %v1636 = vadd.f32 %v1534, %v1599
        %v1637 = vadd.f32 %v1534, %v1603
        %v1638 = vadd.f32 %v1538, %v1599
        %v1639 = vadd.f32 %v1538, %v1603
        %v1640 = vadd.f32 %v1542, %v1599
        %v1641 = vadd.f32 %v1542, %v1603
        %v1642 = vadd.f32 %v1546, %v1599
        %v1643 = vadd.f32 %v1546, %v1603
        %v1644 = vadd.f32 %v1550, %v1599
        %v1645 = vadd.f32 %v1550, %v1603
        %v1646 = vadd.f32 %v1554, %v1599
        %v1647 = vadd.f32 %v1554, %v1603
        %v1648 = vadd.f32 %v1558, %v1599
        %v1649 = vadd.f32 %v1558, %v1603
        %v1650 = vadd.f32 %v1562, %v1599
        %v1651 = vadd.f32 %v1562, %v1603
        %v1652 = vadd.f32 %v1566, %v1599
        %v1653 = vadd.f32 %v1566, %v1603
        %v1654 = vadd.f32 %v1570, %v1599
        %v1655 = vadd.f32 %v1570, %v1603
        %v1656 = vadd.f32 %v1574, %v1599
        %v1657 = vadd.f32 %v1574, %v1603
        %v1658 = vadd.f32 %v1578, %v1599
        %v1659 = vadd.f32 %v1578, %v1603
        %v1660 = vadd.f32 %v1582, %v1599
        %v1661 = vadd.f32 %v1582, %v1603
        %v1662 = vadd.f32 %v1586, %v1599
        %v1663 = vadd.f32 %v1586, %v1603
        %v1664 = vadd.f32 %v1590, %v1599
        %v1665 = vadd.f32 %v1590, %v1603
        %v1666 = vadd.f32 %v1594, %v1599
        %v1667 = vadd.f32 %v1594, %v1603
        %v1668 = vmul.f32 %v1604, 0.2
        %v1669 = vmul.f32 %v1605, 0.2
        %v1670 = vmul.f32 %v1606, 0.2
        %v1671 = vmul.f32 %v1607, 0.2
        %v1672 = vmul.f32 %v1608, 0.2
        %v1673 = vmul.f32 %v1609, 0.2
        %v1674 = vmul.f32 %v1610, 0.2
        %v1675 = vmul.f32 %v1611, 0.2
        %v1676 = vmul.f32 %v1612, 0.2
        %v1677 = vmul.f32 %v1613, 0.2
        %v1678 = vmul.f32 %v1614, 0.2
        %v1679 = vmul.f32 %v1615, 0.2
        %v1680 = vmul.f32 %v1616, 0.2
        %v1681 = vmul.f32 %v1617, 0.2
        %v1682 = vmul.f32 %v1618, 0.2
        %v1683 = vmul.f32 %v1619, 0.2
        %v1684 = vmul.f32 %v1620, 0.2
        %v1685 = vmul.f32 %v1621, 0.2
        %v1686 = vmul.f32 %v1622, 0.2
        %v1687 = vmul.f32 %v1623, 0.2
        %v1688 = vmul.f32 %v1624, 0.2
        %v1689 = vmul.f32 %v1625, 0.2
        %v1690 = vmul.f32 %v1626, 0.2
        %v1691 = vmul.f32 %v1627, 0.2
        %v1692 = vmul.f32 %v1628, 0.2
        %v1693 = vmul.f32 %v1629, 0.2
        %v1694 = vmul.f32 %v1630, 0.2
        %v1695 = vmul.f32 %v1631, 0.2
        %v1696 = vmul.f32 %v1632, 0.2
        %v1697 = vmul.f32 %v1633, 0.2
        %v1698 = vmul.f32 %v1634, 0.2
        %v1699 = vmul.f32 %v1635, 0.2
        %v1700 = vmul.f32 %v1636, 0.2
        %v1701 = vmul.f32 %v1637, 0.2
        %v1702 = vmul.f32 %v1638, 0.2
        %v1703 = vmul.f32 %v1639, 0.2
        %v1704 = vmul.f32 %v1640, 0.2
        %v1705 = vmul.f32 %v1641, 0.2
        %v1706 = vmul.f32 %v1642, 0.2
        %v1707 = vmul.f32 %v1643, 0.2
        %v1708 = vmul.f32 %v1644, 0.2
        %v1709 = vmul.f32 %v1645, 0.2
        %v1710 = vmul.f32 %v1646, 0.2
        %v1711 = vmul.f32 %v1647, 0.2
        %v1712 = vmul.f32 %v1648, 0.2
        %v1713 = vmul.f32 %v1649, 0.2
        %v1714 = vmul.f32 %v1650, 0.2
        %v1715 = vmul.f32 %v1651, 0.2
        %v1716 = vmul.f32 %v1652, 0.2
        %v1717 = vmul.f32 %v1653, 0.2
        %v1718 = vmul.f32 %v1654, 0.2
        %v1719 = vmul.f32 %v1655, 0.2
        %v1720 = vmul.f32 %v1656, 0.2
        %v1721 = vmul.f32 %v1657, 0.2
        %v1722 = vmul.f32 %v1658, 0.2
        %v1723 = vmul.f32 %v1659, 0.2
        %v1724 = vmul.f32 %v1660, 0.2
        %v1725 = vmul.f32 %v1661, 0.2
        %v1726 = vmul.f32 %v1662, 0.2
        %v1727 = vmul.f32 %v1663, 0.2
        %v1728 = vmul.f32 %v1664, 0.2
        %v1729 = vmul.f32 %v1665, 0.2
        %v1730 = vmul.f32 %v1666, 0.2
        %v1731 = vmul.f32 %v1667, 0.2
        %v1732 = vmax.f32 %v1604, %v1668
        %v1733 = vmax.f32 %v1605, %v1669
        %v1734 = vmax.f32 %v1606, %v1670
        %v1735 = vmax.f32 %v1607, %v1671
        %v1736 = vmax.f32 %v1608, %v1672
        %v1737 = vmax.f32 %v1609, %v1673
        %v1738 = vmax.f32 %v1610, %v1674
        %v1739 = vmax.f32 %v1611, %v1675
        %v1740 = vmax.f32 %v1612, %v1676
        %v1741 = vmax.f32 %v1613, %v1677
        %v1742 = vmax.f32 %v1614, %v1678
        %v1743 = vmax.f32 %v1615, %v1679
        %v1744 = vmax.f32 %v1616, %v1680
        %v1745 = vmax.f32 %v1617, %v1681
        %v1746 = vmax.f32 %v1618, %v1682
        %v1747 = vmax.f32 %v1619, %v1683
        %v1748 = vmax.f32 %v1620, %v1684
        %v1749 = vmax.f32 %v1621, %v1685
        %v1750 = vmax.f32 %v1622, %v1686
        %v1751 = vmax.f32 %v1623, %v1687
        %v1752 = vmax.f32 %v1624, %v1688
        %v1753 = vmax.f32 %v1625, %v1689
        %v1754 = vmax.f32 %v1626, %v1690
        %v1755 = vmax.f32 %v1627, %v1691
        %v1756 = vmax.f32 %v1628, %v1692
        %v1757 = vmax.f32 %v1629, %v1693
        %v1758 = vmax.f32 %v1630, %v1694
        %v1759 = vmax.f32 %v1631, %v1695
        %v1760 = vmax.f32 %v1632, %v1696
        %v1761 = vmax.f32 %v1633, %v1697
        %v1762 = vmax.f32 %v1634, %v1698
        %v1763 = vmax.f32 %v1635, %v1699
        %v1764 = vmax.f32 %v1636, %v1700
        %v1765 = vmax.f32 %v1637, %v1701
        %v1766 = vmax.f32 %v1638, %v1702
        %v1767 = vmax.f32 %v1639, %v1703
        %v1768 = vmax.f32 %v1640, %v1704
        %v1769 = vmax.f32 %v1641, %v1705
        %v1770 = vmax.f32 %v1642, %v1706
        %v1771 = vmax.f32 %v1643, %v1707
        %v1772 = vmax.f32 %v1644, %v1708
        %v1773 = vmax.f32 %v1645, %v1709
        %v1774 = vmax.f32 %v1646, %v1710
        %v1775 = vmax.f32 %v1647, %v1711
        %v1776 = vmax.f32 %v1648, %v1712
        %v1777 = vmax.f32 %v1649, %v1713
        %v1778 = vmax.f32 %v1650, %v1714
        %v1779 = vmax.f32 %v1651, %v1715
        %v1780 = vmax.f32 %v1652, %v1716
        %v1781 = vmax.f32 %v1653, %v1717
        %v1782 = vmax.f32 %v1654, %v1718
        %v1783 = vmax.f32 %v1655, %v1719
        %v1784 = vmax.f32 %v1656, %v1720
        %v1785 = vmax.f32 %v1657, %v1721
        %v1786 = vmax.f32 %v1658, %v1722
        %v1787 = vmax.f32 %v1659, %v1723
        %v1788 = vmax.f32 %v1660, %v1724
        %v1789 = vmax.f32 %v1661, %v1725
        %v1790 = vmax.f32 %v1662, %v1726
        %v1791 = vmax.f32 %v1663, %v1727
        %v1792 = vmax.f32 %v1664, %v1728
        %v1793 = vmax.f32 %v1665, %v1729
        %v1794 = vmax.f32 %v1666, %v1730
        %v1795 = vmax.f32 %v1667, %v1731
        %v1796 = vadd.f32 %v1732, %v698
        %v1797 = vadd.f32 %v1733, %v699
        %v1798 = vadd.f32 %v1734, %v700
        %v1799 = vadd.f32 %v1735, %v701
        %v1800 = vadd.f32 %v1736, %v702
        %v1801 = vadd.f32 %v1737, %v703
        %v1802 = vadd.f32 %v1738, %v704
        %v1803 = vadd.f32 %v1739, %v705
        %v1804 = vadd.f32 %v1740, %v706
        %v1805 = vadd.f32 %v1741, %v707
        %v1806 = vadd.f32 %v1742, %v708
        %v1807 = vadd.f32 %v1743, %v709
        %v1808 = vadd.f32 %v1744, %v710
        %v1809 = vadd.f32 %v1745, %v711
        %v1810 = vadd.f32 %v1746, %v712
        %v1811 = vadd.f32 %v1747, %v713
        %v1812 = vadd.f32 %v1748, %v714
        %v1813 = vadd.f32 %v1749, %v715
        %v1814 = vadd.f32 %v1750, %v716
        %v1815 = vadd.f32 %v1751, %v717
        %v1816 = vadd.f32 %v1752, %v718
        %v1817 = vadd.f32 %v1753, %v719
        %v1818 = vadd.f32 %v1754, %v720
        %v1819 = vadd.f32 %v1755, %v721
        %v1820 = vadd.f32 %v1756, %v722
        %v1821 = vadd.f32 %v1757, %v723
        %v1822 = vadd.f32 %v1758, %v724
        %v1823 = vadd.f32 %v1759, %v725
        %v1824 = vadd.f32 %v1760, %v726
        %v1825 = vadd.f32 %v1761, %v727
        %v1826 = vadd.f32 %v1762, %v728
        %v1827 = vadd.f32 %v1763, %v729
        %v1828 = vadd.f32 %v1764, %v730
        %v1829 = vadd.f32 %v1765, %v731
        %v1830 = vadd.f32 %v1766, %v732
        %v1831 = vadd.f32 %v1767, %v733
        %v1832 = vadd.f32 %v1768, %v734
        %v1833 = vadd.f32 %v1769, %v735
        %v1834 = vadd.f32 %v1770, %v736
        %v1835 = vadd.f32 %v1771, %v737
        %v1836 = vadd.f32 %v1772, %v738
        %v1837 = vadd.f32 %v1773, %v739
        %v1838 = vadd.f32 %v1774, %v740
        %v1839 = vadd.f32 %v1775, %v741
        %v1840 = vadd.f32 %v1776, %v742
        %v1841 = vadd.f32 %v1777, %v743
        %v1842 = vadd.f32 %v1778, %v744
        %v1843 = vadd.f32 %v1779, %v745
        %v1844 = vadd.f32 %v1780, %v746
        %v1845 = vadd.f32 %v1781, %v747
        %v1846 = vadd.f32 %v1782, %v748
        %v1847 = vadd.f32 %v1783, %v749
        %v1848 = vadd.f32 %v1784, %v750
        %v1849 = vadd.f32 %v1785, %v751
        %v1850 = vadd.f32 %v1786, %v752
        %v1851 = vadd.f32 %v1787, %v753
        %v1852 = vadd.f32 %v1788, %v754
        %v1853 = vadd.f32 %v1789, %v755
        %v1854 = vadd.f32 %v1790, %v756
        %v1855 = vadd.f32 %v1791, %v757
        %v1856 = vadd.f32 %v1792, %v758
        %v1857 = vadd.f32 %v1793, %v759
        %v1858 = vadd.f32 %v1794, %v760
        %v1859 = vadd.f32 %v1795, %v761
        %v1860 = vmax.f32 %v1796, %v1797
        %1861 = vmax.xlane.f32.xlu0 %v1860
        %v1862 = vpop.xlane.xlu0 %1861
        %v1863 = vmax.f32 %v1798, %v1799
        %1864 = vmax.xlane.f32.xlu0 %v1863
        %v1865 = vpop.xlane.xlu0 %1864
        %v1866 = vmax.f32 %v1800, %v1801
        %1867 = vmax.xlane.f32.xlu0 %v1866
        %v1868 = vpop.xlane.xlu0 %1867
        %v1869 = vmax.f32 %v1802, %v1803
        %1870 = vmax.xlane.f32.xlu0 %v1869
        %v1871 = vpop.xlane.xlu0 %1870
        %v1872 = vmax.f32 %v1804, %v1805
        %1873 = vmax.xlane.f32.xlu0 %v1872
        %v1874 = vpop.xlane.xlu0 %1873
        %v1875 = vmax.f32 %v1806, %v1807
        %1876 = vmax.xlane.f32.xlu0 %v1875
        %v1877 = vpop.xlane.xlu0 %1876
        %v1878 = vmax.f32 %v1808, %v1809
        %1879 = vmax.xlane.f32.xlu0 %v1878
        %v1880 = vpop.xlane.xlu0 %1879
        %v1881 = vmax.f32 %v1810, %v1811
        %1882 = vmax.xlane.f32.xlu0 %v1881
        %v1883 = vpop.xlane.xlu0 %1882
        %v1884 = vmax.f32 %v1812, %v1813
        %1885 = vmax.xlane.f32.xlu0 %v1884
        %v1886 = vpop.xlane.xlu0 %1885
        %v1887 = vmax.f32 %v1814, %v1815
        %1888 = vmax.xlane.f32.xlu0 %v1887
        %v1889 = vpop.xlane.xlu0 %1888
        %v1890 = vmax.f32 %v1816, %v1817
        %1891 = vmax.xlane.f32.xlu0 %v1890
        %v1892 = vpop.xlane.xlu0 %1891
        %v1893 = vmax.f32 %v1818, %v1819
        %1894 = vmax.xlane.f32.xlu0 %v1893
        %v1895 = vpop.xlane.xlu0 %1894
        %v1896 = vmax.f32 %v1820, %v1821
        %1897 = vmax.xlane.f32.xlu0 %v1896
        %v1898 = vpop.xlane.xlu0 %1897
        %v1899 = vmax.f32 %v1822, %v1823
        %1900 = vmax.xlane.f32.xlu0 %v1899
        %v1901 = vpop.xlane.xlu0 %1900
        %v1902 = vmax.f32 %v1824, %v1825
        %1903 = vmax.xlane.f32.xlu0 %v1902
        %v1904 = vpop.xlane.xlu0 %1903
        %v1905 = vmax.f32 %v1826, %v1827
        %1906 = vmax.xlane.f32.xlu0 %v1905
        %v1907 = vpop.xlane.xlu0 %1906
        %v1908 = vmax.f32 %v1828, %v1829
        %1909 = vmax.xlane.f32.xlu0 %v1908
        %v1910 = vpop.xlane.xlu0 %1909
        %v1911 = vmax.f32 %v1830, %v1831
        %1912 = vmax.xlane.f32.xlu0 %v1911
        %v1913 = vpop.xlane.xlu0 %1912
        %v1914 = vmax.f32 %v1832, %v1833
        %1915 = vmax.xlane.f32.xlu0 %v1914
        %v1916 = vpop.xlane.xlu0 %1915
        %v1917 = vmax.f32 %v1834, %v1835
        %1918 = vmax.xlane.f32.xlu0 %v1917
        %v1919 = vpop.xlane.xlu0 %1918
        %v1920 = vmax.f32 %v1836, %v1837
        %1921 = vmax.xlane.f32.xlu0 %v1920
        %v1922 = vpop.xlane.xlu0 %1921
        %v1923 = vmax.f32 %v1838, %v1839
        %1924 = vmax.xlane.f32.xlu0 %v1923
        %v1925 = vpop.xlane.xlu0 %1924
        %v1926 = vmax.f32 %v1840, %v1841
        %1927 = vmax.xlane.f32.xlu0 %v1926
        %v1928 = vpop.xlane.xlu0 %1927
        %v1929 = vmax.f32 %v1842, %v1843
        %1930 = vmax.xlane.f32.xlu0 %v1929
        %v1931 = vpop.xlane.xlu0 %1930
        %v1932 = vmax.f32 %v1844, %v1845
        %1933 = vmax.xlane.f32.xlu0 %v1932
        %v1934 = vpop.xlane.xlu0 %1933
        %v1935 = vmax.f32 %v1846, %v1847
        %1936 = vmax.xlane.f32.xlu0 %v1935
        %v1937 = vpop.xlane.xlu0 %1936
        %v1938 = vmax.f32 %v1848, %v1849
        %1939 = vmax.xlane.f32.xlu0 %v1938
        %v1940 = vpop.xlane.xlu0 %1939
        %v1941 = vmax.f32 %v1850, %v1851
        %1942 = vmax.xlane.f32.xlu0 %v1941
        %v1943 = vpop.xlane.xlu0 %1942
        %v1944 = vmax.f32 %v1852, %v1853
        %1945 = vmax.xlane.f32.xlu0 %v1944
        %v1946 = vpop.xlane.xlu0 %1945
        %v1947 = vmax.f32 %v1854, %v1855
        %1948 = vmax.xlane.f32.xlu0 %v1947
        %v1949 = vpop.xlane.xlu0 %1948
        %v1950 = vmax.f32 %v1856, %v1857
        %1951 = vmax.xlane.f32.xlu0 %v1950
        %v1952 = vpop.xlane.xlu0 %1951
        %v1953 = vmax.f32 %v1858, %v1859
        %1954 = vmax.xlane.f32.xlu0 %v1953
        %v1955 = vpop.xlane.xlu0 %1954
        %v1956 = vsub.f32 %v1796, %v1862
        %v1957 = vsub.f32 %v1797, %v1862
        %v1958 = vsub.f32 %v1798, %v1865
        %v1959 = vsub.f32 %v1799, %v1865
        %v1960 = vsub.f32 %v1800, %v1868
        %v1961 = vsub.f32 %v1801, %v1868
        %v1962 = vsub.f32 %v1802, %v1871
        %v1963 = vsub.f32 %v1803, %v1871
        %v1964 = vsub.f32 %v1804, %v1874
        %v1965 = vsub.f32 %v1805, %v1874
        %v1966 = vsub.f32 %v1806, %v1877
        %v1967 = vsub.f32 %v1807, %v1877
        %v1968 = vsub.f32 %v1808, %v1880
        %v1969 = vsub.f32 %v1809, %v1880
        %v1970 = vsub.f32 %v1810, %v1883
        %v1971 = vsub.f32 %v1811, %v1883
        %v1972 = vsub.f32 %v1812, %v1886
        %v1973 = vsub.f32 %v1813, %v1886
        %v1974 = vsub.f32 %v1814, %v1889
        %v1975 = vsub.f32 %v1815, %v1889
        %v1976 = vsub.f32 %v1816, %v1892
        %v1977 = vsub.f32 %v1817, %v1892
        %v1978 = vsub.f32 %v1818, %v1895
        %v1979 = vsub.f32 %v1819, %v1895
        %v1980 = vsub.f32 %v1820, %v1898
        %v1981 = vsub.f32 %v1821, %v1898
        %v1982 = vsub.f32 %v1822, %v1901
        %v1983 = vsub.f32 %v1823, %v1901
        %v1984 = vsub.f32 %v1824, %v1904
        %v1985 = vsub.f32 %v1825, %v1904
        %v1986 = vsub.f32 %v1826, %v1907
        %v1987 = vsub.f32 %v1827, %v1907
        %v1988 = vsub.f32 %v1828, %v1910
        %v1989 = vsub.f32 %v1829, %v1910
        %v1990 = vsub.f32 %v1830, %v1913
        %v1991 = vsub.f32 %v1831, %v1913
        %v1992 = vsub.f32 %v1832, %v1916
        %v1993 = vsub.f32 %v1833, %v1916
        %v1994 = vsub.f32 %v1834, %v1919
        %v1995 = vsub.f32 %v1835, %v1919
        %v1996 = vsub.f32 %v1836, %v1922
        %v1997 = vsub.f32 %v1837, %v1922
        %v1998 = vsub.f32 %v1838, %v1925
        %v1999 = vsub.f32 %v1839, %v1925
        %v2000 = vsub.f32 %v1840, %v1928
        %v2001 = vsub.f32 %v1841, %v1928
        %v2002 = vsub.f32 %v1842, %v1931
        %v2003 = vsub.f32 %v1843, %v1931
        %v2004 = vsub.f32 %v1844, %v1934
        %v2005 = vsub.f32 %v1845, %v1934
        %v2006 = vsub.f32 %v1846, %v1937
        %v2007 = vsub.f32 %v1847, %v1937
        %v2008 = vsub.f32 %v1848, %v1940
        %v2009 = vsub.f32 %v1849, %v1940
        %v2010 = vsub.f32 %v1850, %v1943
        %v2011 = vsub.f32 %v1851, %v1943
        %v2012 = vsub.f32 %v1852, %v1946
        %v2013 = vsub.f32 %v1853, %v1946
        %v2014 = vsub.f32 %v1854, %v1949
        %v2015 = vsub.f32 %v1855, %v1949
        %v2016 = vsub.f32 %v1856, %v1952
        %v2017 = vsub.f32 %v1857, %v1952
        %v2018 = vsub.f32 %v1858, %v1955
        %v2019 = vsub.f32 %v1859, %v1955
        %v2020 = vmul.f32 %v1956, 1.442695
        %v2021 = vpow.pop %v2020
        %v2022 = vmul.f32 %v1957, 1.442695
        %v2023 = vpow.pop %v2022
        %v2024 = vmul.f32 %v1958, 1.442695
        %v2025 = vpow.pop %v2024
        %v2026 = vmul.f32 %v1959, 1.442695
        %v2027 = vpow.pop %v2026
        %v2028 = vmul.f32 %v1960, 1.442695
        %v2029 = vpow.pop %v2028
        %v2030 = vmul.f32 %v1961, 1.442695
        %v2031 = vpow.pop %v2030
        %v2032 = vmul.f32 %v1962, 1.442695
        %v2033 = vpow.pop %v2032
        %v2034 = vmul.f32 %v1963, 1.442695
        %v2035 = vpow.pop %v2034
        %v2036 = vmul.f32 %v1964, 1.442695
        %v2037 = vpow.pop %v2036
        %v2038 = vmul.f32 %v1965, 1.442695
        %v2039 = vpow.pop %v2038
        %v2040 = vmul.f32 %v1966, 1.442695
        %v2041 = vpow.pop %v2040
        %v2042 = vmul.f32 %v1967, 1.442695
        %v2043 = vpow.pop %v2042
        %v2044 = vmul.f32 %v1968, 1.442695
        %v2045 = vpow.pop %v2044
        %v2046 = vmul.f32 %v1969, 1.442695
        %v2047 = vpow.pop %v2046
        %v2048 = vmul.f32 %v1970, 1.442695
        %v2049 = vpow.pop %v2048
        %v2050 = vmul.f32 %v1971, 1.442695
        %v2051 = vpow.pop %v2050
        %v2052 = vmul.f32 %v1972, 1.442695
        %v2053 = vpow.pop %v2052
        %v2054 = vmul.f32 %v1973, 1.442695
        %v2055 = vpow.pop %v2054
        %v2056 = vmul.f32 %v1974, 1.442695
        %v2057 = vpow.pop %v2056
        %v2058 = vmul.f32 %v1975, 1.442695
        %v2059 = vpow.pop %v2058
        %v2060 = vmul.f32 %v1976, 1.442695
        %v2061 = vpow.pop %v2060
        %v2062 = vmul.f32 %v1977, 1.442695
        %v2063 = vpow.pop %v2062
        %v2064 = vmul.f32 %v1978, 1.442695
        %v2065 = vpow.pop %v2064
        %v2066 = vmul.f32 %v1979, 1.442695
        %v2067 = vpow.pop %v2066
        %v2068 = vmul.f32 %v1980, 1.442695
        %v2069 = vpow.pop %v2068
        %v2070 = vmul.f32 %v1981, 1.442695
        %v2071 = vpow.pop %v2070
        %v2072 = vmul.f32 %v1982, 1.442695
        %v2073 = vpow.pop %v2072
        %v2074 = vmul.f32 %v1983, 1.442695
        %v2075 = vpow.pop %v2074
        %v2076 = vmul.f32 %v1984, 1.442695
        %v2077 = vpow.pop %v2076
        %v2078 = vmul.f32 %v1985, 1.442695
        %v2079 = vpow.pop %v2078
        %v2080 = vmul.f32 %v1986, 1.442695
        %v2081 = vpow.pop %v2080
        %v2082 = vmul.f32 %v1987, 1.442695
        %v2083 = vpow.pop %v2082
        %v2084 = vmul.f32 %v1988, 1.442695
        %v2085 = vpow.pop %v2084
        %v2086 = vmul.f32 %v1989, 1.442695
        %v2087 = vpow.pop %v2086
        %v2088 = vmul.f32 %v1990, 1.442695
        %v2089 = vpow.pop %v2088
        %v2090 = vmul.f32 %v1991, 1.442695
        %v2091 = vpow.pop %v2090
        %v2092 = vmul.f32 %v1992, 1.442695
        %v2093 = vpow.pop %v2092
        %v2094 = vmul.f32 %v1993, 1.442695
        %v2095 = vpow.pop %v2094
        %v2096 = vmul.f32 %v1994, 1.442695
        %v2097 = vpow.pop %v2096
        %v2098 = vmul.f32 %v1995, 1.442695
        %v2099 = vpow.pop %v2098
        %v2100 = vmul.f32 %v1996, 1.442695
        %v2101 = vpow.pop %v2100
        %v2102 = vmul.f32 %v1997, 1.442695
        %v2103 = vpow.pop %v2102
        %v2104 = vmul.f32 %v1998, 1.442695
        %v2105 = vpow.pop %v2104
        %v2106 = vmul.f32 %v1999, 1.442695
        %v2107 = vpow.pop %v2106
        %v2108 = vmul.f32 %v2000, 1.442695
        %v2109 = vpow.pop %v2108
        %v2110 = vmul.f32 %v2001, 1.442695
        %v2111 = vpow.pop %v2110
        %v2112 = vmul.f32 %v2002, 1.442695
        %v2113 = vpow.pop %v2112
        %v2114 = vmul.f32 %v2003, 1.442695
        %v2115 = vpow.pop %v2114
        %v2116 = vmul.f32 %v2004, 1.442695
        %v2117 = vpow.pop %v2116
        %v2118 = vmul.f32 %v2005, 1.442695
        %v2119 = vpow.pop %v2118
        %v2120 = vmul.f32 %v2006, 1.442695
        %v2121 = vpow.pop %v2120
        %v2122 = vmul.f32 %v2007, 1.442695
        %v2123 = vpow.pop %v2122
        %v2124 = vmul.f32 %v2008, 1.442695
        %v2125 = vpow.pop %v2124
        %v2126 = vmul.f32 %v2009, 1.442695
        %v2127 = vpow.pop %v2126
        %v2128 = vmul.f32 %v2010, 1.442695
        %v2129 = vpow.pop %v2128
        %v2130 = vmul.f32 %v2011, 1.442695
        %v2131 = vpow.pop %v2130
        %v2132 = vmul.f32 %v2012, 1.442695
        %v2133 = vpow.pop %v2132
        %v2134 = vmul.f32 %v2013, 1.442695
        %v2135 = vpow.pop %v2134
        %v2136 = vmul.f32 %v2014, 1.442695
        %v2137 = vpow.pop %v2136
        %v2138 = vmul.f32 %v2015, 1.442695
        %v2139 = vpow.pop %v2138
        %v2140 = vmul.f32 %v2016, 1.442695
        %v2141 = vpow.pop %v2140
        %v2142 = vmul.f32 %v2017, 1.442695
        %v2143 = vpow.pop %v2142
        %v2144 = vmul.f32 %v2018, 1.442695
        %v2145 = vpow.pop %v2144
        %v2146 = vmul.f32 %v2019, 1.442695
        %v2147 = vpow.pop %v2146
        %v2148 = vadd.f32 %v2021, %v2023
        %2149 = vadd.xlane.f32.xlu0 %v2148
        %v2150 = vpop.xlane.xlu0 %2149
        %v2151 = vadd.f32 %v2025, %v2027
        %2152 = vadd.xlane.f32.xlu0 %v2151
        %v2153 = vpop.xlane.xlu0 %2152
        %v2154 = vadd.f32 %v2029, %v2031
        %2155 = vadd.xlane.f32.xlu0 %v2154
        %v2156 = vpop.xlane.xlu0 %2155
        %v2157 = vadd.f32 %v2033, %v2035
        %2158 = vadd.xlane.f32.xlu0 %v2157
        %v2159 = vpop.xlane.xlu0 %2158
        %v2160 = vadd.f32 %v2037, %v2039
        %2161 = vadd.xlane.f32.xlu0 %v2160
        %v2162 = vpop.xlane.xlu0 %2161
        %v2163 = vadd.f32 %v2041, %v2043
        %2164 = vadd.xlane.f32.xlu0 %v2163
        %v2165 = vpop.xlane.xlu0 %2164
        %v2166 = vadd.f32 %v2045, %v2047
        %2167 = vadd.xlane.f32.xlu0 %v2166
        %v2168 = vpop.xlane.xlu0 %2167
        %v2169 = vadd.f32 %v2049, %v2051
        %2170 = vadd.xlane.f32.xlu0 %v2169
        %v2171 = vpop.xlane.xlu0 %2170
        %v2172 = vadd.f32 %v2053, %v2055
        %2173 = vadd.xlane.f32.xlu0 %v2172
        %v2174 = vpop.xlane.xlu0 %2173
        %v2175 = vadd.f32 %v2057, %v2059
        %2176 = vadd.xlane.f32.xlu0 %v2175
        %v2177 = vpop.xlane.xlu0 %2176
        %v2178 = vadd.f32 %v2061, %v2063
        %2179 = vadd.xlane.f32.xlu0 %v2178
        %v2180 = vpop.xlane.xlu0 %2179
        %v2181 = vadd.f32 %v2065, %v2067
        %2182 = vadd.xlane.f32.xlu0 %v2181
        %v2183 = vpop.xlane.xlu0 %2182
        %v2184 = vadd.f32 %v2069, %v2071
        %2185 = vadd.xlane.f32.xlu0 %v2184
        %v2186 = vpop.xlane.xlu0 %2185
        %v2187 = vadd.f32 %v2073, %v2075
        %2188 = vadd.xlane.f32.xlu0 %v2187
        %v2189 = vpop.xlane.xlu0 %2188
        %v2190 = vadd.f32 %v2077, %v2079
        %2191 = vadd.xlane.f32.xlu0 %v2190
        %v2192 = vpop.xlane.xlu0 %2191
        %v2193 = vadd.f32 %v2081, %v2083
        %2194 = vadd.xlane.f32.xlu0 %v2193
        %v2195 = vpop.xlane.xlu0 %2194
        %v2196 = vadd.f32 %v2085, %v2087
        %2197 = vadd.xlane.f32.xlu0 %v2196
        %v2198 = vpop.xlane.xlu0 %2197
        %v2199 = vadd.f32 %v2089, %v2091
        %2200 = vadd.xlane.f32.xlu0 %v2199
        %v2201 = vpop.xlane.xlu0 %2200
        %v2202 = vadd.f32 %v2093, %v2095
        %2203 = vadd.xlane.f32.xlu0 %v2202
        %v2204 = vpop.xlane.xlu0 %2203
        %v2205 = vadd.f32 %v2097, %v2099
        %2206 = vadd.xlane.f32.xlu0 %v2205
        %v2207 = vpop.xlane.xlu0 %2206
        %v2208 = vadd.f32 %v2101, %v2103
        %2209 = vadd.xlane.f32.xlu0 %v2208
        %v2210 = vpop.xlane.xlu0 %2209
        %v2211 = vadd.f32 %v2105, %v2107
        %2212 = vadd.xlane.f32.xlu0 %v2211
        %v2213 = vpop.xlane.xlu0 %2212
        %v2214 = vadd.f32 %v2109, %v2111
        %2215 = vadd.xlane.f32.xlu0 %v2214
        %v2216 = vpop.xlane.xlu0 %2215
        %v2217 = vadd.f32 %v2113, %v2115
        %2218 = vadd.xlane.f32.xlu0 %v2217
        %v2219 = vpop.xlane.xlu0 %2218
        %v2220 = vadd.f32 %v2117, %v2119
        %2221 = vadd.xlane.f32.xlu0 %v2220
        %v2222 = vpop.xlane.xlu0 %2221
        %v2223 = vadd.f32 %v2121, %v2123
        %2224 = vadd.xlane.f32.xlu0 %v2223
        %v2225 = vpop.xlane.xlu0 %2224
        %v2226 = vadd.f32 %v2125, %v2127
        %2227 = vadd.xlane.f32.xlu0 %v2226
        %v2228 = vpop.xlane.xlu0 %2227
        %v2229 = vadd.f32 %v2129, %v2131
        %2230 = vadd.xlane.f32.xlu0 %v2229
        %v2231 = vpop.xlane.xlu0 %2230
        %v2232 = vadd.f32 %v2133, %v2135
        %2233 = vadd.xlane.f32.xlu0 %v2232
        %v2234 = vpop.xlane.xlu0 %2233
        %v2235 = vadd.f32 %v2137, %v2139
        %2236 = vadd.xlane.f32.xlu0 %v2235
        %v2237 = vpop.xlane.xlu0 %2236
        %v2238 = vadd.f32 %v2141, %v2143
        %2239 = vadd.xlane.f32.xlu0 %v2238
        %v2240 = vpop.xlane.xlu0 %2239
        %v2241 = vadd.f32 %v2145, %v2147
        %2242 = vadd.xlane.f32.xlu0 %v2241
        %v2243 = vpop.xlane.xlu0 %2242
        %v2244 = vrcp.pop %v2150
        %v2245 = vrcp.pop %v2153
        %v2246 = vrcp.pop %v2156
        %v2247 = vrcp.pop %v2159
        %v2248 = vrcp.pop %v2162
        %v2249 = vrcp.pop %v2165
        %v2250 = vrcp.pop %v2168
        %v2251 = vrcp.pop %v2171
        %v2252 = vrcp.pop %v2174
        %v2253 = vrcp.pop %v2177
        %v2254 = vrcp.pop %v2180
        %v2255 = vrcp.pop %v2183
        %v2256 = vrcp.pop %v2186
        %v2257 = vrcp.pop %v2189
        %v2258 = vrcp.pop %v2192
        %v2259 = vrcp.pop %v2195
        %v2260 = vrcp.pop %v2198
        %v2261 = vrcp.pop %v2201
        %v2262 = vrcp.pop %v2204
        %v2263 = vrcp.pop %v2207
        %v2264 = vrcp.pop %v2210
        %v2265 = vrcp.pop %v2213
        %v2266 = vrcp.pop %v2216
        %v2267 = vrcp.pop %v2219
        %v2268 = vrcp.pop %v2222
        %v2269 = vrcp.pop %v2225
        %v2270 = vrcp.pop %v2228
        %v2271 = vrcp.pop %v2231
        %v2272 = vrcp.pop %v2234
        %v2273 = vrcp.pop %v2237
        %v2274 = vrcp.pop %v2240
        %v2275 = vrcp.pop %v2243
        %v2276 = vmul.f32 %v2021, %v2244
        %v2277 = vmul.f32 %v2023, %v2244
        %v2278 = vmul.f32 %v2025, %v2245
        %v2279 = vmul.f32 %v2027, %v2245
        %v2280 = vmul.f32 %v2029, %v2246
        %v2281 = vmul.f32 %v2031, %v2246
        %v2282 = vmul.f32 %v2033, %v2247
        %v2283 = vmul.f32 %v2035, %v2247
        %v2284 = vmul.f32 %v2037, %v2248
        %v2285 = vmul.f32 %v2039, %v2248
        %v2286 = vmul.f32 %v2041, %v2249
        %v2287 = vmul.f32 %v2043, %v2249
        %v2288 = vmul.f32 %v2045, %v2250
        %v2289 = vmul.f32 %v2047, %v2250
        %v2290 = vmul.f32 %v2049, %v2251
        %v2291 = vmul.f32 %v2051, %v2251
        %v2292 = vmul.f32 %v2053, %v2252
        %v2293 = vmul.f32 %v2055, %v2252
        %v2294 = vmul.f32 %v2057, %v2253
        %v2295 = vmul.f32 %v2059, %v2253
        %v2296 = vmul.f32 %v2061, %v2254
        %v2297 = vmul.f32 %v2063, %v2254
        %v2298 = vmul.f32 %v2065, %v2255
        %v2299 = vmul.f32 %v2067, %v2255
        %v2300 = vmul.f32 %v2069, %v2256
        %v2301 = vmul.f32 %v2071, %v2256
        %v2302 = vmul.f32 %v2073, %v2257
        %v2303 = vmul.f32 %v2075, %v2257
        %v2304 = vmul.f32 %v2077, %v2258
        %v2305 = vmul.f32 %v2079, %v2258
        %v2306 = vmul.f32 %v2081, %v2259
        %v2307 = vmul.f32 %v2083, %v2259
        %v2308 = vmul.f32 %v2085, %v2260
        %v2309 = vmul.f32 %v2087, %v2260
        %v2310 = vmul.f32 %v2089, %v2261
        %v2311 = vmul.f32 %v2091, %v2261
        %v2312 = vmul.f32 %v2093, %v2262
        %v2313 = vmul.f32 %v2095, %v2262
        %v2314 = vmul.f32 %v2097, %v2263
        %v2315 = vmul.f32 %v2099, %v2263
        %v2316 = vmul.f32 %v2101, %v2264
        %v2317 = vmul.f32 %v2103, %v2264
        %v2318 = vmul.f32 %v2105, %v2265
        %v2319 = vmul.f32 %v2107, %v2265
        %v2320 = vmul.f32 %v2109, %v2266
        %v2321 = vmul.f32 %v2111, %v2266
        %v2322 = vmul.f32 %v2113, %v2267
        %v2323 = vmul.f32 %v2115, %v2267
        %v2324 = vmul.f32 %v2117, %v2268
        %v2325 = vmul.f32 %v2119, %v2268
        %v2326 = vmul.f32 %v2121, %v2269
        %v2327 = vmul.f32 %v2123, %v2269
        %v2328 = vmul.f32 %v2125, %v2270
        %v2329 = vmul.f32 %v2127, %v2270
        %v2330 = vmul.f32 %v2129, %v2271
        %v2331 = vmul.f32 %v2131, %v2271
        %v2332 = vmul.f32 %v2133, %v2272
        %v2333 = vmul.f32 %v2135, %v2272
        %v2334 = vmul.f32 %v2137, %v2273
        %v2335 = vmul.f32 %v2139, %v2273
        %v2336 = vmul.f32 %v2141, %v2274
        %v2337 = vmul.f32 %v2143, %v2274
        %v2338 = vmul.f32 %v2145, %v2275
        %v2339 = vmul.f32 %v2147, %v2275
        %2340 = vmatprep.subr.mxu0 0.0
        %2341 = vmatpush1.msra.mxu0 %v952
        %2342 = vmatprep.subr.mxu0 0.0
        %2343 = vmatpush1.msra.mxu0 %v947
        %2344 = vmatprep.subr.mxu0 0.0
        %2345 = vmatpush1.msra.mxu0 %v942
        %2346 = vmatprep.subr.mxu0 0.0
        %2347 = vmatpush1.msra.mxu0 %v937
        %2348 = vmatprep.subr.mxu0 0.0
        %2349 = vmatpush1.msra.mxu0 %v932
        %2350 = vmatprep.subr.mxu0 0.0
        %2351 = vmatpush1.msra.mxu0 %v927
        %2352 = vmatprep.subr.mxu0 0.0
        %2353 = vmatpush1.msra.mxu0 %v922
        %2354 = vmatprep.subr.mxu0 0.0
        %2355 = vmatpush1.msra.mxu0 %v917
        %2356 = vmatprep.subr.mxu0 0.0
        %2357 = vmatpush1.msra.mxu0 %v912
        %2358 = vmatprep.subr.mxu0 0.0
        %2359 = vmatpush1.msra.mxu0 %v907
        %2360 = vmatprep.subr.mxu0 0.0
        %2361 = vmatpush1.msra.mxu0 %v902
        %2362 = vmatprep.subr.mxu0 0.0
        %2363 = vmatpush1.msra.mxu0 %v897
        %2364 = vmatprep.subr.mxu0 0.0
        %2365 = vmatpush1.msra.mxu0 %v892
        %2366 = vmatprep.subr.mxu0 0.0
        %2367 = vmatpush1.msra.mxu0 %v887
        %2368 = vmatprep.subr.mxu0 0.0
        %2369 = vmatpush1.msra.mxu0 %v882
        %2370 = vmatprep.subr.mxu0 0.0
        %2371 = vmatpush1.msra.mxu0 %v877
        %2372 = vmatprep.subr.mxu0 0.0
        %2373 = vmatpush2.msra.mxu0 %v1032
        %2374 = vmatprep.subr.mxu0 0.0
        %2375 = vmatpush2.msra.mxu0 %v1027
        %2376 = vmatprep.subr.mxu0 0.0
        %2377 = vmatpush2.msra.mxu0 %v1022
        %2378 = vmatprep.subr.mxu0 0.0
        %2379 = vmatpush2.msra.mxu0 %v1017
        %2380 = vmatprep.subr.mxu0 0.0
        %2381 = vmatpush2.msra.mxu0 %v1012
        %2382 = vmatprep.subr.mxu0 0.0
        %2383 = vmatpush2.msra.mxu0 %v1007
        %2384 = vmatprep.subr.mxu0 0.0
        %2385 = vmatpush2.msra.mxu0 %v1002
        %2386 = vmatprep.subr.mxu0 0.0
        %2387 = vmatpush2.msra.mxu0 %v997
        %2388 = vmatprep.subr.mxu0 0.0
        %2389 = vmatpush2.msra.mxu0 %v992
        %2390 = vmatprep.subr.mxu0 0.0
        %2391 = vmatpush2.msra.mxu0 %v987
        %2392 = vmatprep.subr.mxu0 0.0
        %2393 = vmatpush2.msra.mxu0 %v982
        %2394 = vmatprep.subr.mxu0 0.0
        %2395 = vmatpush2.msra.mxu0 %v977
        %2396 = vmatprep.subr.mxu0 0.0
        %2397 = vmatpush2.msra.mxu0 %v972
        %2398 = vmatprep.subr.mxu0 0.0
        %2399 = vmatpush2.msra.mxu0 %v967
        %2400 = vmatprep.subr.mxu0 0.0
        %2401 = vmatpush2.msra.mxu0 %v962
        %2402 = vmatprep.subr.mxu0 0.0
        %2403 = vmatpush2.msra.mxu0 %v957
        %2404 = vmatprep.mubr.f32.mxu0 %v2277
        %2405 = vmatmul.mubr.f32.gmra.mxu0 %v2276
        %v2406 = vpop.f32.mrf.mxu0
        %v2407 = vadd.f32 0.0, %v2406
        %v2408 = vpop.f32.mrf.mxu0
        %2409 = vmatprep.mubr.f32.mxu0 %v2279
        %2410 = vmatmul.mubr.f32.gmra.mxu0 %v2278
        %v2411 = vpop.f32.mrf.mxu0
        %v2412 = vadd.f32 0.0, %v2411
        %v2413 = vpop.f32.mrf.mxu0
        %2414 = vmatprep.mubr.f32.mxu0 %v2281
        %2415 = vmatmul.mubr.f32.gmra.mxu0 %v2280
        %v2416 = vpop.f32.mrf.mxu0
        %v2417 = vadd.f32 0.0, %v2416
        %v2418 = vpop.f32.mrf.mxu0
        %2419 = vmatprep.mubr.f32.mxu0 %v2283
        %2420 = vmatmul.mubr.f32.gmra.mxu0 %v2282
        %v2421 = vpop.f32.mrf.mxu0
        %v2422 = vadd.f32 0.0, %v2421
        %v2423 = vpop.f32.mrf.mxu0
        %2424 = vmatprep.mubr.f32.mxu0 %v2285
        %2425 = vmatmul.mubr.f32.gmra.mxu0 %v2284
        %v2426 = vpop.f32.mrf.mxu0
        %v2427 = vadd.f32 0.0, %v2426
        %v2428 = vpop.f32.mrf.mxu0
        %2429 = vmatprep.mubr.f32.mxu0 %v2287
        %2430 = vmatmul.mubr.f32.gmra.mxu0 %v2286
        %v2431 = vpop.f32.mrf.mxu0
        %v2432 = vadd.f32 0.0, %v2431
        %v2433 = vpop.f32.mrf.mxu0
        %2434 = vmatprep.mubr.f32.mxu0 %v2289
        %2435 = vmatmul.mubr.f32.gmra.mxu0 %v2288
        %v2436 = vpop.f32.mrf.mxu0
        %v2437 = vadd.f32 0.0, %v2436
        %v2438 = vpop.f32.mrf.mxu0
        %2439 = vmatprep.mubr.f32.mxu0 %v2291
        %2440 = vmatmul.mubr.f32.gmra.mxu0 %v2290
        %v2441 = vpop.f32.mrf.mxu0
        %v2442 = vadd.f32 0.0, %v2441
        %v2443 = vpop.f32.mrf.mxu0
        %2444 = vmatprep.mubr.f32.mxu0 %v2293
        %2445 = vmatmul.mubr.f32.gmra.mxu0 %v2292
        %v2446 = vpop.f32.mrf.mxu0
        %v2447 = vadd.f32 0.0, %v2446
        %v2448 = vpop.f32.mrf.mxu0
        %2449 = vmatprep.mubr.f32.mxu0 %v2295
        %2450 = vmatmul.mubr.f32.gmra.mxu0 %v2294
        %v2451 = vpop.f32.mrf.mxu0
        %v2452 = vadd.f32 0.0, %v2451
        %v2453 = vpop.f32.mrf.mxu0
        %2454 = vmatprep.mubr.f32.mxu0 %v2297
        %2455 = vmatmul.mubr.f32.gmra.mxu0 %v2296
        %v2456 = vpop.f32.mrf.mxu0
        %v2457 = vadd.f32 0.0, %v2456
        %v2458 = vpop.f32.mrf.mxu0
        %2459 = vmatprep.mubr.f32.mxu0 %v2299
        %2460 = vmatmul.mubr.f32.gmra.mxu0 %v2298
        %v2461 = vpop.f32.mrf.mxu0
        %v2462 = vadd.f32 0.0, %v2461
        %v2463 = vpop.f32.mrf.mxu0
        %2464 = vmatprep.mubr.f32.mxu0 %v2301
        %2465 = vmatmul.mubr.f32.gmra.mxu0 %v2300
        %v2466 = vpop.f32.mrf.mxu0
        %v2467 = vadd.f32 0.0, %v2466
        %v2468 = vpop.f32.mrf.mxu0
        %2469 = vmatprep.mubr.f32.mxu0 %v2303
        %2470 = vmatmul.mubr.f32.gmra.mxu0 %v2302
        %v2471 = vpop.f32.mrf.mxu0
        %v2472 = vadd.f32 0.0, %v2471
        %v2473 = vpop.f32.mrf.mxu0
        %2474 = vmatprep.mubr.f32.mxu0 %v2305
        %2475 = vmatmul.mubr.f32.gmra.mxu0 %v2304
        %v2476 = vpop.f32.mrf.mxu0
        %v2477 = vadd.f32 0.0, %v2476
        %v2478 = vpop.f32.mrf.mxu0
        %2479 = vmatprep.mubr.f32.mxu0 %v2307
        %2480 = vmatmul.mubr.f32.gmra.mxu0 %v2306
        %v2481 = vpop.f32.mrf.mxu0
        %v2482 = vadd.f32 0.0, %v2481
        %v2483 = vpop.f32.mrf.mxu0
        %2484 = vmatprep.mubr.f32.mxu0 %v2309
        %2485 = vmatmul.mubr.f32.gmra.mxu0 %v2308
        %v2486 = vpop.f32.mrf.mxu0
        %v2487 = vadd.f32 0.0, %v2486
        %v2488 = vpop.f32.mrf.mxu0
        %2489 = vmatprep.mubr.f32.mxu0 %v2311
        %2490 = vmatmul.mubr.f32.gmra.mxu0 %v2310
        %v2491 = vpop.f32.mrf.mxu0
        %v2492 = vadd.f32 0.0, %v2491
        %v2493 = vpop.f32.mrf.mxu0
        %2494 = vmatprep.mubr.f32.mxu0 %v2313
        %2495 = vmatmul.mubr.f32.gmra.mxu0 %v2312
        %v2496 = vpop.f32.mrf.mxu0
        %v2497 = vadd.f32 0.0, %v2496
        %v2498 = vpop.f32.mrf.mxu0
        %2499 = vmatprep.mubr.f32.mxu0 %v2315
        %2500 = vmatmul.mubr.f32.gmra.mxu0 %v2314
        %v2501 = vpop.f32.mrf.mxu0
        %v2502 = vadd.f32 0.0, %v2501
        %v2503 = vpop.f32.mrf.mxu0
        %2504 = vmatprep.mubr.f32.mxu0 %v2317
        %2505 = vmatmul.mubr.f32.gmra.mxu0 %v2316
        %v2506 = vpop.f32.mrf.mxu0
        %v2507 = vadd.f32 0.0, %v2506
        %v2508 = vpop.f32.mrf.mxu0
        %2509 = vmatprep.mubr.f32.mxu0 %v2319
        %2510 = vmatmul.mubr.f32.gmra.mxu0 %v2318
        %v2511 = vpop.f32.mrf.mxu0
        %v2512 = vadd.f32 0.0, %v2511
        %v2513 = vpop.f32.mrf.mxu0
        %2514 = vmatprep.mubr.f32.mxu0 %v2321
        %2515 = vmatmul.mubr.f32.gmra.mxu0 %v2320
        %v2516 = vpop.f32.mrf.mxu0
        %v2517 = vadd.f32 0.0, %v2516
        %v2518 = vpop.f32.mrf.mxu0
        %2519 = vmatprep.mubr.f32.mxu0 %v2323
        %2520 = vmatmul.mubr.f32.gmra.mxu0 %v2322
        %v2521 = vpop.f32.mrf.mxu0
        %v2522 = vadd.f32 0.0, %v2521
        %v2523 = vpop.f32.mrf.mxu0
        %2524 = vmatprep.mubr.f32.mxu0 %v2325
        %2525 = vmatmul.mubr.f32.gmra.mxu0 %v2324
        %v2526 = vpop.f32.mrf.mxu0
        %v2527 = vadd.f32 0.0, %v2526
        %v2528 = vpop.f32.mrf.mxu0
        %2529 = vmatprep.mubr.f32.mxu0 %v2327
        %2530 = vmatmul.mubr.f32.gmra.mxu0 %v2326
        %v2531 = vpop.f32.mrf.mxu0
        %v2532 = vadd.f32 0.0, %v2531
        %v2533 = vpop.f32.mrf.mxu0
        %2534 = vmatprep.mubr.f32.mxu0 %v2329
        %2535 = vmatmul.mubr.f32.gmra.mxu0 %v2328
        %v2536 = vpop.f32.mrf.mxu0
        %v2537 = vadd.f32 0.0, %v2536
        %v2538 = vpop.f32.mrf.mxu0
        %2539 = vmatprep.mubr.f32.mxu0 %v2331
        %2540 = vmatmul.mubr.f32.gmra.mxu0 %v2330
        %v2541 = vpop.f32.mrf.mxu0
        %v2542 = vadd.f32 0.0, %v2541
        %v2543 = vpop.f32.mrf.mxu0
        %2544 = vmatprep.mubr.f32.mxu0 %v2333
        %2545 = vmatmul.mubr.f32.gmra.mxu0 %v2332
        %v2546 = vpop.f32.mrf.mxu0
        %v2547 = vadd.f32 0.0, %v2546
        %v2548 = vpop.f32.mrf.mxu0
        %2549 = vmatprep.mubr.f32.mxu0 %v2335
        %2550 = vmatmul.mubr.f32.gmra.mxu0 %v2334
        %v2551 = vpop.f32.mrf.mxu0
        %v2552 = vadd.f32 0.0, %v2551
        %v2553 = vpop.f32.mrf.mxu0
        %2554 = vmatprep.mubr.f32.mxu0 %v2337
        %2555 = vmatmul.mubr.f32.gmra.mxu0 %v2336
        %v2556 = vpop.f32.mrf.mxu0
        %v2557 = vadd.f32 0.0, %v2556
        %v2558 = vpop.f32.mrf.mxu0
        %2559 = vmatprep.mubr.f32.mxu0 %v2339
        %2560 = vmatmul.mubr.f32.gmra.mxu0 %v2338
        %v2561 = vpop.f32.mrf.mxu0
        %v2562 = vadd.f32 0.0, %v2561
        %v2563 = vpop.f32.mrf.mxu0
        %2564 = vdwg.mxu0
        %vm2565 = vcmp.gt.f32.partialorder %v2407, 0.0
        %vm2566 = vcmp.gt.f32.partialorder %v2412, 0.0
        %vm2567 = vcmp.gt.f32.partialorder %v2417, 0.0
        %vm2568 = vcmp.gt.f32.partialorder %v2422, 0.0
        %vm2569 = vcmp.gt.f32.partialorder %v2427, 0.0
        %vm2570 = vcmp.gt.f32.partialorder %v2432, 0.0
        %vm2571 = vcmp.gt.f32.partialorder %v2437, 0.0
        %vm2572 = vcmp.gt.f32.partialorder %v2442, 0.0
        %vm2573 = vcmp.gt.f32.partialorder %v2447, 0.0
        %vm2574 = vcmp.gt.f32.partialorder %v2452, 0.0
        %vm2575 = vcmp.gt.f32.partialorder %v2457, 0.0
        %vm2576 = vcmp.gt.f32.partialorder %v2462, 0.0
        %vm2577 = vcmp.gt.f32.partialorder %v2467, 0.0
        %vm2578 = vcmp.gt.f32.partialorder %v2472, 0.0
        %vm2579 = vcmp.gt.f32.partialorder %v2477, 0.0
        %vm2580 = vcmp.gt.f32.partialorder %v2482, 0.0
        %vm2581 = vcmp.gt.f32.partialorder %v2487, 0.0
        %vm2582 = vcmp.gt.f32.partialorder %v2492, 0.0
        %vm2583 = vcmp.gt.f32.partialorder %v2497, 0.0
        %vm2584 = vcmp.gt.f32.partialorder %v2502, 0.0
        %vm2585 = vcmp.gt.f32.partialorder %v2507, 0.0
        %vm2586 = vcmp.gt.f32.partialorder %v2512, 0.0
        %vm2587 = vcmp.gt.f32.partialorder %v2517, 0.0
        %vm2588 = vcmp.gt.f32.partialorder %v2522, 0.0
        %vm2589 = vcmp.gt.f32.partialorder %v2527, 0.0
        %vm2590 = vcmp.gt.f32.partialorder %v2532, 0.0
        %vm2591 = vcmp.gt.f32.partialorder %v2537, 0.0
        %vm2592 = vcmp.gt.f32.partialorder %v2542, 0.0
        %vm2593 = vcmp.gt.f32.partialorder %v2547, 0.0
        %vm2594 = vcmp.gt.f32.partialorder %v2552, 0.0
        %vm2595 = vcmp.gt.f32.partialorder %v2557, 0.0
        %vm2596 = vcmp.gt.f32.partialorder %v2562, 0.0
        %v2597 = vmin.f32 %v2407, 0.0
        %v2598 = vmin.f32 %v2412, 0.0
        %v2599 = vmin.f32 %v2417, 0.0
        %v2600 = vmin.f32 %v2422, 0.0
        %v2601 = vmin.f32 %v2427, 0.0
        %v2602 = vmin.f32 %v2432, 0.0
        %v2603 = vmin.f32 %v2437, 0.0
        %v2604 = vmin.f32 %v2442, 0.0
        %v2605 = vmin.f32 %v2447, 0.0
        %v2606 = vmin.f32 %v2452, 0.0
        %v2607 = vmin.f32 %v2457, 0.0
        %v2608 = vmin.f32 %v2462, 0.0
        %v2609 = vmin.f32 %v2467, 0.0
        %v2610 = vmin.f32 %v2472, 0.0
        %v2611 = vmin.f32 %v2477, 0.0
        %v2612 = vmin.f32 %v2482, 0.0
        %v2613 = vmin.f32 %v2487, 0.0
        %v2614 = vmin.f32 %v2492, 0.0
        %v2615 = vmin.f32 %v2497, 0.0
        %v2616 = vmin.f32 %v2502, 0.0
        %v2617 = vmin.f32 %v2507, 0.0
        %v2618 = vmin.f32 %v2512, 0.0
        %v2619 = vmin.f32 %v2517, 0.0
        %v2620 = vmin.f32 %v2522, 0.0
        %v2621 = vmin.f32 %v2527, 0.0
        %v2622 = vmin.f32 %v2532, 0.0
        %v2623 = vmin.f32 %v2537, 0.0
        %v2624 = vmin.f32 %v2542, 0.0
        %v2625 = vmin.f32 %v2547, 0.0
        %v2626 = vmin.f32 %v2552, 0.0
        %v2627 = vmin.f32 %v2557, 0.0
        %v2628 = vmin.f32 %v2562, 0.0
        %v2629 = vmul.f32 %v2597, 1.442695
        %v2630 = vpow.pop %v2629
        %v2631 = vmul.f32 %v2598, 1.442695
        %v2632 = vpow.pop %v2631
        %v2633 = vmul.f32 %v2599, 1.442695
        %v2634 = vpow.pop %v2633
        %v2635 = vmul.f32 %v2600, 1.442695
        %v2636 = vpow.pop %v2635
        %v2637 = vmul.f32 %v2601, 1.442695
        %v2638 = vpow.pop %v2637
        %v2639 = vmul.f32 %v2602, 1.442695
        %v2640 = vpow.pop %v2639
        %v2641 = vmul.f32 %v2603, 1.442695
        %v2642 = vpow.pop %v2641
        %v2643 = vmul.f32 %v2604, 1.442695
        %v2644 = vpow.pop %v2643
        %v2645 = vmul.f32 %v2605, 1.442695
        %v2646 = vpow.pop %v2645
        %v2647 = vmul.f32 %v2606, 1.442695
        %v2648 = vpow.pop %v2647
        %v2649 = vmul.f32 %v2607, 1.442695
        %v2650 = vpow.pop %v2649
        %v2651 = vmul.f32 %v2608, 1.442695
        %v2652 = vpow.pop %v2651
        %v2653 = vmul.f32 %v2609, 1.442695
        %v2654 = vpow.pop %v2653
        %v2655 = vmul.f32 %v2610, 1.442695
        %v2656 = vpow.pop %v2655
        %v2657 = vmul.f32 %v2611, 1.442695
        %v2658 = vpow.pop %v2657
        %v2659 = vmul.f32 %v2612, 1.442695
        %v2660 = vpow.pop %v2659
        %v2661 = vmul.f32 %v2613, 1.442695
        %v2662 = vpow.pop %v2661
        %v2663 = vmul.f32 %v2614, 1.442695
        %v2664 = vpow.pop %v2663
        %v2665 = vmul.f32 %v2615, 1.442695
        %v2666 = vpow.pop %v2665
        %v2667 = vmul.f32 %v2616, 1.442695
        %v2668 = vpow.pop %v2667
        %v2669 = vmul.f32 %v2617, 1.442695
        %v2670 = vpow.pop %v2669
        %v2671 = vmul.f32 %v2618, 1.442695
        %v2672 = vpow.pop %v2671
        %v2673 = vmul.f32 %v2619, 1.442695
        %v2674 = vpow.pop %v2673
        %v2675 = vmul.f32 %v2620, 1.442695
        %v2676 = vpow.pop %v2675
        %v2677 = vmul.f32 %v2621, 1.442695
        %v2678 = vpow.pop %v2677
        %v2679 = vmul.f32 %v2622, 1.442695
        %v2680 = vpow.pop %v2679
        %v2681 = vmul.f32 %v2623, 1.442695
        %v2682 = vpow.pop %v2681
        %v2683 = vmul.f32 %v2624, 1.442695
        %v2684 = vpow.pop %v2683
        %v2685 = vmul.f32 %v2625, 1.442695
        %v2686 = vpow.pop %v2685
        %v2687 = vmul.f32 %v2626, 1.442695
        %v2688 = vpow.pop %v2687
        %v2689 = vmul.f32 %v2627, 1.442695
        %v2690 = vpow.pop %v2689
        %v2691 = vmul.f32 %v2628, 1.442695
        %v2692 = vpow.pop %v2691
        %v2693 = vsub.f32 %v2630, 1.0
        %v2694 = vsub.f32 %v2632, 1.0
        %v2695 = vsub.f32 %v2634, 1.0
        %v2696 = vsub.f32 %v2636, 1.0
        %v2697 = vsub.f32 %v2638, 1.0
        %v2698 = vsub.f32 %v2640, 1.0
        %v2699 = vsub.f32 %v2642, 1.0
        %v2700 = vsub.f32 %v2644, 1.0
        %v2701 = vsub.f32 %v2646, 1.0
        %v2702 = vsub.f32 %v2648, 1.0
        %v2703 = vsub.f32 %v2650, 1.0
        %v2704 = vsub.f32 %v2652, 1.0
        %v2705 = vsub.f32 %v2654, 1.0
        %v2706 = vsub.f32 %v2656, 1.0
        %v2707 = vsub.f32 %v2658, 1.0
        %v2708 = vsub.f32 %v2660, 1.0
        %v2709 = vsub.f32 %v2662, 1.0
        %v2710 = vsub.f32 %v2664, 1.0
        %v2711 = vsub.f32 %v2666, 1.0
        %v2712 = vsub.f32 %v2668, 1.0
        %v2713 = vsub.f32 %v2670, 1.0
        %v2714 = vsub.f32 %v2672, 1.0
        %v2715 = vsub.f32 %v2674, 1.0
        %v2716 = vsub.f32 %v2676, 1.0
        %v2717 = vsub.f32 %v2678, 1.0
        %v2718 = vsub.f32 %v2680, 1.0
        %v2719 = vsub.f32 %v2682, 1.0
        %v2720 = vsub.f32 %v2684, 1.0
        %v2721 = vsub.f32 %v2686, 1.0
        %v2722 = vsub.f32 %v2688, 1.0
        %v2723 = vsub.f32 %v2690, 1.0
        %v2724 = vsub.f32 %v2692, 1.0
        %v2725 = vsel %vm2565, %v2407, %v2693
        %v2726 = vsel %vm2566, %v2412, %v2694
        %v2727 = vsel %vm2567, %v2417, %v2695
        %v2728 = vsel %vm2568, %v2422, %v2696
        %v2729 = vsel %vm2569, %v2427, %v2697
        %v2730 = vsel %vm2570, %v2432, %v2698
        %v2731 = vsel %vm2571, %v2437, %v2699
        %v2732 = vsel %vm2572, %v2442, %v2700
        %v2733 = vsel %vm2573, %v2447, %v2701
        %v2734 = vsel %vm2574, %v2452, %v2702
        %v2735 = vsel %vm2575, %v2457, %v2703
        %v2736 = vsel %vm2576, %v2462, %v2704
        %v2737 = vsel %vm2577, %v2467, %v2705
        %v2738 = vsel %vm2578, %v2472, %v2706
        %v2739 = vsel %vm2579, %v2477, %v2707
        %v2740 = vsel %vm2580, %v2482, %v2708
        %v2741 = vsel %vm2581, %v2487, %v2709
        %v2742 = vsel %vm2582, %v2492, %v2710
        %v2743 = vsel %vm2583, %v2497, %v2711
        %v2744 = vsel %vm2584, %v2502, %v2712
        %v2745 = vsel %vm2585, %v2507, %v2713
        %v2746 = vsel %vm2586, %v2512, %v2714
        %v2747 = vsel %vm2587, %v2517, %v2715
        %v2748 = vsel %vm2588, %v2522, %v2716
        %v2749 = vsel %vm2589, %v2527, %v2717
        %v2750 = vsel %vm2590, %v2532, %v2718
        %v2751 = vsel %vm2591, %v2537, %v2719
        %v2752 = vsel %vm2592, %v2542, %v2720
        %v2753 = vsel %vm2593, %v2547, %v2721
        %v2754 = vsel %vm2594, %v2552, %v2722
        %v2755 = vsel %vm2595, %v2557, %v2723
        %v2756 = vsel %vm2596, %v2562, %v2724
        %v2757 = vld [vmem:[%s594] sm:$0xff]
        %v2758 = vld [vmem:[%s594 + $0x8] sm:$0xff]
        %v2759 = vld [vmem:[%s594 + $0x10] sm:$0xff]
        %v2760 = vld [vmem:[%s594 + $0x18] sm:$0xff]
        %v2761 = vld [vmem:[%s594 + $0x20] sm:$0xff]
        %v2762 = vld [vmem:[%s594 + $0x28] sm:$0xff]
        %v2763 = vld [vmem:[%s594 + $0x30] sm:$0xff]
        %v2764 = vld [vmem:[%s594 + $0x38] sm:$0xff]
        %v2765 = vld [vmem:[%s594 + $0x40] sm:$0xff]
        %v2766 = vld [vmem:[%s594 + $0x48] sm:$0xff]
        %v2767 = vld [vmem:[%s594 + $0x50] sm:$0xff]
        %v2768 = vld [vmem:[%s594 + $0x58] sm:$0xff]
        %v2769 = vld [vmem:[%s594 + $0x60] sm:$0xff]
        %v2770 = vld [vmem:[%s594 + $0x68] sm:$0xff]
        %v2771 = vld [vmem:[%s594 + $0x70] sm:$0xff]
        %v2772 = vld [vmem:[%s594 + $0x78] sm:$0xff]
        %v2773 = vld [vmem:[%s594 + $0x80] sm:$0xff]
        %v2774 = vld [vmem:[%s594 + $0x88] sm:$0xff]
        %v2775 = vld [vmem:[%s594 + $0x90] sm:$0xff]
        %v2776 = vld [vmem:[%s594 + $0x98] sm:$0xff]
        %v2777 = vld [vmem:[%s594 + $0xa0] sm:$0xff]
        %v2778 = vld [vmem:[%s594 + $0xa8] sm:$0xff]
        %v2779 = vld [vmem:[%s594 + $0xb0] sm:$0xff]
        %v2780 = vld [vmem:[%s594 + $0xb8] sm:$0xff]
        %v2781 = vld [vmem:[%s594 + $0xc0] sm:$0xff]
        %v2782 = vld [vmem:[%s594 + $0xc8] sm:$0xff]
        %v2783 = vld [vmem:[%s594 + $0xd0] sm:$0xff]
        %v2784 = vld [vmem:[%s594 + $0xd8] sm:$0xff]
        %v2785 = vld [vmem:[%s594 + $0xe0] sm:$0xff]
        %v2786 = vld [vmem:[%s594 + $0xe8] sm:$0xff]
        %v2787 = vld [vmem:[%s594 + $0xf0] sm:$0xff]
        %v2788 = vld [vmem:[%s594 + $0xf8] sm:$0xff]
        %v2789 = vld [vmem:[#allocation14] sm:$0xff]
        %v2790 = vld [vmem:[#allocation14 + $0x8] sm:$0xff]
        %v2791 = vld [vmem:[#allocation14 + $0x10] sm:$0xff]
        %v2792 = vld [vmem:[#allocation14 + $0x18] sm:$0xff]
        %v2793 = vld [vmem:[#allocation14 + $0x20] sm:$0xff]
        %v2794 = vld [vmem:[#allocation14 + $0x28] sm:$0xff]
        %v2795 = vld [vmem:[#allocation14 + $0x30] sm:$0xff]
        %v2796 = vld [vmem:[#allocation14 + $0x38] sm:$0xff]
        %v2797 = vld [vmem:[#allocation14 + $0x40] sm:$0xff]
        %v2798 = vld [vmem:[#allocation14 + $0x48] sm:$0xff]
        %v2799 = vld [vmem:[#allocation14 + $0x50] sm:$0xff]
        %v2800 = vld [vmem:[#allocation14 + $0x58] sm:$0xff]
        %v2801 = vld [vmem:[#allocation14 + $0x60] sm:$0xff]
        %v2802 = vld [vmem:[#allocation14 + $0x68] sm:$0xff]
        %v2803 = vld [vmem:[#allocation14 + $0x70] sm:$0xff]
        %v2804 = vld [vmem:[#allocation14 + $0x78] sm:$0xff]
        %v2805 = vld [vmem:[#allocation14 + $0x80] sm:$0xff]
        %v2806 = vld [vmem:[#allocation14 + $0x88] sm:$0xff]
        %v2807 = vld [vmem:[#allocation14 + $0x90] sm:$0xff]
        %v2808 = vld [vmem:[#allocation14 + $0x98] sm:$0xff]
        %v2809 = vld [vmem:[#allocation14 + $0xa0] sm:$0xff]
        %v2810 = vld [vmem:[#allocation14 + $0xa8] sm:$0xff]
        %v2811 = vld [vmem:[#allocation14 + $0xb0] sm:$0xff]
        %v2812 = vld [vmem:[#allocation14 + $0xb8] sm:$0xff]
        %v2813 = vld [vmem:[#allocation14 + $0xc0] sm:$0xff]
        %v2814 = vld [vmem:[#allocation14 + $0xc8] sm:$0xff]
        %v2815 = vld [vmem:[#allocation14 + $0xd0] sm:$0xff]
        %v2816 = vld [vmem:[#allocation14 + $0xd8] sm:$0xff]
        %v2817 = vld [vmem:[#allocation14 + $0xe0] sm:$0xff]
        %v2818 = vld [vmem:[#allocation14 + $0xe8] sm:$0xff]
        %v2819 = vld [vmem:[#allocation14 + $0xf0] sm:$0xff]
        %v2820 = vld [vmem:[#allocation14 + $0xf8] sm:$0xff]
        %v2821 = vld [vmem:[#allocation15] sm:$0xff]
        %v2822 = vld [vmem:[#allocation15 + $0x8] sm:$0xff]
        %v2823 = vld [vmem:[#allocation15 + $0x10] sm:$0xff]
        %v2824 = vld [vmem:[#allocation15 + $0x18] sm:$0xff]
        %v2825 = vld [vmem:[#allocation15 + $0x20] sm:$0xff]
        %v2826 = vld [vmem:[#allocation15 + $0x28] sm:$0xff]
        %v2827 = vld [vmem:[#allocation15 + $0x30] sm:$0xff]
        %v2828 = vld [vmem:[#allocation15 + $0x38] sm:$0xff]
        %v2829 = vld [vmem:[#allocation15 + $0x40] sm:$0xff]
        %v2830 = vld [vmem:[#allocation15 + $0x48] sm:$0xff]
        %v2831 = vld [vmem:[#allocation15 + $0x50] sm:$0xff]
        %v2832 = vld [vmem:[#allocation15 + $0x58] sm:$0xff]
        %v2833 = vld [vmem:[#allocation15 + $0x60] sm:$0xff]
        %v2834 = vld [vmem:[#allocation15 + $0x68] sm:$0xff]
        %v2835 = vld [vmem:[#allocation15 + $0x70] sm:$0xff]
        %v2836 = vld [vmem:[#allocation15 + $0x78] sm:$0xff]
        %v2837 = vld [vmem:[#allocation15 + $0x80] sm:$0xff]
        %v2838 = vld [vmem:[#allocation15 + $0x88] sm:$0xff]
        %v2839 = vld [vmem:[#allocation15 + $0x90] sm:$0xff]
        %v2840 = vld [vmem:[#allocation15 + $0x98] sm:$0xff]
        %v2841 = vld [vmem:[#allocation15 + $0xa0] sm:$0xff]
        %v2842 = vld [vmem:[#allocation15 + $0xa8] sm:$0xff]
        %v2843 = vld [vmem:[#allocation15 + $0xb0] sm:$0xff]
        %v2844 = vld [vmem:[#allocation15 + $0xb8] sm:$0xff]
        %v2845 = vld [vmem:[#allocation15 + $0xc0] sm:$0xff]
        %v2846 = vld [vmem:[#allocation15 + $0xc8] sm:$0xff]
        %v2847 = vld [vmem:[#allocation15 + $0xd0] sm:$0xff]
        %v2848 = vld [vmem:[#allocation15 + $0xd8] sm:$0xff]
        %v2849 = vld [vmem:[#allocation15 + $0xe0] sm:$0xff]
        %v2850 = vld [vmem:[#allocation15 + $0xe8] sm:$0xff]
        %v2851 = vld [vmem:[#allocation15 + $0xf0] sm:$0xff]
        %v2852 = vld [vmem:[#allocation15 + $0xf8] sm:$0xff]
        %2853 = vmatprep.subr.mxu0 %v2852
        %2854 = vmatpush1.msra.mxu0 %v2851
        %2855 = vmatprep.subr.mxu0 %v2850
        %2856 = vmatpush1.msra.mxu0 %v2849
        %2857 = vmatprep.subr.mxu0 %v2848
        %2858 = vmatpush1.msra.mxu0 %v2847
        %2859 = vmatprep.subr.mxu0 %v2846
        %2860 = vmatpush1.msra.mxu0 %v2845
        %2861 = vmatprep.subr.mxu0 %v2844
        %2862 = vmatpush1.msra.mxu0 %v2843
        %2863 = vmatprep.subr.mxu0 %v2842
        %2864 = vmatpush1.msra.mxu0 %v2841
        %2865 = vmatprep.subr.mxu0 %v2840
        %2866 = vmatpush1.msra.mxu0 %v2839
        %2867 = vmatprep.subr.mxu0 %v2838
        %2868 = vmatpush1.msra.mxu0 %v2837
        %2869 = vmatprep.subr.mxu0 %v2836
        %2870 = vmatpush1.msra.mxu0 %v2835
        %2871 = vmatprep.subr.mxu0 %v2834
        %2872 = vmatpush1.msra.mxu0 %v2833
        %2873 = vmatprep.subr.mxu0 %v2832
        %2874 = vmatpush1.msra.mxu0 %v2831
        %2875 = vmatprep.subr.mxu0 %v2830
        %2876 = vmatpush1.msra.mxu0 %v2829
        %2877 = vmatprep.subr.mxu0 %v2828
        %2878 = vmatpush1.msra.mxu0 %v2827
        %2879 = vmatprep.subr.mxu0 %v2826
        %2880 = vmatpush1.msra.mxu0 %v2825
        %2881 = vmatprep.subr.mxu0 %v2824
        %2882 = vmatpush1.msra.mxu0 %v2823
        %2883 = vmatprep.subr.mxu0 %v2822
        %2884 = vmatpush1.msra.mxu0 %v2821
        %2885 = vmatprep.subr.mxu0 0.0
        %2886 = vmatpush2.msra.mxu0 0.0
        %2887 = vmatprep.subr.mxu0 0.0
        %2888 = vmatpush2.msra.mxu0 0.0
        %2889 = vmatprep.subr.mxu0 0.0
        %2890 = vmatpush2.msra.mxu0 0.0
        %2891 = vmatprep.subr.mxu0 0.0
        %2892 = vmatpush2.msra.mxu0 0.0
        %2893 = vmatprep.subr.mxu0 0.0
        %2894 = vmatpush2.msra.mxu0 0.0
        %2895 = vmatprep.subr.mxu0 0.0
        %2896 = vmatpush2.msra.mxu0 0.0
        %2897 = vmatprep.subr.mxu0 0.0
        %2898 = vmatpush2.msra.mxu0 0.0
        %2899 = vmatprep.subr.mxu0 0.0
        %2900 = vmatpush2.msra.mxu0 0.0
        %2901 = vmatprep.subr.mxu0 0.0
        %2902 = vmatpush2.msra.mxu0 0.0
        %2903 = vmatprep.subr.mxu0 0.0
        %2904 = vmatpush2.msra.mxu0 0.0
        %2905 = vmatprep.subr.mxu0 0.0
        %2906 = vmatpush2.msra.mxu0 0.0
        %2907 = vmatprep.subr.mxu0 0.0
        %2908 = vmatpush2.msra.mxu0 0.0
        %2909 = vmatprep.subr.mxu0 0.0
        %2910 = vmatpush2.msra.mxu0 0.0
        %2911 = vmatprep.subr.mxu0 0.0
        %2912 = vmatpush2.msra.mxu0 0.0
        %2913 = vmatprep.subr.mxu0 0.0
        %2914 = vmatpush2.msra.mxu0 0.0
        %2915 = vmatprep.subr.mxu0 0.0
        %2916 = vmatpush2.msra.mxu0 0.0
        %2917 = vmatprep.mubr.f32.mxu0 0.0
        %2918 = vmatmul.mubr.f32.gmra.mxu0 %v2757
        %v2919 = vpop.f32.mrf.mxu0
        %v2920 = vadd.f32 0.0, %v2919
        %v2921 = vpop.f32.mrf.mxu0
        %v2922 = vadd.f32 0.0, %v2921
        %2923 = vmatprep.mubr.f32.mxu0 0.0
        %2924 = vmatmul.mubr.f32.gmra.mxu0 %v2758
        %v2925 = vpop.f32.mrf.mxu0
        %v2926 = vadd.f32 0.0, %v2925
        %v2927 = vpop.f32.mrf.mxu0
        %v2928 = vadd.f32 0.0, %v2927
        %2929 = vmatprep.mubr.f32.mxu0 0.0
        %2930 = vmatmul.mubr.f32.gmra.mxu0 %v2759
        %v2931 = vpop.f32.mrf.mxu0
        %v2932 = vadd.f32 0.0, %v2931
        %v2933 = vpop.f32.mrf.mxu0
        %v2934 = vadd.f32 0.0, %v2933
        %2935 = vmatprep.mubr.f32.mxu0 0.0
        %2936 = vmatmul.mubr.f32.gmra.mxu0 %v2760
        %v2937 = vpop.f32.mrf.mxu0
        %v2938 = vadd.f32 0.0, %v2937
        %v2939 = vpop.f32.mrf.mxu0
        %v2940 = vadd.f32 0.0, %v2939
        %2941 = vmatprep.mubr.f32.mxu0 0.0
        %2942 = vmatmul.mubr.f32.gmra.mxu0 %v2761
        %v2943 = vpop.f32.mrf.mxu0
        %v2944 = vadd.f32 0.0, %v2943
        %v2945 = vpop.f32.mrf.mxu0
        %v2946 = vadd.f32 0.0, %v2945
        %2947 = vmatprep.mubr.f32.mxu0 0.0
        %2948 = vmatmul.mubr.f32.gmra.mxu0 %v2762
        %v2949 = vpop.f32.mrf.mxu0
        %v2950 = vadd.f32 0.0, %v2949
        %v2951 = vpop.f32.mrf.mxu0
        %v2952 = vadd.f32 0.0, %v2951
        %2953 = vmatprep.mubr.f32.mxu0 0.0
        %2954 = vmatmul.mubr.f32.gmra.mxu0 %v2763
        %v2955 = vpop.f32.mrf.mxu0
        %v2956 = vadd.f32 0.0, %v2955
        %v2957 = vpop.f32.mrf.mxu0
        %v2958 = vadd.f32 0.0, %v2957
        %2959 = vmatprep.mubr.f32.mxu0 0.0
        %2960 = vmatmul.mubr.f32.gmra.mxu0 %v2764
        %v2961 = vpop.f32.mrf.mxu0
        %v2962 = vadd.f32 0.0, %v2961
        %v2963 = vpop.f32.mrf.mxu0
        %v2964 = vadd.f32 0.0, %v2963
        %2965 = vmatprep.mubr.f32.mxu0 0.0
        %2966 = vmatmul.mubr.f32.gmra.mxu0 %v2765
        %v2967 = vpop.f32.mrf.mxu0
        %v2968 = vadd.f32 0.0, %v2967
        %v2969 = vpop.f32.mrf.mxu0
        %v2970 = vadd.f32 0.0, %v2969
        %2971 = vmatprep.mubr.f32.mxu0 0.0
        %2972 = vmatmul.mubr.f32.gmra.mxu0 %v2766
        %v2973 = vpop.f32.mrf.mxu0
        %v2974 = vadd.f32 0.0, %v2973
        %v2975 = vpop.f32.mrf.mxu0
        %v2976 = vadd.f32 0.0, %v2975
        %2977 = vmatprep.mubr.f32.mxu0 0.0
        %2978 = vmatmul.mubr.f32.gmra.mxu0 %v2767
        %v2979 = vpop.f32.mrf.mxu0
        %v2980 = vadd.f32 0.0, %v2979
        %v2981 = vpop.f32.mrf.mxu0
        %v2982 = vadd.f32 0.0, %v2981
        %2983 = vmatprep.mubr.f32.mxu0 0.0
        %2984 = vmatmul.mubr.f32.gmra.mxu0 %v2768
        %v2985 = vpop.f32.mrf.mxu0
        %v2986 = vadd.f32 0.0, %v2985
        %v2987 = vpop.f32.mrf.mxu0
        %v2988 = vadd.f32 0.0, %v2987
        %2989 = vmatprep.mubr.f32.mxu0 0.0
        %2990 = vmatmul.mubr.f32.gmra.mxu0 %v2769
        %v2991 = vpop.f32.mrf.mxu0
        %v2992 = vadd.f32 0.0, %v2991
        %v2993 = vpop.f32.mrf.mxu0
        %v2994 = vadd.f32 0.0, %v2993
        %2995 = vmatprep.mubr.f32.mxu0 0.0
        %2996 = vmatmul.mubr.f32.gmra.mxu0 %v2770
        %v2997 = vpop.f32.mrf.mxu0
        %v2998 = vadd.f32 0.0, %v2997
        %v2999 = vpop.f32.mrf.mxu0
        %v3000 = vadd.f32 0.0, %v2999
        %3001 = vmatprep.mubr.f32.mxu0 0.0
        %3002 = vmatmul.mubr.f32.gmra.mxu0 %v2771
        %v3003 = vpop.f32.mrf.mxu0
        %v3004 = vadd.f32 0.0, %v3003
        %v3005 = vpop.f32.mrf.mxu0
        %v3006 = vadd.f32 0.0, %v3005
        %3007 = vmatprep.mubr.f32.mxu0 0.0
        %3008 = vmatmul.mubr.f32.gmra.mxu0 %v2772
        %v3009 = vpop.f32.mrf.mxu0
        %v3010 = vadd.f32 0.0, %v3009
        %v3011 = vpop.f32.mrf.mxu0
        %v3012 = vadd.f32 0.0, %v3011
        %3013 = vmatprep.mubr.f32.mxu0 0.0
        %3014 = vmatmul.mubr.f32.gmra.mxu0 %v2773
        %v3015 = vpop.f32.mrf.mxu0
        %v3016 = vadd.f32 0.0, %v3015
        %v3017 = vpop.f32.mrf.mxu0
        %v3018 = vadd.f32 0.0, %v3017
        %3019 = vmatprep.mubr.f32.mxu0 0.0
        %3020 = vmatmul.mubr.f32.gmra.mxu0 %v2774
        %v3021 = vpop.f32.mrf.mxu0
        %v3022 = vadd.f32 0.0, %v3021
        %v3023 = vpop.f32.mrf.mxu0
        %v3024 = vadd.f32 0.0, %v3023
        %3025 = vmatprep.mubr.f32.mxu0 0.0
        %3026 = vmatmul.mubr.f32.gmra.mxu0 %v2775
        %v3027 = vpop.f32.mrf.mxu0
        %v3028 = vadd.f32 0.0, %v3027
        %v3029 = vpop.f32.mrf.mxu0
        %v3030 = vadd.f32 0.0, %v3029
        %3031 = vmatprep.mubr.f32.mxu0 0.0
        %3032 = vmatmul.mubr.f32.gmra.mxu0 %v2776
        %v3033 = vpop.f32.mrf.mxu0
        %v3034 = vadd.f32 0.0, %v3033
        %v3035 = vpop.f32.mrf.mxu0
        %v3036 = vadd.f32 0.0, %v3035
        %3037 = vmatprep.mubr.f32.mxu0 0.0
        %3038 = vmatmul.mubr.f32.gmra.mxu0 %v2777
        %v3039 = vpop.f32.mrf.mxu0
        %v3040 = vadd.f32 0.0, %v3039
        %v3041 = vpop.f32.mrf.mxu0
        %v3042 = vadd.f32 0.0, %v3041
        %3043 = vmatprep.mubr.f32.mxu0 0.0
        %3044 = vmatmul.mubr.f32.gmra.mxu0 %v2778
        %v3045 = vpop.f32.mrf.mxu0
        %v3046 = vadd.f32 0.0, %v3045
        %v3047 = vpop.f32.mrf.mxu0
        %v3048 = vadd.f32 0.0, %v3047
        %3049 = vmatprep.mubr.f32.mxu0 0.0
        %3050 = vmatmul.mubr.f32.gmra.mxu0 %v2779
        %v3051 = vpop.f32.mrf.mxu0
        %v3052 = vadd.f32 0.0, %v3051
        %v3053 = vpop.f32.mrf.mxu0
        %v3054 = vadd.f32 0.0, %v3053
        %3055 = vmatprep.mubr.f32.mxu0 0.0
        %3056 = vmatmul.mubr.f32.gmra.mxu0 %v2780
        %v3057 = vpop.f32.mrf.mxu0
        %v3058 = vadd.f32 0.0, %v3057
        %v3059 = vpop.f32.mrf.mxu0
        %v3060 = vadd.f32 0.0, %v3059
        %3061 = vmatprep.mubr.f32.mxu0 0.0
        %3062 = vmatmul.mubr.f32.gmra.mxu0 %v2781
        %v3063 = vpop.f32.mrf.mxu0
        %v3064 = vadd.f32 0.0, %v3063
        %v3065 = vpop.f32.mrf.mxu0
        %v3066 = vadd.f32 0.0, %v3065
        %3067 = vmatprep.mubr.f32.mxu0 0.0
        %3068 = vmatmul.mubr.f32.gmra.mxu0 %v2782
        %v3069 = vpop.f32.mrf.mxu0
        %v3070 = vadd.f32 0.0, %v3069
        %v3071 = vpop.f32.mrf.mxu0
        %v3072 = vadd.f32 0.0, %v3071
        %3073 = vmatprep.mubr.f32.mxu0 0.0
        %3074 = vmatmul.mubr.f32.gmra.mxu0 %v2783
        %v3075 = vpop.f32.mrf.mxu0
        %v3076 = vadd.f32 0.0, %v3075
        %v3077 = vpop.f32.mrf.mxu0
        %v3078 = vadd.f32 0.0, %v3077
        %3079 = vmatprep.mubr.f32.mxu0 0.0
        %3080 = vmatmul.mubr.f32.gmra.mxu0 %v2784
        %v3081 = vpop.f32.mrf.mxu0
        %v3082 = vadd.f32 0.0, %v3081
        %v3083 = vpop.f32.mrf.mxu0
        %v3084 = vadd.f32 0.0, %v3083
        %3085 = vmatprep.mubr.f32.mxu0 0.0
        %3086 = vmatmul.mubr.f32.gmra.mxu0 %v2785
        %v3087 = vpop.f32.mrf.mxu0
        %v3088 = vadd.f32 0.0, %v3087
        %v3089 = vpop.f32.mrf.mxu0
        %v3090 = vadd.f32 0.0, %v3089
        %3091 = vmatprep.mubr.f32.mxu0 0.0
        %3092 = vmatmul.mubr.f32.gmra.mxu0 %v2786
        %v3093 = vpop.f32.mrf.mxu0
        %v3094 = vadd.f32 0.0, %v3093
        %v3095 = vpop.f32.mrf.mxu0
        %v3096 = vadd.f32 0.0, %v3095
        %3097 = vmatprep.mubr.f32.mxu0 0.0
        %3098 = vmatmul.mubr.f32.gmra.mxu0 %v2787
        %v3099 = vpop.f32.mrf.mxu0
        %v3100 = vadd.f32 0.0, %v3099
        %v3101 = vpop.f32.mrf.mxu0
        %v3102 = vadd.f32 0.0, %v3101
        %3103 = vmatprep.mubr.f32.mxu0 0.0
        %3104 = vmatmul.mubr.f32.gmra.mxu0 %v2788
        %v3105 = vpop.f32.mrf.mxu0
        %v3106 = vadd.f32 0.0, %v3105
        %v3107 = vpop.f32.mrf.mxu0
        %v3108 = vadd.f32 0.0, %v3107
        %3109 = vdwg.mxu0
        %3110 = vmatprep.subr.mxu0 %v2820
        %3111 = vmatpush1.msra.mxu0 %v2819
        %3112 = vmatprep.subr.mxu0 %v2818
        %3113 = vmatpush1.msra.mxu0 %v2817
        %3114 = vmatprep.subr.mxu0 %v2816
        %3115 = vmatpush1.msra.mxu0 %v2815
        %3116 = vmatprep.subr.mxu0 %v2814
        %3117 = vmatpush1.msra.mxu0 %v2813
        %3118 = vmatprep.subr.mxu0 %v2812
        %3119 = vmatpush1.msra.mxu0 %v2811
        %3120 = vmatprep.subr.mxu0 %v2810
        %3121 = vmatpush1.msra.mxu0 %v2809
        %3122 = vmatprep.subr.mxu0 %v2808
        %3123 = vmatpush1.msra.mxu0 %v2807
        %3124 = vmatprep.subr.mxu0 %v2806
        %3125 = vmatpush1.msra.mxu0 %v2805
        %3126 = vmatprep.subr.mxu0 %v2804
        %3127 = vmatpush1.msra.mxu0 %v2803
        %3128 = vmatprep.subr.mxu0 %v2802
        %3129 = vmatpush1.msra.mxu0 %v2801
        %3130 = vmatprep.subr.mxu0 %v2800
        %3131 = vmatpush1.msra.mxu0 %v2799
        %3132 = vmatprep.subr.mxu0 %v2798
        %3133 = vmatpush1.msra.mxu0 %v2797
        %3134 = vmatprep.subr.mxu0 %v2796
        %3135 = vmatpush1.msra.mxu0 %v2795
        %3136 = vmatprep.subr.mxu0 %v2794
        %3137 = vmatpush1.msra.mxu0 %v2793
        %3138 = vmatprep.subr.mxu0 %v2792
        %3139 = vmatpush1.msra.mxu0 %v2791
        %3140 = vmatprep.subr.mxu0 %v2790
        %3141 = vmatpush1.msra.mxu0 %v2789
        %3142 = vmatprep.subr.mxu0 0.0
        %3143 = vmatpush2.msra.mxu0 0.0
        %3144 = vmatprep.subr.mxu0 0.0
        %3145 = vmatpush2.msra.mxu0 0.0
        %3146 = vmatprep.subr.mxu0 0.0
        %3147 = vmatpush2.msra.mxu0 0.0
        %3148 = vmatprep.subr.mxu0 0.0
        %3149 = vmatpush2.msra.mxu0 0.0
        %3150 = vmatprep.subr.mxu0 0.0
        %3151 = vmatpush2.msra.mxu0 0.0
        %3152 = vmatprep.subr.mxu0 0.0
        %3153 = vmatpush2.msra.mxu0 0.0
        %3154 = vmatprep.subr.mxu0 0.0
        %3155 = vmatpush2.msra.mxu0 0.0
        %3156 = vmatprep.subr.mxu0 0.0
        %3157 = vmatpush2.msra.mxu0 0.0
        %3158 = vmatprep.subr.mxu0 0.0
        %3159 = vmatpush2.msra.mxu0 0.0
        %3160 = vmatprep.subr.mxu0 0.0
        %3161 = vmatpush2.msra.mxu0 0.0
        %3162 = vmatprep.subr.mxu0 0.0
        %3163 = vmatpush2.msra.mxu0 0.0
        %3164 = vmatprep.subr.mxu0 0.0
        %3165 = vmatpush2.msra.mxu0 0.0
        %3166 = vmatprep.subr.mxu0 0.0
        %3167 = vmatpush2.msra.mxu0 0.0
        %3168 = vmatprep.subr.mxu0 0.0
        %3169 = vmatpush2.msra.mxu0 0.0
        %3170 = vmatprep.subr.mxu0 0.0
        %3171 = vmatpush2.msra.mxu0 0.0
        %3172 = vmatprep.subr.mxu0 0.0
        %3173 = vmatpush2.msra.mxu0 0.0
        %3174 = vmatprep.mubr.f32.mxu0 0.0
        %3175 = vmatmul.mubr.f32.gmra.mxu0 %v2725
        %v3176 = vpop.f32.mrf.mxu0
        %v3177 = vadd.f32 %v2920, %v3176
        %v3178 = vpop.f32.mrf.mxu0
        %v3179 = vadd.f32 %v2922, %v3178
        %3180 = vmatprep.mubr.f32.mxu0 0.0
        %3181 = vmatmul.mubr.f32.gmra.mxu0 %v2726
        %v3182 = vpop.f32.mrf.mxu0
        %v3183 = vadd.f32 %v2926, %v3182
        %v3184 = vpop.f32.mrf.mxu0
        %v3185 = vadd.f32 %v2928, %v3184
        %3186 = vmatprep.mubr.f32.mxu0 0.0
        %3187 = vmatmul.mubr.f32.gmra.mxu0 %v2727
        %v3188 = vpop.f32.mrf.mxu0
        %v3189 = vadd.f32 %v2932, %v3188
        %v3190 = vpop.f32.mrf.mxu0
        %v3191 = vadd.f32 %v2934, %v3190
        %3192 = vmatprep.mubr.f32.mxu0 0.0
        %3193 = vmatmul.mubr.f32.gmra.mxu0 %v2728
        %v3194 = vpop.f32.mrf.mxu0
        %v3195 = vadd.f32 %v2938, %v3194
        %v3196 = vpop.f32.mrf.mxu0
        %v3197 = vadd.f32 %v2940, %v3196
        %3198 = vmatprep.mubr.f32.mxu0 0.0
        %3199 = vmatmul.mubr.f32.gmra.mxu0 %v2729
        %v3200 = vpop.f32.mrf.mxu0
        %v3201 = vadd.f32 %v2944, %v3200
        %v3202 = vpop.f32.mrf.mxu0
        %v3203 = vadd.f32 %v2946, %v3202
        %3204 = vmatprep.mubr.f32.mxu0 0.0
        %3205 = vmatmul.mubr.f32.gmra.mxu0 %v2730
        %v3206 = vpop.f32.mrf.mxu0
        %v3207 = vadd.f32 %v2950, %v3206
        %v3208 = vpop.f32.mrf.mxu0
        %v3209 = vadd.f32 %v2952, %v3208
        %3210 = vmatprep.mubr.f32.mxu0 0.0
        %3211 = vmatmul.mubr.f32.gmra.mxu0 %v2731
        %v3212 = vpop.f32.mrf.mxu0
        %v3213 = vadd.f32 %v2956, %v3212
        %v3214 = vpop.f32.mrf.mxu0
        %v3215 = vadd.f32 %v2958, %v3214
        %3216 = vmatprep.mubr.f32.mxu0 0.0
        %3217 = vmatmul.mubr.f32.gmra.mxu0 %v2732
        %v3218 = vpop.f32.mrf.mxu0
        %v3219 = vadd.f32 %v2962, %v3218
        %v3220 = vpop.f32.mrf.mxu0
        %v3221 = vadd.f32 %v2964, %v3220
        %3222 = vmatprep.mubr.f32.mxu0 0.0
        %3223 = vmatmul.mubr.f32.gmra.mxu0 %v2733
        %v3224 = vpop.f32.mrf.mxu0
        %v3225 = vadd.f32 %v2968, %v3224
        %v3226 = vpop.f32.mrf.mxu0
        %v3227 = vadd.f32 %v2970, %v3226
        %3228 = vmatprep.mubr.f32.mxu0 0.0
        %3229 = vmatmul.mubr.f32.gmra.mxu0 %v2734
        %v3230 = vpop.f32.mrf.mxu0
        %v3231 = vadd.f32 %v2974, %v3230
        %v3232 = vpop.f32.mrf.mxu0
        %v3233 = vadd.f32 %v2976, %v3232
        %3234 = vmatprep.mubr.f32.mxu0 0.0
        %3235 = vmatmul.mubr.f32.gmra.mxu0 %v2735
        %v3236 = vpop.f32.mrf.mxu0
        %v3237 = vadd.f32 %v2980, %v3236
        %v3238 = vpop.f32.mrf.mxu0
        %v3239 = vadd.f32 %v2982, %v3238
        %3240 = vmatprep.mubr.f32.mxu0 0.0
        %3241 = vmatmul.mubr.f32.gmra.mxu0 %v2736
        %v3242 = vpop.f32.mrf.mxu0
        %v3243 = vadd.f32 %v2986, %v3242
        %v3244 = vpop.f32.mrf.mxu0
        %v3245 = vadd.f32 %v2988, %v3244
        %3246 = vmatprep.mubr.f32.mxu0 0.0
        %3247 = vmatmul.mubr.f32.gmra.mxu0 %v2737
        %v3248 = vpop.f32.mrf.mxu0
        %v3249 = vadd.f32 %v2992, %v3248
        %v3250 = vpop.f32.mrf.mxu0
        %v3251 = vadd.f32 %v2994, %v3250
        %3252 = vmatprep.mubr.f32.mxu0 0.0
        %3253 = vmatmul.mubr.f32.gmra.mxu0 %v2738
        %v3254 = vpop.f32.mrf.mxu0
        %v3255 = vadd.f32 %v2998, %v3254
        %v3256 = vpop.f32.mrf.mxu0
        %v3257 = vadd.f32 %v3000, %v3256
        %3258 = vmatprep.mubr.f32.mxu0 0.0
        %3259 = vmatmul.mubr.f32.gmra.mxu0 %v2739
        %v3260 = vpop.f32.mrf.mxu0
        %v3261 = vadd.f32 %v3004, %v3260
        %v3262 = vpop.f32.mrf.mxu0
        %v3263 = vadd.f32 %v3006, %v3262
        %3264 = vmatprep.mubr.f32.mxu0 0.0
        %3265 = vmatmul.mubr.f32.gmra.mxu0 %v2740
        %v3266 = vpop.f32.mrf.mxu0
        %v3267 = vadd.f32 %v3010, %v3266
        %v3268 = vpop.f32.mrf.mxu0
        %v3269 = vadd.f32 %v3012, %v3268
        %3270 = vmatprep.mubr.f32.mxu0 0.0
        %3271 = vmatmul.mubr.f32.gmra.mxu0 %v2741
        %v3272 = vpop.f32.mrf.mxu0
        %v3273 = vadd.f32 %v3016, %v3272
        %v3274 = vpop.f32.mrf.mxu0
        %v3275 = vadd.f32 %v3018, %v3274
        %3276 = vmatprep.mubr.f32.mxu0 0.0
        %3277 = vmatmul.mubr.f32.gmra.mxu0 %v2742
        %v3278 = vpop.f32.mrf.mxu0
        %v3279 = vadd.f32 %v3022, %v3278
        %v3280 = vpop.f32.mrf.mxu0
        %v3281 = vadd.f32 %v3024, %v3280
        %3282 = vmatprep.mubr.f32.mxu0 0.0
        %3283 = vmatmul.mubr.f32.gmra.mxu0 %v2743
        %v3284 = vpop.f32.mrf.mxu0
        %v3285 = vadd.f32 %v3028, %v3284
        %v3286 = vpop.f32.mrf.mxu0
        %v3287 = vadd.f32 %v3030, %v3286
        %3288 = vmatprep.mubr.f32.mxu0 0.0
        %3289 = vmatmul.mubr.f32.gmra.mxu0 %v2744
        %v3290 = vpop.f32.mrf.mxu0
        %v3291 = vadd.f32 %v3034, %v3290
        %v3292 = vpop.f32.mrf.mxu0
        %v3293 = vadd.f32 %v3036, %v3292
        %3294 = vmatprep.mubr.f32.mxu0 0.0
        %3295 = vmatmul.mubr.f32.gmra.mxu0 %v2745
        %v3296 = vpop.f32.mrf.mxu0
        %v3297 = vadd.f32 %v3040, %v3296
        %v3298 = vpop.f32.mrf.mxu0
        %v3299 = vadd.f32 %v3042, %v3298
        %3300 = vmatprep.mubr.f32.mxu0 0.0
        %3301 = vmatmul.mubr.f32.gmra.mxu0 %v2746
        %v3302 = vpop.f32.mrf.mxu0
        %v3303 = vadd.f32 %v3046, %v3302
        %v3304 = vpop.f32.mrf.mxu0
        %v3305 = vadd.f32 %v3048, %v3304
        %3306 = vmatprep.mubr.f32.mxu0 0.0
        %3307 = vmatmul.mubr.f32.gmra.mxu0 %v2747
        %v3308 = vpop.f32.mrf.mxu0
        %v3309 = vadd.f32 %v3052, %v3308
        %v3310 = vpop.f32.mrf.mxu0
        %v3311 = vadd.f32 %v3054, %v3310
        %3312 = vmatprep.mubr.f32.mxu0 0.0
        %3313 = vmatmul.mubr.f32.gmra.mxu0 %v2748
        %v3314 = vpop.f32.mrf.mxu0
        %v3315 = vadd.f32 %v3058, %v3314
        %v3316 = vpop.f32.mrf.mxu0
        %v3317 = vadd.f32 %v3060, %v3316
        %3318 = vmatprep.mubr.f32.mxu0 0.0
        %3319 = vmatmul.mubr.f32.gmra.mxu0 %v2749
        %v3320 = vpop.f32.mrf.mxu0
        %v3321 = vadd.f32 %v3064, %v3320
        %v3322 = vpop.f32.mrf.mxu0
        %v3323 = vadd.f32 %v3066, %v3322
        %3324 = vmatprep.mubr.f32.mxu0 0.0
        %3325 = vmatmul.mubr.f32.gmra.mxu0 %v2750
        %v3326 = vpop.f32.mrf.mxu0
        %v3327 = vadd.f32 %v3070, %v3326
        %v3328 = vpop.f32.mrf.mxu0
        %v3329 = vadd.f32 %v3072, %v3328
        %3330 = vmatprep.mubr.f32.mxu0 0.0
        %3331 = vmatmul.mubr.f32.gmra.mxu0 %v2751
        %v3332 = vpop.f32.mrf.mxu0
        %v3333 = vadd.f32 %v3076, %v3332
        %v3334 = vpop.f32.mrf.mxu0
        %v3335 = vadd.f32 %v3078, %v3334
        %3336 = vmatprep.mubr.f32.mxu0 0.0
        %3337 = vmatmul.mubr.f32.gmra.mxu0 %v2752
        %v3338 = vpop.f32.mrf.mxu0
        %v3339 = vadd.f32 %v3082, %v3338
        %v3340 = vpop.f32.mrf.mxu0
        %v3341 = vadd.f32 %v3084, %v3340
        %3342 = vmatprep.mubr.f32.mxu0 0.0
        %3343 = vmatmul.mubr.f32.gmra.mxu0 %v2753
        %v3344 = vpop.f32.mrf.mxu0
        %v3345 = vadd.f32 %v3088, %v3344
        %v3346 = vpop.f32.mrf.mxu0
        %v3347 = vadd.f32 %v3090, %v3346
        %3348 = vmatprep.mubr.f32.mxu0 0.0
        %3349 = vmatmul.mubr.f32.gmra.mxu0 %v2754
        %v3350 = vpop.f32.mrf.mxu0
        %v3351 = vadd.f32 %v3094, %v3350
        %v3352 = vpop.f32.mrf.mxu0
        %v3353 = vadd.f32 %v3096, %v3352
        %3354 = vmatprep.mubr.f32.mxu0 0.0
        %3355 = vmatmul.mubr.f32.gmra.mxu0 %v2755
        %v3356 = vpop.f32.mrf.mxu0
        %v3357 = vadd.f32 %v3100, %v3356
        %v3358 = vpop.f32.mrf.mxu0
        %v3359 = vadd.f32 %v3102, %v3358
        %3360 = vmatprep.mubr.f32.mxu0 0.0
        %3361 = vmatmul.mubr.f32.gmra.mxu0 %v2756
        %v3362 = vpop.f32.mrf.mxu0
        %v3363 = vadd.f32 %v3106, %v3362
        %v3364 = vpop.f32.mrf.mxu0
        %v3365 = vadd.f32 %v3108, %v3364
        %3366 = vdwg.mxu0
        %v3367 = vld [vmem:[#allocation17] sm:$0xff]
        %v3368 = vld [vmem:[#allocation17 + $0x8] sm:$0xff]
        %v3369 = vld [vmem:[#allocation17 + $0x10] sm:$0xff]
        %v3370 = vld [vmem:[#allocation17 + $0x18] sm:$0xff]
        %v3371 = vld [vmem:[#allocation17 + $0x20] sm:$0xff]
        %v3372 = vld [vmem:[#allocation17 + $0x28] sm:$0xff]
        %v3373 = vld [vmem:[#allocation17 + $0x30] sm:$0xff]
        %v3374 = vld [vmem:[#allocation17 + $0x38] sm:$0xff]
        %v3375 = vld [vmem:[#allocation17 + $0x40] sm:$0xff]
        %v3376 = vld [vmem:[#allocation17 + $0x48] sm:$0xff]
        %v3377 = vld [vmem:[#allocation17 + $0x50] sm:$0xff]
        %v3378 = vld [vmem:[#allocation17 + $0x58] sm:$0xff]
        %v3379 = vld [vmem:[#allocation17 + $0x60] sm:$0xff]
        %v3380 = vld [vmem:[#allocation17 + $0x68] sm:$0xff]
        %v3381 = vld [vmem:[#allocation17 + $0x70] sm:$0xff]
        %v3382 = vld [vmem:[#allocation17 + $0x78] sm:$0xff]
        %v3383 = vld [vmem:[#allocation17 + $0x80] sm:$0xff]
        %v3384 = vld [vmem:[#allocation17 + $0x88] sm:$0xff]
        %v3385 = vld [vmem:[#allocation17 + $0x90] sm:$0xff]
        %v3386 = vld [vmem:[#allocation17 + $0x98] sm:$0xff]
        %v3387 = vld [vmem:[#allocation17 + $0xa0] sm:$0xff]
        %v3388 = vld [vmem:[#allocation17 + $0xa8] sm:$0xff]
        %v3389 = vld [vmem:[#allocation17 + $0xb0] sm:$0xff]
        %v3390 = vld [vmem:[#allocation17 + $0xb8] sm:$0xff]
        %v3391 = vld [vmem:[#allocation17 + $0xc0] sm:$0xff]
        %v3392 = vld [vmem:[#allocation17 + $0xc8] sm:$0xff]
        %v3393 = vld [vmem:[#allocation17 + $0xd0] sm:$0xff]
        %v3394 = vld [vmem:[#allocation17 + $0xd8] sm:$0xff]
        %v3395 = vld [vmem:[#allocation17 + $0xe0] sm:$0xff]
        %v3396 = vld [vmem:[#allocation17 + $0xe8] sm:$0xff]
        %v3397 = vld [vmem:[#allocation17 + $0xf0] sm:$0xff]
        %v3398 = vld [vmem:[#allocation17 + $0xf8] sm:$0xff]
        %3399 = vmatprep.subr.mxu0 0.0
        %3400 = vmatpush1.msra.mxu0 %v3382
        %3401 = vmatprep.subr.mxu0 0.0
        %3402 = vmatpush1.msra.mxu0 %v3381
        %3403 = vmatprep.subr.mxu0 0.0
        %3404 = vmatpush1.msra.mxu0 %v3380
        %3405 = vmatprep.subr.mxu0 0.0
        %3406 = vmatpush1.msra.mxu0 %v3379
        %3407 = vmatprep.subr.mxu0 0.0
        %3408 = vmatpush1.msra.mxu0 %v3378
        %3409 = vmatprep.subr.mxu0 0.0
        %3410 = vmatpush1.msra.mxu0 %v3377
        %3411 = vmatprep.subr.mxu0 0.0
        %3412 = vmatpush1.msra.mxu0 %v3376
        %3413 = vmatprep.subr.mxu0 0.0
        %3414 = vmatpush1.msra.mxu0 %v3375
        %3415 = vmatprep.subr.mxu0 0.0
        %3416 = vmatpush1.msra.mxu0 %v3374
        %3417 = vmatprep.subr.mxu0 0.0
        %3418 = vmatpush1.msra.mxu0 %v3373
        %3419 = vmatprep.subr.mxu0 0.0
        %3420 = vmatpush1.msra.mxu0 %v3372
        %3421 = vmatprep.subr.mxu0 0.0
        %3422 = vmatpush1.msra.mxu0 %v3371
        %3423 = vmatprep.subr.mxu0 0.0
        %3424 = vmatpush1.msra.mxu0 %v3370
        %3425 = vmatprep.subr.mxu0 0.0
        %3426 = vmatpush1.msra.mxu0 %v3369
        %3427 = vmatprep.subr.mxu0 0.0
        %3428 = vmatpush1.msra.mxu0 %v3368
        %3429 = vmatprep.subr.mxu0 0.0
        %3430 = vmatpush1.msra.mxu0 %v3367
        %3431 = vmatprep.subr.mxu0 0.0
        %3432 = vmatpush2.msra.mxu0 %v3398
        %3433 = vmatprep.subr.mxu0 0.0
        %3434 = vmatpush2.msra.mxu0 %v3397
        %3435 = vmatprep.subr.mxu0 0.0
        %3436 = vmatpush2.msra.mxu0 %v3396
        %3437 = vmatprep.subr.mxu0 0.0
        %3438 = vmatpush2.msra.mxu0 %v3395
        %3439 = vmatprep.subr.mxu0 0.0
        %3440 = vmatpush2.msra.mxu0 %v3394
        %3441 = vmatprep.subr.mxu0 0.0
        %3442 = vmatpush2.msra.mxu0 %v3393
        %3443 = vmatprep.subr.mxu0 0.0
        %3444 = vmatpush2.msra.mxu0 %v3392
        %3445 = vmatprep.subr.mxu0 0.0
        %3446 = vmatpush2.msra.mxu0 %v3391
        %3447 = vmatprep.subr.mxu0 0.0
        %3448 = vmatpush2.msra.mxu0 %v3390
        %3449 = vmatprep.subr.mxu0 0.0
        %3450 = vmatpush2.msra.mxu0 %v3389
        %3451 = vmatprep.subr.mxu0 0.0
        %3452 = vmatpush2.msra.mxu0 %v3388
        %3453 = vmatprep.subr.mxu0 0.0
        %3454 = vmatpush2.msra.mxu0 %v3387
        %3455 = vmatprep.subr.mxu0 0.0
        %3456 = vmatpush2.msra.mxu0 %v3386
        %3457 = vmatprep.subr.mxu0 0.0
        %3458 = vmatpush2.msra.mxu0 %v3385
        %3459 = vmatprep.subr.mxu0 0.0
        %3460 = vmatpush2.msra.mxu0 %v3384
        %3461 = vmatprep.subr.mxu0 0.0
        %3462 = vmatpush2.msra.mxu0 %v3383
        %3463 = vmatprep.mubr.f32.mxu0 %v3179
        %3464 = vmatmul.mubr.f32.gmra.mxu0 %v3177
        %v3465 = vpop.f32.mrf.mxu0
        %v3466 = vadd.f32 0.0, %v3465
        %v3467 = vpop.f32.mrf.mxu0
        %3468 = vmatprep.mubr.f32.mxu0 %v3185
        %3469 = vmatmul.mubr.f32.gmra.mxu0 %v3183
        %v3470 = vpop.f32.mrf.mxu0
        %v3471 = vadd.f32 0.0, %v3470
        %v3472 = vpop.f32.mrf.mxu0
        %3473 = vmatprep.mubr.f32.mxu0 %v3191
        %3474 = vmatmul.mubr.f32.gmra.mxu0 %v3189
        %v3475 = vpop.f32.mrf.mxu0
        %v3476 = vadd.f32 0.0, %v3475
        %v3477 = vpop.f32.mrf.mxu0
        %3478 = vmatprep.mubr.f32.mxu0 %v3197
        %3479 = vmatmul.mubr.f32.gmra.mxu0 %v3195
        %v3480 = vpop.f32.mrf.mxu0
        %v3481 = vadd.f32 0.0, %v3480
        %v3482 = vpop.f32.mrf.mxu0
        %3483 = vmatprep.mubr.f32.mxu0 %v3203
        %3484 = vmatmul.mubr.f32.gmra.mxu0 %v3201
        %v3485 = vpop.f32.mrf.mxu0
        %v3486 = vadd.f32 0.0, %v3485
        %v3487 = vpop.f32.mrf.mxu0
        %3488 = vmatprep.mubr.f32.mxu0 %v3209
        %3489 = vmatmul.mubr.f32.gmra.mxu0 %v3207
        %v3490 = vpop.f32.mrf.mxu0
        %v3491 = vadd.f32 0.0, %v3490
        %v3492 = vpop.f32.mrf.mxu0
        %3493 = vmatprep.mubr.f32.mxu0 %v3215
        %3494 = vmatmul.mubr.f32.gmra.mxu0 %v3213
        %v3495 = vpop.f32.mrf.mxu0
        %v3496 = vadd.f32 0.0, %v3495
        %v3497 = vpop.f32.mrf.mxu0
        %3498 = vmatprep.mubr.f32.mxu0 %v3221
        %3499 = vmatmul.mubr.f32.gmra.mxu0 %v3219
        %v3500 = vpop.f32.mrf.mxu0
        %v3501 = vadd.f32 0.0, %v3500
        %v3502 = vpop.f32.mrf.mxu0
        %3503 = vmatprep.mubr.f32.mxu0 %v3227
        %3504 = vmatmul.mubr.f32.gmra.mxu0 %v3225
        %v3505 = vpop.f32.mrf.mxu0
        %v3506 = vadd.f32 0.0, %v3505
        %v3507 = vpop.f32.mrf.mxu0
        %3508 = vmatprep.mubr.f32.mxu0 %v3233
        %3509 = vmatmul.mubr.f32.gmra.mxu0 %v3231
        %v3510 = vpop.f32.mrf.mxu0
        %v3511 = vadd.f32 0.0, %v3510
        %v3512 = vpop.f32.mrf.mxu0
        %3513 = vmatprep.mubr.f32.mxu0 %v3239
        %3514 = vmatmul.mubr.f32.gmra.mxu0 %v3237
        %v3515 = vpop.f32.mrf.mxu0
        %v3516 = vadd.f32 0.0, %v3515
        %v3517 = vpop.f32.mrf.mxu0
        %3518 = vmatprep.mubr.f32.mxu0 %v3245
        %3519 = vmatmul.mubr.f32.gmra.mxu0 %v3243
        %v3520 = vpop.f32.mrf.mxu0
        %v3521 = vadd.f32 0.0, %v3520
        %v3522 = vpop.f32.mrf.mxu0
        %3523 = vmatprep.mubr.f32.mxu0 %v3251
        %3524 = vmatmul.mubr.f32.gmra.mxu0 %v3249
        %v3525 = vpop.f32.mrf.mxu0
        %v3526 = vadd.f32 0.0, %v3525
        %v3527 = vpop.f32.mrf.mxu0
        %3528 = vmatprep.mubr.f32.mxu0 %v3257
        %3529 = vmatmul.mubr.f32.gmra.mxu0 %v3255
        %v3530 = vpop.f32.mrf.mxu0
        %v3531 = vadd.f32 0.0, %v3530
        %v3532 = vpop.f32.mrf.mxu0
        %3533 = vmatprep.mubr.f32.mxu0 %v3263
        %3534 = vmatmul.mubr.f32.gmra.mxu0 %v3261
        %v3535 = vpop.f32.mrf.mxu0
        %v3536 = vadd.f32 0.0, %v3535
        %v3537 = vpop.f32.mrf.mxu0
        %3538 = vmatprep.mubr.f32.mxu0 %v3269
        %3539 = vmatmul.mubr.f32.gmra.mxu0 %v3267
        %v3540 = vpop.f32.mrf.mxu0
        %v3541 = vadd.f32 0.0, %v3540
        %v3542 = vpop.f32.mrf.mxu0
        %3543 = vmatprep.mubr.f32.mxu0 %v3275
        %3544 = vmatmul.mubr.f32.gmra.mxu0 %v3273
        %v3545 = vpop.f32.mrf.mxu0
        %v3546 = vadd.f32 0.0, %v3545
        %v3547 = vpop.f32.mrf.mxu0
        %3548 = vmatprep.mubr.f32.mxu0 %v3281
        %3549 = vmatmul.mubr.f32.gmra.mxu0 %v3279
        %v3550 = vpop.f32.mrf.mxu0
        %v3551 = vadd.f32 0.0, %v3550
        %v3552 = vpop.f32.mrf.mxu0
        %3553 = vmatprep.mubr.f32.mxu0 %v3287
        %3554 = vmatmul.mubr.f32.gmra.mxu0 %v3285
        %v3555 = vpop.f32.mrf.mxu0
        %v3556 = vadd.f32 0.0, %v3555
        %v3557 = vpop.f32.mrf.mxu0
        %3558 = vmatprep.mubr.f32.mxu0 %v3293
        %3559 = vmatmul.mubr.f32.gmra.mxu0 %v3291
        %v3560 = vpop.f32.mrf.mxu0
        %v3561 = vadd.f32 0.0, %v3560
        %v3562 = vpop.f32.mrf.mxu0
        %3563 = vmatprep.mubr.f32.mxu0 %v3299
        %3564 = vmatmul.mubr.f32.gmra.mxu0 %v3297
        %v3565 = vpop.f32.mrf.mxu0
        %v3566 = vadd.f32 0.0, %v3565
        %v3567 = vpop.f32.mrf.mxu0
        %3568 = vmatprep.mubr.f32.mxu0 %v3305
        %3569 = vmatmul.mubr.f32.gmra.mxu0 %v3303
        %v3570 = vpop.f32.mrf.mxu0
        %v3571 = vadd.f32 0.0, %v3570
        %v3572 = vpop.f32.mrf.mxu0
        %3573 = vmatprep.mubr.f32.mxu0 %v3311
        %3574 = vmatmul.mubr.f32.gmra.mxu0 %v3309
        %v3575 = vpop.f32.mrf.mxu0
        %v3576 = vadd.f32 0.0, %v3575
        %v3577 = vpop.f32.mrf.mxu0
        %3578 = vmatprep.mubr.f32.mxu0 %v3317
        %3579 = vmatmul.mubr.f32.gmra.mxu0 %v3315
        %v3580 = vpop.f32.mrf.mxu0
        %v3581 = vadd.f32 0.0, %v3580
        %v3582 = vpop.f32.mrf.mxu0
        %3583 = vmatprep.mubr.f32.mxu0 %v3323
        %3584 = vmatmul.mubr.f32.gmra.mxu0 %v3321
        %v3585 = vpop.f32.mrf.mxu0
        %v3586 = vadd.f32 0.0, %v3585
        %v3587 = vpop.f32.mrf.mxu0
        %3588 = vmatprep.mubr.f32.mxu0 %v3329
        %3589 = vmatmul.mubr.f32.gmra.mxu0 %v3327
        %v3590 = vpop.f32.mrf.mxu0
        %v3591 = vadd.f32 0.0, %v3590
        %v3592 = vpop.f32.mrf.mxu0
        %3593 = vmatprep.mubr.f32.mxu0 %v3335
        %3594 = vmatmul.mubr.f32.gmra.mxu0 %v3333
        %v3595 = vpop.f32.mrf.mxu0
        %v3596 = vadd.f32 0.0, %v3595
        %v3597 = vpop.f32.mrf.mxu0
        %3598 = vmatprep.mubr.f32.mxu0 %v3341
        %3599 = vmatmul.mubr.f32.gmra.mxu0 %v3339
        %v3600 = vpop.f32.mrf.mxu0
        %v3601 = vadd.f32 0.0, %v3600
        %v3602 = vpop.f32.mrf.mxu0
        %3603 = vmatprep.mubr.f32.mxu0 %v3347
        %3604 = vmatmul.mubr.f32.gmra.mxu0 %v3345
        %v3605 = vpop.f32.mrf.mxu0
        %v3606 = vadd.f32 0.0, %v3605
        %v3607 = vpop.f32.mrf.mxu0
        %3608 = vmatprep.mubr.f32.mxu0 %v3353
        %3609 = vmatmul.mubr.f32.gmra.mxu0 %v3351
        %v3610 = vpop.f32.mrf.mxu0
        %v3611 = vadd.f32 0.0, %v3610
        %v3612 = vpop.f32.mrf.mxu0
        %3613 = vmatprep.mubr.f32.mxu0 %v3359
        %3614 = vmatmul.mubr.f32.gmra.mxu0 %v3357
        %v3615 = vpop.f32.mrf.mxu0
        %v3616 = vadd.f32 0.0, %v3615
        %v3617 = vpop.f32.mrf.mxu0
        %3618 = vmatprep.mubr.f32.mxu0 %v3365
        %3619 = vmatmul.mubr.f32.gmra.mxu0 %v3363
        %v3620 = vpop.f32.mrf.mxu0
        %v3621 = vadd.f32 0.0, %v3620
        %v3622 = vpop.f32.mrf.mxu0
        %3623 = vdwg.mxu0
        %3624 = vst [vmem:[#allocation2] sm:$0xff] %v3177
        %3625 = vst [vmem:[#allocation2 + $0x8] sm:$0xff] %v3179
        %3626 = vst [vmem:[#allocation2 + $0x10] sm:$0xff] %v3183
        %3627 = vst [vmem:[#allocation2 + $0x18] sm:$0xff] %v3185
        %3628 = vst [vmem:[#allocation2 + $0x20] sm:$0xff] %v3189
        %3629 = vst [vmem:[#allocation2 + $0x28] sm:$0xff] %v3191
        %3630 = vst [vmem:[#allocation2 + $0x30] sm:$0xff] %v3195
        %3631 = vst [vmem:[#allocation2 + $0x38] sm:$0xff] %v3197
        %3632 = vst [vmem:[#allocation2 + $0x40] sm:$0xff] %v3201
        %3633 = vst [vmem:[#allocation2 + $0x48] sm:$0xff] %v3203
        %3634 = vst [vmem:[#allocation2 + $0x50] sm:$0xff] %v3207
        %3635 = vst [vmem:[#allocation2 + $0x58] sm:$0xff] %v3209
        %3636 = vst [vmem:[#allocation2 + $0x60] sm:$0xff] %v3213
        %3637 = vst [vmem:[#allocation2 + $0x68] sm:$0xff] %v3215
        %3638 = vst [vmem:[#allocation2 + $0x70] sm:$0xff] %v3219
        %3639 = vst [vmem:[#allocation2 + $0x78] sm:$0xff] %v3221
        %3640 = vst [vmem:[#allocation2 + $0x80] sm:$0xff] %v3225
        %3641 = vst [vmem:[#allocation2 + $0x88] sm:$0xff] %v3227
        %3642 = vst [vmem:[#allocation2 + $0x90] sm:$0xff] %v3231
        %3643 = vst [vmem:[#allocation2 + $0x98] sm:$0xff] %v3233
        %3644 = vst [vmem:[#allocation2 + $0xa0] sm:$0xff] %v3237
        %3645 = vst [vmem:[#allocation2 + $0xa8] sm:$0xff] %v3239
        %3646 = vst [vmem:[#allocation2 + $0xb0] sm:$0xff] %v3243
        %3647 = vst [vmem:[#allocation2 + $0xb8] sm:$0xff] %v3245
        %3648 = vst [vmem:[#allocation2 + $0xc0] sm:$0xff] %v3249
        %3649 = vst [vmem:[#allocation2 + $0xc8] sm:$0xff] %v3251
        %3650 = vst [vmem:[#allocation2 + $0xd0] sm:$0xff] %v3255
        %3651 = vst [vmem:[#allocation2 + $0xd8] sm:$0xff] %v3257
        %3652 = vst [vmem:[#allocation2 + $0xe0] sm:$0xff] %v3261
        %3653 = vst [vmem:[#allocation2 + $0xe8] sm:$0xff] %v3263
        %3654 = vst [vmem:[#allocation2 + $0xf0] sm:$0xff] %v3267
        %3655 = vst [vmem:[#allocation2 + $0xf8] sm:$0xff] %v3269
        %3656 = vst [vmem:[#allocation2 + $0x100] sm:$0xff] %v3273
        %3657 = vst [vmem:[#allocation2 + $0x108] sm:$0xff] %v3275
        %3658 = vst [vmem:[#allocation2 + $0x110] sm:$0xff] %v3279
        %3659 = vst [vmem:[#allocation2 + $0x118] sm:$0xff] %v3281
        %3660 = vst [vmem:[#allocation2 + $0x120] sm:$0xff] %v3285
        %3661 = vst [vmem:[#allocation2 + $0x128] sm:$0xff] %v3287
        %3662 = vst [vmem:[#allocation2 + $0x130] sm:$0xff] %v3291
        %3663 = vst [vmem:[#allocation2 + $0x138] sm:$0xff] %v3293
        %3664 = vst [vmem:[#allocation2 + $0x140] sm:$0xff] %v3297
        %3665 = vst [vmem:[#allocation2 + $0x148] sm:$0xff] %v3299
        %3666 = vst [vmem:[#allocation2 + $0x150] sm:$0xff] %v3303
        %3667 = vst [vmem:[#allocation2 + $0x158] sm:$0xff] %v3305
        %3668 = vst [vmem:[#allocation2 + $0x160] sm:$0xff] %v3309
        %3669 = vst [vmem:[#allocation2 + $0x168] sm:$0xff] %v3311
        %3670 = vst [vmem:[#allocation2 + $0x170] sm:$0xff] %v3315
        %3671 = vst [vmem:[#allocation2 + $0x178] sm:$0xff] %v3317
        %3672 = vst [vmem:[#allocation2 + $0x180] sm:$0xff] %v3321
        %3673 = vst [vmem:[#allocation2 + $0x188] sm:$0xff] %v3323
        %3674 = vst [vmem:[#allocation2 + $0x190] sm:$0xff] %v3327
        %3675 = vst [vmem:[#allocation2 + $0x198] sm:$0xff] %v3329
        %3676 = vst [vmem:[#allocation2 + $0x1a0] sm:$0xff] %v3333
        %3677 = vst [vmem:[#allocation2 + $0x1a8] sm:$0xff] %v3335
        %3678 = vst [vmem:[#allocation2 + $0x1b0] sm:$0xff] %v3339
        %3679 = vst [vmem:[#allocation2 + $0x1b8] sm:$0xff] %v3341
        %3680 = vst [vmem:[#allocation2 + $0x1c0] sm:$0xff] %v3345
        %3681 = vst [vmem:[#allocation2 + $0x1c8] sm:$0xff] %v3347
        %3682 = vst [vmem:[#allocation2 + $0x1d0] sm:$0xff] %v3351
        %3683 = vst [vmem:[#allocation2 + $0x1d8] sm:$0xff] %v3353
        %3684 = vst [vmem:[#allocation2 + $0x1e0] sm:$0xff] %v3357
        %3685 = vst [vmem:[#allocation2 + $0x1e8] sm:$0xff] %v3359
        %3686 = vst [vmem:[#allocation2 + $0x1f0] sm:$0xff] %v3363
        %3687 = vst [vmem:[#allocation2 + $0x1f8] sm:$0xff] %v3365
        %3720 = vrot.lane.b32.xlu0 %v3466, 126
        %v3721 = vpop.permute.xlu0 %3720
        %3722 = vrot.lane.b32.xlu0 %v3471, 126
        %v3723 = vpop.permute.xlu0 %3722
        %3724 = vrot.lane.b32.xlu0 %v3476, 126
        %v3725 = vpop.permute.xlu0 %3724
        %3726 = vrot.lane.b32.xlu0 %v3481, 126
        %v3727 = vpop.permute.xlu0 %3726
        %3728 = vrot.lane.b32.xlu0 %v3486, 126
        %v3729 = vpop.permute.xlu0 %3728
        %3730 = vrot.lane.b32.xlu0 %v3491, 126
        %v3731 = vpop.permute.xlu0 %3730
        %3732 = vrot.lane.b32.xlu0 %v3496, 126
        %v3733 = vpop.permute.xlu0 %3732
        %3734 = vrot.lane.b32.xlu0 %v3501, 126
        %v3735 = vpop.permute.xlu0 %3734
        %3736 = vrot.lane.b32.xlu0 %v3506, 126
        %v3737 = vpop.permute.xlu0 %3736
        %3738 = vrot.lane.b32.xlu0 %v3511, 126
        %v3739 = vpop.permute.xlu0 %3738
        %3740 = vrot.lane.b32.xlu0 %v3516, 126
        %v3741 = vpop.permute.xlu0 %3740
        %3742 = vrot.lane.b32.xlu0 %v3521, 126
        %v3743 = vpop.permute.xlu0 %3742
        %3744 = vrot.lane.b32.xlu0 %v3526, 126
        %v3745 = vpop.permute.xlu0 %3744
        %3746 = vrot.lane.b32.xlu0 %v3531, 126
        %v3747 = vpop.permute.xlu0 %3746
        %3748 = vrot.lane.b32.xlu0 %v3536, 126
        %v3749 = vpop.permute.xlu0 %3748
        %3750 = vrot.lane.b32.xlu0 %v3541, 126
        %v3751 = vpop.permute.xlu0 %3750
        %3752 = vrot.lane.b32.xlu0 %v3546, 126
        %v3753 = vpop.permute.xlu0 %3752
        %3754 = vrot.lane.b32.xlu0 %v3551, 126
        %v3755 = vpop.permute.xlu0 %3754
        %3756 = vrot.lane.b32.xlu0 %v3556, 126
        %v3757 = vpop.permute.xlu0 %3756
        %3758 = vrot.lane.b32.xlu0 %v3561, 126
        %v3759 = vpop.permute.xlu0 %3758
        %3760 = vrot.lane.b32.xlu0 %v3566, 126
        %v3761 = vpop.permute.xlu0 %3760
        %3762 = vrot.lane.b32.xlu0 %v3571, 126
        %v3763 = vpop.permute.xlu0 %3762
        %3764 = vrot.lane.b32.xlu0 %v3576, 126
        %v3765 = vpop.permute.xlu0 %3764
        %3766 = vrot.lane.b32.xlu0 %v3581, 126
        %v3767 = vpop.permute.xlu0 %3766
        %3768 = vrot.lane.b32.xlu0 %v3586, 126
        %v3769 = vpop.permute.xlu0 %3768
        %3770 = vrot.lane.b32.xlu0 %v3591, 126
        %v3771 = vpop.permute.xlu0 %3770
        %3772 = vrot.lane.b32.xlu0 %v3596, 126
        %v3773 = vpop.permute.xlu0 %3772
        %3774 = vrot.lane.b32.xlu0 %v3601, 126
        %v3775 = vpop.permute.xlu0 %3774
        %3776 = vrot.lane.b32.xlu0 %v3606, 126
        %v3777 = vpop.permute.xlu0 %3776
        %3778 = vrot.lane.b32.xlu0 %v3611, 126
        %v3779 = vpop.permute.xlu0 %3778
        %3780 = vrot.lane.b32.xlu0 %v3616, 126
        %v3781 = vpop.permute.xlu0 %3780
        %3782 = vrot.lane.b32.xlu0 %v3621, 126
        %v3783 = vpop.permute.xlu0 %3782
        %3816 = vxpose.xlu0.b32.start [1/16] %v3721, 128
        %3817 = vxpose.xlu0.b32.cont [2/16] %v3723, 128
        %3818 = vxpose.xlu0.b32.cont [3/16] %v3725, 128
        %3819 = vxpose.xlu0.b32.cont [4/16] %v3727, 128
        %3820 = vxpose.xlu0.b32.cont [5/16] %v3729, 128
        %3821 = vxpose.xlu0.b32.cont [6/16] %v3731, 128
        %3822 = vxpose.xlu0.b32.cont [7/16] %v3733, 128
        %3823 = vxpose.xlu0.b32.cont [8/16] %v3735, 128
        %3824 = vxpose.xlu0.b32.cont [9/16] %v3737, 128
        %3825 = vxpose.xlu0.b32.cont [10/16] %v3739, 128
        %3826 = vxpose.xlu0.b32.cont [11/16] %v3741, 128
        %3827 = vxpose.xlu0.b32.cont [12/16] %v3743, 128
        %3828 = vxpose.xlu0.b32.cont [13/16] %v3745, 128
        %3829 = vxpose.xlu0.b32.cont [14/16] %v3747, 128
        %3830 = vxpose.xlu0.b32.cont [15/16] %v3749, 128
        %3831 = vxpose.xlu0.b32.end [16/16] %v3751, 128
        %v3832 = vpop.trf.xlu0
        %v3833 = vpop.trf.xlu0
        %v3834 = vpop.trf.xlu0
        %v3835 = vpop.trf.xlu0
        %v3836 = vpop.trf.xlu0
        %v3837 = vpop.trf.xlu0
        %v3838 = vpop.trf.xlu0
        %v3839 = vpop.trf.xlu0
        %v3840 = vpop.trf.xlu0
        %v3841 = vpop.trf.xlu0
        %v3842 = vpop.trf.xlu0
        %v3843 = vpop.trf.xlu0
        %v3844 = vpop.trf.xlu0
        %v3845 = vpop.trf.xlu0
        %v3846 = vpop.trf.xlu0
        %v3847 = vpop.trf.xlu0
        %3848 = vxpose.xlu0.b32.start [1/16] %v3753, 128
        %3849 = vxpose.xlu0.b32.cont [2/16] %v3755, 128
        %3850 = vxpose.xlu0.b32.cont [3/16] %v3757, 128
        %3851 = vxpose.xlu0.b32.cont [4/16] %v3759, 128
        %3852 = vxpose.xlu0.b32.cont [5/16] %v3761, 128
        %3853 = vxpose.xlu0.b32.cont [6/16] %v3763, 128
        %3854 = vxpose.xlu0.b32.cont [7/16] %v3765, 128
        %3855 = vxpose.xlu0.b32.cont [8/16] %v3767, 128
        %3856 = vxpose.xlu0.b32.cont [9/16] %v3769, 128
        %3857 = vxpose.xlu0.b32.cont [10/16] %v3771, 128
        %3858 = vxpose.xlu0.b32.cont [11/16] %v3773, 128
        %3859 = vxpose.xlu0.b32.cont [12/16] %v3775, 128
        %3860 = vxpose.xlu0.b32.cont [13/16] %v3777, 128
        %3861 = vxpose.xlu0.b32.cont [14/16] %v3779, 128
        %3862 = vxpose.xlu0.b32.cont [15/16] %v3781, 128
        %3863 = vxpose.xlu0.b32.end [16/16] %v3783, 128
        %v3864 = vpop.trf.xlu0
        %v3865 = vpop.trf.xlu0
        %v3866 = vpop.trf.xlu0
        %v3867 = vpop.trf.xlu0
        %v3868 = vpop.trf.xlu0
        %v3869 = vpop.trf.xlu0
        %v3870 = vpop.trf.xlu0
        %v3871 = vpop.trf.xlu0
        %v3872 = vpop.trf.xlu0
        %v3873 = vpop.trf.xlu0
        %v3874 = vpop.trf.xlu0
        %v3875 = vpop.trf.xlu0
        %v3876 = vpop.trf.xlu0
        %v3877 = vpop.trf.xlu0
        %v3878 = vpop.trf.xlu0
        %v3879 = vpop.trf.xlu0
        %v3880 = vld [vmem:[#allocation2] sm:$0xff]
        %v3881 = vld [vmem:[#allocation2 + $0x10] sm:$0xff]
        %v3882 = vld [vmem:[#allocation2 + $0x20] sm:$0xff]
        %v3883 = vld [vmem:[#allocation2 + $0x30] sm:$0xff]
        %v3884 = vld [vmem:[#allocation2 + $0x40] sm:$0xff]
        %v3885 = vld [vmem:[#allocation2 + $0x50] sm:$0xff]
        %v3886 = vld [vmem:[#allocation2 + $0x60] sm:$0xff]
        %v3887 = vld [vmem:[#allocation2 + $0x70] sm:$0xff]
        %v3888 = vld [vmem:[#allocation2 + $0x80] sm:$0xff]
        %v3889 = vld [vmem:[#allocation2 + $0x90] sm:$0xff]
        %v3890 = vld [vmem:[#allocation2 + $0xa0] sm:$0xff]
        %v3891 = vld [vmem:[#allocation2 + $0xb0] sm:$0xff]
        %v3892 = vld [vmem:[#allocation2 + $0xc0] sm:$0xff]
        %v3893 = vld [vmem:[#allocation2 + $0xd0] sm:$0xff]
        %v3894 = vld [vmem:[#allocation2 + $0xe0] sm:$0xff]
        %v3895 = vld [vmem:[#allocation2 + $0xf0] sm:$0xff]
        %v3896 = vld [vmem:[#allocation2 + $0x100] sm:$0xff]
        %v3897 = vld [vmem:[#allocation2 + $0x110] sm:$0xff]
        %v3898 = vld [vmem:[#allocation2 + $0x120] sm:$0xff]
        %v3899 = vld [vmem:[#allocation2 + $0x130] sm:$0xff]
        %v3900 = vld [vmem:[#allocation2 + $0x140] sm:$0xff]
        %v3901 = vld [vmem:[#allocation2 + $0x150] sm:$0xff]
        %v3902 = vld [vmem:[#allocation2 + $0x160] sm:$0xff]
        %v3903 = vld [vmem:[#allocation2 + $0x170] sm:$0xff]
        %v3904 = vld [vmem:[#allocation2 + $0x180] sm:$0xff]
        %v3905 = vld [vmem:[#allocation2 + $0x190] sm:$0xff]
        %v3906 = vld [vmem:[#allocation2 + $0x1a0] sm:$0xff]
        %v3907 = vld [vmem:[#allocation2 + $0x1b0] sm:$0xff]
        %v3908 = vld [vmem:[#allocation2 + $0x1c0] sm:$0xff]
        %v3909 = vld [vmem:[#allocation2 + $0x1d0] sm:$0xff]
        %v3910 = vld [vmem:[#allocation2 + $0x1e0] sm:$0xff]
        %v3911 = vld [vmem:[#allocation2 + $0x1f0] sm:$0xff]
        %3912 = vset.pattern.permute.xlu0 0
        %3913 = vperm.xlu0 %3912, %v3466
        %v3914 = vpop.permute.xlu0 %3913
        %3916 = vset.pattern.permute.xlu0 0
        %3917 = vperm.xlu0 %3916, %v3471
        %v3918 = vpop.permute.xlu0 %3917
        %3920 = vset.pattern.permute.xlu0 0
        %3921 = vperm.xlu0 %3920, %v3476
        %v3922 = vpop.permute.xlu0 %3921
        %3924 = vset.pattern.permute.xlu0 0
        %3925 = vperm.xlu0 %3924, %v3481
        %v3926 = vpop.permute.xlu0 %3925
        %3928 = vset.pattern.permute.xlu0 0
        %3929 = vperm.xlu0 %3928, %v3486
        %v3930 = vpop.permute.xlu0 %3929
        %3932 = vset.pattern.permute.xlu0 0
        %3933 = vperm.xlu0 %3932, %v3491
        %v3934 = vpop.permute.xlu0 %3933
        %3936 = vset.pattern.permute.xlu0 0
        %3937 = vperm.xlu0 %3936, %v3496
        %v3938 = vpop.permute.xlu0 %3937
        %3940 = vset.pattern.permute.xlu0 0
        %3941 = vperm.xlu0 %3940, %v3501
        %v3942 = vpop.permute.xlu0 %3941
        %3944 = vset.pattern.permute.xlu0 0
        %3945 = vperm.xlu0 %3944, %v3506
        %v3946 = vpop.permute.xlu0 %3945
        %3948 = vset.pattern.permute.xlu0 0
        %3949 = vperm.xlu0 %3948, %v3511
        %v3950 = vpop.permute.xlu0 %3949
        %3952 = vset.pattern.permute.xlu0 0
        %3953 = vperm.xlu0 %3952, %v3516
        %v3954 = vpop.permute.xlu0 %3953
        %3956 = vset.pattern.permute.xlu0 0
        %3957 = vperm.xlu0 %3956, %v3521
        %v3958 = vpop.permute.xlu0 %3957
        %3960 = vset.pattern.permute.xlu0 0
        %3961 = vperm.xlu0 %3960, %v3526
        %v3962 = vpop.permute.xlu0 %3961
        %3964 = vset.pattern.permute.xlu0 0
        %3965 = vperm.xlu0 %3964, %v3531
        %v3966 = vpop.permute.xlu0 %3965
        %3968 = vset.pattern.permute.xlu0 0
        %3969 = vperm.xlu0 %3968, %v3536
        %v3970 = vpop.permute.xlu0 %3969
        %3972 = vset.pattern.permute.xlu0 0
        %3973 = vperm.xlu0 %3972, %v3541
        %v3974 = vpop.permute.xlu0 %3973
        %3976 = vset.pattern.permute.xlu0 0
        %3977 = vperm.xlu0 %3976, %v3546
        %v3978 = vpop.permute.xlu0 %3977
        %3980 = vset.pattern.permute.xlu0 0
        %3981 = vperm.xlu0 %3980, %v3551
        %v3982 = vpop.permute.xlu0 %3981
        %3984 = vset.pattern.permute.xlu0 0
        %3985 = vperm.xlu0 %3984, %v3556
        %v3986 = vpop.permute.xlu0 %3985
        %3988 = vset.pattern.permute.xlu0 0
        %3989 = vperm.xlu0 %3988, %v3561
        %v3990 = vpop.permute.xlu0 %3989
        %3992 = vset.pattern.permute.xlu0 0
        %3993 = vperm.xlu0 %3992, %v3566
        %v3994 = vpop.permute.xlu0 %3993
        %3996 = vset.pattern.permute.xlu0 0
        %3997 = vperm.xlu0 %3996, %v3571
        %v3998 = vpop.permute.xlu0 %3997
        %4000 = vset.pattern.permute.xlu0 0
        %4001 = vperm.xlu0 %4000, %v3576
        %v4002 = vpop.permute.xlu0 %4001
        %4004 = vset.pattern.permute.xlu0 0
        %4005 = vperm.xlu0 %4004, %v3581
        %v4006 = vpop.permute.xlu0 %4005
        %4008 = vset.pattern.permute.xlu0 0
        %4009 = vperm.xlu0 %4008, %v3586
        %v4010 = vpop.permute.xlu0 %4009
        %4012 = vset.pattern.permute.xlu0 0
        %4013 = vperm.xlu0 %4012, %v3591
        %v4014 = vpop.permute.xlu0 %4013
        %4016 = vset.pattern.permute.xlu0 0
        %4017 = vperm.xlu0 %4016, %v3596
        %v4018 = vpop.permute.xlu0 %4017
        %4020 = vset.pattern.permute.xlu0 0
        %4021 = vperm.xlu0 %4020, %v3601
        %v4022 = vpop.permute.xlu0 %4021
        %4024 = vset.pattern.permute.xlu0 0
        %4025 = vperm.xlu0 %4024, %v3606
        %v4026 = vpop.permute.xlu0 %4025
        %4028 = vset.pattern.permute.xlu0 0
        %4029 = vperm.xlu0 %4028, %v3611
        %v4030 = vpop.permute.xlu0 %4029
        %4032 = vset.pattern.permute.xlu0 0
        %4033 = vperm.xlu0 %4032, %v3616
        %v4034 = vpop.permute.xlu0 %4033
        %4036 = vset.pattern.permute.xlu0 0
        %4037 = vperm.xlu0 %4036, %v3621
        %v4038 = vpop.permute.xlu0 %4037
        %v4040 = vlaneseq
        %v4041 = vshrl.u32 %v4040, 7
        %v4042 = vsub.s32 0, %v4041
        %v4043 = vrot.slane %v3832, %v4042
        %v4044 = vlaneseq
        %v4045 = vshrl.u32 %v4044, 7
        %v4046 = vsub.s32 0, %v4045
        %v4047 = vrot.slane %v3864, %v4046
        %v4048 = vadd.f32 %v3914, %v4043
        %v4049 = vadd.f32 %v3914, %v4047
        %v4050 = vadd.f32 %v3918, %v4043
        %v4051 = vadd.f32 %v3918, %v4047
        %v4052 = vadd.f32 %v3922, %v4043
        %v4053 = vadd.f32 %v3922, %v4047
        %v4054 = vadd.f32 %v3926, %v4043
        %v4055 = vadd.f32 %v3926, %v4047
        %v4056 = vadd.f32 %v3930, %v4043
        %v4057 = vadd.f32 %v3930, %v4047
        %v4058 = vadd.f32 %v3934, %v4043
        %v4059 = vadd.f32 %v3934, %v4047
        %v4060 = vadd.f32 %v3938, %v4043
        %v4061 = vadd.f32 %v3938, %v4047
        %v4062 = vadd.f32 %v3942, %v4043
        %v4063 = vadd.f32 %v3942, %v4047
        %v4064 = vadd.f32 %v3946, %v4043
        %v4065 = vadd.f32 %v3946, %v4047
        %v4066 = vadd.f32 %v3950, %v4043
        %v4067 = vadd.f32 %v3950, %v4047
        %v4068 = vadd.f32 %v3954, %v4043
        %v4069 = vadd.f32 %v3954, %v4047
        %v4070 = vadd.f32 %v3958, %v4043
        %v4071 = vadd.f32 %v3958, %v4047
        %v4072 = vadd.f32 %v3962, %v4043
        %v4073 = vadd.f32 %v3962, %v4047
        %v4074 = vadd.f32 %v3966, %v4043
        %v4075 = vadd.f32 %v3966, %v4047
        %v4076 = vadd.f32 %v3970, %v4043
        %v4077 = vadd.f32 %v3970, %v4047
        %v4078 = vadd.f32 %v3974, %v4043
        %v4079 = vadd.f32 %v3974, %v4047
        %v4080 = vadd.f32 %v3978, %v4043
        %v4081 = vadd.f32 %v3978, %v4047
        %v4082 = vadd.f32 %v3982, %v4043
        %v4083 = vadd.f32 %v3982, %v4047
        %v4084 = vadd.f32 %v3986, %v4043
        %v4085 = vadd.f32 %v3986, %v4047
        %v4086 = vadd.f32 %v3990, %v4043
        %v4087 = vadd.f32 %v3990, %v4047
        %v4088 = vadd.f32 %v3994, %v4043
        %v4089 = vadd.f32 %v3994, %v4047
        %v4090 = vadd.f32 %v3998, %v4043
        %v4091 = vadd.f32 %v3998, %v4047
        %v4092 = vadd.f32 %v4002, %v4043
        %v4093 = vadd.f32 %v4002, %v4047
        %v4094 = vadd.f32 %v4006, %v4043
        %v4095 = vadd.f32 %v4006, %v4047
        %v4096 = vadd.f32 %v4010, %v4043
        %v4097 = vadd.f32 %v4010, %v4047
        %v4098 = vadd.f32 %v4014, %v4043
        %v4099 = vadd.f32 %v4014, %v4047
        %v4100 = vadd.f32 %v4018, %v4043
        %v4101 = vadd.f32 %v4018, %v4047
        %v4102 = vadd.f32 %v4022, %v4043
        %v4103 = vadd.f32 %v4022, %v4047
        %v4104 = vadd.f32 %v4026, %v4043
        %v4105 = vadd.f32 %v4026, %v4047
        %v4106 = vadd.f32 %v4030, %v4043
        %v4107 = vadd.f32 %v4030, %v4047
        %v4108 = vadd.f32 %v4034, %v4043
        %v4109 = vadd.f32 %v4034, %v4047
        %v4110 = vadd.f32 %v4038, %v4043
        %v4111 = vadd.f32 %v4038, %v4047
        %v4112 = vmul.f32 %v4048, 0.2
        %v4113 = vmul.f32 %v4049, 0.2
        %v4114 = vmul.f32 %v4050, 0.2
        %v4115 = vmul.f32 %v4051, 0.2
        %v4116 = vmul.f32 %v4052, 0.2
        %v4117 = vmul.f32 %v4053, 0.2
        %v4118 = vmul.f32 %v4054, 0.2
        %v4119 = vmul.f32 %v4055, 0.2
        %v4120 = vmul.f32 %v4056, 0.2
        %v4121 = vmul.f32 %v4057, 0.2
        %v4122 = vmul.f32 %v4058, 0.2
        %v4123 = vmul.f32 %v4059, 0.2
        %v4124 = vmul.f32 %v4060, 0.2
        %v4125 = vmul.f32 %v4061, 0.2
        %v4126 = vmul.f32 %v4062, 0.2
        %v4127 = vmul.f32 %v4063, 0.2
        %v4128 = vmul.f32 %v4064, 0.2
        %v4129 = vmul.f32 %v4065, 0.2
        %v4130 = vmul.f32 %v4066, 0.2
        %v4131 = vmul.f32 %v4067, 0.2
        %v4132 = vmul.f32 %v4068, 0.2
        %v4133 = vmul.f32 %v4069, 0.2
        %v4134 = vmul.f32 %v4070, 0.2
        %v4135 = vmul.f32 %v4071, 0.2
        %v4136 = vmul.f32 %v4072, 0.2
        %v4137 = vmul.f32 %v4073, 0.2
        %v4138 = vmul.f32 %v4074, 0.2
        %v4139 = vmul.f32 %v4075, 0.2
        %v4140 = vmul.f32 %v4076, 0.2
        %v4141 = vmul.f32 %v4077, 0.2
        %v4142 = vmul.f32 %v4078, 0.2
        %v4143 = vmul.f32 %v4079, 0.2
        %v4144 = vmul.f32 %v4080, 0.2
        %v4145 = vmul.f32 %v4081, 0.2
        %v4146 = vmul.f32 %v4082, 0.2
        %v4147 = vmul.f32 %v4083, 0.2
        %v4148 = vmul.f32 %v4084, 0.2
        %v4149 = vmul.f32 %v4085, 0.2
        %v4150 = vmul.f32 %v4086, 0.2
        %v4151 = vmul.f32 %v4087, 0.2
        %v4152 = vmul.f32 %v4088, 0.2
        %v4153 = vmul.f32 %v4089, 0.2
        %v4154 = vmul.f32 %v4090, 0.2
        %v4155 = vmul.f32 %v4091, 0.2
        %v4156 = vmul.f32 %v4092, 0.2
        %v4157 = vmul.f32 %v4093, 0.2
        %v4158 = vmul.f32 %v4094, 0.2
        %v4159 = vmul.f32 %v4095, 0.2
        %v4160 = vmul.f32 %v4096, 0.2
        %v4161 = vmul.f32 %v4097, 0.2
        %v4162 = vmul.f32 %v4098, 0.2
        %v4163 = vmul.f32 %v4099, 0.2
        %v4164 = vmul.f32 %v4100, 0.2
        %v4165 = vmul.f32 %v4101, 0.2
        %v4166 = vmul.f32 %v4102, 0.2
        %v4167 = vmul.f32 %v4103, 0.2
        %v4168 = vmul.f32 %v4104, 0.2
        %v4169 = vmul.f32 %v4105, 0.2
        %v4170 = vmul.f32 %v4106, 0.2
        %v4171 = vmul.f32 %v4107, 0.2
        %v4172 = vmul.f32 %v4108, 0.2
        %v4173 = vmul.f32 %v4109, 0.2
        %v4174 = vmul.f32 %v4110, 0.2
        %v4175 = vmul.f32 %v4111, 0.2
        %v4176 = vmax.f32 %v4048, %v4112
        %v4177 = vmax.f32 %v4049, %v4113
        %v4178 = vmax.f32 %v4050, %v4114
        %v4179 = vmax.f32 %v4051, %v4115
        %v4180 = vmax.f32 %v4052, %v4116
        %v4181 = vmax.f32 %v4053, %v4117
        %v4182 = vmax.f32 %v4054, %v4118
        %v4183 = vmax.f32 %v4055, %v4119
        %v4184 = vmax.f32 %v4056, %v4120
        %v4185 = vmax.f32 %v4057, %v4121
        %v4186 = vmax.f32 %v4058, %v4122
        %v4187 = vmax.f32 %v4059, %v4123
        %v4188 = vmax.f32 %v4060, %v4124
        %v4189 = vmax.f32 %v4061, %v4125
        %v4190 = vmax.f32 %v4062, %v4126
        %v4191 = vmax.f32 %v4063, %v4127
        %v4192 = vmax.f32 %v4064, %v4128
        %v4193 = vmax.f32 %v4065, %v4129
        %v4194 = vmax.f32 %v4066, %v4130
        %v4195 = vmax.f32 %v4067, %v4131
        %v4196 = vmax.f32 %v4068, %v4132
        %v4197 = vmax.f32 %v4069, %v4133
        %v4198 = vmax.f32 %v4070, %v4134
        %v4199 = vmax.f32 %v4071, %v4135
        %v4200 = vmax.f32 %v4072, %v4136
        %v4201 = vmax.f32 %v4073, %v4137
        %v4202 = vmax.f32 %v4074, %v4138
        %v4203 = vmax.f32 %v4075, %v4139
        %v4204 = vmax.f32 %v4076, %v4140
        %v4205 = vmax.f32 %v4077, %v4141
        %v4206 = vmax.f32 %v4078, %v4142
        %v4207 = vmax.f32 %v4079, %v4143
        %v4208 = vmax.f32 %v4080, %v4144
        %v4209 = vmax.f32 %v4081, %v4145
        %v4210 = vmax.f32 %v4082, %v4146
        %v4211 = vmax.f32 %v4083, %v4147
        %v4212 = vmax.f32 %v4084, %v4148
        %v4213 = vmax.f32 %v4085, %v4149
        %v4214 = vmax.f32 %v4086, %v4150
        %v4215 = vmax.f32 %v4087, %v4151
        %v4216 = vmax.f32 %v4088, %v4152
        %v4217 = vmax.f32 %v4089, %v4153
        %v4218 = vmax.f32 %v4090, %v4154
        %v4219 = vmax.f32 %v4091, %v4155
        %v4220 = vmax.f32 %v4092, %v4156
        %v4221 = vmax.f32 %v4093, %v4157
        %v4222 = vmax.f32 %v4094, %v4158
        %v4223 = vmax.f32 %v4095, %v4159
        %v4224 = vmax.f32 %v4096, %v4160
        %v4225 = vmax.f32 %v4097, %v4161
        %v4226 = vmax.f32 %v4098, %v4162
        %v4227 = vmax.f32 %v4099, %v4163
        %v4228 = vmax.f32 %v4100, %v4164
        %v4229 = vmax.f32 %v4101, %v4165
        %v4230 = vmax.f32 %v4102, %v4166
        %v4231 = vmax.f32 %v4103, %v4167
        %v4232 = vmax.f32 %v4104, %v4168
        %v4233 = vmax.f32 %v4105, %v4169
        %v4234 = vmax.f32 %v4106, %v4170
        %v4235 = vmax.f32 %v4107, %v4171
        %v4236 = vmax.f32 %v4108, %v4172
        %v4237 = vmax.f32 %v4109, %v4173
        %v4238 = vmax.f32 %v4110, %v4174
        %v4239 = vmax.f32 %v4111, %v4175
        %v4240 = vadd.f32 %v4176, %v698
        %v4241 = vadd.f32 %v4177, %v699
        %v4242 = vadd.f32 %v4178, %v700
        %v4243 = vadd.f32 %v4179, %v701
        %v4244 = vadd.f32 %v4180, %v702
        %v4245 = vadd.f32 %v4181, %v703
        %v4246 = vadd.f32 %v4182, %v704
        %v4247 = vadd.f32 %v4183, %v705
        %v4248 = vadd.f32 %v4184, %v706
        %v4249 = vadd.f32 %v4185, %v707
        %v4250 = vadd.f32 %v4186, %v708
        %v4251 = vadd.f32 %v4187, %v709
        %v4252 = vadd.f32 %v4188, %v710
        %v4253 = vadd.f32 %v4189, %v711
        %v4254 = vadd.f32 %v4190, %v712
        %v4255 = vadd.f32 %v4191, %v713
        %v4256 = vadd.f32 %v4192, %v714
        %v4257 = vadd.f32 %v4193, %v715
        %v4258 = vadd.f32 %v4194, %v716
        %v4259 = vadd.f32 %v4195, %v717
        %v4260 = vadd.f32 %v4196, %v718
        %v4261 = vadd.f32 %v4197, %v719
        %v4262 = vadd.f32 %v4198, %v720
        %v4263 = vadd.f32 %v4199, %v721
        %v4264 = vadd.f32 %v4200, %v722
        %v4265 = vadd.f32 %v4201, %v723
        %v4266 = vadd.f32 %v4202, %v724
        %v4267 = vadd.f32 %v4203, %v725
        %v4268 = vadd.f32 %v4204, %v726
        %v4269 = vadd.f32 %v4205, %v727
        %v4270 = vadd.f32 %v4206, %v728
        %v4271 = vadd.f32 %v4207, %v729
        %v4272 = vadd.f32 %v4208, %v730
        %v4273 = vadd.f32 %v4209, %v731
        %v4274 = vadd.f32 %v4210, %v732
        %v4275 = vadd.f32 %v4211, %v733
        %v4276 = vadd.f32 %v4212, %v734
        %v4277 = vadd.f32 %v4213, %v735
        %v4278 = vadd.f32 %v4214, %v736
        %v4279 = vadd.f32 %v4215, %v737
        %v4280 = vadd.f32 %v4216, %v738
        %v4281 = vadd.f32 %v4217, %v739
        %v4282 = vadd.f32 %v4218, %v740
        %v4283 = vadd.f32 %v4219, %v741
        %v4284 = vadd.f32 %v4220, %v742
        %v4285 = vadd.f32 %v4221, %v743
        %v4286 = vadd.f32 %v4222, %v744
        %v4287 = vadd.f32 %v4223, %v745
        %v4288 = vadd.f32 %v4224, %v746
        %v4289 = vadd.f32 %v4225, %v747
        %v4290 = vadd.f32 %v4226, %v748
        %v4291 = vadd.f32 %v4227, %v749
        %v4292 = vadd.f32 %v4228, %v750
        %v4293 = vadd.f32 %v4229, %v751
        %v4294 = vadd.f32 %v4230, %v752
        %v4295 = vadd.f32 %v4231, %v753
        %v4296 = vadd.f32 %v4232, %v754
        %v4297 = vadd.f32 %v4233, %v755
        %v4298 = vadd.f32 %v4234, %v756
        %v4299 = vadd.f32 %v4235, %v757
        %v4300 = vadd.f32 %v4236, %v758
        %v4301 = vadd.f32 %v4237, %v759
        %v4302 = vadd.f32 %v4238, %v760
        %v4303 = vadd.f32 %v4239, %v761
        %v4304 = vmax.f32 %v4240, %v4241
        %4305 = vmax.xlane.f32.xlu0 %v4304
        %v4306 = vpop.xlane.xlu0 %4305
        %v4307 = vmax.f32 %v4242, %v4243
        %4308 = vmax.xlane.f32.xlu0 %v4307
        %v4309 = vpop.xlane.xlu0 %4308
        %v4310 = vmax.f32 %v4244, %v4245
        %4311 = vmax.xlane.f32.xlu0 %v4310
        %v4312 = vpop.xlane.xlu0 %4311
        %v4313 = vmax.f32 %v4246, %v4247
        %4314 = vmax.xlane.f32.xlu0 %v4313
        %v4315 = vpop.xlane.xlu0 %4314
        %v4316 = vmax.f32 %v4248, %v4249
        %4317 = vmax.xlane.f32.xlu0 %v4316
        %v4318 = vpop.xlane.xlu0 %4317
        %v4319 = vmax.f32 %v4250, %v4251
        %4320 = vmax.xlane.f32.xlu0 %v4319
        %v4321 = vpop.xlane.xlu0 %4320
        %v4322 = vmax.f32 %v4252, %v4253
        %4323 = vmax.xlane.f32.xlu0 %v4322
        %v4324 = vpop.xlane.xlu0 %4323
        %v4325 = vmax.f32 %v4254, %v4255
        %4326 = vmax.xlane.f32.xlu0 %v4325
        %v4327 = vpop.xlane.xlu0 %4326
        %v4328 = vmax.f32 %v4256, %v4257
        %4329 = vmax.xlane.f32.xlu0 %v4328
        %v4330 = vpop.xlane.xlu0 %4329
        %v4331 = vmax.f32 %v4258, %v4259
        %4332 = vmax.xlane.f32.xlu0 %v4331
        %v4333 = vpop.xlane.xlu0 %4332
        %v4334 = vmax.f32 %v4260, %v4261
        %4335 = vmax.xlane.f32.xlu0 %v4334
        %v4336 = vpop.xlane.xlu0 %4335
        %v4337 = vmax.f32 %v4262, %v4263
        %4338 = vmax.xlane.f32.xlu0 %v4337
        %v4339 = vpop.xlane.xlu0 %4338
        %v4340 = vmax.f32 %v4264, %v4265
        %4341 = vmax.xlane.f32.xlu0 %v4340
        %v4342 = vpop.xlane.xlu0 %4341
        %v4343 = vmax.f32 %v4266, %v4267
        %4344 = vmax.xlane.f32.xlu0 %v4343
        %v4345 = vpop.xlane.xlu0 %4344
        %v4346 = vmax.f32 %v4268, %v4269
        %4347 = vmax.xlane.f32.xlu0 %v4346
        %v4348 = vpop.xlane.xlu0 %4347
        %v4349 = vmax.f32 %v4270, %v4271
        %4350 = vmax.xlane.f32.xlu0 %v4349
        %v4351 = vpop.xlane.xlu0 %4350
        %v4352 = vmax.f32 %v4272, %v4273
        %4353 = vmax.xlane.f32.xlu0 %v4352
        %v4354 = vpop.xlane.xlu0 %4353
        %v4355 = vmax.f32 %v4274, %v4275
        %4356 = vmax.xlane.f32.xlu0 %v4355
        %v4357 = vpop.xlane.xlu0 %4356
        %v4358 = vmax.f32 %v4276, %v4277
        %4359 = vmax.xlane.f32.xlu0 %v4358
        %v4360 = vpop.xlane.xlu0 %4359
        %v4361 = vmax.f32 %v4278, %v4279
        %4362 = vmax.xlane.f32.xlu0 %v4361
        %v4363 = vpop.xlane.xlu0 %4362
        %v4364 = vmax.f32 %v4280, %v4281
        %4365 = vmax.xlane.f32.xlu0 %v4364
        %v4366 = vpop.xlane.xlu0 %4365
        %v4367 = vmax.f32 %v4282, %v4283
        %4368 = vmax.xlane.f32.xlu0 %v4367
        %v4369 = vpop.xlane.xlu0 %4368
        %v4370 = vmax.f32 %v4284, %v4285
        %4371 = vmax.xlane.f32.xlu0 %v4370
        %v4372 = vpop.xlane.xlu0 %4371
        %v4373 = vmax.f32 %v4286, %v4287
        %4374 = vmax.xlane.f32.xlu0 %v4373
        %v4375 = vpop.xlane.xlu0 %4374
        %v4376 = vmax.f32 %v4288, %v4289
        %4377 = vmax.xlane.f32.xlu0 %v4376
        %v4378 = vpop.xlane.xlu0 %4377
        %v4379 = vmax.f32 %v4290, %v4291
        %4380 = vmax.xlane.f32.xlu0 %v4379
        %v4381 = vpop.xlane.xlu0 %4380
        %v4382 = vmax.f32 %v4292, %v4293
        %4383 = vmax.xlane.f32.xlu0 %v4382
        %v4384 = vpop.xlane.xlu0 %4383
        %v4385 = vmax.f32 %v4294, %v4295
        %4386 = vmax.xlane.f32.xlu0 %v4385
        %v4387 = vpop.xlane.xlu0 %4386
        %v4388 = vmax.f32 %v4296, %v4297
        %4389 = vmax.xlane.f32.xlu0 %v4388
        %v4390 = vpop.xlane.xlu0 %4389
        %v4391 = vmax.f32 %v4298, %v4299
        %4392 = vmax.xlane.f32.xlu0 %v4391
        %v4393 = vpop.xlane.xlu0 %4392
        %v4394 = vmax.f32 %v4300, %v4301
        %4395 = vmax.xlane.f32.xlu0 %v4394
        %v4396 = vpop.xlane.xlu0 %4395
        %v4397 = vmax.f32 %v4302, %v4303
        %4398 = vmax.xlane.f32.xlu0 %v4397
        %v4399 = vpop.xlane.xlu0 %4398
        %v4400 = vsub.f32 %v4240, %v4306
        %v4401 = vsub.f32 %v4241, %v4306
        %v4402 = vsub.f32 %v4242, %v4309
        %v4403 = vsub.f32 %v4243, %v4309
        %v4404 = vsub.f32 %v4244, %v4312
        %v4405 = vsub.f32 %v4245, %v4312
        %v4406 = vsub.f32 %v4246, %v4315
        %v4407 = vsub.f32 %v4247, %v4315
        %v4408 = vsub.f32 %v4248, %v4318
        %v4409 = vsub.f32 %v4249, %v4318
        %v4410 = vsub.f32 %v4250, %v4321
        %v4411 = vsub.f32 %v4251, %v4321
        %v4412 = vsub.f32 %v4252, %v4324
        %v4413 = vsub.f32 %v4253, %v4324
        %v4414 = vsub.f32 %v4254, %v4327
        %v4415 = vsub.f32 %v4255, %v4327
        %v4416 = vsub.f32 %v4256, %v4330
        %v4417 = vsub.f32 %v4257, %v4330
        %v4418 = vsub.f32 %v4258, %v4333
        %v4419 = vsub.f32 %v4259, %v4333
        %v4420 = vsub.f32 %v4260, %v4336
        %v4421 = vsub.f32 %v4261, %v4336
        %v4422 = vsub.f32 %v4262, %v4339
        %v4423 = vsub.f32 %v4263, %v4339
        %v4424 = vsub.f32 %v4264, %v4342
        %v4425 = vsub.f32 %v4265, %v4342
        %v4426 = vsub.f32 %v4266, %v4345
        %v4427 = vsub.f32 %v4267, %v4345
        %v4428 = vsub.f32 %v4268, %v4348
        %v4429 = vsub.f32 %v4269, %v4348
        %v4430 = vsub.f32 %v4270, %v4351
        %v4431 = vsub.f32 %v4271, %v4351
        %v4432 = vsub.f32 %v4272, %v4354
        %v4433 = vsub.f32 %v4273, %v4354
        %v4434 = vsub.f32 %v4274, %v4357
        %v4435 = vsub.f32 %v4275, %v4357
        %v4436 = vsub.f32 %v4276, %v4360
        %v4437 = vsub.f32 %v4277, %v4360
        %v4438 = vsub.f32 %v4278, %v4363
        %v4439 = vsub.f32 %v4279, %v4363
        %v4440 = vsub.f32 %v4280, %v4366
        %v4441 = vsub.f32 %v4281, %v4366
        %v4442 = vsub.f32 %v4282, %v4369
        %v4443 = vsub.f32 %v4283, %v4369
        %v4444 = vsub.f32 %v4284, %v4372
        %v4445 = vsub.f32 %v4285, %v4372
        %v4446 = vsub.f32 %v4286, %v4375
        %v4447 = vsub.f32 %v4287, %v4375
        %v4448 = vsub.f32 %v4288, %v4378
        %v4449 = vsub.f32 %v4289, %v4378
        %v4450 = vsub.f32 %v4290, %v4381
        %v4451 = vsub.f32 %v4291, %v4381
        %v4452 = vsub.f32 %v4292, %v4384
        %v4453 = vsub.f32 %v4293, %v4384
        %v4454 = vsub.f32 %v4294, %v4387
        %v4455 = vsub.f32 %v4295, %v4387
        %v4456 = vsub.f32 %v4296, %v4390
        %v4457 = vsub.f32 %v4297, %v4390
        %v4458 = vsub.f32 %v4298, %v4393
        %v4459 = vsub.f32 %v4299, %v4393
        %v4460 = vsub.f32 %v4300, %v4396
        %v4461 = vsub.f32 %v4301, %v4396
        %v4462 = vsub.f32 %v4302, %v4399
        %v4463 = vsub.f32 %v4303, %v4399
        %v4464 = vmul.f32 %v4400, 1.442695
        %v4465 = vpow.pop %v4464
        %v4466 = vmul.f32 %v4401, 1.442695
        %v4467 = vpow.pop %v4466
        %v4468 = vmul.f32 %v4402, 1.442695
        %v4469 = vpow.pop %v4468
        %v4470 = vmul.f32 %v4403, 1.442695
        %v4471 = vpow.pop %v4470
        %v4472 = vmul.f32 %v4404, 1.442695
        %v4473 = vpow.pop %v4472
        %v4474 = vmul.f32 %v4405, 1.442695
        %v4475 = vpow.pop %v4474
        %v4476 = vmul.f32 %v4406, 1.442695
        %v4477 = vpow.pop %v4476
        %v4478 = vmul.f32 %v4407, 1.442695
        %v4479 = vpow.pop %v4478
        %v4480 = vmul.f32 %v4408, 1.442695
        %v4481 = vpow.pop %v4480
        %v4482 = vmul.f32 %v4409, 1.442695
        %v4483 = vpow.pop %v4482
        %v4484 = vmul.f32 %v4410, 1.442695
        %v4485 = vpow.pop %v4484
        %v4486 = vmul.f32 %v4411, 1.442695
        %v4487 = vpow.pop %v4486
        %v4488 = vmul.f32 %v4412, 1.442695
        %v4489 = vpow.pop %v4488
        %v4490 = vmul.f32 %v4413, 1.442695
        %v4491 = vpow.pop %v4490
        %v4492 = vmul.f32 %v4414, 1.442695
        %v4493 = vpow.pop %v4492
        %v4494 = vmul.f32 %v4415, 1.442695
        %v4495 = vpow.pop %v4494
        %v4496 = vmul.f32 %v4416, 1.442695
        %v4497 = vpow.pop %v4496
        %v4498 = vmul.f32 %v4417, 1.442695
        %v4499 = vpow.pop %v4498
        %v4500 = vmul.f32 %v4418, 1.442695
        %v4501 = vpow.pop %v4500
        %v4502 = vmul.f32 %v4419, 1.442695
        %v4503 = vpow.pop %v4502
        %v4504 = vmul.f32 %v4420, 1.442695
        %v4505 = vpow.pop %v4504
        %v4506 = vmul.f32 %v4421, 1.442695
        %v4507 = vpow.pop %v4506
        %v4508 = vmul.f32 %v4422, 1.442695
        %v4509 = vpow.pop %v4508
        %v4510 = vmul.f32 %v4423, 1.442695
        %v4511 = vpow.pop %v4510
        %v4512 = vmul.f32 %v4424, 1.442695
        %v4513 = vpow.pop %v4512
        %v4514 = vmul.f32 %v4425, 1.442695
        %v4515 = vpow.pop %v4514
        %v4516 = vmul.f32 %v4426, 1.442695
        %v4517 = vpow.pop %v4516
        %v4518 = vmul.f32 %v4427, 1.442695
        %v4519 = vpow.pop %v4518
        %v4520 = vmul.f32 %v4428, 1.442695
        %v4521 = vpow.pop %v4520
        %v4522 = vmul.f32 %v4429, 1.442695
        %v4523 = vpow.pop %v4522
        %v4524 = vmul.f32 %v4430, 1.442695
        %v4525 = vpow.pop %v4524
        %v4526 = vmul.f32 %v4431, 1.442695
        %v4527 = vpow.pop %v4526
        %v4528 = vmul.f32 %v4432, 1.442695
        %v4529 = vpow.pop %v4528
        %v4530 = vmul.f32 %v4433, 1.442695
        %v4531 = vpow.pop %v4530
        %v4532 = vmul.f32 %v4434, 1.442695
        %v4533 = vpow.pop %v4532
        %v4534 = vmul.f32 %v4435, 1.442695
        %v4535 = vpow.pop %v4534
        %v4536 = vmul.f32 %v4436, 1.442695
        %v4537 = vpow.pop %v4536
        %v4538 = vmul.f32 %v4437, 1.442695
        %v4539 = vpow.pop %v4538
        %v4540 = vmul.f32 %v4438, 1.442695
        %v4541 = vpow.pop %v4540
        %v4542 = vmul.f32 %v4439, 1.442695
        %v4543 = vpow.pop %v4542
        %v4544 = vmul.f32 %v4440, 1.442695
        %v4545 = vpow.pop %v4544
        %v4546 = vmul.f32 %v4441, 1.442695
        %v4547 = vpow.pop %v4546
        %v4548 = vmul.f32 %v4442, 1.442695
        %v4549 = vpow.pop %v4548
        %v4550 = vmul.f32 %v4443, 1.442695
        %v4551 = vpow.pop %v4550
        %v4552 = vmul.f32 %v4444, 1.442695
        %v4553 = vpow.pop %v4552
        %v4554 = vmul.f32 %v4445, 1.442695
        %v4555 = vpow.pop %v4554
        %v4556 = vmul.f32 %v4446, 1.442695
        %v4557 = vpow.pop %v4556
        %v4558 = vmul.f32 %v4447, 1.442695
        %v4559 = vpow.pop %v4558
        %v4560 = vmul.f32 %v4448, 1.442695
        %v4561 = vpow.pop %v4560
        %v4562 = vmul.f32 %v4449, 1.442695
        %v4563 = vpow.pop %v4562
        %v4564 = vmul.f32 %v4450, 1.442695
        %v4565 = vpow.pop %v4564
        %v4566 = vmul.f32 %v4451, 1.442695
        %v4567 = vpow.pop %v4566
        %v4568 = vmul.f32 %v4452, 1.442695
        %v4569 = vpow.pop %v4568
        %v4570 = vmul.f32 %v4453, 1.442695
        %v4571 = vpow.pop %v4570
        %v4572 = vmul.f32 %v4454, 1.442695
        %v4573 = vpow.pop %v4572
        %v4574 = vmul.f32 %v4455, 1.442695
        %v4575 = vpow.pop %v4574
        %v4576 = vmul.f32 %v4456, 1.442695
        %v4577 = vpow.pop %v4576
        %v4578 = vmul.f32 %v4457, 1.442695
        %v4579 = vpow.pop %v4578
        %v4580 = vmul.f32 %v4458, 1.442695
        %v4581 = vpow.pop %v4580
        %v4582 = vmul.f32 %v4459, 1.442695
        %v4583 = vpow.pop %v4582
        %v4584 = vmul.f32 %v4460, 1.442695
        %v4585 = vpow.pop %v4584
        %v4586 = vmul.f32 %v4461, 1.442695
        %v4587 = vpow.pop %v4586
        %v4588 = vmul.f32 %v4462, 1.442695
        %v4589 = vpow.pop %v4588
        %v4590 = vmul.f32 %v4463, 1.442695
        %v4591 = vpow.pop %v4590
        %v4592 = vadd.f32 %v4465, %v4467
        %4593 = vadd.xlane.f32.xlu0 %v4592
        %v4594 = vpop.xlane.xlu0 %4593
        %v4595 = vadd.f32 %v4469, %v4471
        %4596 = vadd.xlane.f32.xlu0 %v4595
        %v4597 = vpop.xlane.xlu0 %4596
        %v4598 = vadd.f32 %v4473, %v4475
        %4599 = vadd.xlane.f32.xlu0 %v4598
        %v4600 = vpop.xlane.xlu0 %4599
        %v4601 = vadd.f32 %v4477, %v4479
        %4602 = vadd.xlane.f32.xlu0 %v4601
        %v4603 = vpop.xlane.xlu0 %4602
        %v4604 = vadd.f32 %v4481, %v4483
        %4605 = vadd.xlane.f32.xlu0 %v4604
        %v4606 = vpop.xlane.xlu0 %4605
        %v4607 = vadd.f32 %v4485, %v4487
        %4608 = vadd.xlane.f32.xlu0 %v4607
        %v4609 = vpop.xlane.xlu0 %4608
        %v4610 = vadd.f32 %v4489, %v4491
        %4611 = vadd.xlane.f32.xlu0 %v4610
        %v4612 = vpop.xlane.xlu0 %4611
        %v4613 = vadd.f32 %v4493, %v4495
        %4614 = vadd.xlane.f32.xlu0 %v4613
        %v4615 = vpop.xlane.xlu0 %4614
        %v4616 = vadd.f32 %v4497, %v4499
        %4617 = vadd.xlane.f32.xlu0 %v4616
        %v4618 = vpop.xlane.xlu0 %4617
        %v4619 = vadd.f32 %v4501, %v4503
        %4620 = vadd.xlane.f32.xlu0 %v4619
        %v4621 = vpop.xlane.xlu0 %4620
        %v4622 = vadd.f32 %v4505, %v4507
        %4623 = vadd.xlane.f32.xlu0 %v4622
        %v4624 = vpop.xlane.xlu0 %4623
        %v4625 = vadd.f32 %v4509, %v4511
        %4626 = vadd.xlane.f32.xlu0 %v4625
        %v4627 = vpop.xlane.xlu0 %4626
        %v4628 = vadd.f32 %v4513, %v4515
        %4629 = vadd.xlane.f32.xlu0 %v4628
        %v4630 = vpop.xlane.xlu0 %4629
        %v4631 = vadd.f32 %v4517, %v4519
        %4632 = vadd.xlane.f32.xlu0 %v4631
        %v4633 = vpop.xlane.xlu0 %4632
        %v4634 = vadd.f32 %v4521, %v4523
        %4635 = vadd.xlane.f32.xlu0 %v4634
        %v4636 = vpop.xlane.xlu0 %4635
        %v4637 = vadd.f32 %v4525, %v4527
        %4638 = vadd.xlane.f32.xlu0 %v4637
        %v4639 = vpop.xlane.xlu0 %4638
        %v4640 = vadd.f32 %v4529, %v4531
        %4641 = vadd.xlane.f32.xlu0 %v4640
        %v4642 = vpop.xlane.xlu0 %4641
        %v4643 = vadd.f32 %v4533, %v4535
        %4644 = vadd.xlane.f32.xlu0 %v4643
        %v4645 = vpop.xlane.xlu0 %4644
        %v4646 = vadd.f32 %v4537, %v4539
        %4647 = vadd.xlane.f32.xlu0 %v4646
        %v4648 = vpop.xlane.xlu0 %4647
        %v4649 = vadd.f32 %v4541, %v4543
        %4650 = vadd.xlane.f32.xlu0 %v4649
        %v4651 = vpop.xlane.xlu0 %4650
        %v4652 = vadd.f32 %v4545, %v4547
        %4653 = vadd.xlane.f32.xlu0 %v4652
        %v4654 = vpop.xlane.xlu0 %4653
        %v4655 = vadd.f32 %v4549, %v4551
        %4656 = vadd.xlane.f32.xlu0 %v4655
        %v4657 = vpop.xlane.xlu0 %4656
        %v4658 = vadd.f32 %v4553, %v4555
        %4659 = vadd.xlane.f32.xlu0 %v4658
        %v4660 = vpop.xlane.xlu0 %4659
        %v4661 = vadd.f32 %v4557, %v4559
        %4662 = vadd.xlane.f32.xlu0 %v4661
        %v4663 = vpop.xlane.xlu0 %4662
        %v4664 = vadd.f32 %v4561, %v4563
        %4665 = vadd.xlane.f32.xlu0 %v4664
        %v4666 = vpop.xlane.xlu0 %4665
        %v4667 = vadd.f32 %v4565, %v4567
        %4668 = vadd.xlane.f32.xlu0 %v4667
        %v4669 = vpop.xlane.xlu0 %4668
        %v4670 = vadd.f32 %v4569, %v4571
        %4671 = vadd.xlane.f32.xlu0 %v4670
        %v4672 = vpop.xlane.xlu0 %4671
        %v4673 = vadd.f32 %v4573, %v4575
        %4674 = vadd.xlane.f32.xlu0 %v4673
        %v4675 = vpop.xlane.xlu0 %4674
        %v4676 = vadd.f32 %v4577, %v4579
        %4677 = vadd.xlane.f32.xlu0 %v4676
        %v4678 = vpop.xlane.xlu0 %4677
        %v4679 = vadd.f32 %v4581, %v4583
        %4680 = vadd.xlane.f32.xlu0 %v4679
        %v4681 = vpop.xlane.xlu0 %4680
        %v4682 = vadd.f32 %v4585, %v4587
        %4683 = vadd.xlane.f32.xlu0 %v4682
        %v4684 = vpop.xlane.xlu0 %4683
        %v4685 = vadd.f32 %v4589, %v4591
        %4686 = vadd.xlane.f32.xlu0 %v4685
        %v4687 = vpop.xlane.xlu0 %4686
        %v4688 = vrcp.pop %v4594
        %v4689 = vrcp.pop %v4597
        %v4690 = vrcp.pop %v4600
        %v4691 = vrcp.pop %v4603
        %v4692 = vrcp.pop %v4606
        %v4693 = vrcp.pop %v4609
        %v4694 = vrcp.pop %v4612
        %v4695 = vrcp.pop %v4615
        %v4696 = vrcp.pop %v4618
        %v4697 = vrcp.pop %v4621
        %v4698 = vrcp.pop %v4624
        %v4699 = vrcp.pop %v4627
        %v4700 = vrcp.pop %v4630
        %v4701 = vrcp.pop %v4633
        %v4702 = vrcp.pop %v4636
        %v4703 = vrcp.pop %v4639
        %v4704 = vrcp.pop %v4642
        %v4705 = vrcp.pop %v4645
        %v4706 = vrcp.pop %v4648
        %v4707 = vrcp.pop %v4651
        %v4708 = vrcp.pop %v4654
        %v4709 = vrcp.pop %v4657
        %v4710 = vrcp.pop %v4660
        %v4711 = vrcp.pop %v4663
        %v4712 = vrcp.pop %v4666
        %v4713 = vrcp.pop %v4669
        %v4714 = vrcp.pop %v4672
        %v4715 = vrcp.pop %v4675
        %v4716 = vrcp.pop %v4678
        %v4717 = vrcp.pop %v4681
        %v4718 = vrcp.pop %v4684
        %v4719 = vrcp.pop %v4687
        %v4720 = vmul.f32 %v4465, %v4688
        %v4721 = vmul.f32 %v4467, %v4688
        %v4722 = vmul.f32 %v4469, %v4689
        %v4723 = vmul.f32 %v4471, %v4689
        %v4724 = vmul.f32 %v4473, %v4690
        %v4725 = vmul.f32 %v4475, %v4690
        %v4726 = vmul.f32 %v4477, %v4691
        %v4727 = vmul.f32 %v4479, %v4691
        %v4728 = vmul.f32 %v4481, %v4692
        %v4729 = vmul.f32 %v4483, %v4692
        %v4730 = vmul.f32 %v4485, %v4693
        %v4731 = vmul.f32 %v4487, %v4693
        %v4732 = vmul.f32 %v4489, %v4694
        %v4733 = vmul.f32 %v4491, %v4694
        %v4734 = vmul.f32 %v4493, %v4695
        %v4735 = vmul.f32 %v4495, %v4695
        %v4736 = vmul.f32 %v4497, %v4696
        %v4737 = vmul.f32 %v4499, %v4696
        %v4738 = vmul.f32 %v4501, %v4697
        %v4739 = vmul.f32 %v4503, %v4697
        %v4740 = vmul.f32 %v4505, %v4698
        %v4741 = vmul.f32 %v4507, %v4698
        %v4742 = vmul.f32 %v4509, %v4699
        %v4743 = vmul.f32 %v4511, %v4699
        %v4744 = vmul.f32 %v4513, %v4700
        %v4745 = vmul.f32 %v4515, %v4700
        %v4746 = vmul.f32 %v4517, %v4701
        %v4747 = vmul.f32 %v4519, %v4701
        %v4748 = vmul.f32 %v4521, %v4702
        %v4749 = vmul.f32 %v4523, %v4702
        %v4750 = vmul.f32 %v4525, %v4703
        %v4751 = vmul.f32 %v4527, %v4703
        %v4752 = vmul.f32 %v4529, %v4704
        %v4753 = vmul.f32 %v4531, %v4704
        %v4754 = vmul.f32 %v4533, %v4705
        %v4755 = vmul.f32 %v4535, %v4705
        %v4756 = vmul.f32 %v4537, %v4706
        %v4757 = vmul.f32 %v4539, %v4706
        %v4758 = vmul.f32 %v4541, %v4707
        %v4759 = vmul.f32 %v4543, %v4707
        %v4760 = vmul.f32 %v4545, %v4708
        %v4761 = vmul.f32 %v4547, %v4708
        %v4762 = vmul.f32 %v4549, %v4709
        %v4763 = vmul.f32 %v4551, %v4709
        %v4764 = vmul.f32 %v4553, %v4710
        %v4765 = vmul.f32 %v4555, %v4710
        %v4766 = vmul.f32 %v4557, %v4711
        %v4767 = vmul.f32 %v4559, %v4711
        %v4768 = vmul.f32 %v4561, %v4712
        %v4769 = vmul.f32 %v4563, %v4712
        %v4770 = vmul.f32 %v4565, %v4713
        %v4771 = vmul.f32 %v4567, %v4713
        %v4772 = vmul.f32 %v4569, %v4714
        %v4773 = vmul.f32 %v4571, %v4714
        %v4774 = vmul.f32 %v4573, %v4715
        %v4775 = vmul.f32 %v4575, %v4715
        %v4776 = vmul.f32 %v4577, %v4716
        %v4777 = vmul.f32 %v4579, %v4716
        %v4778 = vmul.f32 %v4581, %v4717
        %v4779 = vmul.f32 %v4583, %v4717
        %v4780 = vmul.f32 %v4585, %v4718
        %v4781 = vmul.f32 %v4587, %v4718
        %v4782 = vmul.f32 %v4589, %v4719
        %v4783 = vmul.f32 %v4591, %v4719
        %4784 = vmatprep.subr.mxu0 0.0
        %4785 = vmatpush1.msra.mxu0 %v3895
        %4786 = vmatprep.subr.mxu0 0.0
        %4787 = vmatpush1.msra.mxu0 %v3894
        %4788 = vmatprep.subr.mxu0 0.0
        %4789 = vmatpush1.msra.mxu0 %v3893
        %4790 = vmatprep.subr.mxu0 0.0
        %4791 = vmatpush1.msra.mxu0 %v3892
        %4792 = vmatprep.subr.mxu0 0.0
        %4793 = vmatpush1.msra.mxu0 %v3891
        %4794 = vmatprep.subr.mxu0 0.0
        %4795 = vmatpush1.msra.mxu0 %v3890
        %4796 = vmatprep.subr.mxu0 0.0
        %4797 = vmatpush1.msra.mxu0 %v3889
        %4798 = vmatprep.subr.mxu0 0.0
        %4799 = vmatpush1.msra.mxu0 %v3888
        %4800 = vmatprep.subr.mxu0 0.0
        %4801 = vmatpush1.msra.mxu0 %v3887
        %4802 = vmatprep.subr.mxu0 0.0
        %4803 = vmatpush1.msra.mxu0 %v3886
        %4804 = vmatprep.subr.mxu0 0.0
        %4805 = vmatpush1.msra.mxu0 %v3885
        %4806 = vmatprep.subr.mxu0 0.0
        %4807 = vmatpush1.msra.mxu0 %v3884
        %4808 = vmatprep.subr.mxu0 0.0
        %4809 = vmatpush1.msra.mxu0 %v3883
        %4810 = vmatprep.subr.mxu0 0.0
        %4811 = vmatpush1.msra.mxu0 %v3882
        %4812 = vmatprep.subr.mxu0 0.0
        %4813 = vmatpush1.msra.mxu0 %v3881
        %4814 = vmatprep.subr.mxu0 0.0
        %4815 = vmatpush1.msra.mxu0 %v3880
        %4816 = vmatprep.subr.mxu0 0.0
        %4817 = vmatpush2.msra.mxu0 %v3911
        %4818 = vmatprep.subr.mxu0 0.0
        %4819 = vmatpush2.msra.mxu0 %v3910
        %4820 = vmatprep.subr.mxu0 0.0
        %4821 = vmatpush2.msra.mxu0 %v3909
        %4822 = vmatprep.subr.mxu0 0.0
        %4823 = vmatpush2.msra.mxu0 %v3908
        %4824 = vmatprep.subr.mxu0 0.0
        %4825 = vmatpush2.msra.mxu0 %v3907
        %4826 = vmatprep.subr.mxu0 0.0
        %4827 = vmatpush2.msra.mxu0 %v3906
        %4828 = vmatprep.subr.mxu0 0.0
        %4829 = vmatpush2.msra.mxu0 %v3905
        %4830 = vmatprep.subr.mxu0 0.0
        %4831 = vmatpush2.msra.mxu0 %v3904
        %4832 = vmatprep.subr.mxu0 0.0
        %4833 = vmatpush2.msra.mxu0 %v3903
        %4834 = vmatprep.subr.mxu0 0.0
        %4835 = vmatpush2.msra.mxu0 %v3902
        %4836 = vmatprep.subr.mxu0 0.0
        %4837 = vmatpush2.msra.mxu0 %v3901
        %4838 = vmatprep.subr.mxu0 0.0
        %4839 = vmatpush2.msra.mxu0 %v3900
        %4840 = vmatprep.subr.mxu0 0.0
        %4841 = vmatpush2.msra.mxu0 %v3899
        %4842 = vmatprep.subr.mxu0 0.0
        %4843 = vmatpush2.msra.mxu0 %v3898
        %4844 = vmatprep.subr.mxu0 0.0
        %4845 = vmatpush2.msra.mxu0 %v3897
        %4846 = vmatprep.subr.mxu0 0.0
        %4847 = vmatpush2.msra.mxu0 %v3896
        %4848 = vmatprep.mubr.f32.mxu0 %v4721
        %4849 = vmatmul.mubr.f32.gmra.mxu0 %v4720
        %v4850 = vpop.f32.mrf.mxu0
        %v4851 = vadd.f32 0.0, %v4850
        %v4852 = vpop.f32.mrf.mxu0
        %4853 = vmatprep.mubr.f32.mxu0 %v4723
        %4854 = vmatmul.mubr.f32.gmra.mxu0 %v4722
        %v4855 = vpop.f32.mrf.mxu0
        %v4856 = vadd.f32 0.0, %v4855
        %v4857 = vpop.f32.mrf.mxu0
        %4858 = vmatprep.mubr.f32.mxu0 %v4725
        %4859 = vmatmul.mubr.f32.gmra.mxu0 %v4724
        %v4860 = vpop.f32.mrf.mxu0
        %v4861 = vadd.f32 0.0, %v4860
        %v4862 = vpop.f32.mrf.mxu0
        %4863 = vmatprep.mubr.f32.mxu0 %v4727
        %4864 = vmatmul.mubr.f32.gmra.mxu0 %v4726
        %v4865 = vpop.f32.mrf.mxu0
        %v4866 = vadd.f32 0.0, %v4865
        %v4867 = vpop.f32.mrf.mxu0
        %4868 = vmatprep.mubr.f32.mxu0 %v4729
        %4869 = vmatmul.mubr.f32.gmra.mxu0 %v4728
        %v4870 = vpop.f32.mrf.mxu0
        %v4871 = vadd.f32 0.0, %v4870
        %v4872 = vpop.f32.mrf.mxu0
        %4873 = vmatprep.mubr.f32.mxu0 %v4731
        %4874 = vmatmul.mubr.f32.gmra.mxu0 %v4730
        %v4875 = vpop.f32.mrf.mxu0
        %v4876 = vadd.f32 0.0, %v4875
        %v4877 = vpop.f32.mrf.mxu0
        %4878 = vmatprep.mubr.f32.mxu0 %v4733
        %4879 = vmatmul.mubr.f32.gmra.mxu0 %v4732
        %v4880 = vpop.f32.mrf.mxu0
        %v4881 = vadd.f32 0.0, %v4880
        %v4882 = vpop.f32.mrf.mxu0
        %4883 = vmatprep.mubr.f32.mxu0 %v4735
        %4884 = vmatmul.mubr.f32.gmra.mxu0 %v4734
        %v4885 = vpop.f32.mrf.mxu0
        %v4886 = vadd.f32 0.0, %v4885
        %v4887 = vpop.f32.mrf.mxu0
        %4888 = vmatprep.mubr.f32.mxu0 %v4737
        %4889 = vmatmul.mubr.f32.gmra.mxu0 %v4736
        %v4890 = vpop.f32.mrf.mxu0
        %v4891 = vadd.f32 0.0, %v4890
        %v4892 = vpop.f32.mrf.mxu0
        %4893 = vmatprep.mubr.f32.mxu0 %v4739
        %4894 = vmatmul.mubr.f32.gmra.mxu0 %v4738
        %v4895 = vpop.f32.mrf.mxu0
        %v4896 = vadd.f32 0.0, %v4895
        %v4897 = vpop.f32.mrf.mxu0
        %4898 = vmatprep.mubr.f32.mxu0 %v4741
        %4899 = vmatmul.mubr.f32.gmra.mxu0 %v4740
        %v4900 = vpop.f32.mrf.mxu0
        %v4901 = vadd.f32 0.0, %v4900
        %v4902 = vpop.f32.mrf.mxu0
        %4903 = vmatprep.mubr.f32.mxu0 %v4743
        %4904 = vmatmul.mubr.f32.gmra.mxu0 %v4742
        %v4905 = vpop.f32.mrf.mxu0
        %v4906 = vadd.f32 0.0, %v4905
        %v4907 = vpop.f32.mrf.mxu0
        %4908 = vmatprep.mubr.f32.mxu0 %v4745
        %4909 = vmatmul.mubr.f32.gmra.mxu0 %v4744
        %v4910 = vpop.f32.mrf.mxu0
        %v4911 = vadd.f32 0.0, %v4910
        %v4912 = vpop.f32.mrf.mxu0
        %4913 = vmatprep.mubr.f32.mxu0 %v4747
        %4914 = vmatmul.mubr.f32.gmra.mxu0 %v4746
        %v4915 = vpop.f32.mrf.mxu0
        %v4916 = vadd.f32 0.0, %v4915
        %v4917 = vpop.f32.mrf.mxu0
        %4918 = vmatprep.mubr.f32.mxu0 %v4749
        %4919 = vmatmul.mubr.f32.gmra.mxu0 %v4748
        %v4920 = vpop.f32.mrf.mxu0
        %v4921 = vadd.f32 0.0, %v4920
        %v4922 = vpop.f32.mrf.mxu0
        %4923 = vmatprep.mubr.f32.mxu0 %v4751
        %4924 = vmatmul.mubr.f32.gmra.mxu0 %v4750
        %v4925 = vpop.f32.mrf.mxu0
        %v4926 = vadd.f32 0.0, %v4925
        %v4927 = vpop.f32.mrf.mxu0
        %4928 = vmatprep.mubr.f32.mxu0 %v4753
        %4929 = vmatmul.mubr.f32.gmra.mxu0 %v4752
        %v4930 = vpop.f32.mrf.mxu0
        %v4931 = vadd.f32 0.0, %v4930
        %v4932 = vpop.f32.mrf.mxu0
        %4933 = vmatprep.mubr.f32.mxu0 %v4755
        %4934 = vmatmul.mubr.f32.gmra.mxu0 %v4754
        %v4935 = vpop.f32.mrf.mxu0
        %v4936 = vadd.f32 0.0, %v4935
        %v4937 = vpop.f32.mrf.mxu0
        %4938 = vmatprep.mubr.f32.mxu0 %v4757
        %4939 = vmatmul.mubr.f32.gmra.mxu0 %v4756
        %v4940 = vpop.f32.mrf.mxu0
        %v4941 = vadd.f32 0.0, %v4940
        %v4942 = vpop.f32.mrf.mxu0
        %4943 = vmatprep.mubr.f32.mxu0 %v4759
        %4944 = vmatmul.mubr.f32.gmra.mxu0 %v4758
        %v4945 = vpop.f32.mrf.mxu0
        %v4946 = vadd.f32 0.0, %v4945
        %v4947 = vpop.f32.mrf.mxu0
        %4948 = vmatprep.mubr.f32.mxu0 %v4761
        %4949 = vmatmul.mubr.f32.gmra.mxu0 %v4760
        %v4950 = vpop.f32.mrf.mxu0
        %v4951 = vadd.f32 0.0, %v4950
        %v4952 = vpop.f32.mrf.mxu0
        %4953 = vmatprep.mubr.f32.mxu0 %v4763
        %4954 = vmatmul.mubr.f32.gmra.mxu0 %v4762
        %v4955 = vpop.f32.mrf.mxu0
        %v4956 = vadd.f32 0.0, %v4955
        %v4957 = vpop.f32.mrf.mxu0
        %4958 = vmatprep.mubr.f32.mxu0 %v4765
        %4959 = vmatmul.mubr.f32.gmra.mxu0 %v4764
        %v4960 = vpop.f32.mrf.mxu0
        %v4961 = vadd.f32 0.0, %v4960
        %v4962 = vpop.f32.mrf.mxu0
        %4963 = vmatprep.mubr.f32.mxu0 %v4767
        %4964 = vmatmul.mubr.f32.gmra.mxu0 %v4766
        %v4965 = vpop.f32.mrf.mxu0
        %v4966 = vadd.f32 0.0, %v4965
        %v4967 = vpop.f32.mrf.mxu0
        %4968 = vmatprep.mubr.f32.mxu0 %v4769
        %4969 = vmatmul.mubr.f32.gmra.mxu0 %v4768
        %v4970 = vpop.f32.mrf.mxu0
        %v4971 = vadd.f32 0.0, %v4970
        %v4972 = vpop.f32.mrf.mxu0
        %4973 = vmatprep.mubr.f32.mxu0 %v4771
        %4974 = vmatmul.mubr.f32.gmra.mxu0 %v4770
        %v4975 = vpop.f32.mrf.mxu0
        %v4976 = vadd.f32 0.0, %v4975
        %v4977 = vpop.f32.mrf.mxu0
        %4978 = vmatprep.mubr.f32.mxu0 %v4773
        %4979 = vmatmul.mubr.f32.gmra.mxu0 %v4772
        %v4980 = vpop.f32.mrf.mxu0
        %v4981 = vadd.f32 0.0, %v4980
        %v4982 = vpop.f32.mrf.mxu0
        %4983 = vmatprep.mubr.f32.mxu0 %v4775
        %4984 = vmatmul.mubr.f32.gmra.mxu0 %v4774
        %v4985 = vpop.f32.mrf.mxu0
        %v4986 = vadd.f32 0.0, %v4985
        %v4987 = vpop.f32.mrf.mxu0
        %4988 = vmatprep.mubr.f32.mxu0 %v4777
        %4989 = vmatmul.mubr.f32.gmra.mxu0 %v4776
        %v4990 = vpop.f32.mrf.mxu0
        %v4991 = vadd.f32 0.0, %v4990
        %v4992 = vpop.f32.mrf.mxu0
        %4993 = vmatprep.mubr.f32.mxu0 %v4779
        %4994 = vmatmul.mubr.f32.gmra.mxu0 %v4778
        %v4995 = vpop.f32.mrf.mxu0
        %v4996 = vadd.f32 0.0, %v4995
        %v4997 = vpop.f32.mrf.mxu0
        %4998 = vmatprep.mubr.f32.mxu0 %v4781
        %4999 = vmatmul.mubr.f32.gmra.mxu0 %v4780
        %v5000 = vpop.f32.mrf.mxu0
        %v5001 = vadd.f32 0.0, %v5000
        %v5002 = vpop.f32.mrf.mxu0
        %5003 = vmatprep.mubr.f32.mxu0 %v4783
        %5004 = vmatmul.mubr.f32.gmra.mxu0 %v4782
        %v5005 = vpop.f32.mrf.mxu0
        %v5006 = vadd.f32 0.0, %v5005
        %v5007 = vpop.f32.mrf.mxu0
        %5008 = vdwg.mxu0
        %vm5009 = vcmp.gt.f32.partialorder %v4851, 0.0
        %vm5010 = vcmp.gt.f32.partialorder %v4856, 0.0
        %vm5011 = vcmp.gt.f32.partialorder %v4861, 0.0
        %vm5012 = vcmp.gt.f32.partialorder %v4866, 0.0
        %vm5013 = vcmp.gt.f32.partialorder %v4871, 0.0
        %vm5014 = vcmp.gt.f32.partialorder %v4876, 0.0
        %vm5015 = vcmp.gt.f32.partialorder %v4881, 0.0
        %vm5016 = vcmp.gt.f32.partialorder %v4886, 0.0
        %vm5017 = vcmp.gt.f32.partialorder %v4891, 0.0
        %vm5018 = vcmp.gt.f32.partialorder %v4896, 0.0
        %vm5019 = vcmp.gt.f32.partialorder %v4901, 0.0
        %vm5020 = vcmp.gt.f32.partialorder %v4906, 0.0
        %vm5021 = vcmp.gt.f32.partialorder %v4911, 0.0
        %vm5022 = vcmp.gt.f32.partialorder %v4916, 0.0
        %vm5023 = vcmp.gt.f32.partialorder %v4921, 0.0
        %vm5024 = vcmp.gt.f32.partialorder %v4926, 0.0
        %vm5025 = vcmp.gt.f32.partialorder %v4931, 0.0
        %vm5026 = vcmp.gt.f32.partialorder %v4936, 0.0
        %vm5027 = vcmp.gt.f32.partialorder %v4941, 0.0
        %vm5028 = vcmp.gt.f32.partialorder %v4946, 0.0
        %vm5029 = vcmp.gt.f32.partialorder %v4951, 0.0
        %vm5030 = vcmp.gt.f32.partialorder %v4956, 0.0
        %vm5031 = vcmp.gt.f32.partialorder %v4961, 0.0
        %vm5032 = vcmp.gt.f32.partialorder %v4966, 0.0
        %vm5033 = vcmp.gt.f32.partialorder %v4971, 0.0
        %vm5034 = vcmp.gt.f32.partialorder %v4976, 0.0
        %vm5035 = vcmp.gt.f32.partialorder %v4981, 0.0
        %vm5036 = vcmp.gt.f32.partialorder %v4986, 0.0
        %vm5037 = vcmp.gt.f32.partialorder %v4991, 0.0
        %vm5038 = vcmp.gt.f32.partialorder %v4996, 0.0
        %vm5039 = vcmp.gt.f32.partialorder %v5001, 0.0
        %vm5040 = vcmp.gt.f32.partialorder %v5006, 0.0
        %v5041 = vmin.f32 %v4851, 0.0
        %v5042 = vmin.f32 %v4856, 0.0
        %v5043 = vmin.f32 %v4861, 0.0
        %v5044 = vmin.f32 %v4866, 0.0
        %v5045 = vmin.f32 %v4871, 0.0
        %v5046 = vmin.f32 %v4876, 0.0
        %v5047 = vmin.f32 %v4881, 0.0
        %v5048 = vmin.f32 %v4886, 0.0
        %v5049 = vmin.f32 %v4891, 0.0
        %v5050 = vmin.f32 %v4896, 0.0
        %v5051 = vmin.f32 %v4901, 0.0
        %v5052 = vmin.f32 %v4906, 0.0
        %v5053 = vmin.f32 %v4911, 0.0
        %v5054 = vmin.f32 %v4916, 0.0
        %v5055 = vmin.f32 %v4921, 0.0
        %v5056 = vmin.f32 %v4926, 0.0
        %v5057 = vmin.f32 %v4931, 0.0
        %v5058 = vmin.f32 %v4936, 0.0
        %v5059 = vmin.f32 %v4941, 0.0
        %v5060 = vmin.f32 %v4946, 0.0
        %v5061 = vmin.f32 %v4951, 0.0
        %v5062 = vmin.f32 %v4956, 0.0
        %v5063 = vmin.f32 %v4961, 0.0
        %v5064 = vmin.f32 %v4966, 0.0
        %v5065 = vmin.f32 %v4971, 0.0
        %v5066 = vmin.f32 %v4976, 0.0
        %v5067 = vmin.f32 %v4981, 0.0
        %v5068 = vmin.f32 %v4986, 0.0
        %v5069 = vmin.f32 %v4991, 0.0
        %v5070 = vmin.f32 %v4996, 0.0
        %v5071 = vmin.f32 %v5001, 0.0
        %v5072 = vmin.f32 %v5006, 0.0
        %v5073 = vmul.f32 %v5041, 1.442695
        %v5074 = vpow.pop %v5073
        %v5075 = vmul.f32 %v5042, 1.442695
        %v5076 = vpow.pop %v5075
        %v5077 = vmul.f32 %v5043, 1.442695
        %v5078 = vpow.pop %v5077
        %v5079 = vmul.f32 %v5044, 1.442695
        %v5080 = vpow.pop %v5079
        %v5081 = vmul.f32 %v5045, 1.442695
        %v5082 = vpow.pop %v5081
        %v5083 = vmul.f32 %v5046, 1.442695
        %v5084 = vpow.pop %v5083
        %v5085 = vmul.f32 %v5047, 1.442695
        %v5086 = vpow.pop %v5085
        %v5087 = vmul.f32 %v5048, 1.442695
        %v5088 = vpow.pop %v5087
        %v5089 = vmul.f32 %v5049, 1.442695
        %v5090 = vpow.pop %v5089
        %v5091 = vmul.f32 %v5050, 1.442695
        %v5092 = vpow.pop %v5091
        %v5093 = vmul.f32 %v5051, 1.442695
        %v5094 = vpow.pop %v5093
        %v5095 = vmul.f32 %v5052, 1.442695
        %v5096 = vpow.pop %v5095
        %v5097 = vmul.f32 %v5053, 1.442695
        %v5098 = vpow.pop %v5097
        %v5099 = vmul.f32 %v5054, 1.442695
        %v5100 = vpow.pop %v5099
        %v5101 = vmul.f32 %v5055, 1.442695
        %v5102 = vpow.pop %v5101
        %v5103 = vmul.f32 %v5056, 1.442695
        %v5104 = vpow.pop %v5103
        %v5105 = vmul.f32 %v5057, 1.442695
        %v5106 = vpow.pop %v5105
        %v5107 = vmul.f32 %v5058, 1.442695
        %v5108 = vpow.pop %v5107
        %v5109 = vmul.f32 %v5059, 1.442695
        %v5110 = vpow.pop %v5109
        %v5111 = vmul.f32 %v5060, 1.442695
        %v5112 = vpow.pop %v5111
        %v5113 = vmul.f32 %v5061, 1.442695
        %v5114 = vpow.pop %v5113
        %v5115 = vmul.f32 %v5062, 1.442695
        %v5116 = vpow.pop %v5115
        %v5117 = vmul.f32 %v5063, 1.442695
        %v5118 = vpow.pop %v5117
        %v5119 = vmul.f32 %v5064, 1.442695
        %v5120 = vpow.pop %v5119
        %v5121 = vmul.f32 %v5065, 1.442695
        %v5122 = vpow.pop %v5121
        %v5123 = vmul.f32 %v5066, 1.442695
        %v5124 = vpow.pop %v5123
        %v5125 = vmul.f32 %v5067, 1.442695
        %v5126 = vpow.pop %v5125
        %v5127 = vmul.f32 %v5068, 1.442695
        %v5128 = vpow.pop %v5127
        %v5129 = vmul.f32 %v5069, 1.442695
        %v5130 = vpow.pop %v5129
        %v5131 = vmul.f32 %v5070, 1.442695
        %v5132 = vpow.pop %v5131
        %v5133 = vmul.f32 %v5071, 1.442695
        %v5134 = vpow.pop %v5133
        %v5135 = vmul.f32 %v5072, 1.442695
        %v5136 = vpow.pop %v5135
        %v5137 = vsub.f32 %v5074, 1.0
        %v5138 = vsub.f32 %v5076, 1.0
        %v5139 = vsub.f32 %v5078, 1.0
        %v5140 = vsub.f32 %v5080, 1.0
        %v5141 = vsub.f32 %v5082, 1.0
        %v5142 = vsub.f32 %v5084, 1.0
        %v5143 = vsub.f32 %v5086, 1.0
        %v5144 = vsub.f32 %v5088, 1.0
        %v5145 = vsub.f32 %v5090, 1.0
        %v5146 = vsub.f32 %v5092, 1.0
        %v5147 = vsub.f32 %v5094, 1.0
        %v5148 = vsub.f32 %v5096, 1.0
        %v5149 = vsub.f32 %v5098, 1.0
        %v5150 = vsub.f32 %v5100, 1.0
        %v5151 = vsub.f32 %v5102, 1.0
        %v5152 = vsub.f32 %v5104, 1.0
        %v5153 = vsub.f32 %v5106, 1.0
        %v5154 = vsub.f32 %v5108, 1.0
        %v5155 = vsub.f32 %v5110, 1.0
        %v5156 = vsub.f32 %v5112, 1.0
        %v5157 = vsub.f32 %v5114, 1.0
        %v5158 = vsub.f32 %v5116, 1.0
        %v5159 = vsub.f32 %v5118, 1.0
        %v5160 = vsub.f32 %v5120, 1.0
        %v5161 = vsub.f32 %v5122, 1.0
        %v5162 = vsub.f32 %v5124, 1.0
        %v5163 = vsub.f32 %v5126, 1.0
        %v5164 = vsub.f32 %v5128, 1.0
        %v5165 = vsub.f32 %v5130, 1.0
        %v5166 = vsub.f32 %v5132, 1.0
        %v5167 = vsub.f32 %v5134, 1.0
        %v5168 = vsub.f32 %v5136, 1.0
        %v5169 = vsel %vm5009, %v4851, %v5137
        %v5170 = vsel %vm5010, %v4856, %v5138
        %v5171 = vsel %vm5011, %v4861, %v5139
        %v5172 = vsel %vm5012, %v4866, %v5140
        %v5173 = vsel %vm5013, %v4871, %v5141
        %v5174 = vsel %vm5014, %v4876, %v5142
        %v5175 = vsel %vm5015, %v4881, %v5143
        %v5176 = vsel %vm5016, %v4886, %v5144
        %v5177 = vsel %vm5017, %v4891, %v5145
        %v5178 = vsel %vm5018, %v4896, %v5146
        %v5179 = vsel %vm5019, %v4901, %v5147
        %v5180 = vsel %vm5020, %v4906, %v5148
        %v5181 = vsel %vm5021, %v4911, %v5149
        %v5182 = vsel %vm5022, %v4916, %v5150
        %v5183 = vsel %vm5023, %v4921, %v5151
        %v5184 = vsel %vm5024, %v4926, %v5152
        %v5185 = vsel %vm5025, %v4931, %v5153
        %v5186 = vsel %vm5026, %v4936, %v5154
        %v5187 = vsel %vm5027, %v4941, %v5155
        %v5188 = vsel %vm5028, %v4946, %v5156
        %v5189 = vsel %vm5029, %v4951, %v5157
        %v5190 = vsel %vm5030, %v4956, %v5158
        %v5191 = vsel %vm5031, %v4961, %v5159
        %v5192 = vsel %vm5032, %v4966, %v5160
        %v5193 = vsel %vm5033, %v4971, %v5161
        %v5194 = vsel %vm5034, %v4976, %v5162
        %v5195 = vsel %vm5035, %v4981, %v5163
        %v5196 = vsel %vm5036, %v4986, %v5164
        %v5197 = vsel %vm5037, %v4991, %v5165
        %v5198 = vsel %vm5038, %v4996, %v5166
        %v5199 = vsel %vm5039, %v5001, %v5167
        %v5200 = vsel %vm5040, %v5006, %v5168
        %v5201 = vld [vmem:[#allocation2 + $0x8] sm:$0xff]
        %v5202 = vld [vmem:[#allocation2 + $0x18] sm:$0xff]
        %v5203 = vld [vmem:[#allocation2 + $0x28] sm:$0xff]
        %v5204 = vld [vmem:[#allocation2 + $0x38] sm:$0xff]
        %v5205 = vld [vmem:[#allocation2 + $0x48] sm:$0xff]
        %v5206 = vld [vmem:[#allocation2 + $0x58] sm:$0xff]
        %v5207 = vld [vmem:[#allocation2 + $0x68] sm:$0xff]
        %v5208 = vld [vmem:[#allocation2 + $0x78] sm:$0xff]
        %v5209 = vld [vmem:[#allocation2 + $0x88] sm:$0xff]
        %v5210 = vld [vmem:[#allocation2 + $0x98] sm:$0xff]
        %v5211 = vld [vmem:[#allocation2 + $0xa8] sm:$0xff]
        %v5212 = vld [vmem:[#allocation2 + $0xb8] sm:$0xff]
        %v5213 = vld [vmem:[#allocation2 + $0xc8] sm:$0xff]
        %v5214 = vld [vmem:[#allocation2 + $0xd8] sm:$0xff]
        %v5215 = vld [vmem:[#allocation2 + $0xe8] sm:$0xff]
        %v5216 = vld [vmem:[#allocation2 + $0xf8] sm:$0xff]
        %v5217 = vld [vmem:[#allocation2 + $0x108] sm:$0xff]
        %v5218 = vld [vmem:[#allocation2 + $0x118] sm:$0xff]
        %v5219 = vld [vmem:[#allocation2 + $0x128] sm:$0xff]
        %v5220 = vld [vmem:[#allocation2 + $0x138] sm:$0xff]
        %v5221 = vld [vmem:[#allocation2 + $0x148] sm:$0xff]
        %v5222 = vld [vmem:[#allocation2 + $0x158] sm:$0xff]
        %v5223 = vld [vmem:[#allocation2 + $0x168] sm:$0xff]
        %v5224 = vld [vmem:[#allocation2 + $0x178] sm:$0xff]
        %v5225 = vld [vmem:[#allocation2 + $0x188] sm:$0xff]
        %v5226 = vld [vmem:[#allocation2 + $0x198] sm:$0xff]
        %v5227 = vld [vmem:[#allocation2 + $0x1a8] sm:$0xff]
        %v5228 = vld [vmem:[#allocation2 + $0x1b8] sm:$0xff]
        %v5229 = vld [vmem:[#allocation2 + $0x1c8] sm:$0xff]
        %v5230 = vld [vmem:[#allocation2 + $0x1d8] sm:$0xff]
        %v5231 = vld [vmem:[#allocation2 + $0x1e8] sm:$0xff]
        %v5232 = vld [vmem:[#allocation2 + $0x1f8] sm:$0xff]
        %5233 = vset.pattern.permute.xlu0 1
        %5234 = vperm.xlu0 %5233, %v3466
        %v5235 = vpop.permute.xlu0 %5234
        %5237 = vset.pattern.permute.xlu0 1
        %5238 = vperm.xlu0 %5237, %v3471
        %v5239 = vpop.permute.xlu0 %5238
        %5241 = vset.pattern.permute.xlu0 1
        %5242 = vperm.xlu0 %5241, %v3476
        %v5243 = vpop.permute.xlu0 %5242
        %5245 = vset.pattern.permute.xlu0 1
        %5246 = vperm.xlu0 %5245, %v3481
        %v5247 = vpop.permute.xlu0 %5246
        %5249 = vset.pattern.permute.xlu0 1
        %5250 = vperm.xlu0 %5249, %v3486
        %v5251 = vpop.permute.xlu0 %5250
        %5253 = vset.pattern.permute.xlu0 1
        %5254 = vperm.xlu0 %5253, %v3491
        %v5255 = vpop.permute.xlu0 %5254
        %5257 = vset.pattern.permute.xlu0 1
        %5258 = vperm.xlu0 %5257, %v3496
        %v5259 = vpop.permute.xlu0 %5258
        %5261 = vset.pattern.permute.xlu0 1
        %5262 = vperm.xlu0 %5261, %v3501
        %v5263 = vpop.permute.xlu0 %5262
        %5265 = vset.pattern.permute.xlu0 1
        %5266 = vperm.xlu0 %5265, %v3506
        %v5267 = vpop.permute.xlu0 %5266
        %5269 = vset.pattern.permute.xlu0 1
        %5270 = vperm.xlu0 %5269, %v3511
        %v5271 = vpop.permute.xlu0 %5270
        %5273 = vset.pattern.permute.xlu0 1
        %5274 = vperm.xlu0 %5273, %v3516
        %v5275 = vpop.permute.xlu0 %5274
        %5277 = vset.pattern.permute.xlu0 1
        %5278 = vperm.xlu0 %5277, %v3521
        %v5279 = vpop.permute.xlu0 %5278
        %5281 = vset.pattern.permute.xlu0 1
        %5282 = vperm.xlu0 %5281, %v3526
        %v5283 = vpop.permute.xlu0 %5282
        %5285 = vset.pattern.permute.xlu0 1
        %5286 = vperm.xlu0 %5285, %v3531
        %v5287 = vpop.permute.xlu0 %5286
        %5289 = vset.pattern.permute.xlu0 1
        %5290 = vperm.xlu0 %5289, %v3536
        %v5291 = vpop.permute.xlu0 %5290
        %5293 = vset.pattern.permute.xlu0 1
        %5294 = vperm.xlu0 %5293, %v3541
        %v5295 = vpop.permute.xlu0 %5294
        %5297 = vset.pattern.permute.xlu0 1
        %5298 = vperm.xlu0 %5297, %v3546
        %v5299 = vpop.permute.xlu0 %5298
        %5301 = vset.pattern.permute.xlu0 1
        %5302 = vperm.xlu0 %5301, %v3551
        %v5303 = vpop.permute.xlu0 %5302
        %5305 = vset.pattern.permute.xlu0 1
        %5306 = vperm.xlu0 %5305, %v3556
        %v5307 = vpop.permute.xlu0 %5306
        %5309 = vset.pattern.permute.xlu0 1
        %5310 = vperm.xlu0 %5309, %v3561
        %v5311 = vpop.permute.xlu0 %5310
        %5313 = vset.pattern.permute.xlu0 1
        %5314 = vperm.xlu0 %5313, %v3566
        %v5315 = vpop.permute.xlu0 %5314
        %5317 = vset.pattern.permute.xlu0 1
        %5318 = vperm.xlu0 %5317, %v3571
        %v5319 = vpop.permute.xlu0 %5318
        %5321 = vset.pattern.permute.xlu0 1
        %5322 = vperm.xlu0 %5321, %v3576
        %v5323 = vpop.permute.xlu0 %5322
        %5325 = vset.pattern.permute.xlu0 1
        %5326 = vperm.xlu0 %5325, %v3581
        %v5327 = vpop.permute.xlu0 %5326
        %5329 = vset.pattern.permute.xlu0 1
        %5330 = vperm.xlu0 %5329, %v3586
        %v5331 = vpop.permute.xlu0 %5330
        %5333 = vset.pattern.permute.xlu0 1
        %5334 = vperm.xlu0 %5333, %v3591
        %v5335 = vpop.permute.xlu0 %5334
        %5337 = vset.pattern.permute.xlu0 1
        %5338 = vperm.xlu0 %5337, %v3596
        %v5339 = vpop.permute.xlu0 %5338
        %5341 = vset.pattern.permute.xlu0 1
        %5342 = vperm.xlu0 %5341, %v3601
        %v5343 = vpop.permute.xlu0 %5342
        %5345 = vset.pattern.permute.xlu0 1
        %5346 = vperm.xlu0 %5345, %v3606
        %v5347 = vpop.permute.xlu0 %5346
        %5349 = vset.pattern.permute.xlu0 1
        %5350 = vperm.xlu0 %5349, %v3611
        %v5351 = vpop.permute.xlu0 %5350
        %5353 = vset.pattern.permute.xlu0 1
        %5354 = vperm.xlu0 %5353, %v3616
        %v5355 = vpop.permute.xlu0 %5354
        %5357 = vset.pattern.permute.xlu0 1
        %5358 = vperm.xlu0 %5357, %v3621
        %v5359 = vpop.permute.xlu0 %5358
        %v5361 = vlaneseq
        %v5362 = vshrl.u32 %v5361, 7
        %v5363 = vsub.s32 1, %v5362
        %v5364 = vrot.slane %v3832, %v5363
        %v5365 = vlaneseq
        %v5366 = vshrl.u32 %v5365, 7
        %v5367 = vsub.s32 1, %v5366
        %v5368 = vrot.slane %v3864, %v5367
        %v5369 = vadd.f32 %v5235, %v5364
        %v5370 = vadd.f32 %v5235, %v5368
        %v5371 = vadd.f32 %v5239, %v5364
        %v5372 = vadd.f32 %v5239, %v5368
        %v5373 = vadd.f32 %v5243, %v5364
        %v5374 = vadd.f32 %v5243, %v5368
        %v5375 = vadd.f32 %v5247, %v5364
        %v5376 = vadd.f32 %v5247, %v5368
        %v5377 = vadd.f32 %v5251, %v5364
        %v5378 = vadd.f32 %v5251, %v5368
        %v5379 = vadd.f32 %v5255, %v5364
        %v5380 = vadd.f32 %v5255, %v5368
        %v5381 = vadd.f32 %v5259, %v5364
        %v5382 = vadd.f32 %v5259, %v5368
        %v5383 = vadd.f32 %v5263, %v5364
        %v5384 = vadd.f32 %v5263, %v5368
        %v5385 = vadd.f32 %v5267, %v5364
        %v5386 = vadd.f32 %v5267, %v5368
        %v5387 = vadd.f32 %v5271, %v5364
        %v5388 = vadd.f32 %v5271, %v5368
        %v5389 = vadd.f32 %v5275, %v5364
        %v5390 = vadd.f32 %v5275, %v5368
        %v5391 = vadd.f32 %v5279, %v5364
        %v5392 = vadd.f32 %v5279, %v5368
        %v5393 = vadd.f32 %v5283, %v5364
        %v5394 = vadd.f32 %v5283, %v5368
        %v5395 = vadd.f32 %v5287, %v5364
        %v5396 = vadd.f32 %v5287, %v5368
        %v5397 = vadd.f32 %v5291, %v5364
        %v5398 = vadd.f32 %v5291, %v5368
        %v5399 = vadd.f32 %v5295, %v5364
        %v5400 = vadd.f32 %v5295, %v5368
        %v5401 = vadd.f32 %v5299, %v5364
        %v5402 = vadd.f32 %v5299, %v5368
        %v5403 = vadd.f32 %v5303, %v5364
        %v5404 = vadd.f32 %v5303, %v5368
        %v5405 = vadd.f32 %v5307, %v5364
        %v5406 = vadd.f32 %v5307, %v5368
        %v5407 = vadd.f32 %v5311, %v5364
        %v5408 = vadd.f32 %v5311, %v5368
        %v5409 = vadd.f32 %v5315, %v5364
        %v5410 = vadd.f32 %v5315, %v5368
        %v5411 = vadd.f32 %v5319, %v5364
        %v5412 = vadd.f32 %v5319, %v5368
        %v5413 = vadd.f32 %v5323, %v5364
        %v5414 = vadd.f32 %v5323, %v5368
        %v5415 = vadd.f32 %v5327, %v5364
        %v5416 = vadd.f32 %v5327, %v5368
        %v5417 = vadd.f32 %v5331, %v5364
        %v5418 = vadd.f32 %v5331, %v5368
        %v5419 = vadd.f32 %v5335, %v5364
        %v5420 = vadd.f32 %v5335, %v5368
        %v5421 = vadd.f32 %v5339, %v5364
        %v5422 = vadd.f32 %v5339, %v5368
        %v5423 = vadd.f32 %v5343, %v5364
        %v5424 = vadd.f32 %v5343, %v5368
        %v5425 = vadd.f32 %v5347, %v5364
        %v5426 = vadd.f32 %v5347, %v5368
        %v5427 = vadd.f32 %v5351, %v5364
        %v5428 = vadd.f32 %v5351, %v5368
        %v5429 = vadd.f32 %v5355, %v5364
        %v5430 = vadd.f32 %v5355, %v5368
        %v5431 = vadd.f32 %v5359, %v5364
        %v5432 = vadd.f32 %v5359, %v5368
        %v5433 = vmul.f32 %v5369, 0.2
        %v5434 = vmul.f32 %v5370, 0.2
        %v5435 = vmul.f32 %v5371, 0.2
        %v5436 = vmul.f32 %v5372, 0.2
        %v5437 = vmul.f32 %v5373, 0.2
        %v5438 = vmul.f32 %v5374, 0.2
        %v5439 = vmul.f32 %v5375, 0.2
        %v5440 = vmul.f32 %v5376, 0.2
        %v5441 = vmul.f32 %v5377, 0.2
        %v5442 = vmul.f32 %v5378, 0.2
        %v5443 = vmul.f32 %v5379, 0.2
        %v5444 = vmul.f32 %v5380, 0.2
        %v5445 = vmul.f32 %v5381, 0.2
        %v5446 = vmul.f32 %v5382, 0.2
        %v5447 = vmul.f32 %v5383, 0.2
        %v5448 = vmul.f32 %v5384, 0.2
        %v5449 = vmul.f32 %v5385, 0.2
        %v5450 = vmul.f32 %v5386, 0.2
        %v5451 = vmul.f32 %v5387, 0.2
        %v5452 = vmul.f32 %v5388, 0.2
        %v5453 = vmul.f32 %v5389, 0.2
        %v5454 = vmul.f32 %v5390, 0.2
        %v5455 = vmul.f32 %v5391, 0.2
        %v5456 = vmul.f32 %v5392, 0.2
        %v5457 = vmul.f32 %v5393, 0.2
        %v5458 = vmul.f32 %v5394, 0.2
        %v5459 = vmul.f32 %v5395, 0.2
        %v5460 = vmul.f32 %v5396, 0.2
        %v5461 = vmul.f32 %v5397, 0.2
        %v5462 = vmul.f32 %v5398, 0.2
        %v5463 = vmul.f32 %v5399, 0.2
        %v5464 = vmul.f32 %v5400, 0.2
        %v5465 = vmul.f32 %v5401, 0.2
        %v5466 = vmul.f32 %v5402, 0.2
        %v5467 = vmul.f32 %v5403, 0.2
        %v5468 = vmul.f32 %v5404, 0.2
        %v5469 = vmul.f32 %v5405, 0.2
        %v5470 = vmul.f32 %v5406, 0.2
        %v5471 = vmul.f32 %v5407, 0.2
        %v5472 = vmul.f32 %v5408, 0.2
        %v5473 = vmul.f32 %v5409, 0.2
        %v5474 = vmul.f32 %v5410, 0.2
        %v5475 = vmul.f32 %v5411, 0.2
        %v5476 = vmul.f32 %v5412, 0.2
        %v5477 = vmul.f32 %v5413, 0.2
        %v5478 = vmul.f32 %v5414, 0.2
        %v5479 = vmul.f32 %v5415, 0.2
        %v5480 = vmul.f32 %v5416, 0.2
        %v5481 = vmul.f32 %v5417, 0.2
        %v5482 = vmul.f32 %v5418, 0.2
        %v5483 = vmul.f32 %v5419, 0.2
        %v5484 = vmul.f32 %v5420, 0.2
        %v5485 = vmul.f32 %v5421, 0.2
        %v5486 = vmul.f32 %v5422, 0.2
        %v5487 = vmul.f32 %v5423, 0.2
        %v5488 = vmul.f32 %v5424, 0.2
        %v5489 = vmul.f32 %v5425, 0.2
        %v5490 = vmul.f32 %v5426, 0.2
        %v5491 = vmul.f32 %v5427, 0.2
        %v5492 = vmul.f32 %v5428, 0.2
        %v5493 = vmul.f32 %v5429, 0.2
        %v5494 = vmul.f32 %v5430, 0.2
        %v5495 = vmul.f32 %v5431, 0.2
        %v5496 = vmul.f32 %v5432, 0.2
        %v5497 = vmax.f32 %v5369, %v5433
        %v5498 = vmax.f32 %v5370, %v5434
        %v5499 = vmax.f32 %v5371, %v5435
        %v5500 = vmax.f32 %v5372, %v5436
        %v5501 = vmax.f32 %v5373, %v5437
        %v5502 = vmax.f32 %v5374, %v5438
        %v5503 = vmax.f32 %v5375, %v5439
        %v5504 = vmax.f32 %v5376, %v5440
        %v5505 = vmax.f32 %v5377, %v5441
        %v5506 = vmax.f32 %v5378, %v5442
        %v5507 = vmax.f32 %v5379, %v5443
        %v5508 = vmax.f32 %v5380, %v5444
        %v5509 = vmax.f32 %v5381, %v5445
        %v5510 = vmax.f32 %v5382, %v5446
        %v5511 = vmax.f32 %v5383, %v5447
        %v5512 = vmax.f32 %v5384, %v5448
        %v5513 = vmax.f32 %v5385, %v5449
        %v5514 = vmax.f32 %v5386, %v5450
        %v5515 = vmax.f32 %v5387, %v5451
        %v5516 = vmax.f32 %v5388, %v5452
        %v5517 = vmax.f32 %v5389, %v5453
        %v5518 = vmax.f32 %v5390, %v5454
        %v5519 = vmax.f32 %v5391, %v5455
        %v5520 = vmax.f32 %v5392, %v5456
        %v5521 = vmax.f32 %v5393, %v5457
        %v5522 = vmax.f32 %v5394, %v5458
        %v5523 = vmax.f32 %v5395, %v5459
        %v5524 = vmax.f32 %v5396, %v5460
        %v5525 = vmax.f32 %v5397, %v5461
        %v5526 = vmax.f32 %v5398, %v5462
        %v5527 = vmax.f32 %v5399, %v5463
        %v5528 = vmax.f32 %v5400, %v5464
        %v5529 = vmax.f32 %v5401, %v5465
        %v5530 = vmax.f32 %v5402, %v5466
        %v5531 = vmax.f32 %v5403, %v5467
        %v5532 = vmax.f32 %v5404, %v5468
        %v5533 = vmax.f32 %v5405, %v5469
        %v5534 = vmax.f32 %v5406, %v5470
        %v5535 = vmax.f32 %v5407, %v5471
        %v5536 = vmax.f32 %v5408, %v5472
        %v5537 = vmax.f32 %v5409, %v5473
        %v5538 = vmax.f32 %v5410, %v5474
        %v5539 = vmax.f32 %v5411, %v5475
        %v5540 = vmax.f32 %v5412, %v5476
        %v5541 = vmax.f32 %v5413, %v5477
        %v5542 = vmax.f32 %v5414, %v5478
        %v5543 = vmax.f32 %v5415, %v5479
        %v5544 = vmax.f32 %v5416, %v5480
        %v5545 = vmax.f32 %v5417, %v5481
        %v5546 = vmax.f32 %v5418, %v5482
        %v5547 = vmax.f32 %v5419, %v5483
        %v5548 = vmax.f32 %v5420, %v5484
        %v5549 = vmax.f32 %v5421, %v5485
        %v5550 = vmax.f32 %v5422, %v5486
        %v5551 = vmax.f32 %v5423, %v5487
        %v5552 = vmax.f32 %v5424, %v5488
        %v5553 = vmax.f32 %v5425, %v5489
        %v5554 = vmax.f32 %v5426, %v5490
        %v5555 = vmax.f32 %v5427, %v5491
        %v5556 = vmax.f32 %v5428, %v5492
        %v5557 = vmax.f32 %v5429, %v5493
        %v5558 = vmax.f32 %v5430, %v5494
        %v5559 = vmax.f32 %v5431, %v5495
        %v5560 = vmax.f32 %v5432, %v5496
        %v5561 = vadd.f32 %v5497, %v698
        %v5562 = vadd.f32 %v5498, %v699
        %v5563 = vadd.f32 %v5499, %v700
        %v5564 = vadd.f32 %v5500, %v701
        %v5565 = vadd.f32 %v5501, %v702
        %v5566 = vadd.f32 %v5502, %v703
        %v5567 = vadd.f32 %v5503, %v704
        %v5568 = vadd.f32 %v5504, %v705
        %v5569 = vadd.f32 %v5505, %v706
        %v5570 = vadd.f32 %v5506, %v707
        %v5571 = vadd.f32 %v5507, %v708
        %v5572 = vadd.f32 %v5508, %v709
        %v5573 = vadd.f32 %v5509, %v710
        %v5574 = vadd.f32 %v5510, %v711
        %v5575 = vadd.f32 %v5511, %v712
        %v5576 = vadd.f32 %v5512, %v713
        %v5577 = vadd.f32 %v5513, %v714
        %v5578 = vadd.f32 %v5514, %v715
        %v5579 = vadd.f32 %v5515, %v716
        %v5580 = vadd.f32 %v5516, %v717
        %v5581 = vadd.f32 %v5517, %v718
        %v5582 = vadd.f32 %v5518, %v719
        %v5583 = vadd.f32 %v5519, %v720
        %v5584 = vadd.f32 %v5520, %v721
        %v5585 = vadd.f32 %v5521, %v722
        %v5586 = vadd.f32 %v5522, %v723
        %v5587 = vadd.f32 %v5523, %v724
        %v5588 = vadd.f32 %v5524, %v725
        %v5589 = vadd.f32 %v5525, %v726
        %v5590 = vadd.f32 %v5526, %v727
        %v5591 = vadd.f32 %v5527, %v728
        %v5592 = vadd.f32 %v5528, %v729
        %v5593 = vadd.f32 %v5529, %v730
        %v5594 = vadd.f32 %v5530, %v731
        %v5595 = vadd.f32 %v5531, %v732
        %v5596 = vadd.f32 %v5532, %v733
        %v5597 = vadd.f32 %v5533, %v734
        %v5598 = vadd.f32 %v5534, %v735
        %v5599 = vadd.f32 %v5535, %v736
        %v5600 = vadd.f32 %v5536, %v737
        %v5601 = vadd.f32 %v5537, %v738
        %v5602 = vadd.f32 %v5538, %v739
        %v5603 = vadd.f32 %v5539, %v740
        %v5604 = vadd.f32 %v5540, %v741
        %v5605 = vadd.f32 %v5541, %v742
        %v5606 = vadd.f32 %v5542, %v743
        %v5607 = vadd.f32 %v5543, %v744
        %v5608 = vadd.f32 %v5544, %v745
        %v5609 = vadd.f32 %v5545, %v746
        %v5610 = vadd.f32 %v5546, %v747
        %v5611 = vadd.f32 %v5547, %v748
        %v5612 = vadd.f32 %v5548, %v749
        %v5613 = vadd.f32 %v5549, %v750
        %v5614 = vadd.f32 %v5550, %v751
        %v5615 = vadd.f32 %v5551, %v752
        %v5616 = vadd.f32 %v5552, %v753
        %v5617 = vadd.f32 %v5553, %v754
        %v5618 = vadd.f32 %v5554, %v755
        %v5619 = vadd.f32 %v5555, %v756
        %v5620 = vadd.f32 %v5556, %v757
        %v5621 = vadd.f32 %v5557, %v758
        %v5622 = vadd.f32 %v5558, %v759
        %v5623 = vadd.f32 %v5559, %v760
        %v5624 = vadd.f32 %v5560, %v761
        %v5625 = vmax.f32 %v5561, %v5562
        %5626 = vmax.xlane.f32.xlu0 %v5625
        %v5627 = vpop.xlane.xlu0 %5626
        %v5628 = vmax.f32 %v5563, %v5564
        %5629 = vmax.xlane.f32.xlu0 %v5628
        %v5630 = vpop.xlane.xlu0 %5629
        %v5631 = vmax.f32 %v5565, %v5566
        %5632 = vmax.xlane.f32.xlu0 %v5631
        %v5633 = vpop.xlane.xlu0 %5632
        %v5634 = vmax.f32 %v5567, %v5568
        %5635 = vmax.xlane.f32.xlu0 %v5634
        %v5636 = vpop.xlane.xlu0 %5635
        %v5637 = vmax.f32 %v5569, %v5570
        %5638 = vmax.xlane.f32.xlu0 %v5637
        %v5639 = vpop.xlane.xlu0 %5638
        %v5640 = vmax.f32 %v5571, %v5572
        %5641 = vmax.xlane.f32.xlu0 %v5640
        %v5642 = vpop.xlane.xlu0 %5641
        %v5643 = vmax.f32 %v5573, %v5574
        %5644 = vmax.xlane.f32.xlu0 %v5643
        %v5645 = vpop.xlane.xlu0 %5644
        %v5646 = vmax.f32 %v5575, %v5576
        %5647 = vmax.xlane.f32.xlu0 %v5646
        %v5648 = vpop.xlane.xlu0 %5647
        %v5649 = vmax.f32 %v5577, %v5578
        %5650 = vmax.xlane.f32.xlu0 %v5649
        %v5651 = vpop.xlane.xlu0 %5650
        %v5652 = vmax.f32 %v5579, %v5580
        %5653 = vmax.xlane.f32.xlu0 %v5652
        %v5654 = vpop.xlane.xlu0 %5653
        %v5655 = vmax.f32 %v5581, %v5582
        %5656 = vmax.xlane.f32.xlu0 %v5655
        %v5657 = vpop.xlane.xlu0 %5656
        %v5658 = vmax.f32 %v5583, %v5584
        %5659 = vmax.xlane.f32.xlu0 %v5658
        %v5660 = vpop.xlane.xlu0 %5659
        %v5661 = vmax.f32 %v5585, %v5586
        %5662 = vmax.xlane.f32.xlu0 %v5661
        %v5663 = vpop.xlane.xlu0 %5662
        %v5664 = vmax.f32 %v5587, %v5588
        %5665 = vmax.xlane.f32.xlu0 %v5664
        %v5666 = vpop.xlane.xlu0 %5665
        %v5667 = vmax.f32 %v5589, %v5590
        %5668 = vmax.xlane.f32.xlu0 %v5667
        %v5669 = vpop.xlane.xlu0 %5668
        %v5670 = vmax.f32 %v5591, %v5592
        %5671 = vmax.xlane.f32.xlu0 %v5670
        %v5672 = vpop.xlane.xlu0 %5671
        %v5673 = vmax.f32 %v5593, %v5594
        %5674 = vmax.xlane.f32.xlu0 %v5673
        %v5675 = vpop.xlane.xlu0 %5674
        %v5676 = vmax.f32 %v5595, %v5596
        %5677 = vmax.xlane.f32.xlu0 %v5676
        %v5678 = vpop.xlane.xlu0 %5677
        %v5679 = vmax.f32 %v5597, %v5598
        %5680 = vmax.xlane.f32.xlu0 %v5679
        %v5681 = vpop.xlane.xlu0 %5680
        %v5682 = vmax.f32 %v5599, %v5600
        %5683 = vmax.xlane.f32.xlu0 %v5682
        %v5684 = vpop.xlane.xlu0 %5683
        %v5685 = vmax.f32 %v5601, %v5602
        %5686 = vmax.xlane.f32.xlu0 %v5685
        %v5687 = vpop.xlane.xlu0 %5686
        %v5688 = vmax.f32 %v5603, %v5604
        %5689 = vmax.xlane.f32.xlu0 %v5688
        %v5690 = vpop.xlane.xlu0 %5689
        %v5691 = vmax.f32 %v5605, %v5606
        %5692 = vmax.xlane.f32.xlu0 %v5691
        %v5693 = vpop.xlane.xlu0 %5692
        %v5694 = vmax.f32 %v5607, %v5608
        %5695 = vmax.xlane.f32.xlu0 %v5694
        %v5696 = vpop.xlane.xlu0 %5695
        %v5697 = vmax.f32 %v5609, %v5610
        %5698 = vmax.xlane.f32.xlu0 %v5697
        %v5699 = vpop.xlane.xlu0 %5698
        %v5700 = vmax.f32 %v5611, %v5612
        %5701 = vmax.xlane.f32.xlu0 %v5700
        %v5702 = vpop.xlane.xlu0 %5701
        %v5703 = vmax.f32 %v5613, %v5614
        %5704 = vmax.xlane.f32.xlu0 %v5703
        %v5705 = vpop.xlane.xlu0 %5704
        %v5706 = vmax.f32 %v5615, %v5616
        %5707 = vmax.xlane.f32.xlu0 %v5706
        %v5708 = vpop.xlane.xlu0 %5707
        %v5709 = vmax.f32 %v5617, %v5618
        %5710 = vmax.xlane.f32.xlu0 %v5709
        %v5711 = vpop.xlane.xlu0 %5710
        %v5712 = vmax.f32 %v5619, %v5620
        %5713 = vmax.xlane.f32.xlu0 %v5712
        %v5714 = vpop.xlane.xlu0 %5713
        %v5715 = vmax.f32 %v5621, %v5622
        %5716 = vmax.xlane.f32.xlu0 %v5715
        %v5717 = vpop.xlane.xlu0 %5716
        %v5718 = vmax.f32 %v5623, %v5624
        %5719 = vmax.xlane.f32.xlu0 %v5718
        %v5720 = vpop.xlane.xlu0 %5719
        %v5721 = vsub.f32 %v5561, %v5627
        %v5722 = vsub.f32 %v5562, %v5627
        %v5723 = vsub.f32 %v5563, %v5630
        %v5724 = vsub.f32 %v5564, %v5630
        %v5725 = vsub.f32 %v5565, %v5633
        %v5726 = vsub.f32 %v5566, %v5633
        %v5727 = vsub.f32 %v5567, %v5636
        %v5728 = vsub.f32 %v5568, %v5636
        %v5729 = vsub.f32 %v5569, %v5639
        %v5730 = vsub.f32 %v5570, %v5639
        %v5731 = vsub.f32 %v5571, %v5642
        %v5732 = vsub.f32 %v5572, %v5642
        %v5733 = vsub.f32 %v5573, %v5645
        %v5734 = vsub.f32 %v5574, %v5645
        %v5735 = vsub.f32 %v5575, %v5648
        %v5736 = vsub.f32 %v5576, %v5648
        %v5737 = vsub.f32 %v5577, %v5651
        %v5738 = vsub.f32 %v5578, %v5651
        %v5739 = vsub.f32 %v5579, %v5654
        %v5740 = vsub.f32 %v5580, %v5654
        %v5741 = vsub.f32 %v5581, %v5657
        %v5742 = vsub.f32 %v5582, %v5657
        %v5743 = vsub.f32 %v5583, %v5660
        %v5744 = vsub.f32 %v5584, %v5660
        %v5745 = vsub.f32 %v5585, %v5663
        %v5746 = vsub.f32 %v5586, %v5663
        %v5747 = vsub.f32 %v5587, %v5666
        %v5748 = vsub.f32 %v5588, %v5666
        %v5749 = vsub.f32 %v5589, %v5669
        %v5750 = vsub.f32 %v5590, %v5669
        %v5751 = vsub.f32 %v5591, %v5672
        %v5752 = vsub.f32 %v5592, %v5672
        %v5753 = vsub.f32 %v5593, %v5675
        %v5754 = vsub.f32 %v5594, %v5675
        %v5755 = vsub.f32 %v5595, %v5678
        %v5756 = vsub.f32 %v5596, %v5678
        %v5757 = vsub.f32 %v5597, %v5681
        %v5758 = vsub.f32 %v5598, %v5681
        %v5759 = vsub.f32 %v5599, %v5684
        %v5760 = vsub.f32 %v5600, %v5684
        %v5761 = vsub.f32 %v5601, %v5687
        %v5762 = vsub.f32 %v5602, %v5687
        %v5763 = vsub.f32 %v5603, %v5690
        %v5764 = vsub.f32 %v5604, %v5690
        %v5765 = vsub.f32 %v5605, %v5693
        %v5766 = vsub.f32 %v5606, %v5693
        %v5767 = vsub.f32 %v5607, %v5696
        %v5768 = vsub.f32 %v5608, %v5696
        %v5769 = vsub.f32 %v5609, %v5699
        %v5770 = vsub.f32 %v5610, %v5699
        %v5771 = vsub.f32 %v5611, %v5702
        %v5772 = vsub.f32 %v5612, %v5702
        %v5773 = vsub.f32 %v5613, %v5705
        %v5774 = vsub.f32 %v5614, %v5705
        %v5775 = vsub.f32 %v5615, %v5708
        %v5776 = vsub.f32 %v5616, %v5708
        %v5777 = vsub.f32 %v5617, %v5711
        %v5778 = vsub.f32 %v5618, %v5711
        %v5779 = vsub.f32 %v5619, %v5714
        %v5780 = vsub.f32 %v5620, %v5714
        %v5781 = vsub.f32 %v5621, %v5717
        %v5782 = vsub.f32 %v5622, %v5717
        %v5783 = vsub.f32 %v5623, %v5720
        %v5784 = vsub.f32 %v5624, %v5720
        %v5785 = vmul.f32 %v5721, 1.442695
        %v5786 = vpow.pop %v5785
        %v5787 = vmul.f32 %v5722, 1.442695
        %v5788 = vpow.pop %v5787
        %v5789 = vmul.f32 %v5723, 1.442695
        %v5790 = vpow.pop %v5789
        %v5791 = vmul.f32 %v5724, 1.442695
        %v5792 = vpow.pop %v5791
        %v5793 = vmul.f32 %v5725, 1.442695
        %v5794 = vpow.pop %v5793
        %v5795 = vmul.f32 %v5726, 1.442695
        %v5796 = vpow.pop %v5795
        %v5797 = vmul.f32 %v5727, 1.442695
        %v5798 = vpow.pop %v5797
        %v5799 = vmul.f32 %v5728, 1.442695
        %v5800 = vpow.pop %v5799
        %v5801 = vmul.f32 %v5729, 1.442695
        %v5802 = vpow.pop %v5801
        %v5803 = vmul.f32 %v5730, 1.442695
        %v5804 = vpow.pop %v5803
        %v5805 = vmul.f32 %v5731, 1.442695
        %v5806 = vpow.pop %v5805
        %v5807 = vmul.f32 %v5732, 1.442695
        %v5808 = vpow.pop %v5807
        %v5809 = vmul.f32 %v5733, 1.442695
        %v5810 = vpow.pop %v5809
        %v5811 = vmul.f32 %v5734, 1.442695
        %v5812 = vpow.pop %v5811
        %v5813 = vmul.f32 %v5735, 1.442695
        %v5814 = vpow.pop %v5813
        %v5815 = vmul.f32 %v5736, 1.442695
        %v5816 = vpow.pop %v5815
        %v5817 = vmul.f32 %v5737, 1.442695
        %v5818 = vpow.pop %v5817
        %v5819 = vmul.f32 %v5738, 1.442695
        %v5820 = vpow.pop %v5819
        %v5821 = vmul.f32 %v5739, 1.442695
        %v5822 = vpow.pop %v5821
        %v5823 = vmul.f32 %v5740, 1.442695
        %v5824 = vpow.pop %v5823
        %v5825 = vmul.f32 %v5741, 1.442695
        %v5826 = vpow.pop %v5825
        %v5827 = vmul.f32 %v5742, 1.442695
        %v5828 = vpow.pop %v5827
        %v5829 = vmul.f32 %v5743, 1.442695
        %v5830 = vpow.pop %v5829
        %v5831 = vmul.f32 %v5744, 1.442695
        %v5832 = vpow.pop %v5831
        %v5833 = vmul.f32 %v5745, 1.442695
        %v5834 = vpow.pop %v5833
        %v5835 = vmul.f32 %v5746, 1.442695
        %v5836 = vpow.pop %v5835
        %v5837 = vmul.f32 %v5747, 1.442695
        %v5838 = vpow.pop %v5837
        %v5839 = vmul.f32 %v5748, 1.442695
        %v5840 = vpow.pop %v5839
        %v5841 = vmul.f32 %v5749, 1.442695
        %v5842 = vpow.pop %v5841
        %v5843 = vmul.f32 %v5750, 1.442695
        %v5844 = vpow.pop %v5843
        %v5845 = vmul.f32 %v5751, 1.442695
        %v5846 = vpow.pop %v5845
        %v5847 = vmul.f32 %v5752, 1.442695
        %v5848 = vpow.pop %v5847
        %v5849 = vmul.f32 %v5753, 1.442695
        %v5850 = vpow.pop %v5849
        %v5851 = vmul.f32 %v5754, 1.442695
        %v5852 = vpow.pop %v5851
        %v5853 = vmul.f32 %v5755, 1.442695
        %v5854 = vpow.pop %v5853
        %v5855 = vmul.f32 %v5756, 1.442695
        %v5856 = vpow.pop %v5855
        %v5857 = vmul.f32 %v5757, 1.442695
        %v5858 = vpow.pop %v5857
        %v5859 = vmul.f32 %v5758, 1.442695
        %v5860 = vpow.pop %v5859
        %v5861 = vmul.f32 %v5759, 1.442695
        %v5862 = vpow.pop %v5861
        %v5863 = vmul.f32 %v5760, 1.442695
        %v5864 = vpow.pop %v5863
        %v5865 = vmul.f32 %v5761, 1.442695
        %v5866 = vpow.pop %v5865
        %v5867 = vmul.f32 %v5762, 1.442695
        %v5868 = vpow.pop %v5867
        %v5869 = vmul.f32 %v5763, 1.442695
        %v5870 = vpow.pop %v5869
        %v5871 = vmul.f32 %v5764, 1.442695
        %v5872 = vpow.pop %v5871
        %v5873 = vmul.f32 %v5765, 1.442695
        %v5874 = vpow.pop %v5873
        %v5875 = vmul.f32 %v5766, 1.442695
        %v5876 = vpow.pop %v5875
        %v5877 = vmul.f32 %v5767, 1.442695
        %v5878 = vpow.pop %v5877
        %v5879 = vmul.f32 %v5768, 1.442695
        %v5880 = vpow.pop %v5879
        %v5881 = vmul.f32 %v5769, 1.442695
        %v5882 = vpow.pop %v5881
        %v5883 = vmul.f32 %v5770, 1.442695
        %v5884 = vpow.pop %v5883
        %v5885 = vmul.f32 %v5771, 1.442695
        %v5886 = vpow.pop %v5885
        %v5887 = vmul.f32 %v5772, 1.442695
        %v5888 = vpow.pop %v5887
        %v5889 = vmul.f32 %v5773, 1.442695
        %v5890 = vpow.pop %v5889
        %v5891 = vmul.f32 %v5774, 1.442695
        %v5892 = vpow.pop %v5891
        %v5893 = vmul.f32 %v5775, 1.442695
        %v5894 = vpow.pop %v5893
        %v5895 = vmul.f32 %v5776, 1.442695
        %v5896 = vpow.pop %v5895
        %v5897 = vmul.f32 %v5777, 1.442695
        %v5898 = vpow.pop %v5897
        %v5899 = vmul.f32 %v5778, 1.442695
        %v5900 = vpow.pop %v5899
        %v5901 = vmul.f32 %v5779, 1.442695
        %v5902 = vpow.pop %v5901
        %v5903 = vmul.f32 %v5780, 1.442695
        %v5904 = vpow.pop %v5903
        %v5905 = vmul.f32 %v5781, 1.442695
        %v5906 = vpow.pop %v5905
        %v5907 = vmul.f32 %v5782, 1.442695
        %v5908 = vpow.pop %v5907
        %v5909 = vmul.f32 %v5783, 1.442695
        %v5910 = vpow.pop %v5909
        %v5911 = vmul.f32 %v5784, 1.442695
        %v5912 = vpow.pop %v5911
        %v5913 = vadd.f32 %v5786, %v5788
        %5914 = vadd.xlane.f32.xlu0 %v5913
        %v5915 = vpop.xlane.xlu0 %5914
        %v5916 = vadd.f32 %v5790, %v5792
        %5917 = vadd.xlane.f32.xlu0 %v5916
        %v5918 = vpop.xlane.xlu0 %5917
        %v5919 = vadd.f32 %v5794, %v5796
        %5920 = vadd.xlane.f32.xlu0 %v5919
        %v5921 = vpop.xlane.xlu0 %5920
        %v5922 = vadd.f32 %v5798, %v5800
        %5923 = vadd.xlane.f32.xlu0 %v5922
        %v5924 = vpop.xlane.xlu0 %5923
        %v5925 = vadd.f32 %v5802, %v5804
        %5926 = vadd.xlane.f32.xlu0 %v5925
        %v5927 = vpop.xlane.xlu0 %5926
        %v5928 = vadd.f32 %v5806, %v5808
        %5929 = vadd.xlane.f32.xlu0 %v5928
        %v5930 = vpop.xlane.xlu0 %5929
        %v5931 = vadd.f32 %v5810, %v5812
        %5932 = vadd.xlane.f32.xlu0 %v5931
        %v5933 = vpop.xlane.xlu0 %5932
        %v5934 = vadd.f32 %v5814, %v5816
        %5935 = vadd.xlane.f32.xlu0 %v5934
        %v5936 = vpop.xlane.xlu0 %5935
        %v5937 = vadd.f32 %v5818, %v5820
        %5938 = vadd.xlane.f32.xlu0 %v5937
        %v5939 = vpop.xlane.xlu0 %5938
        %v5940 = vadd.f32 %v5822, %v5824
        %5941 = vadd.xlane.f32.xlu0 %v5940
        %v5942 = vpop.xlane.xlu0 %5941
        %v5943 = vadd.f32 %v5826, %v5828
        %5944 = vadd.xlane.f32.xlu0 %v5943
        %v5945 = vpop.xlane.xlu0 %5944
        %v5946 = vadd.f32 %v5830, %v5832
        %5947 = vadd.xlane.f32.xlu0 %v5946
        %v5948 = vpop.xlane.xlu0 %5947
        %v5949 = vadd.f32 %v5834, %v5836
        %5950 = vadd.xlane.f32.xlu0 %v5949
        %v5951 = vpop.xlane.xlu0 %5950
        %v5952 = vadd.f32 %v5838, %v5840
        %5953 = vadd.xlane.f32.xlu0 %v5952
        %v5954 = vpop.xlane.xlu0 %5953
        %v5955 = vadd.f32 %v5842, %v5844
        %5956 = vadd.xlane.f32.xlu0 %v5955
        %v5957 = vpop.xlane.xlu0 %5956
        %v5958 = vadd.f32 %v5846, %v5848
        %5959 = vadd.xlane.f32.xlu0 %v5958
        %v5960 = vpop.xlane.xlu0 %5959
        %v5961 = vadd.f32 %v5850, %v5852
        %5962 = vadd.xlane.f32.xlu0 %v5961
        %v5963 = vpop.xlane.xlu0 %5962
        %v5964 = vadd.f32 %v5854, %v5856
        %5965 = vadd.xlane.f32.xlu0 %v5964
        %v5966 = vpop.xlane.xlu0 %5965
        %v5967 = vadd.f32 %v5858, %v5860
        %5968 = vadd.xlane.f32.xlu0 %v5967
        %v5969 = vpop.xlane.xlu0 %5968
        %v5970 = vadd.f32 %v5862, %v5864
        %5971 = vadd.xlane.f32.xlu0 %v5970
        %v5972 = vpop.xlane.xlu0 %5971
        %v5973 = vadd.f32 %v5866, %v5868
        %5974 = vadd.xlane.f32.xlu0 %v5973
        %v5975 = vpop.xlane.xlu0 %5974
        %v5976 = vadd.f32 %v5870, %v5872
        %5977 = vadd.xlane.f32.xlu0 %v5976
        %v5978 = vpop.xlane.xlu0 %5977
        %v5979 = vadd.f32 %v5874, %v5876
        %5980 = vadd.xlane.f32.xlu0 %v5979
        %v5981 = vpop.xlane.xlu0 %5980
        %v5982 = vadd.f32 %v5878, %v5880
        %5983 = vadd.xlane.f32.xlu0 %v5982
        %v5984 = vpop.xlane.xlu0 %5983
        %v5985 = vadd.f32 %v5882, %v5884
        %5986 = vadd.xlane.f32.xlu0 %v5985
        %v5987 = vpop.xlane.xlu0 %5986
        %v5988 = vadd.f32 %v5886, %v5888
        %5989 = vadd.xlane.f32.xlu0 %v5988
        %v5990 = vpop.xlane.xlu0 %5989
        %v5991 = vadd.f32 %v5890, %v5892
        %5992 = vadd.xlane.f32.xlu0 %v5991
        %v5993 = vpop.xlane.xlu0 %5992
        %v5994 = vadd.f32 %v5894, %v5896
        %5995 = vadd.xlane.f32.xlu0 %v5994
        %v5996 = vpop.xlane.xlu0 %5995
        %v5997 = vadd.f32 %v5898, %v5900
        %5998 = vadd.xlane.f32.xlu0 %v5997
        %v5999 = vpop.xlane.xlu0 %5998
        %v6000 = vadd.f32 %v5902, %v5904
        %6001 = vadd.xlane.f32.xlu0 %v6000
        %v6002 = vpop.xlane.xlu0 %6001
        %v6003 = vadd.f32 %v5906, %v5908
        %6004 = vadd.xlane.f32.xlu0 %v6003
        %v6005 = vpop.xlane.xlu0 %6004
        %v6006 = vadd.f32 %v5910, %v5912
        %6007 = vadd.xlane.f32.xlu0 %v6006
        %v6008 = vpop.xlane.xlu0 %6007
        %v6009 = vrcp.pop %v5915
        %v6010 = vrcp.pop %v5918
        %v6011 = vrcp.pop %v5921
        %v6012 = vrcp.pop %v5924
        %v6013 = vrcp.pop %v5927
        %v6014 = vrcp.pop %v5930
        %v6015 = vrcp.pop %v5933
        %v6016 = vrcp.pop %v5936
        %v6017 = vrcp.pop %v5939
        %v6018 = vrcp.pop %v5942
        %v6019 = vrcp.pop %v5945
        %v6020 = vrcp.pop %v5948
        %v6021 = vrcp.pop %v5951
        %v6022 = vrcp.pop %v5954
        %v6023 = vrcp.pop %v5957
        %v6024 = vrcp.pop %v5960
        %v6025 = vrcp.pop %v5963
        %v6026 = vrcp.pop %v5966
        %v6027 = vrcp.pop %v5969
        %v6028 = vrcp.pop %v5972
        %v6029 = vrcp.pop %v5975
        %v6030 = vrcp.pop %v5978
        %v6031 = vrcp.pop %v5981
        %v6032 = vrcp.pop %v5984
        %v6033 = vrcp.pop %v5987
        %v6034 = vrcp.pop %v5990
        %v6035 = vrcp.pop %v5993
        %v6036 = vrcp.pop %v5996
        %v6037 = vrcp.pop %v5999
        %v6038 = vrcp.pop %v6002
        %v6039 = vrcp.pop %v6005
        %v6040 = vrcp.pop %v6008
        %v6041 = vmul.f32 %v5786, %v6009
        %v6042 = vmul.f32 %v5788, %v6009
        %v6043 = vmul.f32 %v5790, %v6010
        %v6044 = vmul.f32 %v5792, %v6010
        %v6045 = vmul.f32 %v5794, %v6011
        %v6046 = vmul.f32 %v5796, %v6011
        %v6047 = vmul.f32 %v5798, %v6012
        %v6048 = vmul.f32 %v5800, %v6012
        %v6049 = vmul.f32 %v5802, %v6013
        %v6050 = vmul.f32 %v5804, %v6013
        %v6051 = vmul.f32 %v5806, %v6014
        %v6052 = vmul.f32 %v5808, %v6014
        %v6053 = vmul.f32 %v5810, %v6015
        %v6054 = vmul.f32 %v5812, %v6015
        %v6055 = vmul.f32 %v5814, %v6016
        %v6056 = vmul.f32 %v5816, %v6016
        %v6057 = vmul.f32 %v5818, %v6017
        %v6058 = vmul.f32 %v5820, %v6017
        %v6059 = vmul.f32 %v5822, %v6018
        %v6060 = vmul.f32 %v5824, %v6018
        %v6061 = vmul.f32 %v5826, %v6019
        %v6062 = vmul.f32 %v5828, %v6019
        %v6063 = vmul.f32 %v5830, %v6020
        %v6064 = vmul.f32 %v5832, %v6020
        %v6065 = vmul.f32 %v5834, %v6021
        %v6066 = vmul.f32 %v5836, %v6021
        %v6067 = vmul.f32 %v5838, %v6022
        %v6068 = vmul.f32 %v5840, %v6022
        %v6069 = vmul.f32 %v5842, %v6023
        %v6070 = vmul.f32 %v5844, %v6023
        %v6071 = vmul.f32 %v5846, %v6024
        %v6072 = vmul.f32 %v5848, %v6024
        %v6073 = vmul.f32 %v5850, %v6025
        %v6074 = vmul.f32 %v5852, %v6025
        %v6075 = vmul.f32 %v5854, %v6026
        %v6076 = vmul.f32 %v5856, %v6026
        %v6077 = vmul.f32 %v5858, %v6027
        %v6078 = vmul.f32 %v5860, %v6027
        %v6079 = vmul.f32 %v5862, %v6028
        %v6080 = vmul.f32 %v5864, %v6028
        %v6081 = vmul.f32 %v5866, %v6029
        %v6082 = vmul.f32 %v5868, %v6029
        %v6083 = vmul.f32 %v5870, %v6030
        %v6084 = vmul.f32 %v5872, %v6030
        %v6085 = vmul.f32 %v5874, %v6031
        %v6086 = vmul.f32 %v5876, %v6031
        %v6087 = vmul.f32 %v5878, %v6032
        %v6088 = vmul.f32 %v5880, %v6032
        %v6089 = vmul.f32 %v5882, %v6033
        %v6090 = vmul.f32 %v5884, %v6033
        %v6091 = vmul.f32 %v5886, %v6034
        %v6092 = vmul.f32 %v5888, %v6034
        %v6093 = vmul.f32 %v5890, %v6035
        %v6094 = vmul.f32 %v5892, %v6035
        %v6095 = vmul.f32 %v5894, %v6036
        %v6096 = vmul.f32 %v5896, %v6036
        %v6097 = vmul.f32 %v5898, %v6037
        %v6098 = vmul.f32 %v5900, %v6037
        %v6099 = vmul.f32 %v5902, %v6038
        %v6100 = vmul.f32 %v5904, %v6038
        %v6101 = vmul.f32 %v5906, %v6039
        %v6102 = vmul.f32 %v5908, %v6039
        %v6103 = vmul.f32 %v5910, %v6040
        %v6104 = vmul.f32 %v5912, %v6040
        %6105 = vmatprep.subr.mxu0 0.0
        %6106 = vmatpush1.msra.mxu0 %v5216
        %6107 = vmatprep.subr.mxu0 0.0
        %6108 = vmatpush1.msra.mxu0 %v5215
        %6109 = vmatprep.subr.mxu0 0.0
        %6110 = vmatpush1.msra.mxu0 %v5214
        %6111 = vmatprep.subr.mxu0 0.0
        %6112 = vmatpush1.msra.mxu0 %v5213
        %6113 = vmatprep.subr.mxu0 0.0
        %6114 = vmatpush1.msra.mxu0 %v5212
        %6115 = vmatprep.subr.mxu0 0.0
        %6116 = vmatpush1.msra.mxu0 %v5211
        %6117 = vmatprep.subr.mxu0 0.0
        %6118 = vmatpush1.msra.mxu0 %v5210
        %6119 = vmatprep.subr.mxu0 0.0
        %6120 = vmatpush1.msra.mxu0 %v5209
        %6121 = vmatprep.subr.mxu0 0.0
        %6122 = vmatpush1.msra.mxu0 %v5208
        %6123 = vmatprep.subr.mxu0 0.0
        %6124 = vmatpush1.msra.mxu0 %v5207
        %6125 = vmatprep.subr.mxu0 0.0
        %6126 = vmatpush1.msra.mxu0 %v5206
        %6127 = vmatprep.subr.mxu0 0.0
        %6128 = vmatpush1.msra.mxu0 %v5205
        %6129 = vmatprep.subr.mxu0 0.0
        %6130 = vmatpush1.msra.mxu0 %v5204
        %6131 = vmatprep.subr.mxu0 0.0
        %6132 = vmatpush1.msra.mxu0 %v5203
        %6133 = vmatprep.subr.mxu0 0.0
        %6134 = vmatpush1.msra.mxu0 %v5202
        %6135 = vmatprep.subr.mxu0 0.0
        %6136 = vmatpush1.msra.mxu0 %v5201
        %6137 = vmatprep.subr.mxu0 0.0
        %6138 = vmatpush2.msra.mxu0 %v5232
        %6139 = vmatprep.subr.mxu0 0.0
        %6140 = vmatpush2.msra.mxu0 %v5231
        %6141 = vmatprep.subr.mxu0 0.0
        %6142 = vmatpush2.msra.mxu0 %v5230
        %6143 = vmatprep.subr.mxu0 0.0
        %6144 = vmatpush2.msra.mxu0 %v5229
        %6145 = vmatprep.subr.mxu0 0.0
        %6146 = vmatpush2.msra.mxu0 %v5228
        %6147 = vmatprep.subr.mxu0 0.0
        %6148 = vmatpush2.msra.mxu0 %v5227
        %6149 = vmatprep.subr.mxu0 0.0
        %6150 = vmatpush2.msra.mxu0 %v5226
        %6151 = vmatprep.subr.mxu0 0.0
        %6152 = vmatpush2.msra.mxu0 %v5225
        %6153 = vmatprep.subr.mxu0 0.0
        %6154 = vmatpush2.msra.mxu0 %v5224
        %6155 = vmatprep.subr.mxu0 0.0
        %6156 = vmatpush2.msra.mxu0 %v5223
        %6157 = vmatprep.subr.mxu0 0.0
        %6158 = vmatpush2.msra.mxu0 %v5222
        %6159 = vmatprep.subr.mxu0 0.0
        %6160 = vmatpush2.msra.mxu0 %v5221
        %6161 = vmatprep.subr.mxu0 0.0
        %6162 = vmatpush2.msra.mxu0 %v5220
        %6163 = vmatprep.subr.mxu0 0.0
        %6164 = vmatpush2.msra.mxu0 %v5219
        %6165 = vmatprep.subr.mxu0 0.0
        %6166 = vmatpush2.msra.mxu0 %v5218
        %6167 = vmatprep.subr.mxu0 0.0
        %6168 = vmatpush2.msra.mxu0 %v5217
        %6169 = vmatprep.mubr.f32.mxu0 %v6042
        %6170 = vmatmul.mubr.f32.gmra.mxu0 %v6041
        %v6171 = vpop.f32.mrf.mxu0
        %v6172 = vadd.f32 0.0, %v6171
        %v6173 = vpop.f32.mrf.mxu0
        %6174 = vmatprep.mubr.f32.mxu0 %v6044
        %6175 = vmatmul.mubr.f32.gmra.mxu0 %v6043
        %v6176 = vpop.f32.mrf.mxu0
        %v6177 = vadd.f32 0.0, %v6176
        %v6178 = vpop.f32.mrf.mxu0
        %6179 = vmatprep.mubr.f32.mxu0 %v6046
        %6180 = vmatmul.mubr.f32.gmra.mxu0 %v6045
        %v6181 = vpop.f32.mrf.mxu0
        %v6182 = vadd.f32 0.0, %v6181
        %v6183 = vpop.f32.mrf.mxu0
        %6184 = vmatprep.mubr.f32.mxu0 %v6048
        %6185 = vmatmul.mubr.f32.gmra.mxu0 %v6047
        %v6186 = vpop.f32.mrf.mxu0
        %v6187 = vadd.f32 0.0, %v6186
        %v6188 = vpop.f32.mrf.mxu0
        %6189 = vmatprep.mubr.f32.mxu0 %v6050
        %6190 = vmatmul.mubr.f32.gmra.mxu0 %v6049
        %v6191 = vpop.f32.mrf.mxu0
        %v6192 = vadd.f32 0.0, %v6191
        %v6193 = vpop.f32.mrf.mxu0
        %6194 = vmatprep.mubr.f32.mxu0 %v6052
        %6195 = vmatmul.mubr.f32.gmra.mxu0 %v6051
        %v6196 = vpop.f32.mrf.mxu0
        %v6197 = vadd.f32 0.0, %v6196
        %v6198 = vpop.f32.mrf.mxu0
        %6199 = vmatprep.mubr.f32.mxu0 %v6054
        %6200 = vmatmul.mubr.f32.gmra.mxu0 %v6053
        %v6201 = vpop.f32.mrf.mxu0
        %v6202 = vadd.f32 0.0, %v6201
        %v6203 = vpop.f32.mrf.mxu0
        %6204 = vmatprep.mubr.f32.mxu0 %v6056
        %6205 = vmatmul.mubr.f32.gmra.mxu0 %v6055
        %v6206 = vpop.f32.mrf.mxu0
        %v6207 = vadd.f32 0.0, %v6206
        %v6208 = vpop.f32.mrf.mxu0
        %6209 = vmatprep.mubr.f32.mxu0 %v6058
        %6210 = vmatmul.mubr.f32.gmra.mxu0 %v6057
        %v6211 = vpop.f32.mrf.mxu0
        %v6212 = vadd.f32 0.0, %v6211
        %v6213 = vpop.f32.mrf.mxu0
        %6214 = vmatprep.mubr.f32.mxu0 %v6060
        %6215 = vmatmul.mubr.f32.gmra.mxu0 %v6059
        %v6216 = vpop.f32.mrf.mxu0
        %v6217 = vadd.f32 0.0, %v6216
        %v6218 = vpop.f32.mrf.mxu0
        %6219 = vmatprep.mubr.f32.mxu0 %v6062
        %6220 = vmatmul.mubr.f32.gmra.mxu0 %v6061
        %v6221 = vpop.f32.mrf.mxu0
        %v6222 = vadd.f32 0.0, %v6221
        %v6223 = vpop.f32.mrf.mxu0
        %6224 = vmatprep.mubr.f32.mxu0 %v6064
        %6225 = vmatmul.mubr.f32.gmra.mxu0 %v6063
        %v6226 = vpop.f32.mrf.mxu0
        %v6227 = vadd.f32 0.0, %v6226
        %v6228 = vpop.f32.mrf.mxu0
        %6229 = vmatprep.mubr.f32.mxu0 %v6066
        %6230 = vmatmul.mubr.f32.gmra.mxu0 %v6065
        %v6231 = vpop.f32.mrf.mxu0
        %v6232 = vadd.f32 0.0, %v6231
        %v6233 = vpop.f32.mrf.mxu0
        %6234 = vmatprep.mubr.f32.mxu0 %v6068
        %6235 = vmatmul.mubr.f32.gmra.mxu0 %v6067
        %v6236 = vpop.f32.mrf.mxu0
        %v6237 = vadd.f32 0.0, %v6236
        %v6238 = vpop.f32.mrf.mxu0
        %6239 = vmatprep.mubr.f32.mxu0 %v6070
        %6240 = vmatmul.mubr.f32.gmra.mxu0 %v6069
        %v6241 = vpop.f32.mrf.mxu0
        %v6242 = vadd.f32 0.0, %v6241
        %v6243 = vpop.f32.mrf.mxu0
        %6244 = vmatprep.mubr.f32.mxu0 %v6072
        %6245 = vmatmul.mubr.f32.gmra.mxu0 %v6071
        %v6246 = vpop.f32.mrf.mxu0
        %v6247 = vadd.f32 0.0, %v6246
        %v6248 = vpop.f32.mrf.mxu0
        %6249 = vmatprep.mubr.f32.mxu0 %v6074
        %6250 = vmatmul.mubr.f32.gmra.mxu0 %v6073
        %v6251 = vpop.f32.mrf.mxu0
        %v6252 = vadd.f32 0.0, %v6251
        %v6253 = vpop.f32.mrf.mxu0
        %6254 = vmatprep.mubr.f32.mxu0 %v6076
        %6255 = vmatmul.mubr.f32.gmra.mxu0 %v6075
        %v6256 = vpop.f32.mrf.mxu0
        %v6257 = vadd.f32 0.0, %v6256
        %v6258 = vpop.f32.mrf.mxu0
        %6259 = vmatprep.mubr.f32.mxu0 %v6078
        %6260 = vmatmul.mubr.f32.gmra.mxu0 %v6077
        %v6261 = vpop.f32.mrf.mxu0
        %v6262 = vadd.f32 0.0, %v6261
        %v6263 = vpop.f32.mrf.mxu0
        %6264 = vmatprep.mubr.f32.mxu0 %v6080
        %6265 = vmatmul.mubr.f32.gmra.mxu0 %v6079
        %v6266 = vpop.f32.mrf.mxu0
        %v6267 = vadd.f32 0.0, %v6266
        %v6268 = vpop.f32.mrf.mxu0
        %6269 = vmatprep.mubr.f32.mxu0 %v6082
        %6270 = vmatmul.mubr.f32.gmra.mxu0 %v6081
        %v6271 = vpop.f32.mrf.mxu0
        %v6272 = vadd.f32 0.0, %v6271
        %v6273 = vpop.f32.mrf.mxu0
        %6274 = vmatprep.mubr.f32.mxu0 %v6084
        %6275 = vmatmul.mubr.f32.gmra.mxu0 %v6083
        %v6276 = vpop.f32.mrf.mxu0
        %v6277 = vadd.f32 0.0, %v6276
        %v6278 = vpop.f32.mrf.mxu0
        %6279 = vmatprep.mubr.f32.mxu0 %v6086
        %6280 = vmatmul.mubr.f32.gmra.mxu0 %v6085
        %v6281 = vpop.f32.mrf.mxu0
        %v6282 = vadd.f32 0.0, %v6281
        %v6283 = vpop.f32.mrf.mxu0
        %6284 = vmatprep.mubr.f32.mxu0 %v6088
        %6285 = vmatmul.mubr.f32.gmra.mxu0 %v6087
        %v6286 = vpop.f32.mrf.mxu0
        %v6287 = vadd.f32 0.0, %v6286
        %v6288 = vpop.f32.mrf.mxu0
        %6289 = vmatprep.mubr.f32.mxu0 %v6090
        %6290 = vmatmul.mubr.f32.gmra.mxu0 %v6089
        %v6291 = vpop.f32.mrf.mxu0
        %v6292 = vadd.f32 0.0, %v6291
        %v6293 = vpop.f32.mrf.mxu0
        %6294 = vmatprep.mubr.f32.mxu0 %v6092
        %6295 = vmatmul.mubr.f32.gmra.mxu0 %v6091
        %v6296 = vpop.f32.mrf.mxu0
        %v6297 = vadd.f32 0.0, %v6296
        %v6298 = vpop.f32.mrf.mxu0
        %6299 = vmatprep.mubr.f32.mxu0 %v6094
        %6300 = vmatmul.mubr.f32.gmra.mxu0 %v6093
        %v6301 = vpop.f32.mrf.mxu0
        %v6302 = vadd.f32 0.0, %v6301
        %v6303 = vpop.f32.mrf.mxu0
        %6304 = vmatprep.mubr.f32.mxu0 %v6096
        %6305 = vmatmul.mubr.f32.gmra.mxu0 %v6095
        %v6306 = vpop.f32.mrf.mxu0
        %v6307 = vadd.f32 0.0, %v6306
        %v6308 = vpop.f32.mrf.mxu0
        %6309 = vmatprep.mubr.f32.mxu0 %v6098
        %6310 = vmatmul.mubr.f32.gmra.mxu0 %v6097
        %v6311 = vpop.f32.mrf.mxu0
        %v6312 = vadd.f32 0.0, %v6311
        %v6313 = vpop.f32.mrf.mxu0
        %6314 = vmatprep.mubr.f32.mxu0 %v6100
        %6315 = vmatmul.mubr.f32.gmra.mxu0 %v6099
        %v6316 = vpop.f32.mrf.mxu0
        %v6317 = vadd.f32 0.0, %v6316
        %v6318 = vpop.f32.mrf.mxu0
        %6319 = vmatprep.mubr.f32.mxu0 %v6102
        %6320 = vmatmul.mubr.f32.gmra.mxu0 %v6101
        %v6321 = vpop.f32.mrf.mxu0
        %v6322 = vadd.f32 0.0, %v6321
        %v6323 = vpop.f32.mrf.mxu0
        %6324 = vmatprep.mubr.f32.mxu0 %v6104
        %6325 = vmatmul.mubr.f32.gmra.mxu0 %v6103
        %v6326 = vpop.f32.mrf.mxu0
        %v6327 = vadd.f32 0.0, %v6326
        %v6328 = vpop.f32.mrf.mxu0
        %6329 = vdwg.mxu0
        %vm6330 = vcmp.gt.f32.partialorder %v6172, 0.0
        %vm6331 = vcmp.gt.f32.partialorder %v6177, 0.0
        %vm6332 = vcmp.gt.f32.partialorder %v6182, 0.0
        %vm6333 = vcmp.gt.f32.partialorder %v6187, 0.0
        %vm6334 = vcmp.gt.f32.partialorder %v6192, 0.0
        %vm6335 = vcmp.gt.f32.partialorder %v6197, 0.0
        %vm6336 = vcmp.gt.f32.partialorder %v6202, 0.0
        %vm6337 = vcmp.gt.f32.partialorder %v6207, 0.0
        %vm6338 = vcmp.gt.f32.partialorder %v6212, 0.0
        %vm6339 = vcmp.gt.f32.partialorder %v6217, 0.0
        %vm6340 = vcmp.gt.f32.partialorder %v6222, 0.0
        %vm6341 = vcmp.gt.f32.partialorder %v6227, 0.0
        %vm6342 = vcmp.gt.f32.partialorder %v6232, 0.0
        %vm6343 = vcmp.gt.f32.partialorder %v6237, 0.0
        %vm6344 = vcmp.gt.f32.partialorder %v6242, 0.0
        %vm6345 = vcmp.gt.f32.partialorder %v6247, 0.0
        %vm6346 = vcmp.gt.f32.partialorder %v6252, 0.0
        %vm6347 = vcmp.gt.f32.partialorder %v6257, 0.0
        %vm6348 = vcmp.gt.f32.partialorder %v6262, 0.0
        %vm6349 = vcmp.gt.f32.partialorder %v6267, 0.0
        %vm6350 = vcmp.gt.f32.partialorder %v6272, 0.0
        %vm6351 = vcmp.gt.f32.partialorder %v6277, 0.0
        %vm6352 = vcmp.gt.f32.partialorder %v6282, 0.0
        %vm6353 = vcmp.gt.f32.partialorder %v6287, 0.0
        %vm6354 = vcmp.gt.f32.partialorder %v6292, 0.0
        %vm6355 = vcmp.gt.f32.partialorder %v6297, 0.0
        %vm6356 = vcmp.gt.f32.partialorder %v6302, 0.0
        %vm6357 = vcmp.gt.f32.partialorder %v6307, 0.0
        %vm6358 = vcmp.gt.f32.partialorder %v6312, 0.0
        %vm6359 = vcmp.gt.f32.partialorder %v6317, 0.0
        %vm6360 = vcmp.gt.f32.partialorder %v6322, 0.0
        %vm6361 = vcmp.gt.f32.partialorder %v6327, 0.0
        %v6362 = vmin.f32 %v6172, 0.0
        %v6363 = vmin.f32 %v6177, 0.0
        %v6364 = vmin.f32 %v6182, 0.0
        %v6365 = vmin.f32 %v6187, 0.0
        %v6366 = vmin.f32 %v6192, 0.0
        %v6367 = vmin.f32 %v6197, 0.0
        %v6368 = vmin.f32 %v6202, 0.0
        %v6369 = vmin.f32 %v6207, 0.0
        %v6370 = vmin.f32 %v6212, 0.0
        %v6371 = vmin.f32 %v6217, 0.0
        %v6372 = vmin.f32 %v6222, 0.0
        %v6373 = vmin.f32 %v6227, 0.0
        %v6374 = vmin.f32 %v6232, 0.0
        %v6375 = vmin.f32 %v6237, 0.0
        %v6376 = vmin.f32 %v6242, 0.0
        %v6377 = vmin.f32 %v6247, 0.0
        %v6378 = vmin.f32 %v6252, 0.0
        %v6379 = vmin.f32 %v6257, 0.0
        %v6380 = vmin.f32 %v6262, 0.0
        %v6381 = vmin.f32 %v6267, 0.0
        %v6382 = vmin.f32 %v6272, 0.0
        %v6383 = vmin.f32 %v6277, 0.0
        %v6384 = vmin.f32 %v6282, 0.0
        %v6385 = vmin.f32 %v6287, 0.0
        %v6386 = vmin.f32 %v6292, 0.0
        %v6387 = vmin.f32 %v6297, 0.0
        %v6388 = vmin.f32 %v6302, 0.0
        %v6389 = vmin.f32 %v6307, 0.0
        %v6390 = vmin.f32 %v6312, 0.0
        %v6391 = vmin.f32 %v6317, 0.0
        %v6392 = vmin.f32 %v6322, 0.0
        %v6393 = vmin.f32 %v6327, 0.0
        %v6394 = vmul.f32 %v6362, 1.442695
        %v6395 = vpow.pop %v6394
        %v6396 = vmul.f32 %v6363, 1.442695
        %v6397 = vpow.pop %v6396
        %v6398 = vmul.f32 %v6364, 1.442695
        %v6399 = vpow.pop %v6398
        %v6400 = vmul.f32 %v6365, 1.442695
        %v6401 = vpow.pop %v6400
        %v6402 = vmul.f32 %v6366, 1.442695
        %v6403 = vpow.pop %v6402
        %v6404 = vmul.f32 %v6367, 1.442695
        %v6405 = vpow.pop %v6404
        %v6406 = vmul.f32 %v6368, 1.442695
        %v6407 = vpow.pop %v6406
        %v6408 = vmul.f32 %v6369, 1.442695
        %v6409 = vpow.pop %v6408
        %v6410 = vmul.f32 %v6370, 1.442695
        %v6411 = vpow.pop %v6410
        %v6412 = vmul.f32 %v6371, 1.442695
        %v6413 = vpow.pop %v6412
        %v6414 = vmul.f32 %v6372, 1.442695
        %v6415 = vpow.pop %v6414
        %v6416 = vmul.f32 %v6373, 1.442695
        %v6417 = vpow.pop %v6416
        %v6418 = vmul.f32 %v6374, 1.442695
        %v6419 = vpow.pop %v6418
        %v6420 = vmul.f32 %v6375, 1.442695
        %v6421 = vpow.pop %v6420
        %v6422 = vmul.f32 %v6376, 1.442695
        %v6423 = vpow.pop %v6422
        %v6424 = vmul.f32 %v6377, 1.442695
        %v6425 = vpow.pop %v6424
        %v6426 = vmul.f32 %v6378, 1.442695
        %v6427 = vpow.pop %v6426
        %v6428 = vmul.f32 %v6379, 1.442695
        %v6429 = vpow.pop %v6428
        %v6430 = vmul.f32 %v6380, 1.442695
        %v6431 = vpow.pop %v6430
        %v6432 = vmul.f32 %v6381, 1.442695
        %v6433 = vpow.pop %v6432
        %v6434 = vmul.f32 %v6382, 1.442695
        %v6435 = vpow.pop %v6434
        %v6436 = vmul.f32 %v6383, 1.442695
        %v6437 = vpow.pop %v6436
        %v6438 = vmul.f32 %v6384, 1.442695
        %v6439 = vpow.pop %v6438
        %v6440 = vmul.f32 %v6385, 1.442695
        %v6441 = vpow.pop %v6440
        %v6442 = vmul.f32 %v6386, 1.442695
        %v6443 = vpow.pop %v6442
        %v6444 = vmul.f32 %v6387, 1.442695
        %v6445 = vpow.pop %v6444
        %v6446 = vmul.f32 %v6388, 1.442695
        %v6447 = vpow.pop %v6446
        %v6448 = vmul.f32 %v6389, 1.442695
        %v6449 = vpow.pop %v6448
        %v6450 = vmul.f32 %v6390, 1.442695
        %v6451 = vpow.pop %v6450
        %v6452 = vmul.f32 %v6391, 1.442695
        %v6453 = vpow.pop %v6452
        %v6454 = vmul.f32 %v6392, 1.442695
        %v6455 = vpow.pop %v6454
        %v6456 = vmul.f32 %v6393, 1.442695
        %v6457 = vpow.pop %v6456
        %v6458 = vsub.f32 %v6395, 1.0
        %v6459 = vsub.f32 %v6397, 1.0
        %v6460 = vsub.f32 %v6399, 1.0
        %v6461 = vsub.f32 %v6401, 1.0
        %v6462 = vsub.f32 %v6403, 1.0
        %v6463 = vsub.f32 %v6405, 1.0
        %v6464 = vsub.f32 %v6407, 1.0
        %v6465 = vsub.f32 %v6409, 1.0
        %v6466 = vsub.f32 %v6411, 1.0
        %v6467 = vsub.f32 %v6413, 1.0
        %v6468 = vsub.f32 %v6415, 1.0
        %v6469 = vsub.f32 %v6417, 1.0
        %v6470 = vsub.f32 %v6419, 1.0
        %v6471 = vsub.f32 %v6421, 1.0
        %v6472 = vsub.f32 %v6423, 1.0
        %v6473 = vsub.f32 %v6425, 1.0
        %v6474 = vsub.f32 %v6427, 1.0
        %v6475 = vsub.f32 %v6429, 1.0
        %v6476 = vsub.f32 %v6431, 1.0
        %v6477 = vsub.f32 %v6433, 1.0
        %v6478 = vsub.f32 %v6435, 1.0
        %v6479 = vsub.f32 %v6437, 1.0
        %v6480 = vsub.f32 %v6439, 1.0
        %v6481 = vsub.f32 %v6441, 1.0
        %v6482 = vsub.f32 %v6443, 1.0
        %v6483 = vsub.f32 %v6445, 1.0
        %v6484 = vsub.f32 %v6447, 1.0
        %v6485 = vsub.f32 %v6449, 1.0
        %v6486 = vsub.f32 %v6451, 1.0
        %v6487 = vsub.f32 %v6453, 1.0
        %v6488 = vsub.f32 %v6455, 1.0
        %v6489 = vsub.f32 %v6457, 1.0
        %v6490 = vsel %vm6330, %v6172, %v6458
        %v6491 = vsel %vm6331, %v6177, %v6459
        %v6492 = vsel %vm6332, %v6182, %v6460
        %v6493 = vsel %vm6333, %v6187, %v6461
        %v6494 = vsel %vm6334, %v6192, %v6462
        %v6495 = vsel %vm6335, %v6197, %v6463
        %v6496 = vsel %vm6336, %v6202, %v6464
        %v6497 = vsel %vm6337, %v6207, %v6465
        %v6498 = vsel %vm6338, %v6212, %v6466
        %v6499 = vsel %vm6339, %v6217, %v6467
        %v6500 = vsel %vm6340, %v6222, %v6468
        %v6501 = vsel %vm6341, %v6227, %v6469
        %v6502 = vsel %vm6342, %v6232, %v6470
        %v6503 = vsel %vm6343, %v6237, %v6471
        %v6504 = vsel %vm6344, %v6242, %v6472
        %v6505 = vsel %vm6345, %v6247, %v6473
        %v6506 = vsel %vm6346, %v6252, %v6474
        %v6507 = vsel %vm6347, %v6257, %v6475
        %v6508 = vsel %vm6348, %v6262, %v6476
        %v6509 = vsel %vm6349, %v6267, %v6477
        %v6510 = vsel %vm6350, %v6272, %v6478
        %v6511 = vsel %vm6351, %v6277, %v6479
        %v6512 = vsel %vm6352, %v6282, %v6480
        %v6513 = vsel %vm6353, %v6287, %v6481
        %v6514 = vsel %vm6354, %v6292, %v6482
        %v6515 = vsel %vm6355, %v6297, %v6483
        %v6516 = vsel %vm6356, %v6302, %v6484
        %v6517 = vsel %vm6357, %v6307, %v6485
        %v6518 = vsel %vm6358, %v6312, %v6486
        %v6519 = vsel %vm6359, %v6317, %v6487
        %v6520 = vsel %vm6360, %v6322, %v6488
        %v6521 = vsel %vm6361, %v6327, %v6489
        %v6522 = vld [vmem:[%s603] sm:$0xff]
        %v6523 = vld [vmem:[%s603 + $0x8] sm:$0xff]
        %v6524 = vld [vmem:[%s603 + $0x10] sm:$0xff]
        %v6525 = vld [vmem:[%s603 + $0x18] sm:$0xff]
        %v6526 = vld [vmem:[%s603 + $0x20] sm:$0xff]
        %v6527 = vld [vmem:[%s603 + $0x28] sm:$0xff]
        %v6528 = vld [vmem:[%s603 + $0x30] sm:$0xff]
        %v6529 = vld [vmem:[%s603 + $0x38] sm:$0xff]
        %v6530 = vld [vmem:[%s603 + $0x40] sm:$0xff]
        %v6531 = vld [vmem:[%s603 + $0x48] sm:$0xff]
        %v6532 = vld [vmem:[%s603 + $0x50] sm:$0xff]
        %v6533 = vld [vmem:[%s603 + $0x58] sm:$0xff]
        %v6534 = vld [vmem:[%s603 + $0x60] sm:$0xff]
        %v6535 = vld [vmem:[%s603 + $0x68] sm:$0xff]
        %v6536 = vld [vmem:[%s603 + $0x70] sm:$0xff]
        %v6537 = vld [vmem:[%s603 + $0x78] sm:$0xff]
        %v6538 = vld [vmem:[%s603 + $0x80] sm:$0xff]
        %v6539 = vld [vmem:[%s603 + $0x88] sm:$0xff]
        %v6540 = vld [vmem:[%s603 + $0x90] sm:$0xff]
        %v6541 = vld [vmem:[%s603 + $0x98] sm:$0xff]
        %v6542 = vld [vmem:[%s603 + $0xa0] sm:$0xff]
        %v6543 = vld [vmem:[%s603 + $0xa8] sm:$0xff]
        %v6544 = vld [vmem:[%s603 + $0xb0] sm:$0xff]
        %v6545 = vld [vmem:[%s603 + $0xb8] sm:$0xff]
        %v6546 = vld [vmem:[%s603 + $0xc0] sm:$0xff]
        %v6547 = vld [vmem:[%s603 + $0xc8] sm:$0xff]
        %v6548 = vld [vmem:[%s603 + $0xd0] sm:$0xff]
        %v6549 = vld [vmem:[%s603 + $0xd8] sm:$0xff]
        %v6550 = vld [vmem:[%s603 + $0xe0] sm:$0xff]
        %v6551 = vld [vmem:[%s603 + $0xe8] sm:$0xff]
        %v6552 = vld [vmem:[%s603 + $0xf0] sm:$0xff]
        %v6553 = vld [vmem:[%s603 + $0xf8] sm:$0xff]
        %v6554 = vmul.f32 %v6490, 1.442695
        %v6555 = vpow.pop %v6554
        %v6556 = vmul.f32 %v6491, 1.442695
        %v6557 = vpow.pop %v6556
        %v6558 = vmul.f32 %v6492, 1.442695
        %v6559 = vpow.pop %v6558
        %v6560 = vmul.f32 %v6493, 1.442695
        %v6561 = vpow.pop %v6560
        %v6562 = vmul.f32 %v6494, 1.442695
        %v6563 = vpow.pop %v6562
        %v6564 = vmul.f32 %v6495, 1.442695
        %v6565 = vpow.pop %v6564
        %v6566 = vmul.f32 %v6496, 1.442695
        %v6567 = vpow.pop %v6566
        %v6568 = vmul.f32 %v6497, 1.442695
        %v6569 = vpow.pop %v6568
        %v6570 = vmul.f32 %v6498, 1.442695
        %v6571 = vpow.pop %v6570
        %v6572 = vmul.f32 %v6499, 1.442695
        %v6573 = vpow.pop %v6572
        %v6574 = vmul.f32 %v6500, 1.442695
        %v6575 = vpow.pop %v6574
        %v6576 = vmul.f32 %v6501, 1.442695
        %v6577 = vpow.pop %v6576
        %v6578 = vmul.f32 %v6502, 1.442695
        %v6579 = vpow.pop %v6578
        %v6580 = vmul.f32 %v6503, 1.442695
        %v6581 = vpow.pop %v6580
        %v6582 = vmul.f32 %v6504, 1.442695
        %v6583 = vpow.pop %v6582
        %v6584 = vmul.f32 %v6505, 1.442695
        %v6585 = vpow.pop %v6584
        %v6586 = vmul.f32 %v6506, 1.442695
        %v6587 = vpow.pop %v6586
        %v6588 = vmul.f32 %v6507, 1.442695
        %v6589 = vpow.pop %v6588
        %v6590 = vmul.f32 %v6508, 1.442695
        %v6591 = vpow.pop %v6590
        %v6592 = vmul.f32 %v6509, 1.442695
        %v6593 = vpow.pop %v6592
        %v6594 = vmul.f32 %v6510, 1.442695
        %v6595 = vpow.pop %v6594
        %v6596 = vmul.f32 %v6511, 1.442695
        %v6597 = vpow.pop %v6596
        %v6598 = vmul.f32 %v6512, 1.442695
        %v6599 = vpow.pop %v6598
        %v6600 = vmul.f32 %v6513, 1.442695
        %v6601 = vpow.pop %v6600
        %v6602 = vmul.f32 %v6514, 1.442695
        %v6603 = vpow.pop %v6602
        %v6604 = vmul.f32 %v6515, 1.442695
        %v6605 = vpow.pop %v6604
        %v6606 = vmul.f32 %v6516, 1.442695
        %v6607 = vpow.pop %v6606
        %v6608 = vmul.f32 %v6517, 1.442695
        %v6609 = vpow.pop %v6608
        %v6610 = vmul.f32 %v6518, 1.442695
        %v6611 = vpow.pop %v6610
        %v6612 = vmul.f32 %v6519, 1.442695
        %v6613 = vpow.pop %v6612
        %v6614 = vmul.f32 %v6520, 1.442695
        %v6615 = vpow.pop %v6614
        %v6616 = vmul.f32 %v6521, 1.442695
        %v6617 = vpow.pop %v6616
        %v6618 = vmul.f32 %v6522, %v6555
        %v6619 = vmul.f32 %v6523, %v6557
        %v6620 = vmul.f32 %v6524, %v6559
        %v6621 = vmul.f32 %v6525, %v6561
        %v6622 = vmul.f32 %v6526, %v6563
        %v6623 = vmul.f32 %v6527, %v6565
        %v6624 = vmul.f32 %v6528, %v6567
        %v6625 = vmul.f32 %v6529, %v6569
        %v6626 = vmul.f32 %v6530, %v6571
        %v6627 = vmul.f32 %v6531, %v6573
        %v6628 = vmul.f32 %v6532, %v6575
        %v6629 = vmul.f32 %v6533, %v6577
        %v6630 = vmul.f32 %v6534, %v6579
        %v6631 = vmul.f32 %v6535, %v6581
        %v6632 = vmul.f32 %v6536, %v6583
        %v6633 = vmul.f32 %v6537, %v6585
        %v6634 = vmul.f32 %v6538, %v6587
        %v6635 = vmul.f32 %v6539, %v6589
        %v6636 = vmul.f32 %v6540, %v6591
        %v6637 = vmul.f32 %v6541, %v6593
        %v6638 = vmul.f32 %v6542, %v6595
        %v6639 = vmul.f32 %v6543, %v6597
        %v6640 = vmul.f32 %v6544, %v6599
        %v6641 = vmul.f32 %v6545, %v6601
        %v6642 = vmul.f32 %v6546, %v6603
        %v6643 = vmul.f32 %v6547, %v6605
        %v6644 = vmul.f32 %v6548, %v6607
        %v6645 = vmul.f32 %v6549, %v6609
        %v6646 = vmul.f32 %v6550, %v6611
        %v6647 = vmul.f32 %v6551, %v6613
        %v6648 = vmul.f32 %v6552, %v6615
        %v6649 = vmul.f32 %v6553, %v6617
        %v6650 = vadd.f32 %v6618, %v5169
        %v6651 = vadd.f32 %v6619, %v5170
        %v6652 = vadd.f32 %v6620, %v5171
        %v6653 = vadd.f32 %v6621, %v5172
        %v6654 = vadd.f32 %v6622, %v5173
        %v6655 = vadd.f32 %v6623, %v5174
        %v6656 = vadd.f32 %v6624, %v5175
        %v6657 = vadd.f32 %v6625, %v5176
        %v6658 = vadd.f32 %v6626, %v5177
        %v6659 = vadd.f32 %v6627, %v5178
        %v6660 = vadd.f32 %v6628, %v5179
        %v6661 = vadd.f32 %v6629, %v5180
        %v6662 = vadd.f32 %v6630, %v5181
        %v6663 = vadd.f32 %v6631, %v5182
        %v6664 = vadd.f32 %v6632, %v5183
        %v6665 = vadd.f32 %v6633, %v5184
        %v6666 = vadd.f32 %v6634, %v5185
        %v6667 = vadd.f32 %v6635, %v5186
        %v6668 = vadd.f32 %v6636, %v5187
        %v6669 = vadd.f32 %v6637, %v5188
        %v6670 = vadd.f32 %v6638, %v5189
        %v6671 = vadd.f32 %v6639, %v5190
        %v6672 = vadd.f32 %v6640, %v5191
        %v6673 = vadd.f32 %v6641, %v5192
        %v6674 = vadd.f32 %v6642, %v5193
        %v6675 = vadd.f32 %v6643, %v5194
        %v6676 = vadd.f32 %v6644, %v5195
        %v6677 = vadd.f32 %v6645, %v5196
        %v6678 = vadd.f32 %v6646, %v5197
        %v6679 = vadd.f32 %v6647, %v5198
        %v6680 = vadd.f32 %v6648, %v5199
        %v6681 = vadd.f32 %v6649, %v5200
        %v6682 = vld [vmem:[#allocation18] sm:$0xff]
        %v6683 = vld [vmem:[#allocation18 + $0x8] sm:$0xff]
        %v6684 = vld [vmem:[#allocation18 + $0x10] sm:$0xff]
        %v6685 = vld [vmem:[#allocation18 + $0x18] sm:$0xff]
        %v6686 = vld [vmem:[#allocation18 + $0x20] sm:$0xff]
        %v6687 = vld [vmem:[#allocation18 + $0x28] sm:$0xff]
        %v6688 = vld [vmem:[#allocation18 + $0x30] sm:$0xff]
        %v6689 = vld [vmem:[#allocation18 + $0x38] sm:$0xff]
        %v6690 = vld [vmem:[#allocation18 + $0x40] sm:$0xff]
        %v6691 = vld [vmem:[#allocation18 + $0x48] sm:$0xff]
        %v6692 = vld [vmem:[#allocation18 + $0x50] sm:$0xff]
        %v6693 = vld [vmem:[#allocation18 + $0x58] sm:$0xff]
        %v6694 = vld [vmem:[#allocation18 + $0x60] sm:$0xff]
        %v6695 = vld [vmem:[#allocation18 + $0x68] sm:$0xff]
        %v6696 = vld [vmem:[#allocation18 + $0x70] sm:$0xff]
        %v6697 = vld [vmem:[#allocation18 + $0x78] sm:$0xff]
        %v6698 = vld [vmem:[#allocation20] sm:$0xff]
        %v6699 = vld [vmem:[#allocation20 + $0x8] sm:$0xff]
        %v6700 = vld [vmem:[#allocation20 + $0x10] sm:$0xff]
        %v6701 = vld [vmem:[#allocation20 + $0x18] sm:$0xff]
        %v6702 = vld [vmem:[#allocation20 + $0x20] sm:$0xff]
        %v6703 = vld [vmem:[#allocation20 + $0x28] sm:$0xff]
        %v6704 = vld [vmem:[#allocation20 + $0x30] sm:$0xff]
        %v6705 = vld [vmem:[#allocation20 + $0x38] sm:$0xff]
        %v6706 = vld [vmem:[#allocation20 + $0x40] sm:$0xff]
        %v6707 = vld [vmem:[#allocation20 + $0x48] sm:$0xff]
        %v6708 = vld [vmem:[#allocation20 + $0x50] sm:$0xff]
        %v6709 = vld [vmem:[#allocation20 + $0x58] sm:$0xff]
        %v6710 = vld [vmem:[#allocation20 + $0x60] sm:$0xff]
        %v6711 = vld [vmem:[#allocation20 + $0x68] sm:$0xff]
        %v6712 = vld [vmem:[#allocation20 + $0x70] sm:$0xff]
        %v6713 = vld [vmem:[#allocation20 + $0x78] sm:$0xff]
        %6714 = vmatprep.subr.mxu0 0.0
        %6715 = vmatpush1.msra.mxu0 %v6713
        %6716 = vmatprep.subr.mxu0 0.0
        %6717 = vmatpush1.msra.mxu0 %v6712
        %6718 = vmatprep.subr.mxu0 0.0
        %6719 = vmatpush1.msra.mxu0 %v6711
        %6720 = vmatprep.subr.mxu0 0.0
        %6721 = vmatpush1.msra.mxu0 %v6710
        %6722 = vmatprep.subr.mxu0 0.0
        %6723 = vmatpush1.msra.mxu0 %v6709
        %6724 = vmatprep.subr.mxu0 0.0
        %6725 = vmatpush1.msra.mxu0 %v6708
        %6726 = vmatprep.subr.mxu0 0.0
        %6727 = vmatpush1.msra.mxu0 %v6707
        %6728 = vmatprep.subr.mxu0 0.0
        %6729 = vmatpush1.msra.mxu0 %v6706
        %6730 = vmatprep.subr.mxu0 0.0
        %6731 = vmatpush1.msra.mxu0 %v6705
        %6732 = vmatprep.subr.mxu0 0.0
        %6733 = vmatpush1.msra.mxu0 %v6704
        %6734 = vmatprep.subr.mxu0 0.0
        %6735 = vmatpush1.msra.mxu0 %v6703
        %6736 = vmatprep.subr.mxu0 0.0
        %6737 = vmatpush1.msra.mxu0 %v6702
        %6738 = vmatprep.subr.mxu0 0.0
        %6739 = vmatpush1.msra.mxu0 %v6701
        %6740 = vmatprep.subr.mxu0 0.0
        %6741 = vmatpush1.msra.mxu0 %v6700
        %6742 = vmatprep.subr.mxu0 0.0
        %6743 = vmatpush1.msra.mxu0 %v6699
        %6744 = vmatprep.subr.mxu0 0.0
        %6745 = vmatpush1.msra.mxu0 %v6698
        %6746 = vmatprep.subr.mxu0 0.0
        %6747 = vmatpush2.msra.mxu0 0.0
        %6748 = vmatprep.subr.mxu0 0.0
        %6749 = vmatpush2.msra.mxu0 0.0
        %6750 = vmatprep.subr.mxu0 0.0
        %6751 = vmatpush2.msra.mxu0 0.0
        %6752 = vmatprep.subr.mxu0 0.0
        %6753 = vmatpush2.msra.mxu0 0.0
        %6754 = vmatprep.subr.mxu0 0.0
        %6755 = vmatpush2.msra.mxu0 0.0
        %6756 = vmatprep.subr.mxu0 0.0
        %6757 = vmatpush2.msra.mxu0 0.0
        %6758 = vmatprep.subr.mxu0 0.0
        %6759 = vmatpush2.msra.mxu0 0.0
        %6760 = vmatprep.subr.mxu0 0.0
        %6761 = vmatpush2.msra.mxu0 0.0
        %6762 = vmatprep.subr.mxu0 0.0
        %6763 = vmatpush2.msra.mxu0 0.0
        %6764 = vmatprep.subr.mxu0 0.0
        %6765 = vmatpush2.msra.mxu0 0.0
        %6766 = vmatprep.subr.mxu0 0.0
        %6767 = vmatpush2.msra.mxu0 0.0
        %6768 = vmatprep.subr.mxu0 0.0
        %6769 = vmatpush2.msra.mxu0 0.0
        %6770 = vmatprep.subr.mxu0 0.0
        %6771 = vmatpush2.msra.mxu0 0.0
        %6772 = vmatprep.subr.mxu0 0.0
        %6773 = vmatpush2.msra.mxu0 0.0
        %6774 = vmatprep.subr.mxu0 0.0
        %6775 = vmatpush2.msra.mxu0 0.0
        %6776 = vmatprep.subr.mxu0 0.0
        %6777 = vmatpush2.msra.mxu0 0.0
        %6778 = vmatprep.mubr.f32.mxu0 0.0
        %6779 = vmatmul.mubr.f32.gmra.mxu0 %v2757
        %v6780 = vpop.f32.mrf.mxu0
        %v6781 = vadd.f32 0.0, %v6780
        %v6782 = vpop.f32.mrf.mxu0
        %6783 = vmatprep.mubr.f32.mxu0 0.0
        %6784 = vmatmul.mubr.f32.gmra.mxu0 %v2758
        %v6785 = vpop.f32.mrf.mxu0
        %v6786 = vadd.f32 0.0, %v6785
        %v6787 = vpop.f32.mrf.mxu0
        %6788 = vmatprep.mubr.f32.mxu0 0.0
        %6789 = vmatmul.mubr.f32.gmra.mxu0 %v2759
        %v6790 = vpop.f32.mrf.mxu0
        %v6791 = vadd.f32 0.0, %v6790
        %v6792 = vpop.f32.mrf.mxu0
        %6793 = vmatprep.mubr.f32.mxu0 0.0
        %6794 = vmatmul.mubr.f32.gmra.mxu0 %v2760
        %v6795 = vpop.f32.mrf.mxu0
        %v6796 = vadd.f32 0.0, %v6795
        %v6797 = vpop.f32.mrf.mxu0
        %6798 = vmatprep.mubr.f32.mxu0 0.0
        %6799 = vmatmul.mubr.f32.gmra.mxu0 %v2761
        %v6800 = vpop.f32.mrf.mxu0
        %v6801 = vadd.f32 0.0, %v6800
        %v6802 = vpop.f32.mrf.mxu0
        %6803 = vmatprep.mubr.f32.mxu0 0.0
        %6804 = vmatmul.mubr.f32.gmra.mxu0 %v2762
        %v6805 = vpop.f32.mrf.mxu0
        %v6806 = vadd.f32 0.0, %v6805
        %v6807 = vpop.f32.mrf.mxu0
        %6808 = vmatprep.mubr.f32.mxu0 0.0
        %6809 = vmatmul.mubr.f32.gmra.mxu0 %v2763
        %v6810 = vpop.f32.mrf.mxu0
        %v6811 = vadd.f32 0.0, %v6810
        %v6812 = vpop.f32.mrf.mxu0
        %6813 = vmatprep.mubr.f32.mxu0 0.0
        %6814 = vmatmul.mubr.f32.gmra.mxu0 %v2764
        %v6815 = vpop.f32.mrf.mxu0
        %v6816 = vadd.f32 0.0, %v6815
        %v6817 = vpop.f32.mrf.mxu0
        %6818 = vmatprep.mubr.f32.mxu0 0.0
        %6819 = vmatmul.mubr.f32.gmra.mxu0 %v2765
        %v6820 = vpop.f32.mrf.mxu0
        %v6821 = vadd.f32 0.0, %v6820
        %v6822 = vpop.f32.mrf.mxu0
        %6823 = vmatprep.mubr.f32.mxu0 0.0
        %6824 = vmatmul.mubr.f32.gmra.mxu0 %v2766
        %v6825 = vpop.f32.mrf.mxu0
        %v6826 = vadd.f32 0.0, %v6825
        %v6827 = vpop.f32.mrf.mxu0
        %6828 = vmatprep.mubr.f32.mxu0 0.0
        %6829 = vmatmul.mubr.f32.gmra.mxu0 %v2767
        %v6830 = vpop.f32.mrf.mxu0
        %v6831 = vadd.f32 0.0, %v6830
        %v6832 = vpop.f32.mrf.mxu0
        %6833 = vmatprep.mubr.f32.mxu0 0.0
        %6834 = vmatmul.mubr.f32.gmra.mxu0 %v2768
        %v6835 = vpop.f32.mrf.mxu0
        %v6836 = vadd.f32 0.0, %v6835
        %v6837 = vpop.f32.mrf.mxu0
        %6838 = vmatprep.mubr.f32.mxu0 0.0
        %6839 = vmatmul.mubr.f32.gmra.mxu0 %v2769
        %v6840 = vpop.f32.mrf.mxu0
        %v6841 = vadd.f32 0.0, %v6840
        %v6842 = vpop.f32.mrf.mxu0
        %6843 = vmatprep.mubr.f32.mxu0 0.0
        %6844 = vmatmul.mubr.f32.gmra.mxu0 %v2770
        %v6845 = vpop.f32.mrf.mxu0
        %v6846 = vadd.f32 0.0, %v6845
        %v6847 = vpop.f32.mrf.mxu0
        %6848 = vmatprep.mubr.f32.mxu0 0.0
        %6849 = vmatmul.mubr.f32.gmra.mxu0 %v2771
        %v6850 = vpop.f32.mrf.mxu0
        %v6851 = vadd.f32 0.0, %v6850
        %v6852 = vpop.f32.mrf.mxu0
        %6853 = vmatprep.mubr.f32.mxu0 0.0
        %6854 = vmatmul.mubr.f32.gmra.mxu0 %v2772
        %v6855 = vpop.f32.mrf.mxu0
        %v6856 = vadd.f32 0.0, %v6855
        %v6857 = vpop.f32.mrf.mxu0
        %6858 = vmatprep.mubr.f32.mxu0 0.0
        %6859 = vmatmul.mubr.f32.gmra.mxu0 %v2773
        %v6860 = vpop.f32.mrf.mxu0
        %v6861 = vadd.f32 0.0, %v6860
        %v6862 = vpop.f32.mrf.mxu0
        %6863 = vmatprep.mubr.f32.mxu0 0.0
        %6864 = vmatmul.mubr.f32.gmra.mxu0 %v2774
        %v6865 = vpop.f32.mrf.mxu0
        %v6866 = vadd.f32 0.0, %v6865
        %v6867 = vpop.f32.mrf.mxu0
        %6868 = vmatprep.mubr.f32.mxu0 0.0
        %6869 = vmatmul.mubr.f32.gmra.mxu0 %v2775
        %v6870 = vpop.f32.mrf.mxu0
        %v6871 = vadd.f32 0.0, %v6870
        %v6872 = vpop.f32.mrf.mxu0
        %6873 = vmatprep.mubr.f32.mxu0 0.0
        %6874 = vmatmul.mubr.f32.gmra.mxu0 %v2776
        %v6875 = vpop.f32.mrf.mxu0
        %v6876 = vadd.f32 0.0, %v6875
        %v6877 = vpop.f32.mrf.mxu0
        %6878 = vmatprep.mubr.f32.mxu0 0.0
        %6879 = vmatmul.mubr.f32.gmra.mxu0 %v2777
        %v6880 = vpop.f32.mrf.mxu0
        %v6881 = vadd.f32 0.0, %v6880
        %v6882 = vpop.f32.mrf.mxu0
        %6883 = vmatprep.mubr.f32.mxu0 0.0
        %6884 = vmatmul.mubr.f32.gmra.mxu0 %v2778
        %v6885 = vpop.f32.mrf.mxu0
        %v6886 = vadd.f32 0.0, %v6885
        %v6887 = vpop.f32.mrf.mxu0
        %6888 = vmatprep.mubr.f32.mxu0 0.0
        %6889 = vmatmul.mubr.f32.gmra.mxu0 %v2779
        %v6890 = vpop.f32.mrf.mxu0
        %v6891 = vadd.f32 0.0, %v6890
        %v6892 = vpop.f32.mrf.mxu0
        %6893 = vmatprep.mubr.f32.mxu0 0.0
        %6894 = vmatmul.mubr.f32.gmra.mxu0 %v2780
        %v6895 = vpop.f32.mrf.mxu0
        %v6896 = vadd.f32 0.0, %v6895
        %v6897 = vpop.f32.mrf.mxu0
        %6898 = vmatprep.mubr.f32.mxu0 0.0
        %6899 = vmatmul.mubr.f32.gmra.mxu0 %v2781
        %v6900 = vpop.f32.mrf.mxu0
        %v6901 = vadd.f32 0.0, %v6900
        %v6902 = vpop.f32.mrf.mxu0
        %6903 = vmatprep.mubr.f32.mxu0 0.0
        %6904 = vmatmul.mubr.f32.gmra.mxu0 %v2782
        %v6905 = vpop.f32.mrf.mxu0
        %v6906 = vadd.f32 0.0, %v6905
        %v6907 = vpop.f32.mrf.mxu0
        %6908 = vmatprep.mubr.f32.mxu0 0.0
        %6909 = vmatmul.mubr.f32.gmra.mxu0 %v2783
        %v6910 = vpop.f32.mrf.mxu0
        %v6911 = vadd.f32 0.0, %v6910
        %v6912 = vpop.f32.mrf.mxu0
        %6913 = vmatprep.mubr.f32.mxu0 0.0
        %6914 = vmatmul.mubr.f32.gmra.mxu0 %v2784
        %v6915 = vpop.f32.mrf.mxu0
        %v6916 = vadd.f32 0.0, %v6915
        %v6917 = vpop.f32.mrf.mxu0
        %6918 = vmatprep.mubr.f32.mxu0 0.0
        %6919 = vmatmul.mubr.f32.gmra.mxu0 %v2785
        %v6920 = vpop.f32.mrf.mxu0
        %v6921 = vadd.f32 0.0, %v6920
        %v6922 = vpop.f32.mrf.mxu0
        %6923 = vmatprep.mubr.f32.mxu0 0.0
        %6924 = vmatmul.mubr.f32.gmra.mxu0 %v2786
        %v6925 = vpop.f32.mrf.mxu0
        %v6926 = vadd.f32 0.0, %v6925
        %v6927 = vpop.f32.mrf.mxu0
        %6928 = vmatprep.mubr.f32.mxu0 0.0
        %6929 = vmatmul.mubr.f32.gmra.mxu0 %v2787
        %v6930 = vpop.f32.mrf.mxu0
        %v6931 = vadd.f32 0.0, %v6930
        %v6932 = vpop.f32.mrf.mxu0
        %6933 = vmatprep.mubr.f32.mxu0 0.0
        %6934 = vmatmul.mubr.f32.gmra.mxu0 %v2788
        %v6935 = vpop.f32.mrf.mxu0
        %v6936 = vadd.f32 0.0, %v6935
        %v6937 = vpop.f32.mrf.mxu0
        %6938 = vdwg.mxu0
        %6939 = vmatprep.subr.mxu0 0.0
        %6940 = vmatpush1.msra.mxu0 %v6697
        %6941 = vmatprep.subr.mxu0 0.0
        %6942 = vmatpush1.msra.mxu0 %v6696
        %6943 = vmatprep.subr.mxu0 0.0
        %6944 = vmatpush1.msra.mxu0 %v6695
        %6945 = vmatprep.subr.mxu0 0.0
        %6946 = vmatpush1.msra.mxu0 %v6694
        %6947 = vmatprep.subr.mxu0 0.0
        %6948 = vmatpush1.msra.mxu0 %v6693
        %6949 = vmatprep.subr.mxu0 0.0
        %6950 = vmatpush1.msra.mxu0 %v6692
        %6951 = vmatprep.subr.mxu0 0.0
        %6952 = vmatpush1.msra.mxu0 %v6691
        %6953 = vmatprep.subr.mxu0 0.0
        %6954 = vmatpush1.msra.mxu0 %v6690
        %6955 = vmatprep.subr.mxu0 0.0
        %6956 = vmatpush1.msra.mxu0 %v6689
        %6957 = vmatprep.subr.mxu0 0.0
        %6958 = vmatpush1.msra.mxu0 %v6688
        %6959 = vmatprep.subr.mxu0 0.0
        %6960 = vmatpush1.msra.mxu0 %v6687
        %6961 = vmatprep.subr.mxu0 0.0
        %6962 = vmatpush1.msra.mxu0 %v6686
        %6963 = vmatprep.subr.mxu0 0.0
        %6964 = vmatpush1.msra.mxu0 %v6685
        %6965 = vmatprep.subr.mxu0 0.0
        %6966 = vmatpush1.msra.mxu0 %v6684
        %6967 = vmatprep.subr.mxu0 0.0
        %6968 = vmatpush1.msra.mxu0 %v6683
        %6969 = vmatprep.subr.mxu0 0.0
        %6970 = vmatpush1.msra.mxu0 %v6682
        %6971 = vmatprep.subr.mxu0 0.0
        %6972 = vmatpush2.msra.mxu0 0.0
        %6973 = vmatprep.subr.mxu0 0.0
        %6974 = vmatpush2.msra.mxu0 0.0
        %6975 = vmatprep.subr.mxu0 0.0
        %6976 = vmatpush2.msra.mxu0 0.0
        %6977 = vmatprep.subr.mxu0 0.0
        %6978 = vmatpush2.msra.mxu0 0.0
        %6979 = vmatprep.subr.mxu0 0.0
        %6980 = vmatpush2.msra.mxu0 0.0
        %6981 = vmatprep.subr.mxu0 0.0
        %6982 = vmatpush2.msra.mxu0 0.0
        %6983 = vmatprep.subr.mxu0 0.0
        %6984 = vmatpush2.msra.mxu0 0.0
        %6985 = vmatprep.subr.mxu0 0.0
        %6986 = vmatpush2.msra.mxu0 0.0
        %6987 = vmatprep.subr.mxu0 0.0
        %6988 = vmatpush2.msra.mxu0 0.0
        %6989 = vmatprep.subr.mxu0 0.0
        %6990 = vmatpush2.msra.mxu0 0.0
        %6991 = vmatprep.subr.mxu0 0.0
        %6992 = vmatpush2.msra.mxu0 0.0
        %6993 = vmatprep.subr.mxu0 0.0
        %6994 = vmatpush2.msra.mxu0 0.0
        %6995 = vmatprep.subr.mxu0 0.0
        %6996 = vmatpush2.msra.mxu0 0.0
        %6997 = vmatprep.subr.mxu0 0.0
        %6998 = vmatpush2.msra.mxu0 0.0
        %6999 = vmatprep.subr.mxu0 0.0
        %7000 = vmatpush2.msra.mxu0 0.0
        %7001 = vmatprep.subr.mxu0 0.0
        %7002 = vmatpush2.msra.mxu0 0.0
        %7003 = vmatprep.mubr.f32.mxu0 0.0
        %7004 = vmatmul.mubr.f32.gmra.mxu0 %v6650
        %v7005 = vpop.f32.mrf.mxu0
        %v7006 = vadd.f32 %v6781, %v7005
        %v7007 = vpop.f32.mrf.mxu0
        %7008 = vmatprep.mubr.f32.mxu0 0.0
        %7009 = vmatmul.mubr.f32.gmra.mxu0 %v6651
        %v7010 = vpop.f32.mrf.mxu0
        %v7011 = vadd.f32 %v6786, %v7010
        %v7012 = vpop.f32.mrf.mxu0
        %7013 = vmatprep.mubr.f32.mxu0 0.0
        %7014 = vmatmul.mubr.f32.gmra.mxu0 %v6652
        %v7015 = vpop.f32.mrf.mxu0
        %v7016 = vadd.f32 %v6791, %v7015
        %v7017 = vpop.f32.mrf.mxu0
        %7018 = vmatprep.mubr.f32.mxu0 0.0
        %7019 = vmatmul.mubr.f32.gmra.mxu0 %v6653
        %v7020 = vpop.f32.mrf.mxu0
        %v7021 = vadd.f32 %v6796, %v7020
        %v7022 = vpop.f32.mrf.mxu0
        %7023 = vmatprep.mubr.f32.mxu0 0.0
        %7024 = vmatmul.mubr.f32.gmra.mxu0 %v6654
        %v7025 = vpop.f32.mrf.mxu0
        %v7026 = vadd.f32 %v6801, %v7025
        %v7027 = vpop.f32.mrf.mxu0
        %7028 = vmatprep.mubr.f32.mxu0 0.0
        %7029 = vmatmul.mubr.f32.gmra.mxu0 %v6655
        %v7030 = vpop.f32.mrf.mxu0
        %v7031 = vadd.f32 %v6806, %v7030
        %v7032 = vpop.f32.mrf.mxu0
        %7033 = vmatprep.mubr.f32.mxu0 0.0
        %7034 = vmatmul.mubr.f32.gmra.mxu0 %v6656
        %v7035 = vpop.f32.mrf.mxu0
        %v7036 = vadd.f32 %v6811, %v7035
        %v7037 = vpop.f32.mrf.mxu0
        %7038 = vmatprep.mubr.f32.mxu0 0.0
        %7039 = vmatmul.mubr.f32.gmra.mxu0 %v6657
        %v7040 = vpop.f32.mrf.mxu0
        %v7041 = vadd.f32 %v6816, %v7040
        %v7042 = vpop.f32.mrf.mxu0
        %7043 = vmatprep.mubr.f32.mxu0 0.0
        %7044 = vmatmul.mubr.f32.gmra.mxu0 %v6658
        %v7045 = vpop.f32.mrf.mxu0
        %v7046 = vadd.f32 %v6821, %v7045
        %v7047 = vpop.f32.mrf.mxu0
        %7048 = vmatprep.mubr.f32.mxu0 0.0
        %7049 = vmatmul.mubr.f32.gmra.mxu0 %v6659
        %v7050 = vpop.f32.mrf.mxu0
        %v7051 = vadd.f32 %v6826, %v7050
        %v7052 = vpop.f32.mrf.mxu0
        %7053 = vmatprep.mubr.f32.mxu0 0.0
        %7054 = vmatmul.mubr.f32.gmra.mxu0 %v6660
        %v7055 = vpop.f32.mrf.mxu0
        %v7056 = vadd.f32 %v6831, %v7055
        %v7057 = vpop.f32.mrf.mxu0
        %7058 = vmatprep.mubr.f32.mxu0 0.0
        %7059 = vmatmul.mubr.f32.gmra.mxu0 %v6661
        %v7060 = vpop.f32.mrf.mxu0
        %v7061 = vadd.f32 %v6836, %v7060
        %v7062 = vpop.f32.mrf.mxu0
        %7063 = vmatprep.mubr.f32.mxu0 0.0
        %7064 = vmatmul.mubr.f32.gmra.mxu0 %v6662
        %v7065 = vpop.f32.mrf.mxu0
        %v7066 = vadd.f32 %v6841, %v7065
        %v7067 = vpop.f32.mrf.mxu0
        %7068 = vmatprep.mubr.f32.mxu0 0.0
        %7069 = vmatmul.mubr.f32.gmra.mxu0 %v6663
        %v7070 = vpop.f32.mrf.mxu0
        %v7071 = vadd.f32 %v6846, %v7070
        %v7072 = vpop.f32.mrf.mxu0
        %7073 = vmatprep.mubr.f32.mxu0 0.0
        %7074 = vmatmul.mubr.f32.gmra.mxu0 %v6664
        %v7075 = vpop.f32.mrf.mxu0
        %v7076 = vadd.f32 %v6851, %v7075
        %v7077 = vpop.f32.mrf.mxu0
        %7078 = vmatprep.mubr.f32.mxu0 0.0
        %7079 = vmatmul.mubr.f32.gmra.mxu0 %v6665
        %v7080 = vpop.f32.mrf.mxu0
        %v7081 = vadd.f32 %v6856, %v7080
        %v7082 = vpop.f32.mrf.mxu0
        %7083 = vmatprep.mubr.f32.mxu0 0.0
        %7084 = vmatmul.mubr.f32.gmra.mxu0 %v6666
        %v7085 = vpop.f32.mrf.mxu0
        %v7086 = vadd.f32 %v6861, %v7085
        %v7087 = vpop.f32.mrf.mxu0
        %7088 = vmatprep.mubr.f32.mxu0 0.0
        %7089 = vmatmul.mubr.f32.gmra.mxu0 %v6667
        %v7090 = vpop.f32.mrf.mxu0
        %v7091 = vadd.f32 %v6866, %v7090
        %v7092 = vpop.f32.mrf.mxu0
        %7093 = vmatprep.mubr.f32.mxu0 0.0
        %7094 = vmatmul.mubr.f32.gmra.mxu0 %v6668
        %v7095 = vpop.f32.mrf.mxu0
        %v7096 = vadd.f32 %v6871, %v7095
        %v7097 = vpop.f32.mrf.mxu0
        %7098 = vmatprep.mubr.f32.mxu0 0.0
        %7099 = vmatmul.mubr.f32.gmra.mxu0 %v6669
        %v7100 = vpop.f32.mrf.mxu0
        %v7101 = vadd.f32 %v6876, %v7100
        %v7102 = vpop.f32.mrf.mxu0
        %7103 = vmatprep.mubr.f32.mxu0 0.0
        %7104 = vmatmul.mubr.f32.gmra.mxu0 %v6670
        %v7105 = vpop.f32.mrf.mxu0
        %v7106 = vadd.f32 %v6881, %v7105
        %v7107 = vpop.f32.mrf.mxu0
        %7108 = vmatprep.mubr.f32.mxu0 0.0
        %7109 = vmatmul.mubr.f32.gmra.mxu0 %v6671
        %v7110 = vpop.f32.mrf.mxu0
        %v7111 = vadd.f32 %v6886, %v7110
        %v7112 = vpop.f32.mrf.mxu0
        %7113 = vmatprep.mubr.f32.mxu0 0.0
        %7114 = vmatmul.mubr.f32.gmra.mxu0 %v6672
        %v7115 = vpop.f32.mrf.mxu0
        %v7116 = vadd.f32 %v6891, %v7115
        %v7117 = vpop.f32.mrf.mxu0
        %7118 = vmatprep.mubr.f32.mxu0 0.0
        %7119 = vmatmul.mubr.f32.gmra.mxu0 %v6673
        %v7120 = vpop.f32.mrf.mxu0
        %v7121 = vadd.f32 %v6896, %v7120
        %v7122 = vpop.f32.mrf.mxu0
        %7123 = vmatprep.mubr.f32.mxu0 0.0
        %7124 = vmatmul.mubr.f32.gmra.mxu0 %v6674
        %v7125 = vpop.f32.mrf.mxu0
        %v7126 = vadd.f32 %v6901, %v7125
        %v7127 = vpop.f32.mrf.mxu0
        %7128 = vmatprep.mubr.f32.mxu0 0.0
        %7129 = vmatmul.mubr.f32.gmra.mxu0 %v6675
        %v7130 = vpop.f32.mrf.mxu0
        %v7131 = vadd.f32 %v6906, %v7130
        %v7132 = vpop.f32.mrf.mxu0
        %7133 = vmatprep.mubr.f32.mxu0 0.0
        %7134 = vmatmul.mubr.f32.gmra.mxu0 %v6676
        %v7135 = vpop.f32.mrf.mxu0
        %v7136 = vadd.f32 %v6911, %v7135
        %v7137 = vpop.f32.mrf.mxu0
        %7138 = vmatprep.mubr.f32.mxu0 0.0
        %7139 = vmatmul.mubr.f32.gmra.mxu0 %v6677
        %v7140 = vpop.f32.mrf.mxu0
        %v7141 = vadd.f32 %v6916, %v7140
        %v7142 = vpop.f32.mrf.mxu0
        %7143 = vmatprep.mubr.f32.mxu0 0.0
        %7144 = vmatmul.mubr.f32.gmra.mxu0 %v6678
        %v7145 = vpop.f32.mrf.mxu0
        %v7146 = vadd.f32 %v6921, %v7145
        %v7147 = vpop.f32.mrf.mxu0
        %7148 = vmatprep.mubr.f32.mxu0 0.0
        %7149 = vmatmul.mubr.f32.gmra.mxu0 %v6679
        %v7150 = vpop.f32.mrf.mxu0
        %v7151 = vadd.f32 %v6926, %v7150
        %v7152 = vpop.f32.mrf.mxu0
        %7153 = vmatprep.mubr.f32.mxu0 0.0
        %7154 = vmatmul.mubr.f32.gmra.mxu0 %v6680
        %v7155 = vpop.f32.mrf.mxu0
        %v7156 = vadd.f32 %v6931, %v7155
        %v7157 = vpop.f32.mrf.mxu0
        %7158 = vmatprep.mubr.f32.mxu0 0.0
        %7159 = vmatmul.mubr.f32.gmra.mxu0 %v6681
        %v7160 = vpop.f32.mrf.mxu0
        %v7161 = vadd.f32 %v6936, %v7160
        %v7162 = vpop.f32.mrf.mxu0
        %7163 = vdwg.mxu0
        %v7164 = vld [vmem:[%s11] sm:$0x1]
        %v7166 = vlaneseq
        %v7167 = vshrl.u32 %v7166, 7
        %v7168 = vsub.s32 0, %v7167
        %v7169 = vrot.slane %v7164, %v7168
        %v7171 = vadd.f32 %v7006, %v7169
        %v7172 = vadd.f32 %v7011, %v7169
        %v7173 = vadd.f32 %v7016, %v7169
        %v7174 = vadd.f32 %v7021, %v7169
        %v7175 = vadd.f32 %v7026, %v7169
        %v7176 = vadd.f32 %v7031, %v7169
        %v7177 = vadd.f32 %v7036, %v7169
        %v7178 = vadd.f32 %v7041, %v7169
        %v7179 = vadd.f32 %v7046, %v7169
        %v7180 = vadd.f32 %v7051, %v7169
        %v7181 = vadd.f32 %v7056, %v7169
        %v7182 = vadd.f32 %v7061, %v7169
        %v7183 = vadd.f32 %v7066, %v7169
        %v7184 = vadd.f32 %v7071, %v7169
        %v7185 = vadd.f32 %v7076, %v7169
        %v7186 = vadd.f32 %v7081, %v7169
        %v7187 = vadd.f32 %v7086, %v7169
        %v7188 = vadd.f32 %v7091, %v7169
        %v7189 = vadd.f32 %v7096, %v7169
        %v7190 = vadd.f32 %v7101, %v7169
        %v7191 = vadd.f32 %v7106, %v7169
        %v7192 = vadd.f32 %v7111, %v7169
        %v7193 = vadd.f32 %v7116, %v7169
        %v7194 = vadd.f32 %v7121, %v7169
        %v7195 = vadd.f32 %v7126, %v7169
        %v7196 = vadd.f32 %v7131, %v7169
        %v7197 = vadd.f32 %v7136, %v7169
        %v7198 = vadd.f32 %v7141, %v7169
        %v7199 = vadd.f32 %v7146, %v7169
        %v7200 = vadd.f32 %v7151, %v7169
        %v7201 = vadd.f32 %v7156, %v7169
        %v7202 = vadd.f32 %v7161, %v7169
        %v7203 = vmax.f32 %v7171, 0.0
        %v7204 = vmax.f32 %v7172, 0.0
        %v7205 = vmax.f32 %v7173, 0.0
        %v7206 = vmax.f32 %v7174, 0.0
        %v7207 = vmax.f32 %v7175, 0.0
        %v7208 = vmax.f32 %v7176, 0.0
        %v7209 = vmax.f32 %v7177, 0.0
        %v7210 = vmax.f32 %v7178, 0.0
        %v7211 = vmax.f32 %v7179, 0.0
        %v7212 = vmax.f32 %v7180, 0.0
        %v7213 = vmax.f32 %v7181, 0.0
        %v7214 = vmax.f32 %v7182, 0.0
        %v7215 = vmax.f32 %v7183, 0.0
        %v7216 = vmax.f32 %v7184, 0.0
        %v7217 = vmax.f32 %v7185, 0.0
        %v7218 = vmax.f32 %v7186, 0.0
        %v7219 = vmax.f32 %v7187, 0.0
        %v7220 = vmax.f32 %v7188, 0.0
        %v7221 = vmax.f32 %v7189, 0.0
        %v7222 = vmax.f32 %v7190, 0.0
        %v7223 = vmax.f32 %v7191, 0.0
        %v7224 = vmax.f32 %v7192, 0.0
        %v7225 = vmax.f32 %v7193, 0.0
        %v7226 = vmax.f32 %v7194, 0.0
        %v7227 = vmax.f32 %v7195, 0.0
        %v7228 = vmax.f32 %v7196, 0.0
        %v7229 = vmax.f32 %v7197, 0.0
        %v7230 = vmax.f32 %v7198, 0.0
        %v7231 = vmax.f32 %v7199, 0.0
        %v7232 = vmax.f32 %v7200, 0.0
        %v7233 = vmax.f32 %v7201, 0.0
        %v7234 = vmax.f32 %v7202, 0.0
        %v7235 = vld [vmem:[#allocation21] sm:$0xff]
        %v7236 = vld [vmem:[#allocation21 + $0x8] sm:$0xff]
        %v7237 = vld [vmem:[#allocation21 + $0x10] sm:$0xff]
        %v7238 = vld [vmem:[#allocation21 + $0x18] sm:$0xff]
        %v7239 = vld [vmem:[#allocation21 + $0x20] sm:$0xff]
        %v7240 = vld [vmem:[#allocation21 + $0x28] sm:$0xff]
        %v7241 = vld [vmem:[#allocation21 + $0x30] sm:$0xff]
        %v7242 = vld [vmem:[#allocation21 + $0x38] sm:$0xff]
        %v7243 = vld [vmem:[#allocation21 + $0x40] sm:$0xff]
        %v7244 = vld [vmem:[#allocation21 + $0x48] sm:$0xff]
        %v7245 = vld [vmem:[#allocation21 + $0x50] sm:$0xff]
        %v7246 = vld [vmem:[#allocation21 + $0x58] sm:$0xff]
        %v7247 = vld [vmem:[#allocation21 + $0x60] sm:$0xff]
        %v7248 = vld [vmem:[#allocation21 + $0x68] sm:$0xff]
        %v7249 = vld [vmem:[#allocation21 + $0x70] sm:$0xff]
        %v7250 = vld [vmem:[#allocation21 + $0x78] sm:$0xff]
        %v7251 = vld [vmem:[%s13] sm:$0x1]
        %v7253 = vlaneseq
        %v7254 = vshrl.u32 %v7253, 7
        %v7255 = vsub.s32 0, %v7254
        %v7256 = vrot.slane %v7251, %v7255
        %7258 = vmatprep.subr.mxu0 0.0
        %7259 = vmatpush1.msra.mxu0 %v7250
        %7260 = vmatprep.subr.mxu0 0.0
        %7261 = vmatpush1.msra.mxu0 %v7249
        %7262 = vmatprep.subr.mxu0 0.0
        %7263 = vmatpush1.msra.mxu0 %v7248
        %7264 = vmatprep.subr.mxu0 0.0
        %7265 = vmatpush1.msra.mxu0 %v7247
        %7266 = vmatprep.subr.mxu0 0.0
        %7267 = vmatpush1.msra.mxu0 %v7246
        %7268 = vmatprep.subr.mxu0 0.0
        %7269 = vmatpush1.msra.mxu0 %v7245
        %7270 = vmatprep.subr.mxu0 0.0
        %7271 = vmatpush1.msra.mxu0 %v7244
        %7272 = vmatprep.subr.mxu0 0.0
        %7273 = vmatpush1.msra.mxu0 %v7243
        %7274 = vmatprep.subr.mxu0 0.0
        %7275 = vmatpush1.msra.mxu0 %v7242
        %7276 = vmatprep.subr.mxu0 0.0
        %7277 = vmatpush1.msra.mxu0 %v7241
        %7278 = vmatprep.subr.mxu0 0.0
        %7279 = vmatpush1.msra.mxu0 %v7240
        %7280 = vmatprep.subr.mxu0 0.0
        %7281 = vmatpush1.msra.mxu0 %v7239
        %7282 = vmatprep.subr.mxu0 0.0
        %7283 = vmatpush1.msra.mxu0 %v7238
        %7284 = vmatprep.subr.mxu0 0.0
        %7285 = vmatpush1.msra.mxu0 %v7237
        %7286 = vmatprep.subr.mxu0 0.0
        %7287 = vmatpush1.msra.mxu0 %v7236
        %7288 = vmatprep.subr.mxu0 0.0
        %7289 = vmatpush1.msra.mxu0 %v7235
        %7290 = vmatprep.subr.mxu0 0.0
        %7291 = vmatpush2.msra.mxu0 0.0
        %7292 = vmatprep.subr.mxu0 0.0
        %7293 = vmatpush2.msra.mxu0 0.0
        %7294 = vmatprep.subr.mxu0 0.0
        %7295 = vmatpush2.msra.mxu0 0.0
        %7296 = vmatprep.subr.mxu0 0.0
        %7297 = vmatpush2.msra.mxu0 0.0
        %7298 = vmatprep.subr.mxu0 0.0
        %7299 = vmatpush2.msra.mxu0 0.0
        %7300 = vmatprep.subr.mxu0 0.0
        %7301 = vmatpush2.msra.mxu0 0.0
        %7302 = vmatprep.subr.mxu0 0.0
        %7303 = vmatpush2.msra.mxu0 0.0
        %7304 = vmatprep.subr.mxu0 0.0
        %7305 = vmatpush2.msra.mxu0 0.0
        %7306 = vmatprep.subr.mxu0 0.0
        %7307 = vmatpush2.msra.mxu0 0.0
        %7308 = vmatprep.subr.mxu0 0.0
        %7309 = vmatpush2.msra.mxu0 0.0
        %7310 = vmatprep.subr.mxu0 0.0
        %7311 = vmatpush2.msra.mxu0 0.0
        %7312 = vmatprep.subr.mxu0 0.0
        %7313 = vmatpush2.msra.mxu0 0.0
        %7314 = vmatprep.subr.mxu0 0.0
        %7315 = vmatpush2.msra.mxu0 0.0
        %7316 = vmatprep.subr.mxu0 0.0
        %7317 = vmatpush2.msra.mxu0 0.0
        %7318 = vmatprep.subr.mxu0 0.0
        %7319 = vmatpush2.msra.mxu0 0.0
        %7320 = vmatprep.subr.mxu0 0.0
        %7321 = vmatpush2.msra.mxu0 0.0
        %7322 = vmatprep.mubr.f32.mxu0 0.0
        %7323 = vmatmul.mubr.f32.gmra.mxu0 %v7203
        %v7324 = vpop.f32.mrf.mxu0
        %v7325 = vadd.f32 %v7256, %v7324
        %v7326 = vpop.f32.mrf.mxu0
        %7327 = vmatprep.mubr.f32.mxu0 0.0
        %7328 = vmatmul.mubr.f32.gmra.mxu0 %v7204
        %v7329 = vpop.f32.mrf.mxu0
        %v7330 = vadd.f32 %v7256, %v7329
        %v7331 = vpop.f32.mrf.mxu0
        %7332 = vmatprep.mubr.f32.mxu0 0.0
        %7333 = vmatmul.mubr.f32.gmra.mxu0 %v7205
        %v7334 = vpop.f32.mrf.mxu0
        %v7335 = vadd.f32 %v7256, %v7334
        %v7336 = vpop.f32.mrf.mxu0
        %7337 = vmatprep.mubr.f32.mxu0 0.0
        %7338 = vmatmul.mubr.f32.gmra.mxu0 %v7206
        %v7339 = vpop.f32.mrf.mxu0
        %v7340 = vadd.f32 %v7256, %v7339
        %v7341 = vpop.f32.mrf.mxu0
        %7342 = vmatprep.mubr.f32.mxu0 0.0
        %7343 = vmatmul.mubr.f32.gmra.mxu0 %v7207
        %v7344 = vpop.f32.mrf.mxu0
        %v7345 = vadd.f32 %v7256, %v7344
        %v7346 = vpop.f32.mrf.mxu0
        %7347 = vmatprep.mubr.f32.mxu0 0.0
        %7348 = vmatmul.mubr.f32.gmra.mxu0 %v7208
        %v7349 = vpop.f32.mrf.mxu0
        %v7350 = vadd.f32 %v7256, %v7349
        %v7351 = vpop.f32.mrf.mxu0
        %7352 = vmatprep.mubr.f32.mxu0 0.0
        %7353 = vmatmul.mubr.f32.gmra.mxu0 %v7209
        %v7354 = vpop.f32.mrf.mxu0
        %v7355 = vadd.f32 %v7256, %v7354
        %v7356 = vpop.f32.mrf.mxu0
        %7357 = vmatprep.mubr.f32.mxu0 0.0
        %7358 = vmatmul.mubr.f32.gmra.mxu0 %v7210
        %v7359 = vpop.f32.mrf.mxu0
        %v7360 = vadd.f32 %v7256, %v7359
        %v7361 = vpop.f32.mrf.mxu0
        %7362 = vmatprep.mubr.f32.mxu0 0.0
        %7363 = vmatmul.mubr.f32.gmra.mxu0 %v7211
        %v7364 = vpop.f32.mrf.mxu0
        %v7365 = vadd.f32 %v7256, %v7364
        %v7366 = vpop.f32.mrf.mxu0
        %7367 = vmatprep.mubr.f32.mxu0 0.0
        %7368 = vmatmul.mubr.f32.gmra.mxu0 %v7212
        %v7369 = vpop.f32.mrf.mxu0
        %v7370 = vadd.f32 %v7256, %v7369
        %v7371 = vpop.f32.mrf.mxu0
        %7372 = vmatprep.mubr.f32.mxu0 0.0
        %7373 = vmatmul.mubr.f32.gmra.mxu0 %v7213
        %v7374 = vpop.f32.mrf.mxu0
        %v7375 = vadd.f32 %v7256, %v7374
        %v7376 = vpop.f32.mrf.mxu0
        %7377 = vmatprep.mubr.f32.mxu0 0.0
        %7378 = vmatmul.mubr.f32.gmra.mxu0 %v7214
        %v7379 = vpop.f32.mrf.mxu0
        %v7380 = vadd.f32 %v7256, %v7379
        %v7381 = vpop.f32.mrf.mxu0
        %7382 = vmatprep.mubr.f32.mxu0 0.0
        %7383 = vmatmul.mubr.f32.gmra.mxu0 %v7215
        %v7384 = vpop.f32.mrf.mxu0
        %v7385 = vadd.f32 %v7256, %v7384
        %v7386 = vpop.f32.mrf.mxu0
        %7387 = vmatprep.mubr.f32.mxu0 0.0
        %7388 = vmatmul.mubr.f32.gmra.mxu0 %v7216
        %v7389 = vpop.f32.mrf.mxu0
        %v7390 = vadd.f32 %v7256, %v7389
        %v7391 = vpop.f32.mrf.mxu0
        %7392 = vmatprep.mubr.f32.mxu0 0.0
        %7393 = vmatmul.mubr.f32.gmra.mxu0 %v7217
        %v7394 = vpop.f32.mrf.mxu0
        %v7395 = vadd.f32 %v7256, %v7394
        %v7396 = vpop.f32.mrf.mxu0
        %7397 = vmatprep.mubr.f32.mxu0 0.0
        %7398 = vmatmul.mubr.f32.gmra.mxu0 %v7218
        %v7399 = vpop.f32.mrf.mxu0
        %v7400 = vadd.f32 %v7256, %v7399
        %v7401 = vpop.f32.mrf.mxu0
        %7402 = vmatprep.mubr.f32.mxu0 0.0
        %7403 = vmatmul.mubr.f32.gmra.mxu0 %v7219
        %v7404 = vpop.f32.mrf.mxu0
        %v7405 = vadd.f32 %v7256, %v7404
        %v7406 = vpop.f32.mrf.mxu0
        %7407 = vmatprep.mubr.f32.mxu0 0.0
        %7408 = vmatmul.mubr.f32.gmra.mxu0 %v7220
        %v7409 = vpop.f32.mrf.mxu0
        %v7410 = vadd.f32 %v7256, %v7409
        %v7411 = vpop.f32.mrf.mxu0
        %7412 = vmatprep.mubr.f32.mxu0 0.0
        %7413 = vmatmul.mubr.f32.gmra.mxu0 %v7221
        %v7414 = vpop.f32.mrf.mxu0
        %v7415 = vadd.f32 %v7256, %v7414
        %v7416 = vpop.f32.mrf.mxu0
        %7417 = vmatprep.mubr.f32.mxu0 0.0
        %7418 = vmatmul.mubr.f32.gmra.mxu0 %v7222
        %v7419 = vpop.f32.mrf.mxu0
        %v7420 = vadd.f32 %v7256, %v7419
        %v7421 = vpop.f32.mrf.mxu0
        %7422 = vmatprep.mubr.f32.mxu0 0.0
        %7423 = vmatmul.mubr.f32.gmra.mxu0 %v7223
        %v7424 = vpop.f32.mrf.mxu0
        %v7425 = vadd.f32 %v7256, %v7424
        %v7426 = vpop.f32.mrf.mxu0
        %7427 = vmatprep.mubr.f32.mxu0 0.0
        %7428 = vmatmul.mubr.f32.gmra.mxu0 %v7224
        %v7429 = vpop.f32.mrf.mxu0
        %v7430 = vadd.f32 %v7256, %v7429
        %v7431 = vpop.f32.mrf.mxu0
        %7432 = vmatprep.mubr.f32.mxu0 0.0
        %7433 = vmatmul.mubr.f32.gmra.mxu0 %v7225
        %v7434 = vpop.f32.mrf.mxu0
        %v7435 = vadd.f32 %v7256, %v7434
        %v7436 = vpop.f32.mrf.mxu0
        %7437 = vmatprep.mubr.f32.mxu0 0.0
        %7438 = vmatmul.mubr.f32.gmra.mxu0 %v7226
        %v7439 = vpop.f32.mrf.mxu0
        %v7440 = vadd.f32 %v7256, %v7439
        %v7441 = vpop.f32.mrf.mxu0
        %7442 = vmatprep.mubr.f32.mxu0 0.0
        %7443 = vmatmul.mubr.f32.gmra.mxu0 %v7227
        %v7444 = vpop.f32.mrf.mxu0
        %v7445 = vadd.f32 %v7256, %v7444
        %v7446 = vpop.f32.mrf.mxu0
        %7447 = vmatprep.mubr.f32.mxu0 0.0
        %7448 = vmatmul.mubr.f32.gmra.mxu0 %v7228
        %v7449 = vpop.f32.mrf.mxu0
        %v7450 = vadd.f32 %v7256, %v7449
        %v7451 = vpop.f32.mrf.mxu0
        %7452 = vmatprep.mubr.f32.mxu0 0.0
        %7453 = vmatmul.mubr.f32.gmra.mxu0 %v7229
        %v7454 = vpop.f32.mrf.mxu0
        %v7455 = vadd.f32 %v7256, %v7454
        %v7456 = vpop.f32.mrf.mxu0
        %7457 = vmatprep.mubr.f32.mxu0 0.0
        %7458 = vmatmul.mubr.f32.gmra.mxu0 %v7230
        %v7459 = vpop.f32.mrf.mxu0
        %v7460 = vadd.f32 %v7256, %v7459
        %v7461 = vpop.f32.mrf.mxu0
        %7462 = vmatprep.mubr.f32.mxu0 0.0
        %7463 = vmatmul.mubr.f32.gmra.mxu0 %v7231
        %v7464 = vpop.f32.mrf.mxu0
        %v7465 = vadd.f32 %v7256, %v7464
        %v7466 = vpop.f32.mrf.mxu0
        %7467 = vmatprep.mubr.f32.mxu0 0.0
        %7468 = vmatmul.mubr.f32.gmra.mxu0 %v7232
        %v7469 = vpop.f32.mrf.mxu0
        %v7470 = vadd.f32 %v7256, %v7469
        %v7471 = vpop.f32.mrf.mxu0
        %7472 = vmatprep.mubr.f32.mxu0 0.0
        %7473 = vmatmul.mubr.f32.gmra.mxu0 %v7233
        %v7474 = vpop.f32.mrf.mxu0
        %v7475 = vadd.f32 %v7256, %v7474
        %v7476 = vpop.f32.mrf.mxu0
        %7477 = vmatprep.mubr.f32.mxu0 0.0
        %7478 = vmatmul.mubr.f32.gmra.mxu0 %v7234
        %v7479 = vpop.f32.mrf.mxu0
        %v7480 = vadd.f32 %v7256, %v7479
        %v7481 = vpop.f32.mrf.mxu0
        %7482 = vdwg.mxu0
        %v7483 = vand.u32 2147483647, %v7325
        %v7484 = vand.u32 2147483647, %v7330
        %v7485 = vand.u32 2147483647, %v7335
        %v7486 = vand.u32 2147483647, %v7340
        %v7487 = vand.u32 2147483647, %v7345
        %v7488 = vand.u32 2147483647, %v7350
        %v7489 = vand.u32 2147483647, %v7355
        %v7490 = vand.u32 2147483647, %v7360
        %v7491 = vand.u32 2147483647, %v7365
        %v7492 = vand.u32 2147483647, %v7370
        %v7493 = vand.u32 2147483647, %v7375
        %v7494 = vand.u32 2147483647, %v7380
        %v7495 = vand.u32 2147483647, %v7385
        %v7496 = vand.u32 2147483647, %v7390
        %v7497 = vand.u32 2147483647, %v7395
        %v7498 = vand.u32 2147483647, %v7400
        %v7499 = vand.u32 2147483647, %v7405
        %v7500 = vand.u32 2147483647, %v7410
        %v7501 = vand.u32 2147483647, %v7415
        %v7502 = vand.u32 2147483647, %v7420
        %v7503 = vand.u32 2147483647, %v7425
        %v7504 = vand.u32 2147483647, %v7430
        %v7505 = vand.u32 2147483647, %v7435
        %v7506 = vand.u32 2147483647, %v7440
        %v7507 = vand.u32 2147483647, %v7445
        %v7508 = vand.u32 2147483647, %v7450
        %v7509 = vand.u32 2147483647, %v7455
        %v7510 = vand.u32 2147483647, %v7460
        %v7511 = vand.u32 2147483647, %v7465
        %v7512 = vand.u32 2147483647, %v7470
        %v7513 = vand.u32 2147483647, %v7475
        %v7514 = vand.u32 2147483647, %v7480
        %v7515 = vsub.f32 0.0, %v7483
        %v7516 = vsub.f32 0.0, %v7484
        %v7517 = vsub.f32 0.0, %v7485
        %v7518 = vsub.f32 0.0, %v7486
        %v7519 = vsub.f32 0.0, %v7487
        %v7520 = vsub.f32 0.0, %v7488
        %v7521 = vsub.f32 0.0, %v7489
        %v7522 = vsub.f32 0.0, %v7490
        %v7523 = vsub.f32 0.0, %v7491
        %v7524 = vsub.f32 0.0, %v7492
        %v7525 = vsub.f32 0.0, %v7493
        %v7526 = vsub.f32 0.0, %v7494
        %v7527 = vsub.f32 0.0, %v7495
        %v7528 = vsub.f32 0.0, %v7496
        %v7529 = vsub.f32 0.0, %v7497
        %v7530 = vsub.f32 0.0, %v7498
        %v7531 = vsub.f32 0.0, %v7499
        %v7532 = vsub.f32 0.0, %v7500
        %v7533 = vsub.f32 0.0, %v7501
        %v7534 = vsub.f32 0.0, %v7502
        %v7535 = vsub.f32 0.0, %v7503
        %v7536 = vsub.f32 0.0, %v7504
        %v7537 = vsub.f32 0.0, %v7505
        %v7538 = vsub.f32 0.0, %v7506
        %v7539 = vsub.f32 0.0, %v7507
        %v7540 = vsub.f32 0.0, %v7508
        %v7541 = vsub.f32 0.0, %v7509
        %v7542 = vsub.f32 0.0, %v7510
        %v7543 = vsub.f32 0.0, %v7511
        %v7544 = vsub.f32 0.0, %v7512
        %v7545 = vsub.f32 0.0, %v7513
        %v7546 = vsub.f32 0.0, %v7514
        %v7547 = vmul.f32 %v7515, 1.442695
        %v7548 = vpow.pop %v7547
        %v7549 = vmul.f32 %v7516, 1.442695
        %v7550 = vpow.pop %v7549
        %v7551 = vmul.f32 %v7517, 1.442695
        %v7552 = vpow.pop %v7551
        %v7553 = vmul.f32 %v7518, 1.442695
        %v7554 = vpow.pop %v7553
        %v7555 = vmul.f32 %v7519, 1.442695
        %v7556 = vpow.pop %v7555
        %v7557 = vmul.f32 %v7520, 1.442695
        %v7558 = vpow.pop %v7557
        %v7559 = vmul.f32 %v7521, 1.442695
        %v7560 = vpow.pop %v7559
        %v7561 = vmul.f32 %v7522, 1.442695
        %v7562 = vpow.pop %v7561
        %v7563 = vmul.f32 %v7523, 1.442695
        %v7564 = vpow.pop %v7563
        %v7565 = vmul.f32 %v7524, 1.442695
        %v7566 = vpow.pop %v7565
        %v7567 = vmul.f32 %v7525, 1.442695
        %v7568 = vpow.pop %v7567
        %v7569 = vmul.f32 %v7526, 1.442695
        %v7570 = vpow.pop %v7569
        %v7571 = vmul.f32 %v7527, 1.442695
        %v7572 = vpow.pop %v7571
        %v7573 = vmul.f32 %v7528, 1.442695
        %v7574 = vpow.pop %v7573
        %v7575 = vmul.f32 %v7529, 1.442695
        %v7576 = vpow.pop %v7575
        %v7577 = vmul.f32 %v7530, 1.442695
        %v7578 = vpow.pop %v7577
        %v7579 = vmul.f32 %v7531, 1.442695
        %v7580 = vpow.pop %v7579
        %v7581 = vmul.f32 %v7532, 1.442695
        %v7582 = vpow.pop %v7581
        %v7583 = vmul.f32 %v7533, 1.442695
        %v7584 = vpow.pop %v7583
        %v7585 = vmul.f32 %v7534, 1.442695
        %v7586 = vpow.pop %v7585
        %v7587 = vmul.f32 %v7535, 1.442695
        %v7588 = vpow.pop %v7587
        %v7589 = vmul.f32 %v7536, 1.442695
        %v7590 = vpow.pop %v7589
        %v7591 = vmul.f32 %v7537, 1.442695
        %v7592 = vpow.pop %v7591
        %v7593 = vmul.f32 %v7538, 1.442695
        %v7594 = vpow.pop %v7593
        %v7595 = vmul.f32 %v7539, 1.442695
        %v7596 = vpow.pop %v7595
        %v7597 = vmul.f32 %v7540, 1.442695
        %v7598 = vpow.pop %v7597
        %v7599 = vmul.f32 %v7541, 1.442695
        %v7600 = vpow.pop %v7599
        %v7601 = vmul.f32 %v7542, 1.442695
        %v7602 = vpow.pop %v7601
        %v7603 = vmul.f32 %v7543, 1.442695
        %v7604 = vpow.pop %v7603
        %v7605 = vmul.f32 %v7544, 1.442695
        %v7606 = vpow.pop %v7605
        %v7607 = vmul.f32 %v7545, 1.442695
        %v7608 = vpow.pop %v7607
        %v7609 = vmul.f32 %v7546, 1.442695
        %v7610 = vpow.pop %v7609
        %v7611 = vadd.f32 %v7548, 1.0
        %v7612 = vadd.f32 %v7550, 1.0
        %v7613 = vadd.f32 %v7552, 1.0
        %v7614 = vadd.f32 %v7554, 1.0
        %v7615 = vadd.f32 %v7556, 1.0
        %v7616 = vadd.f32 %v7558, 1.0
        %v7617 = vadd.f32 %v7560, 1.0
        %v7618 = vadd.f32 %v7562, 1.0
        %v7619 = vadd.f32 %v7564, 1.0
        %v7620 = vadd.f32 %v7566, 1.0
        %v7621 = vadd.f32 %v7568, 1.0
        %v7622 = vadd.f32 %v7570, 1.0
        %v7623 = vadd.f32 %v7572, 1.0
        %v7624 = vadd.f32 %v7574, 1.0
        %v7625 = vadd.f32 %v7576, 1.0
        %v7626 = vadd.f32 %v7578, 1.0
        %v7627 = vadd.f32 %v7580, 1.0
        %v7628 = vadd.f32 %v7582, 1.0
        %v7629 = vadd.f32 %v7584, 1.0
        %v7630 = vadd.f32 %v7586, 1.0
        %v7631 = vadd.f32 %v7588, 1.0
        %v7632 = vadd.f32 %v7590, 1.0
        %v7633 = vadd.f32 %v7592, 1.0
        %v7634 = vadd.f32 %v7594, 1.0
        %v7635 = vadd.f32 %v7596, 1.0
        %v7636 = vadd.f32 %v7598, 1.0
        %v7637 = vadd.f32 %v7600, 1.0
        %v7638 = vadd.f32 %v7602, 1.0
        %v7639 = vadd.f32 %v7604, 1.0
        %v7640 = vadd.f32 %v7606, 1.0
        %v7641 = vadd.f32 %v7608, 1.0
        %v7642 = vadd.f32 %v7610, 1.0
        %v7643 = vrcp.pop %v7611
        %v7644 = vrcp.pop %v7612
        %v7645 = vrcp.pop %v7613
        %v7646 = vrcp.pop %v7614
        %v7647 = vrcp.pop %v7615
        %v7648 = vrcp.pop %v7616
        %v7649 = vrcp.pop %v7617
        %v7650 = vrcp.pop %v7618
        %v7651 = vrcp.pop %v7619
        %v7652 = vrcp.pop %v7620
        %v7653 = vrcp.pop %v7621
        %v7654 = vrcp.pop %v7622
        %v7655 = vrcp.pop %v7623
        %v7656 = vrcp.pop %v7624
        %v7657 = vrcp.pop %v7625
        %v7658 = vrcp.pop %v7626
        %v7659 = vrcp.pop %v7627
        %v7660 = vrcp.pop %v7628
        %v7661 = vrcp.pop %v7629
        %v7662 = vrcp.pop %v7630
        %v7663 = vrcp.pop %v7631
        %v7664 = vrcp.pop %v7632
        %v7665 = vrcp.pop %v7633
        %v7666 = vrcp.pop %v7634
        %v7667 = vrcp.pop %v7635
        %v7668 = vrcp.pop %v7636
        %v7669 = vrcp.pop %v7637
        %v7670 = vrcp.pop %v7638
        %v7671 = vrcp.pop %v7639
        %v7672 = vrcp.pop %v7640
        %v7673 = vrcp.pop %v7641
        %v7674 = vrcp.pop %v7642
        %vm7675 = vcmp.ge.f32.partialorder %v7325, 0.0
        %vm7676 = vcmp.ge.f32.partialorder %v7330, 0.0
        %vm7677 = vcmp.ge.f32.partialorder %v7335, 0.0
        %vm7678 = vcmp.ge.f32.partialorder %v7340, 0.0
        %vm7679 = vcmp.ge.f32.partialorder %v7345, 0.0
        %vm7680 = vcmp.ge.f32.partialorder %v7350, 0.0
        %vm7681 = vcmp.ge.f32.partialorder %v7355, 0.0
        %vm7682 = vcmp.ge.f32.partialorder %v7360, 0.0
        %vm7683 = vcmp.ge.f32.partialorder %v7365, 0.0
        %vm7684 = vcmp.ge.f32.partialorder %v7370, 0.0
        %vm7685 = vcmp.ge.f32.partialorder %v7375, 0.0
        %vm7686 = vcmp.ge.f32.partialorder %v7380, 0.0
        %vm7687 = vcmp.ge.f32.partialorder %v7385, 0.0
        %vm7688 = vcmp.ge.f32.partialorder %v7390, 0.0
        %vm7689 = vcmp.ge.f32.partialorder %v7395, 0.0
        %vm7690 = vcmp.ge.f32.partialorder %v7400, 0.0
        %vm7691 = vcmp.ge.f32.partialorder %v7405, 0.0
        %vm7692 = vcmp.ge.f32.partialorder %v7410, 0.0
        %vm7693 = vcmp.ge.f32.partialorder %v7415, 0.0
        %vm7694 = vcmp.ge.f32.partialorder %v7420, 0.0
        %vm7695 = vcmp.ge.f32.partialorder %v7425, 0.0
        %vm7696 = vcmp.ge.f32.partialorder %v7430, 0.0
        %vm7697 = vcmp.ge.f32.partialorder %v7435, 0.0
        %vm7698 = vcmp.ge.f32.partialorder %v7440, 0.0
        %vm7699 = vcmp.ge.f32.partialorder %v7445, 0.0
        %vm7700 = vcmp.ge.f32.partialorder %v7450, 0.0
        %vm7701 = vcmp.ge.f32.partialorder %v7455, 0.0
        %vm7702 = vcmp.ge.f32.partialorder %v7460, 0.0
        %vm7703 = vcmp.ge.f32.partialorder %v7465, 0.0
        %vm7704 = vcmp.ge.f32.partialorder %v7470, 0.0
        %vm7705 = vcmp.ge.f32.partialorder %v7475, 0.0
        %vm7706 = vcmp.ge.f32.partialorder %v7480, 0.0
        %v7707 = vmul.f32 %v7548, %v7643
        %v7708 = vmul.f32 %v7550, %v7644
        %v7709 = vmul.f32 %v7552, %v7645
        %v7710 = vmul.f32 %v7554, %v7646
        %v7711 = vmul.f32 %v7556, %v7647
        %v7712 = vmul.f32 %v7558, %v7648
        %v7713 = vmul.f32 %v7560, %v7649
        %v7714 = vmul.f32 %v7562, %v7650
        %v7715 = vmul.f32 %v7564, %v7651
        %v7716 = vmul.f32 %v7566, %v7652
        %v7717 = vmul.f32 %v7568, %v7653
        %v7718 = vmul.f32 %v7570, %v7654
        %v7719 = vmul.f32 %v7572, %v7655
        %v7720 = vmul.f32 %v7574, %v7656
        %v7721 = vmul.f32 %v7576, %v7657
        %v7722 = vmul.f32 %v7578, %v7658
        %v7723 = vmul.f32 %v7580, %v7659
        %v7724 = vmul.f32 %v7582, %v7660
        %v7725 = vmul.f32 %v7584, %v7661
        %v7726 = vmul.f32 %v7586, %v7662
        %v7727 = vmul.f32 %v7588, %v7663
        %v7728 = vmul.f32 %v7590, %v7664
        %v7729 = vmul.f32 %v7592, %v7665
        %v7730 = vmul.f32 %v7594, %v7666
        %v7731 = vmul.f32 %v7596, %v7667
        %v7732 = vmul.f32 %v7598, %v7668
        %v7733 = vmul.f32 %v7600, %v7669
        %v7734 = vmul.f32 %v7602, %v7670
        %v7735 = vmul.f32 %v7604, %v7671
        %v7736 = vmul.f32 %v7606, %v7672
        %v7737 = vmul.f32 %v7608, %v7673
        %v7738 = vmul.f32 %v7610, %v7674
        %v7739 = vsel %vm7675, %v7643, %v7707
        %v7740 = vsel %vm7676, %v7644, %v7708
        %v7741 = vsel %vm7677, %v7645, %v7709
        %v7742 = vsel %vm7678, %v7646, %v7710
        %v7743 = vsel %vm7679, %v7647, %v7711
        %v7744 = vsel %vm7680, %v7648, %v7712
        %v7745 = vsel %vm7681, %v7649, %v7713
        %v7746 = vsel %vm7682, %v7650, %v7714
        %v7747 = vsel %vm7683, %v7651, %v7715
        %v7748 = vsel %vm7684, %v7652, %v7716
        %v7749 = vsel %vm7685, %v7653, %v7717
        %v7750 = vsel %vm7686, %v7654, %v7718
        %v7751 = vsel %vm7687, %v7655, %v7719
        %v7752 = vsel %vm7688, %v7656, %v7720
        %v7753 = vsel %vm7689, %v7657, %v7721
        %v7754 = vsel %vm7690, %v7658, %v7722
        %v7755 = vsel %vm7691, %v7659, %v7723
        %v7756 = vsel %vm7692, %v7660, %v7724
        %v7757 = vsel %vm7693, %v7661, %v7725
        %v7758 = vsel %vm7694, %v7662, %v7726
        %v7759 = vsel %vm7695, %v7663, %v7727
        %v7760 = vsel %vm7696, %v7664, %v7728
        %v7761 = vsel %vm7697, %v7665, %v7729
        %v7762 = vsel %vm7698, %v7666, %v7730
        %v7763 = vsel %vm7699, %v7667, %v7731
        %v7764 = vsel %vm7700, %v7668, %v7732
        %v7765 = vsel %vm7701, %v7669, %v7733
        %v7766 = vsel %vm7702, %v7670, %v7734
        %v7767 = vsel %vm7703, %v7671, %v7735
        %v7768 = vsel %vm7704, %v7672, %v7736
        %v7769 = vsel %vm7705, %v7673, %v7737
        %v7770 = vsel %vm7706, %v7674, %v7738
        %7771 = vst [vmem:[%s693] sm:$0xff] %v7739
        %7772 = vst [vmem:[%s693 + $0x8] sm:$0xff] %v7740
        %7773 = vst [vmem:[%s693 + $0x10] sm:$0xff] %v7741
        %7774 = vst [vmem:[%s693 + $0x18] sm:$0xff] %v7742
        %7775 = vst [vmem:[%s693 + $0x20] sm:$0xff] %v7743
        %7776 = vst [vmem:[%s693 + $0x28] sm:$0xff] %v7744
        %7777 = vst [vmem:[%s693 + $0x30] sm:$0xff] %v7745
        %7778 = vst [vmem:[%s693 + $0x38] sm:$0xff] %v7746
        %7779 = vst [vmem:[%s693 + $0x40] sm:$0xff] %v7747
        %7780 = vst [vmem:[%s693 + $0x48] sm:$0xff] %v7748
        %7781 = vst [vmem:[%s693 + $0x50] sm:$0xff] %v7749
        %7782 = vst [vmem:[%s693 + $0x58] sm:$0xff] %v7750
        %7783 = vst [vmem:[%s693 + $0x60] sm:$0xff] %v7751
        %7784 = vst [vmem:[%s693 + $0x68] sm:$0xff] %v7752
        %7785 = vst [vmem:[%s693 + $0x70] sm:$0xff] %v7753
        %7786 = vst [vmem:[%s693 + $0x78] sm:$0xff] %v7754
        %7787 = vst [vmem:[%s693 + $0x80] sm:$0xff] %v7755
        %7788 = vst [vmem:[%s693 + $0x88] sm:$0xff] %v7756
        %7789 = vst [vmem:[%s693 + $0x90] sm:$0xff] %v7757
        %7790 = vst [vmem:[%s693 + $0x98] sm:$0xff] %v7758
        %7791 = vst [vmem:[%s693 + $0xa0] sm:$0xff] %v7759
        %7792 = vst [vmem:[%s693 + $0xa8] sm:$0xff] %v7760
        %7793 = vst [vmem:[%s693 + $0xb0] sm:$0xff] %v7761
        %7794 = vst [vmem:[%s693 + $0xb8] sm:$0xff] %v7762
        %7795 = vst [vmem:[%s693 + $0xc0] sm:$0xff] %v7763
        %7796 = vst [vmem:[%s693 + $0xc8] sm:$0xff] %v7764
        %7797 = vst [vmem:[%s693 + $0xd0] sm:$0xff] %v7765
        %7798 = vst [vmem:[%s693 + $0xd8] sm:$0xff] %v7766
        %7799 = vst [vmem:[%s693 + $0xe0] sm:$0xff] %v7767
        %7800 = vst [vmem:[%s693 + $0xe8] sm:$0xff] %v7768
        %7801 = vst [vmem:[%s693 + $0xf0] sm:$0xff] %v7769
        %7802 = vst [vmem:[%s693 + $0xf8] sm:$0xff] %v7770
        %s7803 = sand.u32 %s356, 1
        %s7804 = scalar_lea.sflag [#allocation5], %s7803
        %s7805 = sand.u32 %s356, 1
        %s7806 = smul.addr %s7805, 256
        %s7807 = scalar_lea.vmem [#allocation23], %s7806
        // Predicated region
        $region125: #{tpu_custom_call.1} parent=75 // pred_check
          %p7808 = pneg %p366
        $region126: #{tpu_custom_call.1} parent=75 // pred_check_branch
          %7810 = sbr.rel (%p7808) target = $region128
        $region127: #{tpu_custom_call.1} parent=75 // pred_region
          %s7811 = smul.u32 32, %s39
          %s7813 = ssub.s32 4096, 4096
          %7814 = vsyncadd %s7804, %s7813
          %s7815 = smul.addr %s7811, 128
          %s7816 = scalar_lea.hbm %s14, %s7815
          %s7817 = sshll.u32 %s7807, 4
          %s7818 = int_to_ptr.vmem [resolvable:$true] %s7817
          %7823 = dma.vmem_to_hbm [thread:$0]  %s7818, 4096, %s7816, %s7804, 128, 128, 8
        $region128: #{tpu_custom_call.1} parent=75 // pred_fallthru
          _
      $region76: #{tpu_custom_call.1} parent=5 // pred_fallthru
        _
      %p7824 = scmp.le.s32.totalorder 2, %s34
      // Predicated region
      $region129: #{tpu_custom_call.1} parent=5 // pred_check
        %p7825 = pneg %p7824
      $region130: #{tpu_custom_call.1} parent=5 // pred_check_branch
        %7827 = sbr.rel (%p7825) target = $region132
      $region131: #{tpu_custom_call.1} parent=5 // pred_region
        %s7828 = ssub.s32 %s34, 2
        // Predicated region
        $region133: #{tpu_custom_call.1} parent=131 // pred_check
          %p7829 = pneg %p372
        $region134: #{tpu_custom_call.1} parent=131 // pred_check_branch
          %7831 = sbr.rel (%p7829) target = $region136
        $region135: #{tpu_custom_call.1} parent=131 // pred_region
          %s7832 = sand.u32 %s357, 1
          %s7833 = scalar_lea.sflag [#allocation5], %s7832
          %s7834 = sand.u32 %s357, 1
          %s7835 = smul.addr %s7834, 256
          %s7836 = scalar_lea.vmem [#allocation23], %s7835
          %7837 = dma.done %s7833, 4096
        $region136: #{tpu_custom_call.1} parent=131 // pred_fallthru
          _
      $region132: #{tpu_custom_call.1} parent=5 // pred_fallthru
        _
    $region6: #{tpu_custom_call.1} parent=1 // loop_footer
      %s38 = sadd.s32 1, %s34
    $region7: #{tpu_custom_call.1} parent=1 // loop_footer_branch
      %33 = sbr.rel target = $region3
    $region8: #{tpu_custom_call.1} parent=1 // loop_exit
      _
    %7838 = vsyncpa [#allocation4], 1
    %s7839 = scalar_lea.sflag [#allocation4], 1
    %7840 = vsyncpa %s7839, 1
    %7841 = vsyncpa [#allocation7], 1
    %s7842 = scalar_lea.sflag [#allocation7], 1
    %7843 = vsyncpa %s7842, 1
    %7844 = vsyncpa [#allocation10], 1
    %7845 = vsyncpa [#allocation13], 1
    %7846 = vsyncpa [#allocation16], 1
    %7847 = vsyncpa [#allocation19], 1
    %7848 = vsyncpa [#allocation22], 1
    %7849 = vsyncpa [#allocation5], 1
    %s7850 = scalar_lea.sflag [#allocation5], 1
    %7851 = vsyncpa %s7850, 1

</llo_original>
